<compile_context>
chip_gen: v6e
topology: v6e:2x2x1
jax: 0.10.0
libtpu: 0.0.40
codegen_flags: <defaults>
</compile_context>

<pallas_src>
import functools
import math

import jax
import jax.numpy as jnp
import numpy as np
from jax.experimental import pallas as pl
from jax.experimental.pallas import tpu as pltpu


# ----------------------------------------------------------------------------
# Module configuration (mirrors DiscriminatorSTFT.__init__)
# ----------------------------------------------------------------------------
def get_2d_padding(kernel_size, dilation=(1, 1)):
    return (
        (kernel_size[0] - 1) * dilation[0] // 2,
        (kernel_size[1] - 1) * dilation[1] // 2,
    )


def build_layer_specs(filters, in_channels, out_channels, kernel_size, dilations,
                      stride, max_filters, filters_scale):
    """Returns (5 inner conv configs, conv_post config)."""
    specs = []
    spec_channels = 2 * in_channels
    specs.append(dict(cin=spec_channels, cout=filters, k=kernel_size,
                      stride=(1, 1), dil=(1, 1), pad=get_2d_padding(kernel_size)))
    in_chs = min(filters_scale * filters, max_filters)
    for i, d in enumerate(dilations):
        out_chs = min(filters_scale ** (i + 1) * filters, max_filters)
        specs.append(dict(cin=in_chs, cout=out_chs, k=kernel_size, stride=stride,
                          dil=(d, 1), pad=get_2d_padding(kernel_size, (d, 1))))
        in_chs = out_chs
    out_chs = min(filters_scale ** (len(dilations) + 1) * filters, max_filters)
    specs.append(dict(cin=in_chs, cout=out_chs, k=(kernel_size[0], kernel_size[0]),
                      stride=(1, 1), dil=(1, 1),
                      pad=get_2d_padding((kernel_size[0], kernel_size[0]))))
    post = dict(cin=out_chs, cout=out_channels, k=(kernel_size[0], kernel_size[0]),
                stride=(1, 1), dil=(1, 1),
                pad=get_2d_padding((kernel_size[0], kernel_size[0])))
    return specs, post


def init_params(key, specs, post):
    """torch Conv2d-style init; weights stored as (KH, KW, Cin, Cout) == HWIO."""
    params = []
    for s in specs + [post]:
        kh, kw = s["k"]
        cin, cout = s["cin"], s["cout"]
        key, kw_key, kb_key = jax.random.split(key, 3)
        fan_in = cin * kh * kw
        bound = 1.0 / math.sqrt(fan_in)
        w = jax.random.uniform(kw_key, (kh, kw, cin, cout), jnp.float32, -bound, bound)
        b = jax.random.uniform(kb_key, (cout,), jnp.float32, -bound, bound)
        params.append((w, b))
    return params[:-1], params[-1]


# ----------------------------------------------------------------------------
# STFT basis (torchaudio Spectrogram: hann window, normalized=True, center=False,
# power=None) as a windowed real-DFT matrix, columns = [real bins | imag bins].
# ----------------------------------------------------------------------------
def make_stft_basis(n_fft, win_length):
    assert win_length <= n_fft
    n = np.arange(n_fft, dtype=np.float64)
    m = np.arange(win_length, dtype=np.float64)
    win = 0.5 * (1.0 - np.cos(2.0 * math.pi * m / win_length))    # periodic hann
    left = (n_fft - win_length) // 2
    win = np.pad(win, (left, n_fft - win_length - left))
    norm = np.sqrt(np.sum(win * win))                             # normalized=True
    freq = n_fft // 2 + 1
    k = np.arange(freq, dtype=np.float64)
    ang = 2.0 * math.pi * n[:, None] * k[None, :] / n_fft
    cos_b = (win[:, None] * np.cos(ang)) / norm                   # real part
    sin_b = (-win[:, None] * np.sin(ang)) / norm                  # imag part (torch sign)
    return np.concatenate([cos_b, sin_b], axis=1).astype(np.float32)   # (n_fft, 2*freq)


# ----------------------------------------------------------------------------
# Per-layer geometry (lane widths padded to 128) and Toeplitz tap matrices
# ----------------------------------------------------------------------------
def _round_up(x, m):
    return (x + m - 1) // m * m


def build_geometry(specs_all, n_frames, freq):
    geo = []
    H, W = n_frames, freq
    for idx, s in enumerate(specs_all):
        KH, KW = s["k"]
        sh, sw = s["stride"]
        dh, dw = s["dil"]
        ph, pw = s["pad"]
        # TODO(synk): generalize to time-stride != 1 / freq-dilation != 1 / even
        # time kernels (unused by this module's config).
        assert sh == 1 and dw == 1
        Hp, Wp = H + 2 * ph, W + 2 * pw
        Hout = Hp - dh * (KH - 1)
        assert Hout == H, "batch-stacked layout assumes 'same' time geometry"
        Wout = (Wp - KW) // sw + 1
        pw_next = specs_all[idx + 1]["pad"][1] if idx + 1 < len(specs_all) else 0
        wlanes = Wout + 2 * pw_next            # output freq axis pre-padded for next layer
        Ltrue = s["cout"] * wlanes
        Lpad = _round_up(Ltrue, 128)           # lane-dense stores / full MXU column blocks
        geo.append(dict(KH=KH, KW=KW, sw=sw, dh=dh, ph=ph, pw=pw, Hp=Hp, Wp=Wp,
                        Hout=Hout, Wout=Wout, wlanes=wlanes, pw_next=pw_next,
                        cin=s["cin"], cout=s["cout"],
                        Lin_true=s["cin"] * Wp, Ltrue=Ltrue, Lpad=Lpad))
        H, W = Hout, Wout
    for l in range(1, len(geo)):
        assert geo[l]["Lin_true"] == geo[l - 1]["Ltrue"]
        geo[l]["Lin_pad"] = geo[l - 1]["Lpad"]
    return geo


def make_basis_packed(basis, C, n_fft, geo0):
    """(C*n_fft, Lin_true0): frame samples -> layer-0 input lanes (freq pads zero)."""
    freq = n_fft // 2 + 1
    Wp0, pw0 = geo0["Wp"], geo0["pw"]
    bp = np.zeros((C * n_fft, geo0["Lin_true"]), np.float32)
    for c in range(C):
        bp[c * n_fft:(c + 1) * n_fft, c * Wp0 + pw0:c * Wp0 + pw0 + freq] = basis[:, :freq]
        bp[c * n_fft:(c + 1) * n_fft,
           (C + c) * Wp0 + pw0:(C + c) * Wp0 + pw0 + freq] = basis[:, freq:]
    return bp


def pack_layer_params(geo, params_all, basis_packed, compute_dtype=jnp.bfloat16):
    """Per-time-tap matmul operands.

    Layer 0 is fused with the STFT basis: M0[i] = basis_packed @ T0[i] (f32),
    contracting raw frame samples straight to layer-0 output lanes.
    Layers >= 1 use Toeplitz tap matrices of shape (Lpad_in, Lpad_out) with zero
    rows/cols on every padding lane, so padded lanes stay exactly zero.
    Bias rows are masked the same way.
    """
    taps, biases = [], []
    for l, (g, (w, b)) in enumerate(zip(geo, params_all)):
        KH, KW, Cin, Cout = w.shape
        P = np.zeros((KW, g["Wp"], g["wlanes"]), np.float32)
        for j in range(KW):
            for wo in range(g["Wout"]):
                P[j, wo * g["sw"] + j, g["pw_next"] + wo] = 1.0
        T = jnp.einsum("ijab,jcl->iacbl", w, jnp.asarray(P))
        T = T.reshape(KH, g["Lin_true"], g["Ltrue"])
        T = jnp.pad(T, ((0, 0), (0, 0), (0, g["Lpad"] - g["Ltrue"])))
        if l == 0:
            # Fold the windowed-DFT basis into layer 0 (keep f32 for parity).
            T = jnp.einsum("rc,icl->irl", jnp.asarray(basis_packed), T,
                           precision=jax.lax.Precision.HIGHEST).astype(jnp.float32)
        else:
            T = jnp.pad(T, ((0, 0), (0, g["Lin_pad"] - g["Lin_true"]), (0, 0)))
            T = T.astype(compute_dtype)

        lane_mask = np.zeros((g["Lpad"],), np.float32)
        for ch in range(Cout):
            lo = ch * g["wlanes"] + g["pw_next"]
            lane_mask[lo:lo + g["Wout"]] = 1.0
        brow = jnp.repeat(b, g["wlanes"])                         # (Ltrue,)
        brow = jnp.pad(brow, (0, g["Lpad"] - g["Ltrue"]))
        brow = (brow * jnp.asarray(lane_mask))[None, :]           # zero on all pad lanes
        taps.append(T)
        biases.append(brow.astype(jnp.float32))
    return taps, biases


# ----------------------------------------------------------------------------
# Fused Pallas kernel: all conv layers, activations VMEM-resident
# ----------------------------------------------------------------------------
def make_fused_kernel(geo, *, n_layers, Bt, R, H, M_total, negative_slope=0.2):
    def kernel(*refs):
        frames_ref = refs[0]                      # (Bt*R, C*n_fft) f32, time pads pre-zeroed
        mask_ref = refs[1]                        # (M_total, 1) f32 row-validity mask
        tap_refs = refs[2:2 + n_layers]           # [0]: f32 basis-folded; [1:]: Toeplitz taps
        bias_refs = refs[2 + n_layers:2 + 2 * n_layers]
        out_refs = refs[2 + 2 * n_layers:2 + 3 * n_layers]
        acc_ref = refs[2 + 3 * n_layers]          # (M_total, Lmax) f32 accumulator
        buf_refs = refs[2 + 3 * n_layers + 1:]    # inter-layer activation buffers

        # Zero ONLY the time-pad border rows of the inter-layer buffers each
        # step (scratch persists across grid steps).  Interior + inter-batch
        # gap rows are fully rewritten below; freq-pad lanes are provably zero
        # from the masked taps/bias and LeakyReLU(0) == 0.
        for l in range(1, n_layers):
            ph = geo[l]["ph"]
            if ph:
                buf = buf_refs[l - 1]
                zeros = jnp.zeros((ph, geo[l]["Lin_pad"]), buf.dtype)
                buf[0:ph, :] = zeros
                buf[ph + M_total:2 * ph + M_total, :] = zeros

        row_mask = mask_ref[...]                  # 1 on valid rows, 0 on inter-batch gaps

        src = frames_ref
        for l in range(n_layers):
            g = geo[l]
            L, dh = g["Lpad"], g["dh"]
            # conv layer l == sum over KH time taps of row-shifted MXU matmuls,
            # accumulated in an f32 VMEM scratch (bias folded into the init).
            acc_ref[:, 0:L] = bias_refs[l][...] + jnp.dot(
                src[0:M_total, :], tap_refs[l][0],
                preferred_element_type=jnp.float32)
            for i in range(1, g["KH"]):
                acc_ref[:, 0:L] += jnp.dot(
                    src[i * dh:i * dh + M_total, :], tap_refs[l][i],
                    preferred_element_type=jnp.float32)

            a = acc_ref[:, 0:L]
            if l < n_layers - 1:
                a = jnp.where(a >= 0.0, a, negative_slope * a)    # LeakyReLU(0.2)

            # fmap_l / final logits: only the valid rows of each batch element.
            for b in range(Bt):
                out_refs[l][b] = a[b * R:b * R + H, :]

            if l < n_layers - 1:
                nxt = buf_refs[l]
                off = geo[l + 1]["ph"]
                # mask kills inter-batch garbage rows -> they land as zeros in
                # the next layer's time-pad gap, which is exactly what it needs.
                nxt[off:off + M_total, :] = (a * row_mask).astype(nxt.dtype)
                src = nxt

    return kernel


# ----------------------------------------------------------------------------
# Forward pass (matches DiscriminatorSTFT.forward)
# ----------------------------------------------------------------------------
def discriminator_stft_forward(x, conv_params, post_params, specs, post,
                               *, n_fft, hop_length, win_length,
                               batch_tile=1, compute_dtype=jnp.bfloat16):
    B, C, T = x.shape
    assert T >= n_fft
    freq = n_fft // 2 + 1
    n_frames = (T - n_fft) // hop_length + 1
    H = n_frames
    Bt = batch_tile
    assert Bt >= 1 and B % Bt == 0
    G = B // Bt

    specs_all = list(specs) + [post]
    params_all = list(conv_params) + [post_params]
    n_layers = len(specs_all)
    geo = build_geometry(specs_all, n_frames, freq)

    ph0 = geo[0]["ph"]
    max_ph = max(g["ph"] for g in geo[1:]) if n_layers > 1 else 0
    # Per-batch row pitch of the stacked layout: big enough to hold the padded
    # frames block and to keep every layer's time pads inside the gap.
    R = _round_up(max(H + 2 * ph0, H + max_ph), 8)
    M_total = (Bt - 1) * R + H                      # stacked matmul M dimension

    basis = make_stft_basis(n_fft, win_length)
    basis_packed = make_basis_packed(basis, C, n_fft, geo[0])
    taps, biases = pack_layer_params(geo, params_all, basis_packed, compute_dtype)

    # ---- STFT framing + time padding + batch stacking done once in XLA ----
    CNF = C * n_fft
    idx = np.arange(n_frames)[:, None] * hop_length + np.arange(n_fft)[None, :]
    frames = x[:, :, idx]                                        # (B, C, nf, n_fft)
    frames = jnp.transpose(frames, (0, 2, 1, 3)).reshape(B, n_frames, CNF)
    frames = jnp.pad(frames, ((0, 0), (ph0, R - ph0 - n_frames), (0, 0)))
    frames = frames.reshape(G * Bt * R, CNF)                     # row pitch R per batch

    # Rows r with (r % R) < H are real output rows; the rest are garbage rows
    # produced by the stacked (cross-batch) matmul and must be masked to zero.
    rm = ((np.arange(M_total) % R) < H).astype(np.float32)[:, None]
    row_mask = jnp.asarray(rm)

    Lmax = max(g["Lpad"] for g in geo)
    kernel = make_fused_kernel(geo, n_layers=n_layers, Bt=Bt, R=R, H=H,
                               M_total=M_total)

    in_specs = (
        [pl.BlockSpec((Bt * R, CNF), lambda gi: (gi, 0)),
         pl.BlockSpec((M_total, 1), lambda gi: (0, 0))]
        + [pl.BlockSpec(t.shape, lambda gi: (0, 0, 0)) for t in taps]
        + [pl.BlockSpec(br.shape, lambda gi: (0, 0)) for br in biases]
    )
    out_shape = tuple(jax.ShapeDtypeStruct((B, H, g["Lpad"]), jnp.float32)
                      for g in geo)
    out_specs = tuple(pl.BlockSpec((Bt, H, g["Lpad"]), lambda gi: (gi, 0, 0))
                      for g in geo)
    scratch_shapes = (
        [pltpu.VMEM((M_total, Lmax), jnp.float32)]
        + [pltpu.VMEM((_round_up(2 * geo[l]["ph"] + M_total, 8), geo[l]["Lin_pad"]),
                      compute_dtype)
           for l in range(1, n_layers)]
    )

    outs = pl.pallas_call(
        kernel,
        out_shape=out_shape,
        grid=(G,),
        in_specs=in_specs,
        out_specs=out_specs,
        scratch_shapes=scratch_shapes,
        compiler_params=pltpu.CompilerParams(
            dimension_semantics=("parallel",),      # grid kept even for v7x's 2 TCs
            vmem_limit_bytes=16 * 1024 * 1024,      # actual use ~4 MB; fits all gens
        ),
    )(frames, row_mask, *taps, *biases)

    # Unpack lane-packed (channel x padded-freq) rows back to torch NCHW layout.
    results = []
    for l, g in enumerate(geo):
        o = outs[l][:, :, :g["Ltrue"]].reshape(B, H, g["cout"], g["wlanes"])
        o = o[:, :, :, g["pw_next"]:g["pw_next"] + g["Wout"]]
        results.append(jnp.transpose(o, (0, 2, 1, 3)))           # (B, C, time, freq)
    return results[-1], results[:-1]


# ----------------------------------------------------------------------------
# Plain-XLA f32 reference (numerical sanity check)
# ----------------------------------------------------------------------------
def reference_forward(x, conv_params, post_params, specs, post,
                      *, n_fft, hop_length, win_length):
    B, C, T = x.shape
    freq = n_fft // 2 + 1
    n_frames = (T - n_fft) // hop_length + 1
    basis = jnp.asarray(make_stft_basis(n_fft, win_length))
    idx = np.arange(n_frames)[:, None] * hop_length + np.arange(n_fft)[None, :]
    frames = x[:, :, idx]                                        # (B, C, nf, n_fft)
    spec = jnp.einsum("bcfn,nk->bcfk", frames, basis,
                      precision=jax.lax.Precision.HIGHEST)       # (B, C, nf, 2*freq)
    z = jnp.concatenate([spec[..., :freq], spec[..., freq:]], axis=1)  # (B, 2C, nf, freq)
    z = jnp.transpose(z, (0, 2, 3, 1))                           # NHWC
    fmap = []
    for (w, b), s in zip(conv_params, specs):
        z = jax.lax.conv_general_dilated(
            z, w, window_strides=s["stride"],
            padding=((s["pad"][0], s["pad"][0]), (s["pad"][1], s["pad"][1])),
            rhs_dilation=s["dil"], dimension_numbers=("NHWC", "HWIO", "NHWC"),
            precision=jax.lax.Precision.HIGHEST) + b
        z = jnp.where(z >= 0.0, z, 0.2 * z)
        fmap.append(jnp.transpose(z, (0, 3, 1, 2)))
    wp, bp = post_params
    z = jax.lax.conv_general_dilated(
        z, wp, window_strides=post["stride"],
        padding=((post["pad"][0], post["pad"][0]), (post["pad"][1], post["pad"][1])),
        rhs_dilation=post["dil"], dimension_numbers=("NHWC", "HWIO", "NHWC"),
        precision=jax.lax.Precision.HIGHEST) + bp
    return jnp.transpose(z, (0, 3, 1, 2)), fmap


# ----------------------------------------------------------------------------
if __name__ == "__main__":
    filters = 8
    in_channels = 1
    out_channels = 1
    n_fft = 64
    hop_length = 16
    win_length = 64
    kernel_size = (3, 9)
    dilations = [1, 2, 4]
    stride = (1, 2)
    max_filters = 1024
    filters_scale = 1

    B, T = 4, 304                    # -> 16 STFT frames, 33 freq bins
    batch_tile = 2                   # 2 batch elems per grid step -> grid=(2,), M=40

    key = jax.random.PRNGKey(0)
    key, xk = jax.random.split(key)
    x = jax.random.normal(xk, (B, in_channels, T), jnp.float32)

    specs, post = build_layer_specs(filters, in_channels, out_channels, kernel_size,
                                    dilations, stride, max_filters, filters_scale)
    conv_params, post_params = init_params(key, specs, post)

    fwd = jax.jit(functools.partial(
        discriminator_stft_forward, specs=specs, post=post,
        n_fft=n_fft, hop_length=hop_length, win_length=win_length,
        batch_tile=batch_tile))

    z, fmap = fwd(x, conv_params, post_params)
    jax.block_until_ready(z)
    for f in fmap:
        jax.block_until_ready(f)

    # ---- structural checks (match the torch module) ----
    z_ref, fmap_ref = reference_forward(
        x, conv_params, post_params, specs, post,
        n_fft=n_fft, hop_length=hop_length, win_length=win_length)
    assert z.shape == z_ref.shape and z.shape[0] == B and z.shape[1] == out_channels
    assert len(fmap) == len(specs) == 5
    for got, want in zip(fmap, fmap_ref):
        assert got.shape == want.shape

    # ---- numerical check vs the f32 XLA reference (kernel uses bf16 convs;
    #      pass compute_dtype=jnp.float32 for an f32-tap validation path) ----
    for got, want in zip([z] + fmap, [z_ref] + fmap_ref):
        err = float(jnp.max(jnp.abs(got - want)))
        scale = float(jnp.max(jnp.abs(want))) + 1e-6
        assert err <= 0.06 * scale + 0.05, (err, scale)

    print("KERNEL_OK")
</pallas_src>

<mosaic_0001>
module attributes {stable_mosaic.version = 11 : i64} {
  func.func @kernel(%arg0: i32, %arg1: memref<48x64xf32, #tpu.memory_space<vmem>>, %arg2: memref<40x1xf32, #tpu.memory_space<vmem>>, %arg3: memref<3x64x384xf32, #tpu.memory_space<vmem>>, %arg4: memref<3x384x256xbf16, #tpu.memory_space<vmem>>, %arg5: memref<3x256x256xbf16, #tpu.memory_space<vmem>>, %arg6: memref<3x256x128xbf16, #tpu.memory_space<vmem>>, %arg7: memref<3x128x128xbf16, #tpu.memory_space<vmem>>, %arg8: memref<3x128x128xbf16, #tpu.memory_space<vmem>>, %arg9: memref<1x384xf32, #tpu.memory_space<vmem>>, %arg10: memref<1x256xf32, #tpu.memory_space<vmem>>, %arg11: memref<1x256xf32, #tpu.memory_space<vmem>>, %arg12: memref<1x128xf32, #tpu.memory_space<vmem>>, %arg13: memref<1x128xf32, #tpu.memory_space<vmem>>, %arg14: memref<1x128xf32, #tpu.memory_space<vmem>>, %arg15: memref<2x16x384xf32, #tpu.memory_space<vmem>>, %arg16: memref<2x16x256xf32, #tpu.memory_space<vmem>>, %arg17: memref<2x16x256xf32, #tpu.memory_space<vmem>>, %arg18: memref<2x16x128xf32, #tpu.memory_space<vmem>>, %arg19: memref<2x16x128xf32, #tpu.memory_space<vmem>>, %arg20: memref<2x16x128xf32, #tpu.memory_space<vmem>>, %arg21: memref<40x384xf32, #tpu.memory_space<vmem>>, %arg22: memref<48x384xbf16, #tpu.memory_space<vmem>>, %arg23: memref<48x256xbf16, #tpu.memory_space<vmem>>, %arg24: memref<48x256xbf16, #tpu.memory_space<vmem>>, %arg25: memref<48x128xbf16, #tpu.memory_space<vmem>>, %arg26: memref<48x128xbf16, #tpu.memory_space<vmem>>) attributes {dimension_semantics = [#tpu.dimension_semantics<parallel>], iteration_bounds = array<i64: 2>, scalar_prefetch = 0 : i64, scratch_operands = 6 : i64, tpu.core_type = #tpu.core_type<tc>, window_params = [{transform_indices = @transform_0, window_bounds = array<i64: 48, 64>}, {pipeline_mode = #tpu.pipeline_mode<synchronous>, transform_indices = @transform_1, window_bounds = array<i64: 40, 1>}, {pipeline_mode = #tpu.pipeline_mode<synchronous>, transform_indices = @transform_2, window_bounds = array<i64: 3, 64, 384>}, {pipeline_mode = #tpu.pipeline_mode<synchronous>, transform_indices = @transform_3, window_bounds = array<i64: 3, 384, 256>}, {pipeline_mode = #tpu.pipeline_mode<synchronous>, transform_indices = @transform_4, window_bounds = array<i64: 3, 256, 256>}, {pipeline_mode = #tpu.pipeline_mode<synchronous>, transform_indices = @transform_5, window_bounds = array<i64: 3, 256, 128>}, {pipeline_mode = #tpu.pipeline_mode<synchronous>, transform_indices = @transform_6, window_bounds = array<i64: 3, 128, 128>}, {pipeline_mode = #tpu.pipeline_mode<synchronous>, transform_indices = @transform_7, window_bounds = array<i64: 3, 128, 128>}, {pipeline_mode = #tpu.pipeline_mode<synchronous>, transform_indices = @transform_8, window_bounds = array<i64: 1, 384>}, {pipeline_mode = #tpu.pipeline_mode<synchronous>, transform_indices = @transform_9, window_bounds = array<i64: 1, 256>}, {pipeline_mode = #tpu.pipeline_mode<synchronous>, transform_indices = @transform_10, window_bounds = array<i64: 1, 256>}, {pipeline_mode = #tpu.pipeline_mode<synchronous>, transform_indices = @transform_11, window_bounds = array<i64: 1, 128>}, {pipeline_mode = #tpu.pipeline_mode<synchronous>, transform_indices = @transform_12, window_bounds = array<i64: 1, 128>}, {pipeline_mode = #tpu.pipeline_mode<synchronous>, transform_indices = @transform_13, window_bounds = array<i64: 1, 128>}, {transform_indices = @transform_14, window_bounds = array<i64: 2, 16, 384>}, {transform_indices = @transform_15, window_bounds = array<i64: 2, 16, 256>}, {transform_indices = @transform_16, window_bounds = array<i64: 2, 16, 256>}, {transform_indices = @transform_17, window_bounds = array<i64: 2, 16, 128>}, {transform_indices = @transform_18, window_bounds = array<i64: 2, 16, 128>}, {transform_indices = @transform_19, window_bounds = array<i64: 2, 16, 128>}]} {
    %cst = arith.constant 0.000000e+00 : bf16
    %0 = vector.broadcast %cst : bf16 to vector<1x384xbf16>
    %c0 = arith.constant 0 : index
    %c0_0 = arith.constant 0 : index
    %1 = vector.load %arg22[%c0, %c0_0] : memref<48x384xbf16, #tpu.memory_space<vmem>>, vector<1x384xbf16>
    tpu.vector_store %arg22[%c0, %c0_0], %0 {strides = array<i32>} : memref<48x384xbf16, #tpu.memory_space<vmem>>, vector<1x384xbf16>,
    %c41 = arith.constant 41 : index
    %c0_1 = arith.constant 0 : index
    %2 = vector.load %arg22[%c41, %c0_1] : memref<48x384xbf16, #tpu.memory_space<vmem>>, vector<1x384xbf16>
    tpu.vector_store %arg22[%c41, %c0_1], %0 {strides = array<i32>} : memref<48x384xbf16, #tpu.memory_space<vmem>>, vector<1x384xbf16>,
    %cst_2 = arith.constant 0.000000e+00 : bf16
    %3 = vector.broadcast %cst_2 : bf16 to vector<2x256xbf16>
    %c0_3 = arith.constant 0 : index
    %c0_4 = arith.constant 0 : index
    %4 = vector.load %arg23[%c0_3, %c0_4] : memref<48x256xbf16, #tpu.memory_space<vmem>>, vector<2x256xbf16>
    tpu.vector_store %arg23[%c0_3, %c0_4], %3 {strides = array<i32>} : memref<48x256xbf16, #tpu.memory_space<vmem>>, vector<2x256xbf16>,
    %c42 = arith.constant 42 : index
    %c0_5 = arith.constant 0 : index
    %5 = vector.load %arg23[%c42, %c0_5] : memref<48x256xbf16, #tpu.memory_space<vmem>>, vector<2x256xbf16>
    tpu.vector_store %arg23[%c42, %c0_5], %3 {strides = array<i32>} : memref<48x256xbf16, #tpu.memory_space<vmem>>, vector<2x256xbf16>,
    %cst_6 = arith.constant 0.000000e+00 : bf16
    %6 = vector.broadcast %cst_6 : bf16 to vector<4x256xbf16>
    %c0_7 = arith.constant 0 : index
    %c0_8 = arith.constant 0 : index
    %7 = vector.load %arg24[%c0_7, %c0_8] : memref<48x256xbf16, #tpu.memory_space<vmem>>, vector<4x256xbf16>
    tpu.vector_store %arg24[%c0_7, %c0_8], %6 {strides = array<i32>} : memref<48x256xbf16, #tpu.memory_space<vmem>>, vector<4x256xbf16>,
    %c44 = arith.constant 44 : index
    %c0_9 = arith.constant 0 : index
    %8 = vector.load %arg24[%c44, %c0_9] : memref<48x256xbf16, #tpu.memory_space<vmem>>, vector<4x256xbf16>
    tpu.vector_store %arg24[%c44, %c0_9], %6 {strides = array<i32>} : memref<48x256xbf16, #tpu.memory_space<vmem>>, vector<4x256xbf16>,
    %cst_10 = arith.constant 0.000000e+00 : bf16
    %9 = vector.broadcast %cst_10 : bf16 to vector<1x128xbf16>
    %c0_11 = arith.constant 0 : index
    %c0_12 = arith.constant 0 : index
    %10 = vector.load %arg25[%c0_11, %c0_12] : memref<48x128xbf16, #tpu.memory_space<vmem>>, vector<1x128xbf16>
    tpu.vector_store %arg25[%c0_11, %c0_12], %9 {strides = array<i32>} : memref<48x128xbf16, #tpu.memory_space<vmem>>, vector<1x128xbf16>,
    %c41_13 = arith.constant 41 : index
    %c0_14 = arith.constant 0 : index
    %11 = vector.load %arg25[%c41_13, %c0_14] : memref<48x128xbf16, #tpu.memory_space<vmem>>, vector<1x128xbf16>
    tpu.vector_store %arg25[%c41_13, %c0_14], %9 {strides = array<i32>} : memref<48x128xbf16, #tpu.memory_space<vmem>>, vector<1x128xbf16>,
    %cst_15 = arith.constant 0.000000e+00 : bf16
    %12 = vector.broadcast %cst_15 : bf16 to vector<1x128xbf16>
    %c0_16 = arith.constant 0 : index
    %c0_17 = arith.constant 0 : index
    %13 = vector.load %arg26[%c0_16, %c0_17] : memref<48x128xbf16, #tpu.memory_space<vmem>>, vector<1x128xbf16>
    tpu.vector_store %arg26[%c0_16, %c0_17], %12 {strides = array<i32>} : memref<48x128xbf16, #tpu.memory_space<vmem>>, vector<1x128xbf16>,
    %c41_18 = arith.constant 41 : index
    %c0_19 = arith.constant 0 : index
    %14 = vector.load %arg26[%c41_18, %c0_19] : memref<48x128xbf16, #tpu.memory_space<vmem>>, vector<1x128xbf16>
    tpu.vector_store %arg26[%c41_18, %c0_19], %12 {strides = array<i32>} : memref<48x128xbf16, #tpu.memory_space<vmem>>, vector<1x128xbf16>,
    %c0_20 = arith.constant 0 : index
    %c0_21 = arith.constant 0 : index
    %15 = vector.load %arg2[%c0_20, %c0_21] : memref<40x1xf32, #tpu.memory_space<vmem>>, vector<40x1xf32>
    %c0_22 = arith.constant 0 : index
    %c0_23 = arith.constant 0 : index
    %16 = vector.load %arg9[%c0_22, %c0_23] : memref<1x384xf32, #tpu.memory_space<vmem>>, vector<1x384xf32>
    %c0_24 = arith.constant 0 : index
    %c0_25 = arith.constant 0 : index
    %17 = vector.load %arg1[%c0_24, %c0_25] : memref<48x64xf32, #tpu.memory_space<vmem>>, vector<40x64xf32>
    %c0_26 = arith.constant 0 : index
    %c0_27 = arith.constant 0 : index
    %c0_28 = arith.constant 0 : index
    %18 = vector.load %arg3[%c0_26, %c0_27, %c0_28] : memref<3x64x384xf32, #tpu.memory_space<vmem>>, vector<1x64x384xf32>
    %19 = vector.shape_cast %18 : vector<1x64x384xf32> to vector<64x384xf32>
    %cst_29 = arith.constant dense<0.000000e+00> : vector<40x384xf32>
    %20 = tpu.matmul %17, %19, %cst_29 {dimension_numbers = #tpu.dot_dimension_numbers<[1], [0], [0], [1], [0, 0, 1, 1], [], []>} : vector<40x64xf32>, vector<64x384xf32>, vector<40x384xf32> -> vector<40x384xf32>
    %21 = vector.broadcast %16 : vector<1x384xf32> to vector<40x384xf32>
    %22 = arith.addf %21, %20 : vector<40x384xf32>
    %c0_30 = arith.constant 0 : index
    %c0_31 = arith.constant 0 : index
    %23 = vector.load %arg21[%c0_30, %c0_31] : memref<40x384xf32, #tpu.memory_space<vmem>>, vector<40x384xf32>
    tpu.vector_store %arg21[%c0_30, %c0_31], %22 {strides = array<i32>} : memref<40x384xf32, #tpu.memory_space<vmem>>, vector<40x384xf32>,
    %c0_32 = arith.constant 0 : index
    %c0_33 = arith.constant 0 : index
    %24 = vector.load %arg21[%c0_32, %c0_33] : memref<40x384xf32, #tpu.memory_space<vmem>>, vector<40x384xf32>
    %c1 = arith.constant 1 : index
    %c0_34 = arith.constant 0 : index
    %25 = vector.load %arg1[%c1, %c0_34] : memref<48x64xf32, #tpu.memory_space<vmem>>, vector<40x64xf32>
    %c1_35 = arith.constant 1 : index
    %c0_36 = arith.constant 0 : index
    %c0_37 = arith.constant 0 : index
    %26 = vector.load %arg3[%c1_35, %c0_36, %c0_37] : memref<3x64x384xf32, #tpu.memory_space<vmem>>, vector<1x64x384xf32>
    %27 = vector.shape_cast %26 : vector<1x64x384xf32> to vector<64x384xf32>
    %cst_38 = arith.constant dense<0.000000e+00> : vector<40x384xf32>
    %28 = tpu.matmul %25, %27, %cst_38 {dimension_numbers = #tpu.dot_dimension_numbers<[1], [0], [0], [1], [0, 0, 1, 1], [], []>} : vector<40x64xf32>, vector<64x384xf32>, vector<40x384xf32> -> vector<40x384xf32>
    %29 = arith.addf %24, %28 : vector<40x384xf32>
    %c0_39 = arith.constant 0 : index
    %c0_40 = arith.constant 0 : index
    %30 = vector.load %arg21[%c0_39, %c0_40] : memref<40x384xf32, #tpu.memory_space<vmem>>, vector<40x384xf32>
    tpu.vector_store %arg21[%c0_39, %c0_40], %29 {strides = array<i32>} : memref<40x384xf32, #tpu.memory_space<vmem>>, vector<40x384xf32>,
    %c0_41 = arith.constant 0 : index
    %c0_42 = arith.constant 0 : index
    %31 = vector.load %arg21[%c0_41, %c0_42] : memref<40x384xf32, #tpu.memory_space<vmem>>, vector<40x384xf32>
    %c2 = arith.constant 2 : index
    %c0_43 = arith.constant 0 : index
    %32 = vector.load %arg1[%c2, %c0_43] : memref<48x64xf32, #tpu.memory_space<vmem>>, vector<40x64xf32>
    %c2_44 = arith.constant 2 : index
    %c0_45 = arith.constant 0 : index
    %c0_46 = arith.constant 0 : index
    %33 = vector.load %arg3[%c2_44, %c0_45, %c0_46] : memref<3x64x384xf32, #tpu.memory_space<vmem>>, vector<1x64x384xf32>
    %34 = vector.shape_cast %33 : vector<1x64x384xf32> to vector<64x384xf32>
    %cst_47 = arith.constant dense<0.000000e+00> : vector<40x384xf32>
    %35 = tpu.matmul %32, %34, %cst_47 {dimension_numbers = #tpu.dot_dimension_numbers<[1], [0], [0], [1], [0, 0, 1, 1], [], []>} : vector<40x64xf32>, vector<64x384xf32>, vector<40x384xf32> -> vector<40x384xf32>
    %36 = arith.addf %31, %35 : vector<40x384xf32>
    %c0_48 = arith.constant 0 : index
    %c0_49 = arith.constant 0 : index
    %37 = vector.load %arg21[%c0_48, %c0_49] : memref<40x384xf32, #tpu.memory_space<vmem>>, vector<40x384xf32>
    tpu.vector_store %arg21[%c0_48, %c0_49], %36 {strides = array<i32>} : memref<40x384xf32, #tpu.memory_space<vmem>>, vector<40x384xf32>,
    %c0_50 = arith.constant 0 : index
    %c0_51 = arith.constant 0 : index
    %38 = vector.load %arg21[%c0_50, %c0_51] : memref<40x384xf32, #tpu.memory_space<vmem>>, vector<40x384xf32>
    %cst_52 = arith.constant 0.000000e+00 : f32
    %39 = vector.broadcast %cst_52 : f32 to vector<40x384xf32>
    %40 = arith.cmpf oge, %38, %39 : vector<40x384xf32>
    %cst_53 = arith.constant 2.000000e-01 : f32
    %41 = vector.broadcast %cst_53 : f32 to vector<40x384xf32>
    %42 = arith.mulf %41, %38 : vector<40x384xf32>
    %43 = arith.select %40, %38, %42 : vector<40x384xi1>, vector<40x384xf32>
    %44 = vector.extract_strided_slice %43 {offsets = [0, 0], sizes = [16, 384], strides = [1, 1]} : vector<40x384xf32> to vector<16x384xf32>
    %c0_54 = arith.constant 0 : index
    %c0_55 = arith.constant 0 : index
    %c0_56 = arith.constant 0 : index
    %45 = vector.load %arg15[%c0_54, %c0_55, %c0_56] : memref<2x16x384xf32, #tpu.memory_space<vmem>>, vector<1x16x384xf32>
    %46 = vector.shape_cast %45 : vector<1x16x384xf32> to vector<16x384xf32>
    %47 = vector.shape_cast %44 : vector<16x384xf32> to vector<1x16x384xf32>
    tpu.vector_store %arg15[%c0_54, %c0_55, %c0_56], %47 {strides = array<i32>} : memref<2x16x384xf32, #tpu.memory_space<vmem>>, vector<1x16x384xf32>,
    %48 = vector.extract_strided_slice %43 {offsets = [24, 0], sizes = [16, 384], strides = [1, 1]} : vector<40x384xf32> to vector<16x384xf32>
    %c1_57 = arith.constant 1 : index
    %c0_58 = arith.constant 0 : index
    %c0_59 = arith.constant 0 : index
    %49 = vector.load %arg15[%c1_57, %c0_58, %c0_59] : memref<2x16x384xf32, #tpu.memory_space<vmem>>, vector<1x16x384xf32>
    %50 = vector.shape_cast %49 : vector<1x16x384xf32> to vector<16x384xf32>
    %51 = vector.shape_cast %48 : vector<16x384xf32> to vector<1x16x384xf32>
    tpu.vector_store %arg15[%c1_57, %c0_58, %c0_59], %51 {strides = array<i32>} : memref<2x16x384xf32, #tpu.memory_space<vmem>>, vector<1x16x384xf32>,
    %52 = vector.broadcast %15 : vector<40x1xf32> to vector<40x384xf32>
    %53 = arith.mulf %43, %52 : vector<40x384xf32>
    %54 = arith.truncf %53 : vector<40x384xf32> to vector<40x384xbf16>
    %c1_60 = arith.constant 1 : index
    %c0_61 = arith.constant 0 : index
    %55 = vector.load %arg22[%c1_60, %c0_61] : memref<48x384xbf16, #tpu.memory_space<vmem>>, vector<40x384xbf16>
    tpu.vector_store %arg22[%c1_60, %c0_61], %54 {strides = array<i32>} : memref<48x384xbf16, #tpu.memory_space<vmem>>, vector<40x384xbf16>,
    %c0_62 = arith.constant 0 : index
    %c0_63 = arith.constant 0 : index
    %56 = vector.load %arg10[%c0_62, %c0_63] : memref<1x256xf32, #tpu.memory_space<vmem>>, vector<1x256xf32>
    %c0_64 = arith.constant 0 : index
    %c0_65 = arith.constant 0 : index
    %57 = vector.load %arg22[%c0_64, %c0_65] : memref<48x384xbf16, #tpu.memory_space<vmem>>, vector<40x384xbf16>
    %c0_66 = arith.constant 0 : index
    %c0_67 = arith.constant 0 : index
    %c0_68 = arith.constant 0 : index
    %58 = vector.load %arg4[%c0_66, %c0_67, %c0_68] : memref<3x384x256xbf16, #tpu.memory_space<vmem>>, vector<1x384x256xbf16>
    %59 = vector.shape_cast %58 : vector<1x384x256xbf16> to vector<384x256xbf16>
    %cst_69 = arith.constant dense<0.000000e+00> : vector<40x256xf32>
    %60 = tpu.matmul %57, %59, %cst_69 {dimension_numbers = #tpu.dot_dimension_numbers<[1], [0], [0], [1], [0, 0, 1, 1], [], []>} : vector<40x384xbf16>, vector<384x256xbf16>, vector<40x256xf32> -> vector<40x256xf32>
    %61 = vector.broadcast %56 : vector<1x256xf32> to vector<40x256xf32>
    %62 = arith.addf %61, %60 : vector<40x256xf32>
    %c0_70 = arith.constant 0 : index
    %c0_71 = arith.constant 0 : index
    %63 = vector.load %arg21[%c0_70, %c0_71] : memref<40x384xf32, #tpu.memory_space<vmem>>, vector<40x256xf32>
    tpu.vector_store %arg21[%c0_70, %c0_71], %62 {strides = array<i32>} : memref<40x384xf32, #tpu.memory_space<vmem>>, vector<40x256xf32>,
    %c0_72 = arith.constant 0 : index
    %c0_73 = arith.constant 0 : index
    %64 = vector.load %arg21[%c0_72, %c0_73] : memref<40x384xf32, #tpu.memory_space<vmem>>, vector<40x256xf32>
    %c1_74 = arith.constant 1 : index
    %c0_75 = arith.constant 0 : index
    %65 = vector.load %arg22[%c1_74, %c0_75] : memref<48x384xbf16, #tpu.memory_space<vmem>>, vector<40x384xbf16>
    %c1_76 = arith.constant 1 : index
    %c0_77 = arith.constant 0 : index
    %c0_78 = arith.constant 0 : index
    %66 = vector.load %arg4[%c1_76, %c0_77, %c0_78] : memref<3x384x256xbf16, #tpu.memory_space<vmem>>, vector<1x384x256xbf16>
    %67 = vector.shape_cast %66 : vector<1x384x256xbf16> to vector<384x256xbf16>
    %cst_79 = arith.constant dense<0.000000e+00> : vector<40x256xf32>
    %68 = tpu.matmul %65, %67, %cst_79 {dimension_numbers = #tpu.dot_dimension_numbers<[1], [0], [0], [1], [0, 0, 1, 1], [], []>} : vector<40x384xbf16>, vector<384x256xbf16>, vector<40x256xf32> -> vector<40x256xf32>
    %69 = arith.addf %64, %68 : vector<40x256xf32>
    %c0_80 = arith.constant 0 : index
    %c0_81 = arith.constant 0 : index
    %70 = vector.load %arg21[%c0_80, %c0_81] : memref<40x384xf32, #tpu.memory_space<vmem>>, vector<40x256xf32>
    tpu.vector_store %arg21[%c0_80, %c0_81], %69 {strides = array<i32>} : memref<40x384xf32, #tpu.memory_space<vmem>>, vector<40x256xf32>,
    %c0_82 = arith.constant 0 : index
    %c0_83 = arith.constant 0 : index
    %71 = vector.load %arg21[%c0_82, %c0_83] : memref<40x384xf32, #tpu.memory_space<vmem>>, vector<40x256xf32>
    %c2_84 = arith.constant 2 : index
    %c0_85 = arith.constant 0 : index
    %72 = vector.load %arg22[%c2_84, %c0_85] : memref<48x384xbf16, #tpu.memory_space<vmem>>, vector<40x384xbf16>
    %c2_86 = arith.constant 2 : index
    %c0_87 = arith.constant 0 : index
    %c0_88 = arith.constant 0 : index
    %73 = vector.load %arg4[%c2_86, %c0_87, %c0_88] : memref<3x384x256xbf16, #tpu.memory_space<vmem>>, vector<1x384x256xbf16>
    %74 = vector.shape_cast %73 : vector<1x384x256xbf16> to vector<384x256xbf16>
    %cst_89 = arith.constant dense<0.000000e+00> : vector<40x256xf32>
    %75 = tpu.matmul %72, %74, %cst_89 {dimension_numbers = #tpu.dot_dimension_numbers<[1], [0], [0], [1], [0, 0, 1, 1], [], []>} : vector<40x384xbf16>, vector<384x256xbf16>, vector<40x256xf32> -> vector<40x256xf32>
    %76 = arith.addf %71, %75 : vector<40x256xf32>
    %c0_90 = arith.constant 0 : index
    %c0_91 = arith.constant 0 : index
    %77 = vector.load %arg21[%c0_90, %c0_91] : memref<40x384xf32, #tpu.memory_space<vmem>>, vector<40x256xf32>
    tpu.vector_store %arg21[%c0_90, %c0_91], %76 {strides = array<i32>} : memref<40x384xf32, #tpu.memory_space<vmem>>, vector<40x256xf32>,
    %c0_92 = arith.constant 0 : index
    %c0_93 = arith.constant 0 : index
    %78 = vector.load %arg21[%c0_92, %c0_93] : memref<40x384xf32, #tpu.memory_space<vmem>>, vector<40x256xf32>
    %cst_94 = arith.constant 0.000000e+00 : f32
    %79 = vector.broadcast %cst_94 : f32 to vector<40x256xf32>
    %80 = arith.cmpf oge, %78, %79 : vector<40x256xf32>
    %cst_95 = arith.constant 2.000000e-01 : f32
    %81 = vector.broadcast %cst_95 : f32 to vector<40x256xf32>
    %82 = arith.mulf %81, %78 : vector<40x256xf32>
    %83 = arith.select %80, %78, %82 : vector<40x256xi1>, vector<40x256xf32>
    %84 = vector.extract_strided_slice %83 {offsets = [0, 0], sizes = [16, 256], strides = [1, 1]} : vector<40x256xf32> to vector<16x256xf32>
    %c0_96 = arith.constant 0 : index
    %c0_97 = arith.constant 0 : index
    %c0_98 = arith.constant 0 : index
    %85 = vector.load %arg16[%c0_96, %c0_97, %c0_98] : memref<2x16x256xf32, #tpu.memory_space<vmem>>, vector<1x16x256xf32>
    %86 = vector.shape_cast %85 : vector<1x16x256xf32> to vector<16x256xf32>
    %87 = vector.shape_cast %84 : vector<16x256xf32> to vector<1x16x256xf32>
    tpu.vector_store %arg16[%c0_96, %c0_97, %c0_98], %87 {strides = array<i32>} : memref<2x16x256xf32, #tpu.memory_space<vmem>>, vector<1x16x256xf32>,
    %88 = vector.extract_strided_slice %83 {offsets = [24, 0], sizes = [16, 256], strides = [1, 1]} : vector<40x256xf32> to vector<16x256xf32>
    %c1_99 = arith.constant 1 : index
    %c0_100 = arith.constant 0 : index
    %c0_101 = arith.constant 0 : index
    %89 = vector.load %arg16[%c1_99, %c0_100, %c0_101] : memref<2x16x256xf32, #tpu.memory_space<vmem>>, vector<1x16x256xf32>
    %90 = vector.shape_cast %89 : vector<1x16x256xf32> to vector<16x256xf32>
    %91 = vector.shape_cast %88 : vector<16x256xf32> to vector<1x16x256xf32>
    tpu.vector_store %arg16[%c1_99, %c0_100, %c0_101], %91 {strides = array<i32>} : memref<2x16x256xf32, #tpu.memory_space<vmem>>, vector<1x16x256xf32>,
    %92 = vector.broadcast %15 : vector<40x1xf32> to vector<40x256xf32>
    %93 = arith.mulf %83, %92 : vector<40x256xf32>
    %94 = arith.truncf %93 : vector<40x256xf32> to vector<40x256xbf16>
    %c2_102 = arith.constant 2 : index
    %c0_103 = arith.constant 0 : index
    %95 = vector.load %arg23[%c2_102, %c0_103] : memref<48x256xbf16, #tpu.memory_space<vmem>>, vector<40x256xbf16>
    tpu.vector_store %arg23[%c2_102, %c0_103], %94 {strides = array<i32>} : memref<48x256xbf16, #tpu.memory_space<vmem>>, vector<40x256xbf16>,
    %c0_104 = arith.constant 0 : index
    %c0_105 = arith.constant 0 : index
    %96 = vector.load %arg11[%c0_104, %c0_105] : memref<1x256xf32, #tpu.memory_space<vmem>>, vector<1x256xf32>
    %c0_106 = arith.constant 0 : index
    %c0_107 = arith.constant 0 : index
    %97 = vector.load %arg23[%c0_106, %c0_107] : memref<48x256xbf16, #tpu.memory_space<vmem>>, vector<40x256xbf16>
    %c0_108 = arith.constant 0 : index
    %c0_109 = arith.constant 0 : index
    %c0_110 = arith.constant 0 : index
    %98 = vector.load %arg5[%c0_108, %c0_109, %c0_110] : memref<3x256x256xbf16, #tpu.memory_space<vmem>>, vector<1x256x256xbf16>
    %99 = vector.shape_cast %98 : vector<1x256x256xbf16> to vector<256x256xbf16>
    %cst_111 = arith.constant dense<0.000000e+00> : vector<40x256xf32>
    %100 = tpu.matmul %97, %99, %cst_111 {dimension_numbers = #tpu.dot_dimension_numbers<[1], [0], [0], [1], [0, 0, 1, 1], [], []>} : vector<40x256xbf16>, vector<256x256xbf16>, vector<40x256xf32> -> vector<40x256xf32>
    %101 = vector.broadcast %96 : vector<1x256xf32> to vector<40x256xf32>
    %102 = arith.addf %101, %100 : vector<40x256xf32>
    %c0_112 = arith.constant 0 : index
    %c0_113 = arith.constant 0 : index
    %103 = vector.load %arg21[%c0_112, %c0_113] : memref<40x384xf32, #tpu.memory_space<vmem>>, vector<40x256xf32>
    tpu.vector_store %arg21[%c0_112, %c0_113], %102 {strides = array<i32>} : memref<40x384xf32, #tpu.memory_space<vmem>>, vector<40x256xf32>,
    %c0_114 = arith.constant 0 : index
    %c0_115 = arith.constant 0 : index
    %104 = vector.load %arg21[%c0_114, %c0_115] : memref<40x384xf32, #tpu.memory_space<vmem>>, vector<40x256xf32>
    %c2_116 = arith.constant 2 : index
    %c0_117 = arith.constant 0 : index
    %105 = vector.load %arg23[%c2_116, %c0_117] : memref<48x256xbf16, #tpu.memory_space<vmem>>, vector<40x256xbf16>
    %c1_118 = arith.constant 1 : index
    %c0_119 = arith.constant 0 : index
    %c0_120 = arith.constant 0 : index
    %106 = vector.load %arg5[%c1_118, %c0_119, %c0_120] : memref<3x256x256xbf16, #tpu.memory_space<vmem>>, vector<1x256x256xbf16>
    %107 = vector.shape_cast %106 : vector<1x256x256xbf16> to vector<256x256xbf16>
    %cst_121 = arith.constant dense<0.000000e+00> : vector<40x256xf32>
    %108 = tpu.matmul %105, %107, %cst_121 {dimension_numbers = #tpu.dot_dimension_numbers<[1], [0], [0], [1], [0, 0, 1, 1], [], []>} : vector<40x256xbf16>, vector<256x256xbf16>, vector<40x256xf32> -> vector<40x256xf32>
    %109 = arith.addf %104, %108 : vector<40x256xf32>
    %c0_122 = arith.constant 0 : index
    %c0_123 = arith.constant 0 : index
    %110 = vector.load %arg21[%c0_122, %c0_123] : memref<40x384xf32, #tpu.memory_space<vmem>>, vector<40x256xf32>
    tpu.vector_store %arg21[%c0_122, %c0_123], %109 {strides = array<i32>} : memref<40x384xf32, #tpu.memory_space<vmem>>, vector<40x256xf32>,
    %c0_124 = arith.constant 0 : index
    %c0_125 = arith.constant 0 : index
    %111 = vector.load %arg21[%c0_124, %c0_125] : memref<40x384xf32, #tpu.memory_space<vmem>>, vector<40x256xf32>
    %c4 = arith.constant 4 : index
    %c0_126 = arith.constant 0 : index
    %112 = vector.load %arg23[%c4, %c0_126] : memref<48x256xbf16, #tpu.memory_space<vmem>>, vector<40x256xbf16>
    %c2_127 = arith.constant 2 : index
    %c0_128 = arith.constant 0 : index
    %c0_129 = arith.constant 0 : index
    %113 = vector.load %arg5[%c2_127, %c0_128, %c0_129] : memref<3x256x256xbf16, #tpu.memory_space<vmem>>, vector<1x256x256xbf16>
    %114 = vector.shape_cast %113 : vector<1x256x256xbf16> to vector<256x256xbf16>
    %cst_130 = arith.constant dense<0.000000e+00> : vector<40x256xf32>
    %115 = tpu.matmul %112, %114, %cst_130 {dimension_numbers = #tpu.dot_dimension_numbers<[1], [0], [0], [1], [0, 0, 1, 1], [], []>} : vector<40x256xbf16>, vector<256x256xbf16>, vector<40x256xf32> -> vector<40x256xf32>
    %116 = arith.addf %111, %115 : vector<40x256xf32>
    %c0_131 = arith.constant 0 : index
    %c0_132 = arith.constant 0 : index
    %117 = vector.load %arg21[%c0_131, %c0_132] : memref<40x384xf32, #tpu.memory_space<vmem>>, vector<40x256xf32>
    tpu.vector_store %arg21[%c0_131, %c0_132], %116 {strides = array<i32>} : memref<40x384xf32, #tpu.memory_space<vmem>>, vector<40x256xf32>,
    %c0_133 = arith.constant 0 : index
    %c0_134 = arith.constant 0 : index
    %118 = vector.load %arg21[%c0_133, %c0_134] : memref<40x384xf32, #tpu.memory_space<vmem>>, vector<40x256xf32>
    %cst_135 = arith.constant 0.000000e+00 : f32
    %119 = vector.broadcast %cst_135 : f32 to vector<40x256xf32>
    %120 = arith.cmpf oge, %118, %119 : vector<40x256xf32>
    %cst_136 = arith.constant 2.000000e-01 : f32
    %121 = vector.broadcast %cst_136 : f32 to vector<40x256xf32>
    %122 = arith.mulf %121, %118 : vector<40x256xf32>
    %123 = arith.select %120, %118, %122 : vector<40x256xi1>, vector<40x256xf32>
    %124 = vector.extract_strided_slice %123 {offsets = [0, 0], sizes = [16, 256], strides = [1, 1]} : vector<40x256xf32> to vector<16x256xf32>
    %c0_137 = arith.constant 0 : index
    %c0_138 = arith.constant 0 : index
    %c0_139 = arith.constant 0 : index
    %125 = vector.load %arg17[%c0_137, %c0_138, %c0_139] : memref<2x16x256xf32, #tpu.memory_space<vmem>>, vector<1x16x256xf32>
    %126 = vector.shape_cast %125 : vector<1x16x256xf32> to vector<16x256xf32>
    %127 = vector.shape_cast %124 : vector<16x256xf32> to vector<1x16x256xf32>
    tpu.vector_store %arg17[%c0_137, %c0_138, %c0_139], %127 {strides = array<i32>} : memref<2x16x256xf32, #tpu.memory_space<vmem>>, vector<1x16x256xf32>,
    %128 = vector.extract_strided_slice %123 {offsets = [24, 0], sizes = [16, 256], strides = [1, 1]} : vector<40x256xf32> to vector<16x256xf32>
    %c1_140 = arith.constant 1 : index
    %c0_141 = arith.constant 0 : index
    %c0_142 = arith.constant 0 : index
    %129 = vector.load %arg17[%c1_140, %c0_141, %c0_142] : memref<2x16x256xf32, #tpu.memory_space<vmem>>, vector<1x16x256xf32>
    %130 = vector.shape_cast %129 : vector<1x16x256xf32> to vector<16x256xf32>
    %131 = vector.shape_cast %128 : vector<16x256xf32> to vector<1x16x256xf32>
    tpu.vector_store %arg17[%c1_140, %c0_141, %c0_142], %131 {strides = array<i32>} : memref<2x16x256xf32, #tpu.memory_space<vmem>>, vector<1x16x256xf32>,
    %132 = vector.broadcast %15 : vector<40x1xf32> to vector<40x256xf32>
    %133 = arith.mulf %123, %132 : vector<40x256xf32>
    %134 = arith.truncf %133 : vector<40x256xf32> to vector<40x256xbf16>
    %c4_143 = arith.constant 4 : index
    %c0_144 = arith.constant 0 : index
    %135 = vector.load %arg24[%c4_143, %c0_144] : memref<48x256xbf16, #tpu.memory_space<vmem>>, vector<40x256xbf16>
    tpu.vector_store %arg24[%c4_143, %c0_144], %134 {strides = array<i32>} : memref<48x256xbf16, #tpu.memory_space<vmem>>, vector<40x256xbf16>,
    %c0_145 = arith.constant 0 : index
    %c0_146 = arith.constant 0 : index
    %136 = vector.load %arg12[%c0_145, %c0_146] : memref<1x128xf32, #tpu.memory_space<vmem>>, vector<1x128xf32>
    %c0_147 = arith.constant 0 : index
    %c0_148 = arith.constant 0 : index
    %137 = vector.load %arg24[%c0_147, %c0_148] : memref<48x256xbf16, #tpu.memory_space<vmem>>, vector<40x256xbf16>
    %c0_149 = arith.constant 0 : index
    %c0_150 = arith.constant 0 : index
    %c0_151 = arith.constant 0 : index
    %138 = vector.load %arg6[%c0_149, %c0_150, %c0_151] : memref<3x256x128xbf16, #tpu.memory_space<vmem>>, vector<1x256x128xbf16>
    %139 = vector.shape_cast %138 : vector<1x256x128xbf16> to vector<256x128xbf16>
    %cst_152 = arith.constant dense<0.000000e+00> : vector<40x128xf32>
    %140 = tpu.matmul %137, %139, %cst_152 {dimension_numbers = #tpu.dot_dimension_numbers<[1], [0], [0], [1], [0, 0, 1, 1], [], []>} : vector<40x256xbf16>, vector<256x128xbf16>, vector<40x128xf32> -> vector<40x128xf32>
    %141 = vector.broadcast %136 : vector<1x128xf32> to vector<40x128xf32>
    %142 = arith.addf %141, %140 : vector<40x128xf32>
    %c0_153 = arith.constant 0 : index
    %c0_154 = arith.constant 0 : index
    %143 = vector.load %arg21[%c0_153, %c0_154] : memref<40x384xf32, #tpu.memory_space<vmem>>, vector<40x128xf32>
    tpu.vector_store %arg21[%c0_153, %c0_154], %142 {strides = array<i32>} : memref<40x384xf32, #tpu.memory_space<vmem>>, vector<40x128xf32>,
    %c0_155 = arith.constant 0 : index
    %c0_156 = arith.constant 0 : index
    %144 = vector.load %arg21[%c0_155, %c0_156] : memref<40x384xf32, #tpu.memory_space<vmem>>, vector<40x128xf32>
    %c4_157 = arith.constant 4 : index
    %c0_158 = arith.constant 0 : index
    %145 = vector.load %arg24[%c4_157, %c0_158] : memref<48x256xbf16, #tpu.memory_space<vmem>>, vector<40x256xbf16>
    %c1_159 = arith.constant 1 : index
    %c0_160 = arith.constant 0 : index
    %c0_161 = arith.constant 0 : index
    %146 = vector.load %arg6[%c1_159, %c0_160, %c0_161] : memref<3x256x128xbf16, #tpu.memory_space<vmem>>, vector<1x256x128xbf16>
    %147 = vector.shape_cast %146 : vector<1x256x128xbf16> to vector<256x128xbf16>
    %cst_162 = arith.constant dense<0.000000e+00> : vector<40x128xf32>
    %148 = tpu.matmul %145, %147, %cst_162 {dimension_numbers = #tpu.dot_dimension_numbers<[1], [0], [0], [1], [0, 0, 1, 1], [], []>} : vector<40x256xbf16>, vector<256x128xbf16>, vector<40x128xf32> -> vector<40x128xf32>
    %149 = arith.addf %144, %148 : vector<40x128xf32>
    %c0_163 = arith.constant 0 : index
    %c0_164 = arith.constant 0 : index
    %150 = vector.load %arg21[%c0_163, %c0_164] : memref<40x384xf32, #tpu.memory_space<vmem>>, vector<40x128xf32>
    tpu.vector_store %arg21[%c0_163, %c0_164], %149 {strides = array<i32>} : memref<40x384xf32, #tpu.memory_space<vmem>>, vector<40x128xf32>,
    %c0_165 = arith.constant 0 : index
    %c0_166 = arith.constant 0 : index
    %151 = vector.load %arg21[%c0_165, %c0_166] : memref<40x384xf32, #tpu.memory_space<vmem>>, vector<40x128xf32>
    %c8 = arith.constant 8 : index
    %c0_167 = arith.constant 0 : index
    %152 = vector.load %arg24[%c8, %c0_167] : memref<48x256xbf16, #tpu.memory_space<vmem>>, vector<40x256xbf16>
    %c2_168 = arith.constant 2 : index
    %c0_169 = arith.constant 0 : index
    %c0_170 = arith.constant 0 : index
    %153 = vector.load %arg6[%c2_168, %c0_169, %c0_170] : memref<3x256x128xbf16, #tpu.memory_space<vmem>>, vector<1x256x128xbf16>
    %154 = vector.shape_cast %153 : vector<1x256x128xbf16> to vector<256x128xbf16>
    %cst_171 = arith.constant dense<0.000000e+00> : vector<40x128xf32>
    %155 = tpu.matmul %152, %154, %cst_171 {dimension_numbers = #tpu.dot_dimension_numbers<[1], [0], [0], [1], [0, 0, 1, 1], [], []>} : vector<40x256xbf16>, vector<256x128xbf16>, vector<40x128xf32> -> vector<40x128xf32>
    %156 = arith.addf %151, %155 : vector<40x128xf32>
    %c0_172 = arith.constant 0 : index
    %c0_173 = arith.constant 0 : index
    %157 = vector.load %arg21[%c0_172, %c0_173] : memref<40x384xf32, #tpu.memory_space<vmem>>, vector<40x128xf32>
    tpu.vector_store %arg21[%c0_172, %c0_173], %156 {strides = array<i32>} : memref<40x384xf32, #tpu.memory_space<vmem>>, vector<40x128xf32>,
    %c0_174 = arith.constant 0 : index
    %c0_175 = arith.constant 0 : index
    %158 = vector.load %arg21[%c0_174, %c0_175] : memref<40x384xf32, #tpu.memory_space<vmem>>, vector<40x128xf32>
    %cst_176 = arith.constant 0.000000e+00 : f32
    %159 = vector.broadcast %cst_176 : f32 to vector<40x128xf32>
    %160 = arith.cmpf oge, %158, %159 : vector<40x128xf32>
    %cst_177 = arith.constant 2.000000e-01 : f32
    %161 = vector.broadcast %cst_177 : f32 to vector<40x128xf32>
    %162 = arith.mulf %161, %158 : vector<40x128xf32>
    %163 = arith.select %160, %158, %162 : vector<40x128xi1>, vector<40x128xf32>
    %164 = vector.extract_strided_slice %163 {offsets = [0, 0], sizes = [16, 128], strides = [1, 1]} : vector<40x128xf32> to vector<16x128xf32>
    %c0_178 = arith.constant 0 : index
    %c0_179 = arith.constant 0 : index
    %c0_180 = arith.constant 0 : index
    %165 = vector.load %arg18[%c0_178, %c0_179, %c0_180] : memref<2x16x128xf32, #tpu.memory_space<vmem>>, vector<1x16x128xf32>
    %166 = vector.shape_cast %165 : vector<1x16x128xf32> to vector<16x128xf32>
    %167 = vector.shape_cast %164 : vector<16x128xf32> to vector<1x16x128xf32>
    tpu.vector_store %arg18[%c0_178, %c0_179, %c0_180], %167 {strides = array<i32>} : memref<2x16x128xf32, #tpu.memory_space<vmem>>, vector<1x16x128xf32>,
    %168 = vector.extract_strided_slice %163 {offsets = [24, 0], sizes = [16, 128], strides = [1, 1]} : vector<40x128xf32> to vector<16x128xf32>
    %c1_181 = arith.constant 1 : index
    %c0_182 = arith.constant 0 : index
    %c0_183 = arith.constant 0 : index
    %169 = vector.load %arg18[%c1_181, %c0_182, %c0_183] : memref<2x16x128xf32, #tpu.memory_space<vmem>>, vector<1x16x128xf32>
    %170 = vector.shape_cast %169 : vector<1x16x128xf32> to vector<16x128xf32>
    %171 = vector.shape_cast %168 : vector<16x128xf32> to vector<1x16x128xf32>
    tpu.vector_store %arg18[%c1_181, %c0_182, %c0_183], %171 {strides = array<i32>} : memref<2x16x128xf32, #tpu.memory_space<vmem>>, vector<1x16x128xf32>,
    %172 = vector.broadcast %15 : vector<40x1xf32> to vector<40x128xf32>
    %173 = arith.mulf %163, %172 : vector<40x128xf32>
    %174 = arith.truncf %173 : vector<40x128xf32> to vector<40x128xbf16>
    %c1_184 = arith.constant 1 : index
    %c0_185 = arith.constant 0 : index
    %175 = vector.load %arg25[%c1_184, %c0_185] : memref<48x128xbf16, #tpu.memory_space<vmem>>, vector<40x128xbf16>
    tpu.vector_store %arg25[%c1_184, %c0_185], %174 {strides = array<i32>} : memref<48x128xbf16, #tpu.memory_space<vmem>>, vector<40x128xbf16>,
    %c0_186 = arith.constant 0 : index
    %c0_187 = arith.constant 0 : index
    %176 = vector.load %arg13[%c0_186, %c0_187] : memref<1x128xf32, #tpu.memory_space<vmem>>, vector<1x128xf32>
    %c0_188 = arith.constant 0 : index
    %c0_189 = arith.constant 0 : index
    %177 = vector.load %arg25[%c0_188, %c0_189] : memref<48x128xbf16, #tpu.memory_space<vmem>>, vector<40x128xbf16>
    %c0_190 = arith.constant 0 : index
    %c0_191 = arith.constant 0 : index
    %c0_192 = arith.constant 0 : index
    %178 = vector.load %arg7[%c0_190, %c0_191, %c0_192] : memref<3x128x128xbf16, #tpu.memory_space<vmem>>, vector<1x128x128xbf16>
    %179 = vector.shape_cast %178 : vector<1x128x128xbf16> to vector<128x128xbf16>
    %cst_193 = arith.constant dense<0.000000e+00> : vector<40x128xf32>
    %180 = tpu.matmul %177, %179, %cst_193 {dimension_numbers = #tpu.dot_dimension_numbers<[1], [0], [0], [1], [0, 0, 1, 1], [], []>} : vector<40x128xbf16>, vector<128x128xbf16>, vector<40x128xf32> -> vector<40x128xf32>
    %181 = vector.broadcast %176 : vector<1x128xf32> to vector<40x128xf32>
    %182 = arith.addf %181, %180 : vector<40x128xf32>
    %c0_194 = arith.constant 0 : index
    %c0_195 = arith.constant 0 : index
    %183 = vector.load %arg21[%c0_194, %c0_195] : memref<40x384xf32, #tpu.memory_space<vmem>>, vector<40x128xf32>
    tpu.vector_store %arg21[%c0_194, %c0_195], %182 {strides = array<i32>} : memref<40x384xf32, #tpu.memory_space<vmem>>, vector<40x128xf32>,
    %c0_196 = arith.constant 0 : index
    %c0_197 = arith.constant 0 : index
    %184 = vector.load %arg21[%c0_196, %c0_197] : memref<40x384xf32, #tpu.memory_space<vmem>>, vector<40x128xf32>
    %c1_198 = arith.constant 1 : index
    %c0_199 = arith.constant 0 : index
    %185 = vector.load %arg25[%c1_198, %c0_199] : memref<48x128xbf16, #tpu.memory_space<vmem>>, vector<40x128xbf16>
    %c1_200 = arith.constant 1 : index
    %c0_201 = arith.constant 0 : index
    %c0_202 = arith.constant 0 : index
    %186 = vector.load %arg7[%c1_200, %c0_201, %c0_202] : memref<3x128x128xbf16, #tpu.memory_space<vmem>>, vector<1x128x128xbf16>
    %187 = vector.shape_cast %186 : vector<1x128x128xbf16> to vector<128x128xbf16>
    %cst_203 = arith.constant dense<0.000000e+00> : vector<40x128xf32>
    %188 = tpu.matmul %185, %187, %cst_203 {dimension_numbers = #tpu.dot_dimension_numbers<[1], [0], [0], [1], [0, 0, 1, 1], [], []>} : vector<40x128xbf16>, vector<128x128xbf16>, vector<40x128xf32> -> vector<40x128xf32>
    %189 = arith.addf %184, %188 : vector<40x128xf32>
    %c0_204 = arith.constant 0 : index
    %c0_205 = arith.constant 0 : index
    %190 = vector.load %arg21[%c0_204, %c0_205] : memref<40x384xf32, #tpu.memory_space<vmem>>, vector<40x128xf32>
    tpu.vector_store %arg21[%c0_204, %c0_205], %189 {strides = array<i32>} : memref<40x384xf32, #tpu.memory_space<vmem>>, vector<40x128xf32>,
    %c0_206 = arith.constant 0 : index
    %c0_207 = arith.constant 0 : index
    %191 = vector.load %arg21[%c0_206, %c0_207] : memref<40x384xf32, #tpu.memory_space<vmem>>, vector<40x128xf32>
    %c2_208 = arith.constant 2 : index
    %c0_209 = arith.constant 0 : index
    %192 = vector.load %arg25[%c2_208, %c0_209] : memref<48x128xbf16, #tpu.memory_space<vmem>>, vector<40x128xbf16>
    %c2_210 = arith.constant 2 : index
    %c0_211 = arith.constant 0 : index
    %c0_212 = arith.constant 0 : index
    %193 = vector.load %arg7[%c2_210, %c0_211, %c0_212] : memref<3x128x128xbf16, #tpu.memory_space<vmem>>, vector<1x128x128xbf16>
    %194 = vector.shape_cast %193 : vector<1x128x128xbf16> to vector<128x128xbf16>
    %cst_213 = arith.constant dense<0.000000e+00> : vector<40x128xf32>
    %195 = tpu.matmul %192, %194, %cst_213 {dimension_numbers = #tpu.dot_dimension_numbers<[1], [0], [0], [1], [0, 0, 1, 1], [], []>} : vector<40x128xbf16>, vector<128x128xbf16>, vector<40x128xf32> -> vector<40x128xf32>
    %196 = arith.addf %191, %195 : vector<40x128xf32>
    %c0_214 = arith.constant 0 : index
    %c0_215 = arith.constant 0 : index
    %197 = vector.load %arg21[%c0_214, %c0_215] : memref<40x384xf32, #tpu.memory_space<vmem>>, vector<40x128xf32>
    tpu.vector_store %arg21[%c0_214, %c0_215], %196 {strides = array<i32>} : memref<40x384xf32, #tpu.memory_space<vmem>>, vector<40x128xf32>,
    %c0_216 = arith.constant 0 : index
    %c0_217 = arith.constant 0 : index
    %198 = vector.load %arg21[%c0_216, %c0_217] : memref<40x384xf32, #tpu.memory_space<vmem>>, vector<40x128xf32>
    %cst_218 = arith.constant 0.000000e+00 : f32
    %199 = vector.broadcast %cst_218 : f32 to vector<40x128xf32>
    %200 = arith.cmpf oge, %198, %199 : vector<40x128xf32>
    %cst_219 = arith.constant 2.000000e-01 : f32
    %201 = vector.broadcast %cst_219 : f32 to vector<40x128xf32>
    %202 = arith.mulf %201, %198 : vector<40x128xf32>
    %203 = arith.select %200, %198, %202 : vector<40x128xi1>, vector<40x128xf32>
    %204 = vector.extract_strided_slice %203 {offsets = [0, 0], sizes = [16, 128], strides = [1, 1]} : vector<40x128xf32> to vector<16x128xf32>
    %c0_220 = arith.constant 0 : index
    %c0_221 = arith.constant 0 : index
    %c0_222 = arith.constant 0 : index
    %205 = vector.load %arg19[%c0_220, %c0_221, %c0_222] : memref<2x16x128xf32, #tpu.memory_space<vmem>>, vector<1x16x128xf32>
    %206 = vector.shape_cast %205 : vector<1x16x128xf32> to vector<16x128xf32>
    %207 = vector.shape_cast %204 : vector<16x128xf32> to vector<1x16x128xf32>
    tpu.vector_store %arg19[%c0_220, %c0_221, %c0_222], %207 {strides = array<i32>} : memref<2x16x128xf32, #tpu.memory_space<vmem>>, vector<1x16x128xf32>,
    %208 = vector.extract_strided_slice %203 {offsets = [24, 0], sizes = [16, 128], strides = [1, 1]} : vector<40x128xf32> to vector<16x128xf32>
    %c1_223 = arith.constant 1 : index
    %c0_224 = arith.constant 0 : index
    %c0_225 = arith.constant 0 : index
    %209 = vector.load %arg19[%c1_223, %c0_224, %c0_225] : memref<2x16x128xf32, #tpu.memory_space<vmem>>, vector<1x16x128xf32>
    %210 = vector.shape_cast %209 : vector<1x16x128xf32> to vector<16x128xf32>
    %211 = vector.shape_cast %208 : vector<16x128xf32> to vector<1x16x128xf32>
    tpu.vector_store %arg19[%c1_223, %c0_224, %c0_225], %211 {strides = array<i32>} : memref<2x16x128xf32, #tpu.memory_space<vmem>>, vector<1x16x128xf32>,
    %212 = vector.broadcast %15 : vector<40x1xf32> to vector<40x128xf32>
    %213 = arith.mulf %203, %212 : vector<40x128xf32>
    %214 = arith.truncf %213 : vector<40x128xf32> to vector<40x128xbf16>
    %c1_226 = arith.constant 1 : index
    %c0_227 = arith.constant 0 : index
    %215 = vector.load %arg26[%c1_226, %c0_227] : memref<48x128xbf16, #tpu.memory_space<vmem>>, vector<40x128xbf16>
    tpu.vector_store %arg26[%c1_226, %c0_227], %214 {strides = array<i32>} : memref<48x128xbf16, #tpu.memory_space<vmem>>, vector<40x128xbf16>,
    %c0_228 = arith.constant 0 : index
    %c0_229 = arith.constant 0 : index
    %216 = vector.load %arg14[%c0_228, %c0_229] : memref<1x128xf32, #tpu.memory_space<vmem>>, vector<1x128xf32>
    %c0_230 = arith.constant 0 : index
    %c0_231 = arith.constant 0 : index
    %217 = vector.load %arg26[%c0_230, %c0_231] : memref<48x128xbf16, #tpu.memory_space<vmem>>, vector<40x128xbf16>
    %c0_232 = arith.constant 0 : index
    %c0_233 = arith.constant 0 : index
    %c0_234 = arith.constant 0 : index
    %218 = vector.load %arg8[%c0_232, %c0_233, %c0_234] : memref<3x128x128xbf16, #tpu.memory_space<vmem>>, vector<1x128x128xbf16>
    %219 = vector.shape_cast %218 : vector<1x128x128xbf16> to vector<128x128xbf16>
    %cst_235 = arith.constant dense<0.000000e+00> : vector<40x128xf32>
    %220 = tpu.matmul %217, %219, %cst_235 {dimension_numbers = #tpu.dot_dimension_numbers<[1], [0], [0], [1], [0, 0, 1, 1], [], []>} : vector<40x128xbf16>, vector<128x128xbf16>, vector<40x128xf32> -> vector<40x128xf32>
    %221 = vector.broadcast %216 : vector<1x128xf32> to vector<40x128xf32>
    %222 = arith.addf %221, %220 : vector<40x128xf32>
    %c0_236 = arith.constant 0 : index
    %c0_237 = arith.constant 0 : index
    %223 = vector.load %arg21[%c0_236, %c0_237] : memref<40x384xf32, #tpu.memory_space<vmem>>, vector<40x128xf32>
    tpu.vector_store %arg21[%c0_236, %c0_237], %222 {strides = array<i32>} : memref<40x384xf32, #tpu.memory_space<vmem>>, vector<40x128xf32>,
    %c0_238 = arith.constant 0 : index
    %c0_239 = arith.constant 0 : index
    %224 = vector.load %arg21[%c0_238, %c0_239] : memref<40x384xf32, #tpu.memory_space<vmem>>, vector<40x128xf32>
    %c1_240 = arith.constant 1 : index
    %c0_241 = arith.constant 0 : index
    %225 = vector.load %arg26[%c1_240, %c0_241] : memref<48x128xbf16, #tpu.memory_space<vmem>>, vector<40x128xbf16>
    %c1_242 = arith.constant 1 : index
    %c0_243 = arith.constant 0 : index
    %c0_244 = arith.constant 0 : index
    %226 = vector.load %arg8[%c1_242, %c0_243, %c0_244] : memref<3x128x128xbf16, #tpu.memory_space<vmem>>, vector<1x128x128xbf16>
    %227 = vector.shape_cast %226 : vector<1x128x128xbf16> to vector<128x128xbf16>
    %cst_245 = arith.constant dense<0.000000e+00> : vector<40x128xf32>
    %228 = tpu.matmul %225, %227, %cst_245 {dimension_numbers = #tpu.dot_dimension_numbers<[1], [0], [0], [1], [0, 0, 1, 1], [], []>} : vector<40x128xbf16>, vector<128x128xbf16>, vector<40x128xf32> -> vector<40x128xf32>
    %229 = arith.addf %224, %228 : vector<40x128xf32>
    %c0_246 = arith.constant 0 : index
    %c0_247 = arith.constant 0 : index
    %230 = vector.load %arg21[%c0_246, %c0_247] : memref<40x384xf32, #tpu.memory_space<vmem>>, vector<40x128xf32>
    tpu.vector_store %arg21[%c0_246, %c0_247], %229 {strides = array<i32>} : memref<40x384xf32, #tpu.memory_space<vmem>>, vector<40x128xf32>,
    %c0_248 = arith.constant 0 : index
    %c0_249 = arith.constant 0 : index
    %231 = vector.load %arg21[%c0_248, %c0_249] : memref<40x384xf32, #tpu.memory_space<vmem>>, vector<40x128xf32>
    %c2_250 = arith.constant 2 : index
    %c0_251 = arith.constant 0 : index
    %232 = vector.load %arg26[%c2_250, %c0_251] : memref<48x128xbf16, #tpu.memory_space<vmem>>, vector<40x128xbf16>
    %c2_252 = arith.constant 2 : index
    %c0_253 = arith.constant 0 : index
    %c0_254 = arith.constant 0 : index
    %233 = vector.load %arg8[%c2_252, %c0_253, %c0_254] : memref<3x128x128xbf16, #tpu.memory_space<vmem>>, vector<1x128x128xbf16>
    %234 = vector.shape_cast %233 : vector<1x128x128xbf16> to vector<128x128xbf16>
    %cst_255 = arith.constant dense<0.000000e+00> : vector<40x128xf32>
    %235 = tpu.matmul %232, %234, %cst_255 {dimension_numbers = #tpu.dot_dimension_numbers<[1], [0], [0], [1], [0, 0, 1, 1], [], []>} : vector<40x128xbf16>, vector<128x128xbf16>, vector<40x128xf32> -> vector<40x128xf32>
    %236 = arith.addf %231, %235 : vector<40x128xf32>
    %c0_256 = arith.constant 0 : index
    %c0_257 = arith.constant 0 : index
    %237 = vector.load %arg21[%c0_256, %c0_257] : memref<40x384xf32, #tpu.memory_space<vmem>>, vector<40x128xf32>
    tpu.vector_store %arg21[%c0_256, %c0_257], %236 {strides = array<i32>} : memref<40x384xf32, #tpu.memory_space<vmem>>, vector<40x128xf32>,
    %c0_258 = arith.constant 0 : index
    %c0_259 = arith.constant 0 : index
    %238 = vector.load %arg21[%c0_258, %c0_259] : memref<40x384xf32, #tpu.memory_space<vmem>>, vector<40x128xf32>
    %239 = vector.extract_strided_slice %238 {offsets = [0, 0], sizes = [16, 128], strides = [1, 1]} : vector<40x128xf32> to vector<16x128xf32>
    %c0_260 = arith.constant 0 : index
    %c0_261 = arith.constant 0 : index
    %c0_262 = arith.constant 0 : index
    %240 = vector.load %arg20[%c0_260, %c0_261, %c0_262] : memref<2x16x128xf32, #tpu.memory_space<vmem>>, vector<1x16x128xf32>
    %241 = vector.shape_cast %240 : vector<1x16x128xf32> to vector<16x128xf32>
    %242 = vector.shape_cast %239 : vector<16x128xf32> to vector<1x16x128xf32>
    tpu.vector_store %arg20[%c0_260, %c0_261, %c0_262], %242 {strides = array<i32>} : memref<2x16x128xf32, #tpu.memory_space<vmem>>, vector<1x16x128xf32>,
    %243 = vector.extract_strided_slice %238 {offsets = [24, 0], sizes = [16, 128], strides = [1, 1]} : vector<40x128xf32> to vector<16x128xf32>
    %c1_263 = arith.constant 1 : index
    %c0_264 = arith.constant 0 : index
    %c0_265 = arith.constant 0 : index
    %244 = vector.load %arg20[%c1_263, %c0_264, %c0_265] : memref<2x16x128xf32, #tpu.memory_space<vmem>>, vector<1x16x128xf32>
    %245 = vector.shape_cast %244 : vector<1x16x128xf32> to vector<16x128xf32>
    %246 = vector.shape_cast %243 : vector<16x128xf32> to vector<1x16x128xf32>
    tpu.vector_store %arg20[%c1_263, %c0_264, %c0_265], %246 {strides = array<i32>} : memref<2x16x128xf32, #tpu.memory_space<vmem>>, vector<1x16x128xf32>,
    return
  }
  func.func @transform_0(%arg0: i32) -> (i32, i32) {
    %c0_i32 = arith.constant 0 : i32
    %c0_i32_0 = arith.constant 0 : i32
    return %arg0, %c0_i32 : i32, i32
  }
  func.func @transform_1(%arg0: i32) -> (i32, i32) {
    %c0_i32 = arith.constant 0 : i32
    %c0_i32_0 = arith.constant 0 : i32
    %c0_i32_1 = arith.constant 0 : i32
    return %c0_i32, %c0_i32_0 : i32, i32
  }
  func.func @transform_2(%arg0: i32) -> (i32, i32, i32) {
    %c0_i32 = arith.constant 0 : i32
    %c0_i32_0 = arith.constant 0 : i32
    %c0_i32_1 = arith.constant 0 : i32
    %c0_i32_2 = arith.constant 0 : i32
    return %c0_i32, %c0_i32_0, %c0_i32_1 : i32, i32, i32
  }
  func.func @transform_3(%arg0: i32) -> (i32, i32, i32) {
    %c0_i32 = arith.constant 0 : i32
    %c0_i32_0 = arith.constant 0 : i32
    %c0_i32_1 = arith.constant 0 : i32
    %c0_i32_2 = arith.constant 0 : i32
    return %c0_i32, %c0_i32_0, %c0_i32_1 : i32, i32, i32
  }
  func.func @transform_4(%arg0: i32) -> (i32, i32, i32) {
    %c0_i32 = arith.constant 0 : i32
    %c0_i32_0 = arith.constant 0 : i32
    %c0_i32_1 = arith.constant 0 : i32
    %c0_i32_2 = arith.constant 0 : i32
    return %c0_i32, %c0_i32_0, %c0_i32_1 : i32, i32, i32
  }
  func.func @transform_5(%arg0: i32) -> (i32, i32, i32) {
    %c0_i32 = arith.constant 0 : i32
    %c0_i32_0 = arith.constant 0 : i32
    %c0_i32_1 = arith.constant 0 : i32
    %c0_i32_2 = arith.constant 0 : i32
    return %c0_i32, %c0_i32_0, %c0_i32_1 : i32, i32, i32
  }
  func.func @transform_6(%arg0: i32) -> (i32, i32, i32) {
    %c0_i32 = arith.constant 0 : i32
    %c0_i32_0 = arith.constant 0 : i32
    %c0_i32_1 = arith.constant 0 : i32
    %c0_i32_2 = arith.constant 0 : i32
    return %c0_i32, %c0_i32_0, %c0_i32_1 : i32, i32, i32
  }
  func.func @transform_7(%arg0: i32) -> (i32, i32, i32) {
    %c0_i32 = arith.constant 0 : i32
    %c0_i32_0 = arith.constant 0 : i32
    %c0_i32_1 = arith.constant 0 : i32
    %c0_i32_2 = arith.constant 0 : i32
    return %c0_i32, %c0_i32_0, %c0_i32_1 : i32, i32, i32
  }
  func.func @transform_8(%arg0: i32) -> (i32, i32) {
    %c0_i32 = arith.constant 0 : i32
    %c0_i32_0 = arith.constant 0 : i32
    %c0_i32_1 = arith.constant 0 : i32
    return %c0_i32, %c0_i32_0 : i32, i32
  }
  func.func @transform_9(%arg0: i32) -> (i32, i32) {
    %c0_i32 = arith.constant 0 : i32
    %c0_i32_0 = arith.constant 0 : i32
    %c0_i32_1 = arith.constant 0 : i32
    return %c0_i32, %c0_i32_0 : i32, i32
  }
  func.func @transform_10(%arg0: i32) -> (i32, i32) {
    %c0_i32 = arith.constant 0 : i32
    %c0_i32_0 = arith.constant 0 : i32
    %c0_i32_1 = arith.constant 0 : i32
    return %c0_i32, %c0_i32_0 : i32, i32
  }
  func.func @transform_11(%arg0: i32) -> (i32, i32) {
    %c0_i32 = arith.constant 0 : i32
    %c0_i32_0 = arith.constant 0 : i32
    %c0_i32_1 = arith.constant 0 : i32
    return %c0_i32, %c0_i32_0 : i32, i32
  }
  func.func @transform_12(%arg0: i32) -> (i32, i32) {
    %c0_i32 = arith.constant 0 : i32
    %c0_i32_0 = arith.constant 0 : i32
    %c0_i32_1 = arith.constant 0 : i32
    return %c0_i32, %c0_i32_0 : i32, i32
  }
  func.func @transform_13(%arg0: i32) -> (i32, i32) {
    %c0_i32 = arith.constant 0 : i32
    %c0_i32_0 = arith.constant 0 : i32
    %c0_i32_1 = arith.constant 0 : i32
    return %c0_i32, %c0_i32_0 : i32, i32
  }
  func.func @transform_14(%arg0: i32) -> (i32, i32, i32) {
    %c0_i32 = arith.constant 0 : i32
    %c0_i32_0 = arith.constant 0 : i32
    %c0_i32_1 = arith.constant 0 : i32
    return %arg0, %c0_i32, %c0_i32_0 : i32, i32, i32
  }
  func.func @transform_15(%arg0: i32) -> (i32, i32, i32) {
    %c0_i32 = arith.constant 0 : i32
    %c0_i32_0 = arith.constant 0 : i32
    %c0_i32_1 = arith.constant 0 : i32
    return %arg0, %c0_i32, %c0_i32_0 : i32, i32, i32
  }
  func.func @transform_16(%arg0: i32) -> (i32, i32, i32) {
    %c0_i32 = arith.constant 0 : i32
    %c0_i32_0 = arith.constant 0 : i32
    %c0_i32_1 = arith.constant 0 : i32
    return %arg0, %c0_i32, %c0_i32_0 : i32, i32, i32
  }
  func.func @transform_17(%arg0: i32) -> (i32, i32, i32) {
    %c0_i32 = arith.constant 0 : i32
    %c0_i32_0 = arith.constant 0 : i32
    %c0_i32_1 = arith.constant 0 : i32
    return %arg0, %c0_i32, %c0_i32_0 : i32, i32, i32
  }
  func.func @transform_18(%arg0: i32) -> (i32, i32, i32) {
    %c0_i32 = arith.constant 0 : i32
    %c0_i32_0 = arith.constant 0 : i32
    %c0_i32_1 = arith.constant 0 : i32
    return %arg0, %c0_i32, %c0_i32_0 : i32, i32, i32
  }
  func.func @transform_19(%arg0: i32) -> (i32, i32, i32) {
    %c0_i32 = arith.constant 0 : i32
    %c0_i32_0 = arith.constant 0 : i32
    %c0_i32_1 = arith.constant 0 : i32
    return %arg0, %c0_i32, %c0_i32_0 : i32, i32, i32
  }
}

</mosaic_0001>

<llo_original>
// kernel: discriminator_stft_forward.1
$region0: #{discriminator_stft_forward.1}
  #allocation0 [shape = 'u32[]', space=smem, size = 0x4, offset = 0x4, fixed_abs, tag = 'smem constant byte address 0x4 - core index']
  #allocation1 [shape = 'u32[144,128]{1,0:T(1,128)}', space=vmem, size = 0x12000, scoped, tag = 'internal scratch']
  #allocation2 [shape = 'f32[40,384]{1,0:T(8,128)}', space=vmem, size = 0xf000, scoped, tag = 'scratch operand']
  #allocation3 [shape = 'bf16[48,384]{1,0:T(8,128)(2,1)}', space=vmem, size = 0x9000, scoped, tag = 'scratch operand']
  #allocation4 [shape = 'bf16[48,256]{1,0:T(8,128)(2,1)}', space=vmem, size = 0x6000, scoped, tag = 'scratch operand']
  #allocation5 [shape = 'bf16[48,256]{1,0:T(8,128)(2,1)}', space=vmem, size = 0x6000, scoped, tag = 'scratch operand']
  #allocation6 [shape = 'bf16[48,128]{1,0:T(8,128)(2,1)}', space=vmem, size = 0x3000, scoped, tag = 'scratch operand']
  #allocation7 [shape = 'bf16[48,128]{1,0:T(8,128)(2,1)}', space=vmem, size = 0x3000, scoped, tag = 'scratch operand']
  %s0 = inlined_call_operand.vmem [shape: f32[96,64], index: 0, kind: input, shape index: {}]
  %s1 = inlined_call_operand.vmem [shape: f32[40,1], index: 1, kind: input, shape index: {}]
  %s2 = inlined_call_operand.vmem [shape: f32[3,64,384], index: 2, kind: input, shape index: {}]
  %s3 = inlined_call_operand.vmem [shape: bf16[3,384,256], index: 3, kind: input, shape index: {}]
  %s4 = inlined_call_operand.vmem [shape: bf16[3,256,256], index: 4, kind: input, shape index: {}]
  %s5 = inlined_call_operand.vmem [shape: bf16[3,256,128], index: 5, kind: input, shape index: {}]
  %s6 = inlined_call_operand.vmem [shape: bf16[3,128,128], index: 6, kind: input, shape index: {}]
  %s7 = inlined_call_operand.vmem [shape: bf16[3,128,128], index: 7, kind: input, shape index: {}]
  %s8 = inlined_call_operand.vmem [shape: f32[1,384], index: 8, kind: input, shape index: {}]
  %s9 = inlined_call_operand.vmem [shape: f32[1,256], index: 9, kind: input, shape index: {}]
  %s10 = inlined_call_operand.vmem [shape: f32[1,256], index: 10, kind: input, shape index: {}]
  %s11 = inlined_call_operand.vmem [shape: f32[1,128], index: 11, kind: input, shape index: {}]
  %s12 = inlined_call_operand.vmem [shape: f32[1,128], index: 12, kind: input, shape index: {}]
  %s13 = inlined_call_operand.vmem [shape: f32[1,128], index: 13, kind: input, shape index: {}]
  %s14 = inlined_call_operand.vmem [shape: f32[4,16,384], index: 14, kind: output, shape index: {0}]
  %s15 = inlined_call_operand.vmem [shape: f32[4,16,256], index: 15, kind: output, shape index: {1}]
  %s16 = inlined_call_operand.vmem [shape: f32[4,16,256], index: 16, kind: output, shape index: {2}]
  %s17 = inlined_call_operand.vmem [shape: f32[4,16,128], index: 17, kind: output, shape index: {3}]
  %s18 = inlined_call_operand.vmem [shape: f32[4,16,128], index: 18, kind: output, shape index: {4}]
  %s19 = inlined_call_operand.vmem [shape: f32[4,16,128], index: 19, kind: output, shape index: {5}]
  %20 = xla_tuple %s14, %s15, %s16, %s17, %s18, %s19
  %s21 = sld [smem:[#allocation0]]
  $region129: #{discriminator_stft_forward.1} parent=0
    _
  %s23 = ssub.s32 1, %s21
  %s24 = scalar_select 0, %s23, %s21
  loop: start=0, step=1, limit=4
  $region2: #{discriminator_stft_forward.1} parent=0 // loop_pre_header
    _
  $region3: #{discriminator_stft_forward.1} parent=0 // loop_header
    %s26 = sphi 0, %s30
    %p27 = scmp.ge.s32.totalorder %s26, 4
    %s36 = sphi 0, %s38
    %s39 = sphi 0, %s36
    %s40 = sphi 0, %s39
    %s56 = sphi 0, %s40
    %s60 = sphi 0, %s60
    %s62 = sphi 0, %s60
    %s63 = sphi 0, %s62
    %s77 = sphi 0, %s63
    %s81 = sphi 0, %s81
    %s83 = sphi 0, %s81
    %s84 = sphi 0, %s83
    %s98 = sphi 0, %s84
    %s102 = sphi 0, %s102
    %s104 = sphi 0, %s102
    %s105 = sphi 0, %s104
    %s119 = sphi 0, %s105
    %s123 = sphi 0, %s123
    %s125 = sphi 0, %s123
    %s126 = sphi 0, %s125
    %s140 = sphi 0, %s126
    %s144 = sphi 0, %s144
    %s146 = sphi 0, %s144
    %s147 = sphi 0, %s146
    %s161 = sphi 0, %s147
    %s165 = sphi 0, %s165
    %s167 = sphi 0, %s165
    %s168 = sphi 0, %s167
    %s182 = sphi 0, %s168
    %s186 = sphi 0, %s186
    %s188 = sphi 0, %s186
    %s189 = sphi 0, %s188
    %s203 = sphi 0, %s189
    %s207 = sphi 0, %s207
    %s209 = sphi 0, %s207
    %s210 = sphi 0, %s209
    %s224 = sphi 0, %s210
    %s228 = sphi 0, %s228
    %s230 = sphi 0, %s228
    %s231 = sphi 0, %s230
    %s245 = sphi 0, %s231
    %s249 = sphi 0, %s249
    %s251 = sphi 0, %s249
    %s252 = sphi 0, %s251
    %s266 = sphi 0, %s252
    %s270 = sphi 0, %s270
    %s272 = sphi 0, %s270
    %s273 = sphi 0, %s272
    %s287 = sphi 0, %s273
    %s291 = sphi 0, %s291
    %s293 = sphi 0, %s291
    %s294 = sphi 0, %s293
    %s308 = sphi 0, %s294
    %s312 = sphi 0, %s312
    %s314 = sphi 0, %s312
    %s315 = sphi 0, %s314
    %s329 = sphi 0, %s315
    %s335 = sphi 0, %s337
    %s338 = sphi 0, %s335
    %s339 = sphi 0, %s338
    %s355 = sphi 0, %s339
    %s361 = sphi 0, %s363
    %s364 = sphi 0, %s361
    %s365 = sphi 0, %s364
    %s381 = sphi 0, %s365
    %s387 = sphi 0, %s389
    %s390 = sphi 0, %s387
    %s391 = sphi 0, %s390
    %s407 = sphi 0, %s391
    %s413 = sphi 0, %s415
    %s416 = sphi 0, %s413
    %s417 = sphi 0, %s416
    %s433 = sphi 0, %s417
    %s439 = sphi 0, %s441
    %s442 = sphi 0, %s439
    %s443 = sphi 0, %s442
    %s459 = sphi 0, %s443
    %s465 = sphi 0, %s467
    %s468 = sphi 0, %s465
    %s469 = sphi 0, %s468
    %s485 = sphi 0, %s469
  $region4: #{discriminator_stft_forward.1} parent=0 // loop_header_branch
    %29 = sbr.rel (%p27) target = $region8
  $region5: #{discriminator_stft_forward.1} parent=0 // loop_body
    %s31 = ssub.s32 %s26, 1
    %s32 = ssub.s32 %s26, 2
    %s33 = sadd.s32 %s26, 1
    %s34 = ssub.s32 %s26, %s33
    %p35 = scmp.eq.s32.totalorder %s34, 0
    %s37 = sadd.s32 %s36, 1
    %s38 = scalar_select %p35, %s36, %s37
    %p41 = pneg %p35
    %p42 = scmp.eq.s32.totalorder %s26, 1
    %p43 = por %p41, %p42
    %p44 = scmp.ne.s32.totalorder %s36, %s39
    %p45 = scmp.eq.s32.totalorder %s26, 0
    %p46 = por %p44, %p45
    %p47 = scmp.ne.s32.totalorder %s36, %s39
    %p48 = scmp.eq.s32.totalorder %s31, 1
    %p49 = por %p47, %p48
    %p50 = scmp.ne.s32.totalorder %s39, %s40
    %p51 = scmp.eq.s32.totalorder %s31, 0
    %p52 = por %p50, %p51
    %p53 = scmp.ne.s32.totalorder %s39, %s40
    %p54 = scmp.eq.s32.totalorder %s32, 1
    %p55 = por %p53, %p54
    %p57 = scmp.ne.s32.totalorder %s40, %s56
    %p58 = scmp.eq.s32.totalorder %s32, 0
    %p59 = por %p57, %p58
    %s61 = sadd.s32 %s60, 1
    %p64 = scmp.eq.s32.totalorder %s26, 1
    %p65 = scmp.ne.s32.totalorder %s60, %s62
    %p66 = scmp.eq.s32.totalorder %s26, 0
    %p67 = por %p65, %p66
    %p68 = scmp.ne.s32.totalorder %s60, %s62
    %p69 = scmp.eq.s32.totalorder %s31, 1
    %p70 = por %p68, %p69
    %p71 = scmp.ne.s32.totalorder %s62, %s63
    %p72 = scmp.eq.s32.totalorder %s31, 0
    %p73 = por %p71, %p72
    %p74 = scmp.ne.s32.totalorder %s62, %s63
    %p75 = scmp.eq.s32.totalorder %s32, 1
    %p76 = por %p74, %p75
    %p78 = scmp.ne.s32.totalorder %s63, %s77
    %p79 = scmp.eq.s32.totalorder %s32, 0
    %p80 = por %p78, %p79
    %s82 = sadd.s32 %s81, 1
    %p85 = scmp.eq.s32.totalorder %s26, 1
    %p86 = scmp.ne.s32.totalorder %s81, %s83
    %p87 = scmp.eq.s32.totalorder %s26, 0
    %p88 = por %p86, %p87
    %p89 = scmp.ne.s32.totalorder %s81, %s83
    %p90 = scmp.eq.s32.totalorder %s31, 1
    %p91 = por %p89, %p90
    %p92 = scmp.ne.s32.totalorder %s83, %s84
    %p93 = scmp.eq.s32.totalorder %s31, 0
    %p94 = por %p92, %p93
    %p95 = scmp.ne.s32.totalorder %s83, %s84
    %p96 = scmp.eq.s32.totalorder %s32, 1
    %p97 = por %p95, %p96
    %p99 = scmp.ne.s32.totalorder %s84, %s98
    %p100 = scmp.eq.s32.totalorder %s32, 0
    %p101 = por %p99, %p100
    %s103 = sadd.s32 %s102, 1
    %p106 = scmp.eq.s32.totalorder %s26, 1
    %p107 = scmp.ne.s32.totalorder %s102, %s104
    %p108 = scmp.eq.s32.totalorder %s26, 0
    %p109 = por %p107, %p108
    %p110 = scmp.ne.s32.totalorder %s102, %s104
    %p111 = scmp.eq.s32.totalorder %s31, 1
    %p112 = por %p110, %p111
    %p113 = scmp.ne.s32.totalorder %s104, %s105
    %p114 = scmp.eq.s32.totalorder %s31, 0
    %p115 = por %p113, %p114
    %p116 = scmp.ne.s32.totalorder %s104, %s105
    %p117 = scmp.eq.s32.totalorder %s32, 1
    %p118 = por %p116, %p117
    %p120 = scmp.ne.s32.totalorder %s105, %s119
    %p121 = scmp.eq.s32.totalorder %s32, 0
    %p122 = por %p120, %p121
    %s124 = sadd.s32 %s123, 1
    %p127 = scmp.eq.s32.totalorder %s26, 1
    %p128 = scmp.ne.s32.totalorder %s123, %s125
    %p129 = scmp.eq.s32.totalorder %s26, 0
    %p130 = por %p128, %p129
    %p131 = scmp.ne.s32.totalorder %s123, %s125
    %p132 = scmp.eq.s32.totalorder %s31, 1
    %p133 = por %p131, %p132
    %p134 = scmp.ne.s32.totalorder %s125, %s126
    %p135 = scmp.eq.s32.totalorder %s31, 0
    %p136 = por %p134, %p135
    %p137 = scmp.ne.s32.totalorder %s125, %s126
    %p138 = scmp.eq.s32.totalorder %s32, 1
    %p139 = por %p137, %p138
    %p141 = scmp.ne.s32.totalorder %s126, %s140
    %p142 = scmp.eq.s32.totalorder %s32, 0
    %p143 = por %p141, %p142
    %s145 = sadd.s32 %s144, 1
    %p148 = scmp.eq.s32.totalorder %s26, 1
    %p149 = scmp.ne.s32.totalorder %s144, %s146
    %p150 = scmp.eq.s32.totalorder %s26, 0
    %p151 = por %p149, %p150
    %p152 = scmp.ne.s32.totalorder %s144, %s146
    %p153 = scmp.eq.s32.totalorder %s31, 1
    %p154 = por %p152, %p153
    %p155 = scmp.ne.s32.totalorder %s146, %s147
    %p156 = scmp.eq.s32.totalorder %s31, 0
    %p157 = por %p155, %p156
    %p158 = scmp.ne.s32.totalorder %s146, %s147
    %p159 = scmp.eq.s32.totalorder %s32, 1
    %p160 = por %p158, %p159
    %p162 = scmp.ne.s32.totalorder %s147, %s161
    %p163 = scmp.eq.s32.totalorder %s32, 0
    %p164 = por %p162, %p163
    %s166 = sadd.s32 %s165, 1
    %p169 = scmp.eq.s32.totalorder %s26, 1
    %p170 = scmp.ne.s32.totalorder %s165, %s167
    %p171 = scmp.eq.s32.totalorder %s26, 0
    %p172 = por %p170, %p171
    %p173 = scmp.ne.s32.totalorder %s165, %s167
    %p174 = scmp.eq.s32.totalorder %s31, 1
    %p175 = por %p173, %p174
    %p176 = scmp.ne.s32.totalorder %s167, %s168
    %p177 = scmp.eq.s32.totalorder %s31, 0
    %p178 = por %p176, %p177
    %p179 = scmp.ne.s32.totalorder %s167, %s168
    %p180 = scmp.eq.s32.totalorder %s32, 1
    %p181 = por %p179, %p180
    %p183 = scmp.ne.s32.totalorder %s168, %s182
    %p184 = scmp.eq.s32.totalorder %s32, 0
    %p185 = por %p183, %p184
    %s187 = sadd.s32 %s186, 1
    %p190 = scmp.eq.s32.totalorder %s26, 1
    %p191 = scmp.ne.s32.totalorder %s186, %s188
    %p192 = scmp.eq.s32.totalorder %s26, 0
    %p193 = por %p191, %p192
    %p194 = scmp.ne.s32.totalorder %s186, %s188
    %p195 = scmp.eq.s32.totalorder %s31, 1
    %p196 = por %p194, %p195
    %p197 = scmp.ne.s32.totalorder %s188, %s189
    %p198 = scmp.eq.s32.totalorder %s31, 0
    %p199 = por %p197, %p198
    %p200 = scmp.ne.s32.totalorder %s188, %s189
    %p201 = scmp.eq.s32.totalorder %s32, 1
    %p202 = por %p200, %p201
    %p204 = scmp.ne.s32.totalorder %s189, %s203
    %p205 = scmp.eq.s32.totalorder %s32, 0
    %p206 = por %p204, %p205
    %s208 = sadd.s32 %s207, 1
    %p211 = scmp.eq.s32.totalorder %s26, 1
    %p212 = scmp.ne.s32.totalorder %s207, %s209
    %p213 = scmp.eq.s32.totalorder %s26, 0
    %p214 = por %p212, %p213
    %p215 = scmp.ne.s32.totalorder %s207, %s209
    %p216 = scmp.eq.s32.totalorder %s31, 1
    %p217 = por %p215, %p216
    %p218 = scmp.ne.s32.totalorder %s209, %s210
    %p219 = scmp.eq.s32.totalorder %s31, 0
    %p220 = por %p218, %p219
    %p221 = scmp.ne.s32.totalorder %s209, %s210
    %p222 = scmp.eq.s32.totalorder %s32, 1
    %p223 = por %p221, %p222
    %p225 = scmp.ne.s32.totalorder %s210, %s224
    %p226 = scmp.eq.s32.totalorder %s32, 0
    %p227 = por %p225, %p226
    %s229 = sadd.s32 %s228, 1
    %p232 = scmp.eq.s32.totalorder %s26, 1
    %p233 = scmp.ne.s32.totalorder %s228, %s230
    %p234 = scmp.eq.s32.totalorder %s26, 0
    %p235 = por %p233, %p234
    %p236 = scmp.ne.s32.totalorder %s228, %s230
    %p237 = scmp.eq.s32.totalorder %s31, 1
    %p238 = por %p236, %p237
    %p239 = scmp.ne.s32.totalorder %s230, %s231
    %p240 = scmp.eq.s32.totalorder %s31, 0
    %p241 = por %p239, %p240
    %p242 = scmp.ne.s32.totalorder %s230, %s231
    %p243 = scmp.eq.s32.totalorder %s32, 1
    %p244 = por %p242, %p243
    %p246 = scmp.ne.s32.totalorder %s231, %s245
    %p247 = scmp.eq.s32.totalorder %s32, 0
    %p248 = por %p246, %p247
    %s250 = sadd.s32 %s249, 1
    %p253 = scmp.eq.s32.totalorder %s26, 1
    %p254 = scmp.ne.s32.totalorder %s249, %s251
    %p255 = scmp.eq.s32.totalorder %s26, 0
    %p256 = por %p254, %p255
    %p257 = scmp.ne.s32.totalorder %s249, %s251
    %p258 = scmp.eq.s32.totalorder %s31, 1
    %p259 = por %p257, %p258
    %p260 = scmp.ne.s32.totalorder %s251, %s252
    %p261 = scmp.eq.s32.totalorder %s31, 0
    %p262 = por %p260, %p261
    %p263 = scmp.ne.s32.totalorder %s251, %s252
    %p264 = scmp.eq.s32.totalorder %s32, 1
    %p265 = por %p263, %p264
    %p267 = scmp.ne.s32.totalorder %s252, %s266
    %p268 = scmp.eq.s32.totalorder %s32, 0
    %p269 = por %p267, %p268
    %s271 = sadd.s32 %s270, 1
    %p274 = scmp.eq.s32.totalorder %s26, 1
    %p275 = scmp.ne.s32.totalorder %s270, %s272
    %p276 = scmp.eq.s32.totalorder %s26, 0
    %p277 = por %p275, %p276
    %p278 = scmp.ne.s32.totalorder %s270, %s272
    %p279 = scmp.eq.s32.totalorder %s31, 1
    %p280 = por %p278, %p279
    %p281 = scmp.ne.s32.totalorder %s272, %s273
    %p282 = scmp.eq.s32.totalorder %s31, 0
    %p283 = por %p281, %p282
    %p284 = scmp.ne.s32.totalorder %s272, %s273
    %p285 = scmp.eq.s32.totalorder %s32, 1
    %p286 = por %p284, %p285
    %p288 = scmp.ne.s32.totalorder %s273, %s287
    %p289 = scmp.eq.s32.totalorder %s32, 0
    %p290 = por %p288, %p289
    %s292 = sadd.s32 %s291, 1
    %p295 = scmp.eq.s32.totalorder %s26, 1
    %p296 = scmp.ne.s32.totalorder %s291, %s293
    %p297 = scmp.eq.s32.totalorder %s26, 0
    %p298 = por %p296, %p297
    %p299 = scmp.ne.s32.totalorder %s291, %s293
    %p300 = scmp.eq.s32.totalorder %s31, 1
    %p301 = por %p299, %p300
    %p302 = scmp.ne.s32.totalorder %s293, %s294
    %p303 = scmp.eq.s32.totalorder %s31, 0
    %p304 = por %p302, %p303
    %p305 = scmp.ne.s32.totalorder %s293, %s294
    %p306 = scmp.eq.s32.totalorder %s32, 1
    %p307 = por %p305, %p306
    %p309 = scmp.ne.s32.totalorder %s294, %s308
    %p310 = scmp.eq.s32.totalorder %s32, 0
    %p311 = por %p309, %p310
    %s313 = sadd.s32 %s312, 1
    %p316 = scmp.eq.s32.totalorder %s26, 1
    %p317 = scmp.ne.s32.totalorder %s312, %s314
    %p318 = scmp.eq.s32.totalorder %s26, 0
    %p319 = por %p317, %p318
    %p320 = scmp.ne.s32.totalorder %s312, %s314
    %p321 = scmp.eq.s32.totalorder %s31, 1
    %p322 = por %p320, %p321
    %p323 = scmp.ne.s32.totalorder %s314, %s315
    %p324 = scmp.eq.s32.totalorder %s31, 0
    %p325 = por %p323, %p324
    %p326 = scmp.ne.s32.totalorder %s314, %s315
    %p327 = scmp.eq.s32.totalorder %s32, 1
    %p328 = por %p326, %p327
    %p330 = scmp.ne.s32.totalorder %s315, %s329
    %p331 = scmp.eq.s32.totalorder %s32, 0
    %p332 = por %p330, %p331
    %s333 = ssub.s32 %s26, %s33
    %p334 = scmp.eq.s32.totalorder %s333, 0
    %s336 = sadd.s32 %s335, 1
    %s337 = scalar_select %p334, %s335, %s336
    %p340 = pneg %p334
    %p341 = scmp.eq.s32.totalorder %s26, 1
    %p342 = por %p340, %p341
    %p343 = scmp.ne.s32.totalorder %s335, %s338
    %p344 = scmp.eq.s32.totalorder %s26, 0
    %p345 = por %p343, %p344
    %p346 = scmp.ne.s32.totalorder %s335, %s338
    %p347 = scmp.eq.s32.totalorder %s31, 1
    %p348 = por %p346, %p347
    %p349 = scmp.ne.s32.totalorder %s338, %s339
    %p350 = scmp.eq.s32.totalorder %s31, 0
    %p351 = por %p349, %p350
    %p352 = scmp.ne.s32.totalorder %s338, %s339
    %p353 = scmp.eq.s32.totalorder %s32, 1
    %p354 = por %p352, %p353
    %p356 = scmp.ne.s32.totalorder %s339, %s355
    %p357 = scmp.eq.s32.totalorder %s32, 0
    %p358 = por %p356, %p357
    %s359 = ssub.s32 %s26, %s33
    %p360 = scmp.eq.s32.totalorder %s359, 0
    %s362 = sadd.s32 %s361, 1
    %s363 = scalar_select %p360, %s361, %s362
    %p366 = pneg %p360
    %p367 = scmp.eq.s32.totalorder %s26, 1
    %p368 = por %p366, %p367
    %p369 = scmp.ne.s32.totalorder %s361, %s364
    %p370 = scmp.eq.s32.totalorder %s26, 0
    %p371 = por %p369, %p370
    %p372 = scmp.ne.s32.totalorder %s361, %s364
    %p373 = scmp.eq.s32.totalorder %s31, 1
    %p374 = por %p372, %p373
    %p375 = scmp.ne.s32.totalorder %s364, %s365
    %p376 = scmp.eq.s32.totalorder %s31, 0
    %p377 = por %p375, %p376
    %p378 = scmp.ne.s32.totalorder %s364, %s365
    %p379 = scmp.eq.s32.totalorder %s32, 1
    %p380 = por %p378, %p379
    %p382 = scmp.ne.s32.totalorder %s365, %s381
    %p383 = scmp.eq.s32.totalorder %s32, 0
    %p384 = por %p382, %p383
    %s385 = ssub.s32 %s26, %s33
    %p386 = scmp.eq.s32.totalorder %s385, 0
    %s388 = sadd.s32 %s387, 1
    %s389 = scalar_select %p386, %s387, %s388
    %p392 = pneg %p386
    %p393 = scmp.eq.s32.totalorder %s26, 1
    %p394 = por %p392, %p393
    %p395 = scmp.ne.s32.totalorder %s387, %s390
    %p396 = scmp.eq.s32.totalorder %s26, 0
    %p397 = por %p395, %p396
    %p398 = scmp.ne.s32.totalorder %s387, %s390
    %p399 = scmp.eq.s32.totalorder %s31, 1
    %p400 = por %p398, %p399
    %p401 = scmp.ne.s32.totalorder %s390, %s391
    %p402 = scmp.eq.s32.totalorder %s31, 0
    %p403 = por %p401, %p402
    %p404 = scmp.ne.s32.totalorder %s390, %s391
    %p405 = scmp.eq.s32.totalorder %s32, 1
    %p406 = por %p404, %p405
    %p408 = scmp.ne.s32.totalorder %s391, %s407
    %p409 = scmp.eq.s32.totalorder %s32, 0
    %p410 = por %p408, %p409
    %s411 = ssub.s32 %s26, %s33
    %p412 = scmp.eq.s32.totalorder %s411, 0
    %s414 = sadd.s32 %s413, 1
    %s415 = scalar_select %p412, %s413, %s414
    %p418 = pneg %p412
    %p419 = scmp.eq.s32.totalorder %s26, 1
    %p420 = por %p418, %p419
    %p421 = scmp.ne.s32.totalorder %s413, %s416
    %p422 = scmp.eq.s32.totalorder %s26, 0
    %p423 = por %p421, %p422
    %p424 = scmp.ne.s32.totalorder %s413, %s416
    %p425 = scmp.eq.s32.totalorder %s31, 1
    %p426 = por %p424, %p425
    %p427 = scmp.ne.s32.totalorder %s416, %s417
    %p428 = scmp.eq.s32.totalorder %s31, 0
    %p429 = por %p427, %p428
    %p430 = scmp.ne.s32.totalorder %s416, %s417
    %p431 = scmp.eq.s32.totalorder %s32, 1
    %p432 = por %p430, %p431
    %p434 = scmp.ne.s32.totalorder %s417, %s433
    %p435 = scmp.eq.s32.totalorder %s32, 0
    %p436 = por %p434, %p435
    %s437 = ssub.s32 %s26, %s33
    %p438 = scmp.eq.s32.totalorder %s437, 0
    %s440 = sadd.s32 %s439, 1
    %s441 = scalar_select %p438, %s439, %s440
    %p444 = pneg %p438
    %p445 = scmp.eq.s32.totalorder %s26, 1
    %p446 = por %p444, %p445
    %p447 = scmp.ne.s32.totalorder %s439, %s442
    %p448 = scmp.eq.s32.totalorder %s26, 0
    %p449 = por %p447, %p448
    %p450 = scmp.ne.s32.totalorder %s439, %s442
    %p451 = scmp.eq.s32.totalorder %s31, 1
    %p452 = por %p450, %p451
    %p453 = scmp.ne.s32.totalorder %s442, %s443
    %p454 = scmp.eq.s32.totalorder %s31, 0
    %p455 = por %p453, %p454
    %p456 = scmp.ne.s32.totalorder %s442, %s443
    %p457 = scmp.eq.s32.totalorder %s32, 1
    %p458 = por %p456, %p457
    %p460 = scmp.ne.s32.totalorder %s443, %s459
    %p461 = scmp.eq.s32.totalorder %s32, 0
    %p462 = por %p460, %p461
    %s463 = ssub.s32 %s26, %s33
    %p464 = scmp.eq.s32.totalorder %s463, 0
    %s466 = sadd.s32 %s465, 1
    %s467 = scalar_select %p464, %s465, %s466
    %p470 = pneg %p464
    %p471 = scmp.eq.s32.totalorder %s26, 1
    %p472 = por %p470, %p471
    %p473 = scmp.ne.s32.totalorder %s465, %s468
    %p474 = scmp.eq.s32.totalorder %s26, 0
    %p475 = por %p473, %p474
    %p476 = scmp.ne.s32.totalorder %s465, %s468
    %p477 = scmp.eq.s32.totalorder %s31, 1
    %p478 = por %p476, %p477
    %p479 = scmp.ne.s32.totalorder %s468, %s469
    %p480 = scmp.eq.s32.totalorder %s31, 0
    %p481 = por %p479, %p480
    %p482 = scmp.ne.s32.totalorder %s468, %s469
    %p483 = scmp.eq.s32.totalorder %s32, 1
    %p484 = por %p482, %p483
    %p486 = scmp.ne.s32.totalorder %s469, %s485
    %p487 = scmp.eq.s32.totalorder %s32, 0
    %p488 = por %p486, %p487
    %p489 = scmp.le.s32.totalorder 1, %s26
    %p490 = scmp.lt.s32.totalorder %s26, 3
    %p491 = pnand %p489, %p490
    %p492 = pneg %p491
    // Predicated region
    $region9: #{discriminator_stft_forward.1} parent=5 // pred_check
      _
    $region10: #{discriminator_stft_forward.1} parent=5 // pred_check_branch
      %494 = sbr.rel (%p491) target = $region12
    $region11: #{discriminator_stft_forward.1} parent=5 // pred_region
      %s495 = ssub.s32 %s26, 1
      // Predicated region
      $region13: #{discriminator_stft_forward.1} parent=11 // pred_check
        %p496 = pneg %p73
      $region14: #{discriminator_stft_forward.1} parent=11 // pred_check_branch
        %498 = sbr.rel (%p496) target = $region16
      $region15: #{discriminator_stft_forward.1} parent=11 // pred_region
        _
      $region16: #{discriminator_stft_forward.1} parent=11 // pred_fallthru
        _
      // Predicated region
      $region17: #{discriminator_stft_forward.1} parent=11 // pred_check
        %p499 = pneg %p94
      $region18: #{discriminator_stft_forward.1} parent=11 // pred_check_branch
        %501 = sbr.rel (%p499) target = $region20
      $region19: #{discriminator_stft_forward.1} parent=11 // pred_region
        _
      $region20: #{discriminator_stft_forward.1} parent=11 // pred_fallthru
        _
      // Predicated region
      $region21: #{discriminator_stft_forward.1} parent=11 // pred_check
        %p502 = pneg %p115
      $region22: #{discriminator_stft_forward.1} parent=11 // pred_check_branch
        %504 = sbr.rel (%p502) target = $region24
      $region23: #{discriminator_stft_forward.1} parent=11 // pred_region
        _
      $region24: #{discriminator_stft_forward.1} parent=11 // pred_fallthru
        _
      // Predicated region
      $region25: #{discriminator_stft_forward.1} parent=11 // pred_check
        %p505 = pneg %p136
      $region26: #{discriminator_stft_forward.1} parent=11 // pred_check_branch
        %507 = sbr.rel (%p505) target = $region28
      $region27: #{discriminator_stft_forward.1} parent=11 // pred_region
        _
      $region28: #{discriminator_stft_forward.1} parent=11 // pred_fallthru
        _
      // Predicated region
      $region29: #{discriminator_stft_forward.1} parent=11 // pred_check
        %p508 = pneg %p157
      $region30: #{discriminator_stft_forward.1} parent=11 // pred_check_branch
        %510 = sbr.rel (%p508) target = $region32
      $region31: #{discriminator_stft_forward.1} parent=11 // pred_region
        _
      $region32: #{discriminator_stft_forward.1} parent=11 // pred_fallthru
        _
      // Predicated region
      $region33: #{discriminator_stft_forward.1} parent=11 // pred_check
        %p511 = pneg %p178
      $region34: #{discriminator_stft_forward.1} parent=11 // pred_check_branch
        %513 = sbr.rel (%p511) target = $region36
      $region35: #{discriminator_stft_forward.1} parent=11 // pred_region
        _
      $region36: #{discriminator_stft_forward.1} parent=11 // pred_fallthru
        _
      // Predicated region
      $region37: #{discriminator_stft_forward.1} parent=11 // pred_check
        %p514 = pneg %p199
      $region38: #{discriminator_stft_forward.1} parent=11 // pred_check_branch
        %516 = sbr.rel (%p514) target = $region40
      $region39: #{discriminator_stft_forward.1} parent=11 // pred_region
        _
      $region40: #{discriminator_stft_forward.1} parent=11 // pred_fallthru
        _
      // Predicated region
      $region41: #{discriminator_stft_forward.1} parent=11 // pred_check
        %p517 = pneg %p220
      $region42: #{discriminator_stft_forward.1} parent=11 // pred_check_branch
        %519 = sbr.rel (%p517) target = $region44
      $region43: #{discriminator_stft_forward.1} parent=11 // pred_region
        _
      $region44: #{discriminator_stft_forward.1} parent=11 // pred_fallthru
        _
      // Predicated region
      $region45: #{discriminator_stft_forward.1} parent=11 // pred_check
        %p520 = pneg %p241
      $region46: #{discriminator_stft_forward.1} parent=11 // pred_check_branch
        %522 = sbr.rel (%p520) target = $region48
      $region47: #{discriminator_stft_forward.1} parent=11 // pred_region
        _
      $region48: #{discriminator_stft_forward.1} parent=11 // pred_fallthru
        _
      // Predicated region
      $region49: #{discriminator_stft_forward.1} parent=11 // pred_check
        %p523 = pneg %p262
      $region50: #{discriminator_stft_forward.1} parent=11 // pred_check_branch
        %525 = sbr.rel (%p523) target = $region52
      $region51: #{discriminator_stft_forward.1} parent=11 // pred_region
        _
      $region52: #{discriminator_stft_forward.1} parent=11 // pred_fallthru
        _
      // Predicated region
      $region53: #{discriminator_stft_forward.1} parent=11 // pred_check
        %p526 = pneg %p283
      $region54: #{discriminator_stft_forward.1} parent=11 // pred_check_branch
        %528 = sbr.rel (%p526) target = $region56
      $region55: #{discriminator_stft_forward.1} parent=11 // pred_region
        _
      $region56: #{discriminator_stft_forward.1} parent=11 // pred_fallthru
        _
      // Predicated region
      $region57: #{discriminator_stft_forward.1} parent=11 // pred_check
        %p529 = pneg %p304
      $region58: #{discriminator_stft_forward.1} parent=11 // pred_check_branch
        %531 = sbr.rel (%p529) target = $region60
      $region59: #{discriminator_stft_forward.1} parent=11 // pred_region
        _
      $region60: #{discriminator_stft_forward.1} parent=11 // pred_fallthru
        _
      // Predicated region
      $region61: #{discriminator_stft_forward.1} parent=11 // pred_check
        %p532 = pneg %p325
      $region62: #{discriminator_stft_forward.1} parent=11 // pred_check_branch
        %534 = sbr.rel (%p532) target = $region64
      $region63: #{discriminator_stft_forward.1} parent=11 // pred_region
        _
      $region64: #{discriminator_stft_forward.1} parent=11 // pred_fallthru
        _
    $region12: #{discriminator_stft_forward.1} parent=5 // pred_fallthru
      _
    %p535 = scmp.lt.s32.totalorder %s26, 2
    // Predicated region
    $region65: #{discriminator_stft_forward.1} parent=5 // pred_check
      %p536 = pneg %p535
    $region66: #{discriminator_stft_forward.1} parent=5 // pred_check_branch
      %538 = sbr.rel (%p536) target = $region68
    $region67: #{discriminator_stft_forward.1} parent=5 // pred_region
      // Predicated region
      $region69: #{discriminator_stft_forward.1} parent=67 // pred_check
        %p539 = pneg %p46
      $region70: #{discriminator_stft_forward.1} parent=67 // pred_check_branch
        %541 = sbr.rel (%p539) target = $region72
      $region71: #{discriminator_stft_forward.1} parent=67 // pred_region
        %s542 = smul.u32 6, %s26
        %p543 = scmp.lt.s32.totalorder %s542, 11
        %s544 = scalar_select %p543, %s542, 11
        %s545 = smul.addr %s544, 8
        %s546 = scalar_lea.vmem %s0, %s545
        %s547 = smul.u32 6, %s26
      $region72: #{discriminator_stft_forward.1} parent=67 // pred_fallthru
        _
    $region68: #{discriminator_stft_forward.1} parent=5 // pred_fallthru
      _
    %p548 = scmp.le.s32.totalorder 1, %s26
    %p549 = scmp.lt.s32.totalorder %s26, 3
    %p550 = pnand %p548, %p549
    %p551 = pneg %p550
    // Predicated region
    $region73: #{discriminator_stft_forward.1} parent=5 // pred_check
      _
    $region74: #{discriminator_stft_forward.1} parent=5 // pred_check_branch
      %553 = sbr.rel (%p550) target = $region76
    $region75: #{discriminator_stft_forward.1} parent=5 // pred_region
      %s554 = ssub.s32 %s26, 1
      %s555 = smul.u32 6, %s31
      %p556 = scmp.lt.s32.totalorder %s555, 11
      %s557 = scalar_select %p556, %s555, 11
      %s558 = smul.addr %s557, 8
      %s559 = scalar_lea.vmem %s0, %s558
      %p560 = pneg %p52
      %p561 = pneg %p49
      %p562 = pneg %p73
      %p563 = pneg %p70
      %p564 = pneg %p94
      %p565 = pneg %p91
      %p566 = pneg %p115
      %p567 = pneg %p112
      %p568 = pneg %p136
      %p569 = pneg %p133
      %p570 = pneg %p157
      %p571 = pneg %p154
      %p572 = pneg %p178
      %p573 = pneg %p175
      %p574 = pneg %p199
      %p575 = pneg %p196
      %p576 = pneg %p220
      %p577 = pneg %p217
      %p578 = pneg %p241
      %p579 = pneg %p238
      %p580 = pneg %p262
      %p581 = pneg %p259
      %p582 = pneg %p283
      %p583 = pneg %p280
      %p584 = pneg %p304
      %p585 = pneg %p301
      %p586 = pneg %p325
      %p587 = pneg %p322
      %p588 = pneg %p351
      %p589 = pneg %p348
      %s590 = smul.u32 2, %s31
      %p591 = scmp.lt.s32.totalorder %s590, 3
      %s592 = scalar_select %p591, %s590, 3
      %s593 = smul.addr %s592, 6
      %s594 = smul.addr %s593, 8
      %s595 = scalar_lea.vmem %s14, %s594
      %p596 = pneg %p377
      %p597 = pneg %p374
      %s598 = smul.u32 2, %s31
      %p599 = scmp.lt.s32.totalorder %s598, 3
      %s600 = scalar_select %p599, %s598, 3
      %s601 = smul.addr %s600, 4
      %s602 = smul.addr %s601, 8
      %s603 = scalar_lea.vmem %s15, %s602
      %p604 = pneg %p403
      %p605 = pneg %p400
      %s606 = smul.u32 2, %s31
      %p607 = scmp.lt.s32.totalorder %s606, 3
      %s608 = scalar_select %p607, %s606, 3
      %s609 = smul.addr %s608, 4
      %s610 = smul.addr %s609, 8
      %s611 = scalar_lea.vmem %s16, %s610
      %p612 = pneg %p429
      %p613 = pneg %p426
      %s614 = smul.u32 2, %s31
      %p615 = scmp.lt.s32.totalorder %s614, 3
      %s616 = scalar_select %p615, %s614, 3
      %s617 = smul.addr %s616, 2
      %s618 = smul.addr %s617, 8
      %s619 = scalar_lea.vmem %s17, %s618
      %p620 = pneg %p455
      %p621 = pneg %p452
      %s622 = smul.u32 2, %s31
      %p623 = scmp.lt.s32.totalorder %s622, 3
      %s624 = scalar_select %p623, %s622, 3
      %s625 = smul.addr %s624, 2
      %s626 = smul.addr %s625, 8
      %s627 = scalar_lea.vmem %s18, %s626
      %p628 = pneg %p481
      %p629 = pneg %p478
      %s630 = smul.u32 2, %s31
      %p631 = scmp.lt.s32.totalorder %s630, 3
      %s632 = scalar_select %p631, %s630, 3
      %s633 = smul.addr %s632, 2
      %s634 = smul.addr %s633, 8
      %s635 = scalar_lea.vmem %s19, %s634
      %s636 = smul.u32 6, %s31
      %p637 = scmp.lt.s32.totalorder %s636, 11
      %s638 = scalar_select %p637, %s636, 11
      %s639 = smul.addr %s638, 8
      %s640 = scalar_lea.vmem %s0, %s639
      %s641 = smul.u32 6, %s31
      %s642 = smul.u32 2, %s31
      %p643 = scmp.lt.s32.totalorder %s642, 3
      %s644 = scalar_select %p643, %s642, 3
      %s645 = smul.addr %s644, 6
      %s646 = smul.addr %s645, 8
      %s647 = scalar_lea.vmem %s14, %s646
      %s648 = smul.u32 2, %s31
      %s649 = smul.u32 2, %s31
      %p650 = scmp.lt.s32.totalorder %s649, 3
      %s651 = scalar_select %p650, %s649, 3
      %s652 = smul.addr %s651, 4
      %s653 = smul.addr %s652, 8
      %s654 = scalar_lea.vmem %s15, %s653
      %s655 = smul.u32 2, %s31
      %s656 = smul.u32 2, %s31
      %p657 = scmp.lt.s32.totalorder %s656, 3
      %s658 = scalar_select %p657, %s656, 3
      %s659 = smul.addr %s658, 4
      %s660 = smul.addr %s659, 8
      %s661 = scalar_lea.vmem %s16, %s660
      %s662 = smul.u32 2, %s31
      %s663 = smul.u32 2, %s31
      %p664 = scmp.lt.s32.totalorder %s663, 3
      %s665 = scalar_select %p664, %s663, 3
      %s666 = smul.addr %s665, 2
      %s667 = smul.addr %s666, 8
      %s668 = scalar_lea.vmem %s17, %s667
      %s669 = smul.u32 2, %s31
      %s670 = smul.u32 2, %s31
      %p671 = scmp.lt.s32.totalorder %s670, 3
      %s672 = scalar_select %p671, %s670, 3
      %s673 = smul.addr %s672, 2
      %s674 = smul.addr %s673, 8
      %s675 = scalar_lea.vmem %s18, %s674
      %s676 = smul.u32 2, %s31
      %s677 = smul.u32 2, %s31
      %p678 = scmp.lt.s32.totalorder %s677, 3
      %s679 = scalar_select %p678, %s677, 3
      %s680 = smul.addr %s679, 2
      %s681 = smul.addr %s680, 8
      %s682 = scalar_lea.vmem %s19, %s681
      %s683 = smul.u32 2, %s31
      %vm685 = vcmask 1040384
      %vm686 = vsmask.f32 256
      %vm687 = vmand %vm685, %vm686
      %vm688 = vcmask 1044484
      %vm689 = vsmask.f32 4352
      %vm690 = vmand %vm688, %vm689
      %vm691 = vmor %vm690, %vm687
      %v692 = vld [vmem:[#allocation3] sm:$0x11]
      %v693 = vsel %vm691, 0, %v692
      %694 = vst [vmem:[#allocation3] sm:$0x11] %v693
      %v695 = vld [vmem:[#allocation3 + $0x8] sm:$0x1]
      %v696 = vsel %vm687, 0, %v695
      %697 = vst [vmem:[#allocation3 + $0x8] sm:$0x1] %v696
      %vm698 = vsmask.f32 7938
      %vm699 = vmand %vm685, %vm698
      %vm700 = vsmask.f32 7954
      %vm701 = vmand %vm688, %vm700
      %vm702 = vmor %vm701, %vm699
      %v703 = vld [vmem:[#allocation3 + $0x3c] sm:$0x11]
      %v704 = vsel %vm702, 0, %v703
      %705 = vst [vmem:[#allocation3 + $0x3c] sm:$0x11] %v704
      %v706 = vld [vmem:[#allocation3 + $0x44] sm:$0x1]
      %v707 = vsel %vm699, 0, %v706
      %708 = vst [vmem:[#allocation3 + $0x44] sm:$0x1] %v707
      %709 = vst [vmem:[#allocation4] sm:$0x11] 0
      %710 = vst [vmem:[#allocation4 + $0x28] sm:$0x22] 0
      %711 = vst [vmem:[#allocation5] sm:$0x33] 0
      %712 = vst [vmem:[#allocation5 + $0x28] sm:$0xcc] 0
      %v713 = vld [vmem:[#allocation6] sm:$0x1]
      %v714 = vsel %vm687, 0, %v713
      %715 = vst [vmem:[#allocation6] sm:$0x1] %v714
      %v716 = vld [vmem:[#allocation6 + $0x14] sm:$0x1]
      %v717 = vsel %vm699, 0, %v716
      %718 = vst [vmem:[#allocation6 + $0x14] sm:$0x1] %v717
      %v719 = vld [vmem:[#allocation7] sm:$0x1]
      %v720 = vsel %vm687, 0, %v719
      %721 = vst [vmem:[#allocation7] sm:$0x1] %v720
      %v722 = vld [vmem:[#allocation7 + $0x14] sm:$0x1]
      %v723 = vsel %vm699, 0, %v722
      %724 = vst [vmem:[#allocation7 + $0x14] sm:$0x1] %v723
      %v725 = vld [vmem:[%s1] sm:$0xff]
      %v726 = vld [vmem:[%s1 + $0x8] sm:$0xff]
      %v727 = vld [vmem:[%s1 + $0x10] sm:$0xff]
      %v728 = vld [vmem:[%s1 + $0x18] sm:$0xff]
      %v729 = vld [vmem:[%s1 + $0x20] sm:$0xff]
      %v730 = vld [vmem:[%s8] sm:$0x7]
      %v731 = vld [vmem:[%s640] sm:$0xff]
      %v732 = vld [vmem:[%s640 + $0x8] sm:$0xff]
      %v733 = vld [vmem:[%s640 + $0x10] sm:$0xff]
      %v734 = vld [vmem:[%s640 + $0x18] sm:$0xff]
      %v735 = vld [vmem:[%s640 + $0x20] sm:$0xff]
      %v736 = vld [vmem:[%s2] sm:$0xff]
      %v737 = vld [vmem:[%s2 + $0x8] sm:$0xff]
      %v738 = vld [vmem:[%s2 + $0x10] sm:$0xff]
      %v739 = vld [vmem:[%s2 + $0x18] sm:$0xff]
      %v740 = vld [vmem:[%s2 + $0x20] sm:$0xff]
      %v741 = vld [vmem:[%s2 + $0x28] sm:$0xff]
      %v742 = vld [vmem:[%s2 + $0x30] sm:$0xff]
      %v743 = vld [vmem:[%s2 + $0x38] sm:$0xff]
      %v744 = vld [vmem:[%s2 + $0x40] sm:$0xff]
      %v745 = vld [vmem:[%s2 + $0x48] sm:$0xff]
      %v746 = vld [vmem:[%s2 + $0x50] sm:$0xff]
      %v747 = vld [vmem:[%s2 + $0x58] sm:$0xff]
      %v748 = vld [vmem:[%s2 + $0x60] sm:$0xff]
      %v749 = vld [vmem:[%s2 + $0x68] sm:$0xff]
      %v750 = vld [vmem:[%s2 + $0x70] sm:$0xff]
      %v751 = vld [vmem:[%s2 + $0x78] sm:$0xff]
      %v752 = vld [vmem:[%s2 + $0x80] sm:$0xff]
      %v753 = vld [vmem:[%s2 + $0x88] sm:$0xff]
      %v754 = vld [vmem:[%s2 + $0x90] sm:$0xff]
      %v755 = vld [vmem:[%s2 + $0x98] sm:$0xff]
      %v756 = vld [vmem:[%s2 + $0xa0] sm:$0xff]
      %v757 = vld [vmem:[%s2 + $0xa8] sm:$0xff]
      %v758 = vld [vmem:[%s2 + $0xb0] sm:$0xff]
      %v759 = vld [vmem:[%s2 + $0xb8] sm:$0xff]
      %vm760 = vcmask 523264
      %v762 = vsel %vm760, %v731, 0
      %v765 = vsel %vm760, %v732, 0
      %v768 = vsel %vm760, %v733, 0
      %v771 = vsel %vm760, %v734, 0
      %v774 = vsel %vm760, %v735, 0
      %776 = vmatprep.subr.mxu0 0.0
      %777 = vmatpush1.msra.mxu0 0.0
      %778 = vmatprep.subr.mxu0 0.0
      %779 = vmatpush1.msra.mxu0 0.0
      %780 = vmatprep.subr.mxu0 0.0
      %781 = vmatpush1.msra.mxu0 0.0
      %782 = vmatprep.subr.mxu0 0.0
      %783 = vmatpush1.msra.mxu0 0.0
      %784 = vmatprep.subr.mxu0 0.0
      %785 = vmatpush1.msra.mxu0 0.0
      %786 = vmatprep.subr.mxu0 0.0
      %787 = vmatpush1.msra.mxu0 0.0
      %788 = vmatprep.subr.mxu0 0.0
      %789 = vmatpush1.msra.mxu0 0.0
      %790 = vmatprep.subr.mxu0 0.0
      %791 = vmatpush1.msra.mxu0 0.0
      %792 = vmatprep.subr.mxu0 %v758
      %793 = vmatpush1.msra.mxu0 %v757
      %794 = vmatprep.subr.mxu0 %v755
      %795 = vmatpush1.msra.mxu0 %v754
      %796 = vmatprep.subr.mxu0 %v752
      %797 = vmatpush1.msra.mxu0 %v751
      %798 = vmatprep.subr.mxu0 %v749
      %799 = vmatpush1.msra.mxu0 %v748
      %800 = vmatprep.subr.mxu0 %v746
      %801 = vmatpush1.msra.mxu0 %v745
      %802 = vmatprep.subr.mxu0 %v743
      %803 = vmatpush1.msra.mxu0 %v742
      %804 = vmatprep.subr.mxu0 %v740
      %805 = vmatpush1.msra.mxu0 %v739
      %806 = vmatprep.subr.mxu0 %v737
      %807 = vmatpush1.msra.mxu0 %v736
      %808 = vmatprep.subr.mxu0 0.0
      %809 = vmatpush2.msra.mxu0 0.0
      %810 = vmatprep.subr.mxu0 0.0
      %811 = vmatpush2.msra.mxu0 0.0
      %812 = vmatprep.subr.mxu0 0.0
      %813 = vmatpush2.msra.mxu0 0.0
      %814 = vmatprep.subr.mxu0 0.0
      %815 = vmatpush2.msra.mxu0 0.0
      %816 = vmatprep.subr.mxu0 0.0
      %817 = vmatpush2.msra.mxu0 0.0
      %818 = vmatprep.subr.mxu0 0.0
      %819 = vmatpush2.msra.mxu0 0.0
      %820 = vmatprep.subr.mxu0 0.0
      %821 = vmatpush2.msra.mxu0 0.0
      %822 = vmatprep.subr.mxu0 0.0
      %823 = vmatpush2.msra.mxu0 0.0
      %824 = vmatprep.subr.mxu0 0.0
      %825 = vmatpush2.msra.mxu0 0.0
      %826 = vmatprep.subr.mxu0 0.0
      %827 = vmatpush2.msra.mxu0 0.0
      %828 = vmatprep.subr.mxu0 0.0
      %829 = vmatpush2.msra.mxu0 0.0
      %830 = vmatprep.subr.mxu0 0.0
      %831 = vmatpush2.msra.mxu0 0.0
      %832 = vmatprep.subr.mxu0 0.0
      %833 = vmatpush2.msra.mxu0 0.0
      %834 = vmatprep.subr.mxu0 0.0
      %835 = vmatpush2.msra.mxu0 0.0
      %836 = vmatprep.subr.mxu0 0.0
      %837 = vmatpush2.msra.mxu0 0.0
      %838 = vmatprep.subr.mxu0 0.0
      %839 = vmatpush2.msra.mxu0 0.0
      %840 = vmatprep.mubr.f32.mxu0 0.0
      %841 = vmatmul.mubr.f32.gmra.mxu0 %v762
      %v842 = vpop.f32.mrf.mxu0
      %v843 = vadd.f32 0.0, %v842
      %v844 = vpop.f32.mrf.mxu0
      %v845 = vadd.f32 0.0, %v844
      %846 = vmatprep.mubr.f32.mxu0 0.0
      %847 = vmatmul.mubr.f32.gmra.mxu0 %v765
      %v848 = vpop.f32.mrf.mxu0
      %v849 = vadd.f32 0.0, %v848
      %v850 = vpop.f32.mrf.mxu0
      %v851 = vadd.f32 0.0, %v850
      %852 = vmatprep.mubr.f32.mxu0 0.0
      %853 = vmatmul.mubr.f32.gmra.mxu0 %v768
      %v854 = vpop.f32.mrf.mxu0
      %v855 = vadd.f32 0.0, %v854
      %v856 = vpop.f32.mrf.mxu0
      %v857 = vadd.f32 0.0, %v856
      %858 = vmatprep.mubr.f32.mxu0 0.0
      %859 = vmatmul.mubr.f32.gmra.mxu0 %v771
      %v860 = vpop.f32.mrf.mxu0
      %v861 = vadd.f32 0.0, %v860
      %v862 = vpop.f32.mrf.mxu0
      %v863 = vadd.f32 0.0, %v862
      %864 = vmatprep.mubr.f32.mxu0 0.0
      %865 = vmatmul.mubr.f32.gmra.mxu0 %v774
      %v866 = vpop.f32.mrf.mxu0
      %v867 = vadd.f32 0.0, %v866
      %v868 = vpop.f32.mrf.mxu0
      %v869 = vadd.f32 0.0, %v868
      %870 = vdwg.mxu0
      %871 = vmatprep.subr.mxu0 0.0
      %872 = vmatpush1.msra.mxu0 0.0
      %873 = vmatprep.subr.mxu0 0.0
      %874 = vmatpush1.msra.mxu0 0.0
      %875 = vmatprep.subr.mxu0 0.0
      %876 = vmatpush1.msra.mxu0 0.0
      %877 = vmatprep.subr.mxu0 0.0
      %878 = vmatpush1.msra.mxu0 0.0
      %879 = vmatprep.subr.mxu0 0.0
      %880 = vmatpush1.msra.mxu0 0.0
      %881 = vmatprep.subr.mxu0 0.0
      %882 = vmatpush1.msra.mxu0 0.0
      %883 = vmatprep.subr.mxu0 0.0
      %884 = vmatpush1.msra.mxu0 0.0
      %885 = vmatprep.subr.mxu0 0.0
      %886 = vmatpush1.msra.mxu0 0.0
      %887 = vmatprep.subr.mxu0 0.0
      %888 = vmatpush1.msra.mxu0 %v759
      %889 = vmatprep.subr.mxu0 0.0
      %890 = vmatpush1.msra.mxu0 %v756
      %891 = vmatprep.subr.mxu0 0.0
      %892 = vmatpush1.msra.mxu0 %v753
      %893 = vmatprep.subr.mxu0 0.0
      %894 = vmatpush1.msra.mxu0 %v750
      %895 = vmatprep.subr.mxu0 0.0
      %896 = vmatpush1.msra.mxu0 %v747
      %897 = vmatprep.subr.mxu0 0.0
      %898 = vmatpush1.msra.mxu0 %v744
      %899 = vmatprep.subr.mxu0 0.0
      %900 = vmatpush1.msra.mxu0 %v741
      %901 = vmatprep.subr.mxu0 0.0
      %902 = vmatpush1.msra.mxu0 %v738
      %903 = vmatprep.subr.mxu0 0.0
      %904 = vmatpush2.msra.mxu0 0.0
      %905 = vmatprep.subr.mxu0 0.0
      %906 = vmatpush2.msra.mxu0 0.0
      %907 = vmatprep.subr.mxu0 0.0
      %908 = vmatpush2.msra.mxu0 0.0
      %909 = vmatprep.subr.mxu0 0.0
      %910 = vmatpush2.msra.mxu0 0.0
      %911 = vmatprep.subr.mxu0 0.0
      %912 = vmatpush2.msra.mxu0 0.0
      %913 = vmatprep.subr.mxu0 0.0
      %914 = vmatpush2.msra.mxu0 0.0
      %915 = vmatprep.subr.mxu0 0.0
      %916 = vmatpush2.msra.mxu0 0.0
      %917 = vmatprep.subr.mxu0 0.0
      %918 = vmatpush2.msra.mxu0 0.0
      %919 = vmatprep.subr.mxu0 0.0
      %920 = vmatpush2.msra.mxu0 0.0
      %921 = vmatprep.subr.mxu0 0.0
      %922 = vmatpush2.msra.mxu0 0.0
      %923 = vmatprep.subr.mxu0 0.0
      %924 = vmatpush2.msra.mxu0 0.0
      %925 = vmatprep.subr.mxu0 0.0
      %926 = vmatpush2.msra.mxu0 0.0
      %927 = vmatprep.subr.mxu0 0.0
      %928 = vmatpush2.msra.mxu0 0.0
      %929 = vmatprep.subr.mxu0 0.0
      %930 = vmatpush2.msra.mxu0 0.0
      %931 = vmatprep.subr.mxu0 0.0
      %932 = vmatpush2.msra.mxu0 0.0
      %933 = vmatprep.subr.mxu0 0.0
      %934 = vmatpush2.msra.mxu0 0.0
      %935 = vmatprep.mubr.f32.mxu0 0.0
      %936 = vmatmul.mubr.f32.gmra.mxu0 %v762
      %v937 = vpop.f32.mrf.mxu0
      %v938 = vadd.f32 0.0, %v937
      %v939 = vpop.f32.mrf.mxu0
      %940 = vmatprep.mubr.f32.mxu0 0.0
      %941 = vmatmul.mubr.f32.gmra.mxu0 %v765
      %v942 = vpop.f32.mrf.mxu0
      %v943 = vadd.f32 0.0, %v942
      %v944 = vpop.f32.mrf.mxu0
      %945 = vmatprep.mubr.f32.mxu0 0.0
      %946 = vmatmul.mubr.f32.gmra.mxu0 %v768
      %v947 = vpop.f32.mrf.mxu0
      %v948 = vadd.f32 0.0, %v947
      %v949 = vpop.f32.mrf.mxu0
      %950 = vmatprep.mubr.f32.mxu0 0.0
      %951 = vmatmul.mubr.f32.gmra.mxu0 %v771
      %v952 = vpop.f32.mrf.mxu0
      %v953 = vadd.f32 0.0, %v952
      %v954 = vpop.f32.mrf.mxu0
      %955 = vmatprep.mubr.f32.mxu0 0.0
      %956 = vmatmul.mubr.f32.gmra.mxu0 %v774
      %v957 = vpop.f32.mrf.mxu0
      %v958 = vadd.f32 0.0, %v957
      %v959 = vpop.f32.mrf.mxu0
      %960 = vdwg.mxu0
      %v962 = vlaneseq
      %v963 = vshrl.u32 %v962, 7
      %v964 = vsub.s32 0, %v963
      %v965 = vrot.slane %v730, %v964
      %v966 = vlaneseq
      %v967 = vshrl.u32 %v966, 7
      %v968 = vsub.s32 1, %v967
      %v969 = vrot.slane %v730, %v968
      %v970 = vlaneseq
      %v971 = vshrl.u32 %v970, 7
      %v972 = vsub.s32 2, %v971
      %v973 = vrot.slane %v730, %v972
      %v977 = vadd.f32 %v965, %v843
      %v978 = vadd.f32 %v969, %v845
      %v979 = vadd.f32 %v973, %v938
      %v980 = vadd.f32 %v965, %v849
      %v981 = vadd.f32 %v969, %v851
      %v982 = vadd.f32 %v973, %v943
      %v983 = vadd.f32 %v965, %v855
      %v984 = vadd.f32 %v969, %v857
      %v985 = vadd.f32 %v973, %v948
      %v986 = vadd.f32 %v965, %v861
      %v987 = vadd.f32 %v969, %v863
      %v988 = vadd.f32 %v973, %v953
      %v989 = vadd.f32 %v965, %v867
      %v990 = vadd.f32 %v969, %v869
      %v991 = vadd.f32 %v973, %v958
      %992 = vst [vmem:[#allocation2] sm:$0xff] %v977
      %993 = vst [vmem:[#allocation2 + $0x8] sm:$0xff] %v978
      %994 = vst [vmem:[#allocation2 + $0x10] sm:$0xff] %v979
      %995 = vst [vmem:[#allocation2 + $0x18] sm:$0xff] %v980
      %996 = vst [vmem:[#allocation2 + $0x20] sm:$0xff] %v981
      %997 = vst [vmem:[#allocation2 + $0x28] sm:$0xff] %v982
      %998 = vst [vmem:[#allocation2 + $0x30] sm:$0xff] %v983
      %999 = vst [vmem:[#allocation2 + $0x38] sm:$0xff] %v984
      %1000 = vst [vmem:[#allocation2 + $0x40] sm:$0xff] %v985
      %1001 = vst [vmem:[#allocation2 + $0x48] sm:$0xff] %v986
      %1002 = vst [vmem:[#allocation2 + $0x50] sm:$0xff] %v987
      %1003 = vst [vmem:[#allocation2 + $0x58] sm:$0xff] %v988
      %1004 = vst [vmem:[#allocation2 + $0x60] sm:$0xff] %v989
      %1005 = vst [vmem:[#allocation2 + $0x68] sm:$0xff] %v990
      %1006 = vst [vmem:[#allocation2 + $0x70] sm:$0xff] %v991
      %v1007 = vld [vmem:[#allocation2] sm:$0xff]
      %v1008 = vld [vmem:[#allocation2 + $0x8] sm:$0xff]
      %v1009 = vld [vmem:[#allocation2 + $0x10] sm:$0xff]
      %v1010 = vld [vmem:[#allocation2 + $0x18] sm:$0xff]
      %v1011 = vld [vmem:[#allocation2 + $0x20] sm:$0xff]
      %v1012 = vld [vmem:[#allocation2 + $0x28] sm:$0xff]
      %v1013 = vld [vmem:[#allocation2 + $0x30] sm:$0xff]
      %v1014 = vld [vmem:[#allocation2 + $0x38] sm:$0xff]
      %v1015 = vld [vmem:[#allocation2 + $0x40] sm:$0xff]
      %v1016 = vld [vmem:[#allocation2 + $0x48] sm:$0xff]
      %v1017 = vld [vmem:[#allocation2 + $0x50] sm:$0xff]
      %v1018 = vld [vmem:[#allocation2 + $0x58] sm:$0xff]
      %v1019 = vld [vmem:[#allocation2 + $0x60] sm:$0xff]
      %v1020 = vld [vmem:[#allocation2 + $0x68] sm:$0xff]
      %v1021 = vld [vmem:[#allocation2 + $0x70] sm:$0xff]
      %v1022 = vld [vmem:[%s640 + $0x1] sm:$0xff]
      %v1023 = vld [vmem:[%s640 + $0x9] sm:$0xff]
      %v1024 = vld [vmem:[%s640 + $0x11] sm:$0xff]
      %v1025 = vld [vmem:[%s640 + $0x19] sm:$0xff]
      %v1026 = vld [vmem:[%s640 + $0x21] sm:$0xff]
      %s1027 = scalar_lea.vmem %s2, 192
      %v1028 = vld [vmem:[%s1027] sm:$0xff]
      %v1029 = vld [vmem:[%s1027 + $0x8] sm:$0xff]
      %v1030 = vld [vmem:[%s1027 + $0x10] sm:$0xff]
      %v1031 = vld [vmem:[%s1027 + $0x18] sm:$0xff]
      %v1032 = vld [vmem:[%s1027 + $0x20] sm:$0xff]
      %v1033 = vld [vmem:[%s1027 + $0x28] sm:$0xff]
      %v1034 = vld [vmem:[%s1027 + $0x30] sm:$0xff]
      %v1035 = vld [vmem:[%s1027 + $0x38] sm:$0xff]
      %v1036 = vld [vmem:[%s1027 + $0x40] sm:$0xff]
      %v1037 = vld [vmem:[%s1027 + $0x48] sm:$0xff]
      %v1038 = vld [vmem:[%s1027 + $0x50] sm:$0xff]
      %v1039 = vld [vmem:[%s1027 + $0x58] sm:$0xff]
      %v1040 = vld [vmem:[%s1027 + $0x60] sm:$0xff]
      %v1041 = vld [vmem:[%s1027 + $0x68] sm:$0xff]
      %v1042 = vld [vmem:[%s1027 + $0x70] sm:$0xff]
      %v1043 = vld [vmem:[%s1027 + $0x78] sm:$0xff]
      %v1044 = vld [vmem:[%s1027 + $0x80] sm:$0xff]
      %v1045 = vld [vmem:[%s1027 + $0x88] sm:$0xff]
      %v1046 = vld [vmem:[%s1027 + $0x90] sm:$0xff]
      %v1047 = vld [vmem:[%s1027 + $0x98] sm:$0xff]
      %v1048 = vld [vmem:[%s1027 + $0xa0] sm:$0xff]
      %v1049 = vld [vmem:[%s1027 + $0xa8] sm:$0xff]
      %v1050 = vld [vmem:[%s1027 + $0xb0] sm:$0xff]
      %v1051 = vld [vmem:[%s1027 + $0xb8] sm:$0xff]
      %v1053 = vsel %vm760, %v1022, 0
      %v1056 = vsel %vm760, %v1023, 0
      %v1059 = vsel %vm760, %v1024, 0
      %v1062 = vsel %vm760, %v1025, 0
      %v1065 = vsel %vm760, %v1026, 0
      %1067 = vmatprep.subr.mxu0 0.0
      %1068 = vmatpush1.msra.mxu0 0.0
      %1069 = vmatprep.subr.mxu0 0.0
      %1070 = vmatpush1.msra.mxu0 0.0
      %1071 = vmatprep.subr.mxu0 0.0
      %1072 = vmatpush1.msra.mxu0 0.0
      %1073 = vmatprep.subr.mxu0 0.0
      %1074 = vmatpush1.msra.mxu0 0.0
      %1075 = vmatprep.subr.mxu0 0.0
      %1076 = vmatpush1.msra.mxu0 0.0
      %1077 = vmatprep.subr.mxu0 0.0
      %1078 = vmatpush1.msra.mxu0 0.0
      %1079 = vmatprep.subr.mxu0 0.0
      %1080 = vmatpush1.msra.mxu0 0.0
      %1081 = vmatprep.subr.mxu0 0.0
      %1082 = vmatpush1.msra.mxu0 0.0
      %1083 = vmatprep.subr.mxu0 %v1050
      %1084 = vmatpush1.msra.mxu0 %v1049
      %1085 = vmatprep.subr.mxu0 %v1047
      %1086 = vmatpush1.msra.mxu0 %v1046
      %1087 = vmatprep.subr.mxu0 %v1044
      %1088 = vmatpush1.msra.mxu0 %v1043
      %1089 = vmatprep.subr.mxu0 %v1041
      %1090 = vmatpush1.msra.mxu0 %v1040
      %1091 = vmatprep.subr.mxu0 %v1038
      %1092 = vmatpush1.msra.mxu0 %v1037
      %1093 = vmatprep.subr.mxu0 %v1035
      %1094 = vmatpush1.msra.mxu0 %v1034
      %1095 = vmatprep.subr.mxu0 %v1032
      %1096 = vmatpush1.msra.mxu0 %v1031
      %1097 = vmatprep.subr.mxu0 %v1029
      %1098 = vmatpush1.msra.mxu0 %v1028
      %1099 = vmatprep.subr.mxu0 0.0
      %1100 = vmatpush2.msra.mxu0 0.0
      %1101 = vmatprep.subr.mxu0 0.0
      %1102 = vmatpush2.msra.mxu0 0.0
      %1103 = vmatprep.subr.mxu0 0.0
      %1104 = vmatpush2.msra.mxu0 0.0
      %1105 = vmatprep.subr.mxu0 0.0
      %1106 = vmatpush2.msra.mxu0 0.0
      %1107 = vmatprep.subr.mxu0 0.0
      %1108 = vmatpush2.msra.mxu0 0.0
      %1109 = vmatprep.subr.mxu0 0.0
      %1110 = vmatpush2.msra.mxu0 0.0
      %1111 = vmatprep.subr.mxu0 0.0
      %1112 = vmatpush2.msra.mxu0 0.0
      %1113 = vmatprep.subr.mxu0 0.0
      %1114 = vmatpush2.msra.mxu0 0.0
      %1115 = vmatprep.subr.mxu0 0.0
      %1116 = vmatpush2.msra.mxu0 0.0
      %1117 = vmatprep.subr.mxu0 0.0
      %1118 = vmatpush2.msra.mxu0 0.0
      %1119 = vmatprep.subr.mxu0 0.0
      %1120 = vmatpush2.msra.mxu0 0.0
      %1121 = vmatprep.subr.mxu0 0.0
      %1122 = vmatpush2.msra.mxu0 0.0
      %1123 = vmatprep.subr.mxu0 0.0
      %1124 = vmatpush2.msra.mxu0 0.0
      %1125 = vmatprep.subr.mxu0 0.0
      %1126 = vmatpush2.msra.mxu0 0.0
      %1127 = vmatprep.subr.mxu0 0.0
      %1128 = vmatpush2.msra.mxu0 0.0
      %1129 = vmatprep.subr.mxu0 0.0
      %1130 = vmatpush2.msra.mxu0 0.0
      %1131 = vmatprep.mubr.f32.mxu0 0.0
      %1132 = vmatmul.mubr.f32.gmra.mxu0 %v1053
      %v1133 = vpop.f32.mrf.mxu0
      %v1134 = vadd.f32 0.0, %v1133
      %v1135 = vpop.f32.mrf.mxu0
      %v1136 = vadd.f32 0.0, %v1135
      %1137 = vmatprep.mubr.f32.mxu0 0.0
      %1138 = vmatmul.mubr.f32.gmra.mxu0 %v1056
      %v1139 = vpop.f32.mrf.mxu0
      %v1140 = vadd.f32 0.0, %v1139
      %v1141 = vpop.f32.mrf.mxu0
      %v1142 = vadd.f32 0.0, %v1141
      %1143 = vmatprep.mubr.f32.mxu0 0.0
      %1144 = vmatmul.mubr.f32.gmra.mxu0 %v1059
      %v1145 = vpop.f32.mrf.mxu0
      %v1146 = vadd.f32 0.0, %v1145
      %v1147 = vpop.f32.mrf.mxu0
      %v1148 = vadd.f32 0.0, %v1147
      %1149 = vmatprep.mubr.f32.mxu0 0.0
      %1150 = vmatmul.mubr.f32.gmra.mxu0 %v1062
      %v1151 = vpop.f32.mrf.mxu0
      %v1152 = vadd.f32 0.0, %v1151
      %v1153 = vpop.f32.mrf.mxu0
      %v1154 = vadd.f32 0.0, %v1153
      %1155 = vmatprep.mubr.f32.mxu0 0.0
      %1156 = vmatmul.mubr.f32.gmra.mxu0 %v1065
      %v1157 = vpop.f32.mrf.mxu0
      %v1158 = vadd.f32 0.0, %v1157
      %v1159 = vpop.f32.mrf.mxu0
      %v1160 = vadd.f32 0.0, %v1159
      %1161 = vdwg.mxu0
      %1162 = vmatprep.subr.mxu0 0.0
      %1163 = vmatpush1.msra.mxu0 0.0
      %1164 = vmatprep.subr.mxu0 0.0
      %1165 = vmatpush1.msra.mxu0 0.0
      %1166 = vmatprep.subr.mxu0 0.0
      %1167 = vmatpush1.msra.mxu0 0.0
      %1168 = vmatprep.subr.mxu0 0.0
      %1169 = vmatpush1.msra.mxu0 0.0
      %1170 = vmatprep.subr.mxu0 0.0
      %1171 = vmatpush1.msra.mxu0 0.0
      %1172 = vmatprep.subr.mxu0 0.0
      %1173 = vmatpush1.msra.mxu0 0.0
      %1174 = vmatprep.subr.mxu0 0.0
      %1175 = vmatpush1.msra.mxu0 0.0
      %1176 = vmatprep.subr.mxu0 0.0
      %1177 = vmatpush1.msra.mxu0 0.0
      %1178 = vmatprep.subr.mxu0 0.0
      %1179 = vmatpush1.msra.mxu0 %v1051
      %1180 = vmatprep.subr.mxu0 0.0
      %1181 = vmatpush1.msra.mxu0 %v1048
      %1182 = vmatprep.subr.mxu0 0.0
      %1183 = vmatpush1.msra.mxu0 %v1045
      %1184 = vmatprep.subr.mxu0 0.0
      %1185 = vmatpush1.msra.mxu0 %v1042
      %1186 = vmatprep.subr.mxu0 0.0
      %1187 = vmatpush1.msra.mxu0 %v1039
      %1188 = vmatprep.subr.mxu0 0.0
      %1189 = vmatpush1.msra.mxu0 %v1036
      %1190 = vmatprep.subr.mxu0 0.0
      %1191 = vmatpush1.msra.mxu0 %v1033
      %1192 = vmatprep.subr.mxu0 0.0
      %1193 = vmatpush1.msra.mxu0 %v1030
      %1194 = vmatprep.subr.mxu0 0.0
      %1195 = vmatpush2.msra.mxu0 0.0
      %1196 = vmatprep.subr.mxu0 0.0
      %1197 = vmatpush2.msra.mxu0 0.0
      %1198 = vmatprep.subr.mxu0 0.0
      %1199 = vmatpush2.msra.mxu0 0.0
      %1200 = vmatprep.subr.mxu0 0.0
      %1201 = vmatpush2.msra.mxu0 0.0
      %1202 = vmatprep.subr.mxu0 0.0
      %1203 = vmatpush2.msra.mxu0 0.0
      %1204 = vmatprep.subr.mxu0 0.0
      %1205 = vmatpush2.msra.mxu0 0.0
      %1206 = vmatprep.subr.mxu0 0.0
      %1207 = vmatpush2.msra.mxu0 0.0
      %1208 = vmatprep.subr.mxu0 0.0
      %1209 = vmatpush2.msra.mxu0 0.0
      %1210 = vmatprep.subr.mxu0 0.0
      %1211 = vmatpush2.msra.mxu0 0.0
      %1212 = vmatprep.subr.mxu0 0.0
      %1213 = vmatpush2.msra.mxu0 0.0
      %1214 = vmatprep.subr.mxu0 0.0
      %1215 = vmatpush2.msra.mxu0 0.0
      %1216 = vmatprep.subr.mxu0 0.0
      %1217 = vmatpush2.msra.mxu0 0.0
      %1218 = vmatprep.subr.mxu0 0.0
      %1219 = vmatpush2.msra.mxu0 0.0
      %1220 = vmatprep.subr.mxu0 0.0
      %1221 = vmatpush2.msra.mxu0 0.0
      %1222 = vmatprep.subr.mxu0 0.0
      %1223 = vmatpush2.msra.mxu0 0.0
      %1224 = vmatprep.subr.mxu0 0.0
      %1225 = vmatpush2.msra.mxu0 0.0
      %1226 = vmatprep.mubr.f32.mxu0 0.0
      %1227 = vmatmul.mubr.f32.gmra.mxu0 %v1053
      %v1228 = vpop.f32.mrf.mxu0
      %v1229 = vadd.f32 0.0, %v1228
      %v1230 = vpop.f32.mrf.mxu0
      %1231 = vmatprep.mubr.f32.mxu0 0.0
      %1232 = vmatmul.mubr.f32.gmra.mxu0 %v1056
      %v1233 = vpop.f32.mrf.mxu0
      %v1234 = vadd.f32 0.0, %v1233
      %v1235 = vpop.f32.mrf.mxu0
      %1236 = vmatprep.mubr.f32.mxu0 0.0
      %1237 = vmatmul.mubr.f32.gmra.mxu0 %v1059
      %v1238 = vpop.f32.mrf.mxu0
      %v1239 = vadd.f32 0.0, %v1238
      %v1240 = vpop.f32.mrf.mxu0
      %1241 = vmatprep.mubr.f32.mxu0 0.0
      %1242 = vmatmul.mubr.f32.gmra.mxu0 %v1062
      %v1243 = vpop.f32.mrf.mxu0
      %v1244 = vadd.f32 0.0, %v1243
      %v1245 = vpop.f32.mrf.mxu0
      %1246 = vmatprep.mubr.f32.mxu0 0.0
      %1247 = vmatmul.mubr.f32.gmra.mxu0 %v1065
      %v1248 = vpop.f32.mrf.mxu0
      %v1249 = vadd.f32 0.0, %v1248
      %v1250 = vpop.f32.mrf.mxu0
      %1251 = vdwg.mxu0
      %v1252 = vadd.f32 %v1007, %v1134
      %v1253 = vadd.f32 %v1008, %v1136
      %v1254 = vadd.f32 %v1009, %v1229
      %v1255 = vadd.f32 %v1010, %v1140
      %v1256 = vadd.f32 %v1011, %v1142
      %v1257 = vadd.f32 %v1012, %v1234
      %v1258 = vadd.f32 %v1013, %v1146
      %v1259 = vadd.f32 %v1014, %v1148
      %v1260 = vadd.f32 %v1015, %v1239
      %v1261 = vadd.f32 %v1016, %v1152
      %v1262 = vadd.f32 %v1017, %v1154
      %v1263 = vadd.f32 %v1018, %v1244
      %v1264 = vadd.f32 %v1019, %v1158
      %v1265 = vadd.f32 %v1020, %v1160
      %v1266 = vadd.f32 %v1021, %v1249
      %1267 = vst [vmem:[#allocation2] sm:$0xff] %v1252
      %1268 = vst [vmem:[#allocation2 + $0x8] sm:$0xff] %v1253
      %1269 = vst [vmem:[#allocation2 + $0x10] sm:$0xff] %v1254
      %1270 = vst [vmem:[#allocation2 + $0x18] sm:$0xff] %v1255
      %1271 = vst [vmem:[#allocation2 + $0x20] sm:$0xff] %v1256
      %1272 = vst [vmem:[#allocation2 + $0x28] sm:$0xff] %v1257
      %1273 = vst [vmem:[#allocation2 + $0x30] sm:$0xff] %v1258
      %1274 = vst [vmem:[#allocation2 + $0x38] sm:$0xff] %v1259
      %1275 = vst [vmem:[#allocation2 + $0x40] sm:$0xff] %v1260
      %1276 = vst [vmem:[#allocation2 + $0x48] sm:$0xff] %v1261
      %1277 = vst [vmem:[#allocation2 + $0x50] sm:$0xff] %v1262
      %1278 = vst [vmem:[#allocation2 + $0x58] sm:$0xff] %v1263
      %1279 = vst [vmem:[#allocation2 + $0x60] sm:$0xff] %v1264
      %1280 = vst [vmem:[#allocation2 + $0x68] sm:$0xff] %v1265
      %1281 = vst [vmem:[#allocation2 + $0x70] sm:$0xff] %v1266
      %v1282 = vld [vmem:[#allocation2] sm:$0xff]
      %v1283 = vld [vmem:[#allocation2 + $0x8] sm:$0xff]
      %v1284 = vld [vmem:[#allocation2 + $0x10] sm:$0xff]
      %v1285 = vld [vmem:[#allocation2 + $0x18] sm:$0xff]
      %v1286 = vld [vmem:[#allocation2 + $0x20] sm:$0xff]
      %v1287 = vld [vmem:[#allocation2 + $0x28] sm:$0xff]
      %v1288 = vld [vmem:[#allocation2 + $0x30] sm:$0xff]
      %v1289 = vld [vmem:[#allocation2 + $0x38] sm:$0xff]
      %v1290 = vld [vmem:[#allocation2 + $0x40] sm:$0xff]
      %v1291 = vld [vmem:[#allocation2 + $0x48] sm:$0xff]
      %v1292 = vld [vmem:[#allocation2 + $0x50] sm:$0xff]
      %v1293 = vld [vmem:[#allocation2 + $0x58] sm:$0xff]
      %v1294 = vld [vmem:[#allocation2 + $0x60] sm:$0xff]
      %v1295 = vld [vmem:[#allocation2 + $0x68] sm:$0xff]
      %v1296 = vld [vmem:[#allocation2 + $0x70] sm:$0xff]
      %v1297 = vld [vmem:[%s640 + $0x2] sm:$0xff]
      %v1298 = vld [vmem:[%s640 + $0xa] sm:$0xff]
      %v1299 = vld [vmem:[%s640 + $0x12] sm:$0xff]
      %v1300 = vld [vmem:[%s640 + $0x1a] sm:$0xff]
      %v1301 = vld [vmem:[%s640 + $0x22] sm:$0xff]
      %s1302 = scalar_lea.vmem %s2, 384
      %v1303 = vld [vmem:[%s1302] sm:$0xff]
      %v1304 = vld [vmem:[%s1302 + $0x8] sm:$0xff]
      %v1305 = vld [vmem:[%s1302 + $0x10] sm:$0xff]
      %v1306 = vld [vmem:[%s1302 + $0x18] sm:$0xff]
      %v1307 = vld [vmem:[%s1302 + $0x20] sm:$0xff]
      %v1308 = vld [vmem:[%s1302 + $0x28] sm:$0xff]
      %v1309 = vld [vmem:[%s1302 + $0x30] sm:$0xff]
      %v1310 = vld [vmem:[%s1302 + $0x38] sm:$0xff]
      %v1311 = vld [vmem:[%s1302 + $0x40] sm:$0xff]
      %v1312 = vld [vmem:[%s1302 + $0x48] sm:$0xff]
      %v1313 = vld [vmem:[%s1302 + $0x50] sm:$0xff]
      %v1314 = vld [vmem:[%s1302 + $0x58] sm:$0xff]
      %v1315 = vld [vmem:[%s1302 + $0x60] sm:$0xff]
      %v1316 = vld [vmem:[%s1302 + $0x68] sm:$0xff]
      %v1317 = vld [vmem:[%s1302 + $0x70] sm:$0xff]
      %v1318 = vld [vmem:[%s1302 + $0x78] sm:$0xff]
      %v1319 = vld [vmem:[%s1302 + $0x80] sm:$0xff]
      %v1320 = vld [vmem:[%s1302 + $0x88] sm:$0xff]
      %v1321 = vld [vmem:[%s1302 + $0x90] sm:$0xff]
      %v1322 = vld [vmem:[%s1302 + $0x98] sm:$0xff]
      %v1323 = vld [vmem:[%s1302 + $0xa0] sm:$0xff]
      %v1324 = vld [vmem:[%s1302 + $0xa8] sm:$0xff]
      %v1325 = vld [vmem:[%s1302 + $0xb0] sm:$0xff]
      %v1326 = vld [vmem:[%s1302 + $0xb8] sm:$0xff]
      %v1328 = vsel %vm760, %v1297, 0
      %v1331 = vsel %vm760, %v1298, 0
      %v1334 = vsel %vm760, %v1299, 0
      %v1337 = vsel %vm760, %v1300, 0
      %v1340 = vsel %vm760, %v1301, 0
      %1342 = vmatprep.subr.mxu0 0.0
      %1343 = vmatpush1.msra.mxu0 0.0
      %1344 = vmatprep.subr.mxu0 0.0
      %1345 = vmatpush1.msra.mxu0 0.0
      %1346 = vmatprep.subr.mxu0 0.0
      %1347 = vmatpush1.msra.mxu0 0.0
      %1348 = vmatprep.subr.mxu0 0.0
      %1349 = vmatpush1.msra.mxu0 0.0
      %1350 = vmatprep.subr.mxu0 0.0
      %1351 = vmatpush1.msra.mxu0 0.0
      %1352 = vmatprep.subr.mxu0 0.0
      %1353 = vmatpush1.msra.mxu0 0.0
      %1354 = vmatprep.subr.mxu0 0.0
      %1355 = vmatpush1.msra.mxu0 0.0
      %1356 = vmatprep.subr.mxu0 0.0
      %1357 = vmatpush1.msra.mxu0 0.0
      %1358 = vmatprep.subr.mxu0 %v1325
      %1359 = vmatpush1.msra.mxu0 %v1324
      %1360 = vmatprep.subr.mxu0 %v1322
      %1361 = vmatpush1.msra.mxu0 %v1321
      %1362 = vmatprep.subr.mxu0 %v1319
      %1363 = vmatpush1.msra.mxu0 %v1318
      %1364 = vmatprep.subr.mxu0 %v1316
      %1365 = vmatpush1.msra.mxu0 %v1315
      %1366 = vmatprep.subr.mxu0 %v1313
      %1367 = vmatpush1.msra.mxu0 %v1312
      %1368 = vmatprep.subr.mxu0 %v1310
      %1369 = vmatpush1.msra.mxu0 %v1309
      %1370 = vmatprep.subr.mxu0 %v1307
      %1371 = vmatpush1.msra.mxu0 %v1306
      %1372 = vmatprep.subr.mxu0 %v1304
      %1373 = vmatpush1.msra.mxu0 %v1303
      %1374 = vmatprep.subr.mxu0 0.0
      %1375 = vmatpush2.msra.mxu0 0.0
      %1376 = vmatprep.subr.mxu0 0.0
      %1377 = vmatpush2.msra.mxu0 0.0
      %1378 = vmatprep.subr.mxu0 0.0
      %1379 = vmatpush2.msra.mxu0 0.0
      %1380 = vmatprep.subr.mxu0 0.0
      %1381 = vmatpush2.msra.mxu0 0.0
      %1382 = vmatprep.subr.mxu0 0.0
      %1383 = vmatpush2.msra.mxu0 0.0
      %1384 = vmatprep.subr.mxu0 0.0
      %1385 = vmatpush2.msra.mxu0 0.0
      %1386 = vmatprep.subr.mxu0 0.0
      %1387 = vmatpush2.msra.mxu0 0.0
      %1388 = vmatprep.subr.mxu0 0.0
      %1389 = vmatpush2.msra.mxu0 0.0
      %1390 = vmatprep.subr.mxu0 0.0
      %1391 = vmatpush2.msra.mxu0 0.0
      %1392 = vmatprep.subr.mxu0 0.0
      %1393 = vmatpush2.msra.mxu0 0.0
      %1394 = vmatprep.subr.mxu0 0.0
      %1395 = vmatpush2.msra.mxu0 0.0
      %1396 = vmatprep.subr.mxu0 0.0
      %1397 = vmatpush2.msra.mxu0 0.0
      %1398 = vmatprep.subr.mxu0 0.0
      %1399 = vmatpush2.msra.mxu0 0.0
      %1400 = vmatprep.subr.mxu0 0.0
      %1401 = vmatpush2.msra.mxu0 0.0
      %1402 = vmatprep.subr.mxu0 0.0
      %1403 = vmatpush2.msra.mxu0 0.0
      %1404 = vmatprep.subr.mxu0 0.0
      %1405 = vmatpush2.msra.mxu0 0.0
      %1406 = vmatprep.mubr.f32.mxu0 0.0
      %1407 = vmatmul.mubr.f32.gmra.mxu0 %v1328
      %v1408 = vpop.f32.mrf.mxu0
      %v1409 = vadd.f32 0.0, %v1408
      %v1410 = vpop.f32.mrf.mxu0
      %v1411 = vadd.f32 0.0, %v1410
      %1412 = vmatprep.mubr.f32.mxu0 0.0
      %1413 = vmatmul.mubr.f32.gmra.mxu0 %v1331
      %v1414 = vpop.f32.mrf.mxu0
      %v1415 = vadd.f32 0.0, %v1414
      %v1416 = vpop.f32.mrf.mxu0
      %v1417 = vadd.f32 0.0, %v1416
      %1418 = vmatprep.mubr.f32.mxu0 0.0
      %1419 = vmatmul.mubr.f32.gmra.mxu0 %v1334
      %v1420 = vpop.f32.mrf.mxu0
      %v1421 = vadd.f32 0.0, %v1420
      %v1422 = vpop.f32.mrf.mxu0
      %v1423 = vadd.f32 0.0, %v1422
      %1424 = vmatprep.mubr.f32.mxu0 0.0
      %1425 = vmatmul.mubr.f32.gmra.mxu0 %v1337
      %v1426 = vpop.f32.mrf.mxu0
      %v1427 = vadd.f32 0.0, %v1426
      %v1428 = vpop.f32.mrf.mxu0
      %v1429 = vadd.f32 0.0, %v1428
      %1430 = vmatprep.mubr.f32.mxu0 0.0
      %1431 = vmatmul.mubr.f32.gmra.mxu0 %v1340
      %v1432 = vpop.f32.mrf.mxu0
      %v1433 = vadd.f32 0.0, %v1432
      %v1434 = vpop.f32.mrf.mxu0
      %v1435 = vadd.f32 0.0, %v1434
      %1436 = vdwg.mxu0
      %1437 = vmatprep.subr.mxu0 0.0
      %1438 = vmatpush1.msra.mxu0 0.0
      %1439 = vmatprep.subr.mxu0 0.0
      %1440 = vmatpush1.msra.mxu0 0.0
      %1441 = vmatprep.subr.mxu0 0.0
      %1442 = vmatpush1.msra.mxu0 0.0
      %1443 = vmatprep.subr.mxu0 0.0
      %1444 = vmatpush1.msra.mxu0 0.0
      %1445 = vmatprep.subr.mxu0 0.0
      %1446 = vmatpush1.msra.mxu0 0.0
      %1447 = vmatprep.subr.mxu0 0.0
      %1448 = vmatpush1.msra.mxu0 0.0
      %1449 = vmatprep.subr.mxu0 0.0
      %1450 = vmatpush1.msra.mxu0 0.0
      %1451 = vmatprep.subr.mxu0 0.0
      %1452 = vmatpush1.msra.mxu0 0.0
      %1453 = vmatprep.subr.mxu0 0.0
      %1454 = vmatpush1.msra.mxu0 %v1326
      %1455 = vmatprep.subr.mxu0 0.0
      %1456 = vmatpush1.msra.mxu0 %v1323
      %1457 = vmatprep.subr.mxu0 0.0
      %1458 = vmatpush1.msra.mxu0 %v1320
      %1459 = vmatprep.subr.mxu0 0.0
      %1460 = vmatpush1.msra.mxu0 %v1317
      %1461 = vmatprep.subr.mxu0 0.0
      %1462 = vmatpush1.msra.mxu0 %v1314
      %1463 = vmatprep.subr.mxu0 0.0
      %1464 = vmatpush1.msra.mxu0 %v1311
      %1465 = vmatprep.subr.mxu0 0.0
      %1466 = vmatpush1.msra.mxu0 %v1308
      %1467 = vmatprep.subr.mxu0 0.0
      %1468 = vmatpush1.msra.mxu0 %v1305
      %1469 = vmatprep.subr.mxu0 0.0
      %1470 = vmatpush2.msra.mxu0 0.0
      %1471 = vmatprep.subr.mxu0 0.0
      %1472 = vmatpush2.msra.mxu0 0.0
      %1473 = vmatprep.subr.mxu0 0.0
      %1474 = vmatpush2.msra.mxu0 0.0
      %1475 = vmatprep.subr.mxu0 0.0
      %1476 = vmatpush2.msra.mxu0 0.0
      %1477 = vmatprep.subr.mxu0 0.0
      %1478 = vmatpush2.msra.mxu0 0.0
      %1479 = vmatprep.subr.mxu0 0.0
      %1480 = vmatpush2.msra.mxu0 0.0
      %1481 = vmatprep.subr.mxu0 0.0
      %1482 = vmatpush2.msra.mxu0 0.0
      %1483 = vmatprep.subr.mxu0 0.0
      %1484 = vmatpush2.msra.mxu0 0.0
      %1485 = vmatprep.subr.mxu0 0.0
      %1486 = vmatpush2.msra.mxu0 0.0
      %1487 = vmatprep.subr.mxu0 0.0
      %1488 = vmatpush2.msra.mxu0 0.0
      %1489 = vmatprep.subr.mxu0 0.0
      %1490 = vmatpush2.msra.mxu0 0.0
      %1491 = vmatprep.subr.mxu0 0.0
      %1492 = vmatpush2.msra.mxu0 0.0
      %1493 = vmatprep.subr.mxu0 0.0
      %1494 = vmatpush2.msra.mxu0 0.0
      %1495 = vmatprep.subr.mxu0 0.0
      %1496 = vmatpush2.msra.mxu0 0.0
      %1497 = vmatprep.subr.mxu0 0.0
      %1498 = vmatpush2.msra.mxu0 0.0
      %1499 = vmatprep.subr.mxu0 0.0
      %1500 = vmatpush2.msra.mxu0 0.0
      %1501 = vmatprep.mubr.f32.mxu0 0.0
      %1502 = vmatmul.mubr.f32.gmra.mxu0 %v1328
      %v1503 = vpop.f32.mrf.mxu0
      %v1504 = vadd.f32 0.0, %v1503
      %v1505 = vpop.f32.mrf.mxu0
      %1506 = vmatprep.mubr.f32.mxu0 0.0
      %1507 = vmatmul.mubr.f32.gmra.mxu0 %v1331
      %v1508 = vpop.f32.mrf.mxu0
      %v1509 = vadd.f32 0.0, %v1508
      %v1510 = vpop.f32.mrf.mxu0
      %1511 = vmatprep.mubr.f32.mxu0 0.0
      %1512 = vmatmul.mubr.f32.gmra.mxu0 %v1334
      %v1513 = vpop.f32.mrf.mxu0
      %v1514 = vadd.f32 0.0, %v1513
      %v1515 = vpop.f32.mrf.mxu0
      %1516 = vmatprep.mubr.f32.mxu0 0.0
      %1517 = vmatmul.mubr.f32.gmra.mxu0 %v1337
      %v1518 = vpop.f32.mrf.mxu0
      %v1519 = vadd.f32 0.0, %v1518
      %v1520 = vpop.f32.mrf.mxu0
      %1521 = vmatprep.mubr.f32.mxu0 0.0
      %1522 = vmatmul.mubr.f32.gmra.mxu0 %v1340
      %v1523 = vpop.f32.mrf.mxu0
      %v1524 = vadd.f32 0.0, %v1523
      %v1525 = vpop.f32.mrf.mxu0
      %1526 = vdwg.mxu0
      %v1527 = vadd.f32 %v1282, %v1409
      %v1528 = vadd.f32 %v1283, %v1411
      %v1529 = vadd.f32 %v1284, %v1504
      %v1530 = vadd.f32 %v1285, %v1415
      %v1531 = vadd.f32 %v1286, %v1417
      %v1532 = vadd.f32 %v1287, %v1509
      %v1533 = vadd.f32 %v1288, %v1421
      %v1534 = vadd.f32 %v1289, %v1423
      %v1535 = vadd.f32 %v1290, %v1514
      %v1536 = vadd.f32 %v1291, %v1427
      %v1537 = vadd.f32 %v1292, %v1429
      %v1538 = vadd.f32 %v1293, %v1519
      %v1539 = vadd.f32 %v1294, %v1433
      %v1540 = vadd.f32 %v1295, %v1435
      %v1541 = vadd.f32 %v1296, %v1524
      %1542 = vst [vmem:[#allocation2] sm:$0xff] %v1527
      %1543 = vst [vmem:[#allocation2 + $0x8] sm:$0xff] %v1528
      %1544 = vst [vmem:[#allocation2 + $0x10] sm:$0xff] %v1529
      %1545 = vst [vmem:[#allocation2 + $0x18] sm:$0xff] %v1530
      %1546 = vst [vmem:[#allocation2 + $0x20] sm:$0xff] %v1531
      %1547 = vst [vmem:[#allocation2 + $0x28] sm:$0xff] %v1532
      %1548 = vst [vmem:[#allocation2 + $0x30] sm:$0xff] %v1533
      %1549 = vst [vmem:[#allocation2 + $0x38] sm:$0xff] %v1534
      %1550 = vst [vmem:[#allocation2 + $0x40] sm:$0xff] %v1535
      %1551 = vst [vmem:[#allocation2 + $0x48] sm:$0xff] %v1536
      %1552 = vst [vmem:[#allocation2 + $0x50] sm:$0xff] %v1537
      %1553 = vst [vmem:[#allocation2 + $0x58] sm:$0xff] %v1538
      %1554 = vst [vmem:[#allocation2 + $0x60] sm:$0xff] %v1539
      %1555 = vst [vmem:[#allocation2 + $0x68] sm:$0xff] %v1540
      %1556 = vst [vmem:[#allocation2 + $0x70] sm:$0xff] %v1541
      %v1557 = vld [vmem:[#allocation2] sm:$0xff]
      %v1558 = vld [vmem:[#allocation2 + $0x8] sm:$0xff]
      %v1559 = vld [vmem:[#allocation2 + $0x10] sm:$0xff]
      %v1560 = vld [vmem:[#allocation2 + $0x18] sm:$0xff]
      %v1561 = vld [vmem:[#allocation2 + $0x20] sm:$0xff]
      %v1562 = vld [vmem:[#allocation2 + $0x28] sm:$0xff]
      %v1563 = vld [vmem:[#allocation2 + $0x30] sm:$0xff]
      %v1564 = vld [vmem:[#allocation2 + $0x38] sm:$0xff]
      %v1565 = vld [vmem:[#allocation2 + $0x40] sm:$0xff]
      %v1566 = vld [vmem:[#allocation2 + $0x48] sm:$0xff]
      %v1567 = vld [vmem:[#allocation2 + $0x50] sm:$0xff]
      %v1568 = vld [vmem:[#allocation2 + $0x58] sm:$0xff]
      %v1569 = vld [vmem:[#allocation2 + $0x60] sm:$0xff]
      %v1570 = vld [vmem:[#allocation2 + $0x68] sm:$0xff]
      %v1571 = vld [vmem:[#allocation2 + $0x70] sm:$0xff]
      %vm1572 = vcmp.ge.f32.partialorder %v1557, 0.0
      %vm1573 = vcmp.ge.f32.partialorder %v1558, 0.0
      %vm1574 = vcmp.ge.f32.partialorder %v1559, 0.0
      %vm1575 = vcmp.ge.f32.partialorder %v1560, 0.0
      %vm1576 = vcmp.ge.f32.partialorder %v1561, 0.0
      %vm1577 = vcmp.ge.f32.partialorder %v1562, 0.0
      %vm1578 = vcmp.ge.f32.partialorder %v1563, 0.0
      %vm1579 = vcmp.ge.f32.partialorder %v1564, 0.0
      %vm1580 = vcmp.ge.f32.partialorder %v1565, 0.0
      %vm1581 = vcmp.ge.f32.partialorder %v1566, 0.0
      %vm1582 = vcmp.ge.f32.partialorder %v1567, 0.0
      %vm1583 = vcmp.ge.f32.partialorder %v1568, 0.0
      %vm1584 = vcmp.ge.f32.partialorder %v1569, 0.0
      %vm1585 = vcmp.ge.f32.partialorder %v1570, 0.0
      %vm1586 = vcmp.ge.f32.partialorder %v1571, 0.0
      %v1587 = vmul.f32 %v1557, 0.2
      %v1588 = vmul.f32 %v1558, 0.2
      %v1589 = vmul.f32 %v1559, 0.2
      %v1590 = vmul.f32 %v1560, 0.2
      %v1591 = vmul.f32 %v1561, 0.2
      %v1592 = vmul.f32 %v1562, 0.2
      %v1593 = vmul.f32 %v1563, 0.2
      %v1594 = vmul.f32 %v1564, 0.2
      %v1595 = vmul.f32 %v1565, 0.2
      %v1596 = vmul.f32 %v1566, 0.2
      %v1597 = vmul.f32 %v1567, 0.2
      %v1598 = vmul.f32 %v1568, 0.2
      %v1599 = vmul.f32 %v1569, 0.2
      %v1600 = vmul.f32 %v1570, 0.2
      %v1601 = vmul.f32 %v1571, 0.2
      %v1602 = vsel %vm1572, %v1557, %v1587
      %v1603 = vsel %vm1573, %v1558, %v1588
      %v1604 = vsel %vm1574, %v1559, %v1589
      %v1605 = vsel %vm1575, %v1560, %v1590
      %v1606 = vsel %vm1576, %v1561, %v1591
      %v1607 = vsel %vm1577, %v1562, %v1592
      %v1608 = vsel %vm1578, %v1563, %v1593
      %v1609 = vsel %vm1579, %v1564, %v1594
      %v1610 = vsel %vm1580, %v1565, %v1595
      %v1611 = vsel %vm1581, %v1566, %v1596
      %v1612 = vsel %vm1582, %v1567, %v1597
      %v1613 = vsel %vm1583, %v1568, %v1598
      %v1614 = vsel %vm1584, %v1569, %v1599
      %v1615 = vsel %vm1585, %v1570, %v1600
      %v1616 = vsel %vm1586, %v1571, %v1601
      %1617 = vst [vmem:[%s647] sm:$0xff] %v1602
      %1618 = vst [vmem:[%s647 + $0x8] sm:$0xff] %v1603
      %1619 = vst [vmem:[%s647 + $0x10] sm:$0xff] %v1604
      %1620 = vst [vmem:[%s647 + $0x18] sm:$0xff] %v1605
      %1621 = vst [vmem:[%s647 + $0x20] sm:$0xff] %v1606
      %1622 = vst [vmem:[%s647 + $0x28] sm:$0xff] %v1607
      %s1623 = scalar_lea.vmem %s647, 48
      %1624 = vst [vmem:[%s1623] sm:$0xff] %v1611
      %1625 = vst [vmem:[%s1623 + $0x8] sm:$0xff] %v1612
      %1626 = vst [vmem:[%s1623 + $0x10] sm:$0xff] %v1613
      %1627 = vst [vmem:[%s1623 + $0x18] sm:$0xff] %v1614
      %1628 = vst [vmem:[%s1623 + $0x20] sm:$0xff] %v1615
      %1629 = vst [vmem:[%s1623 + $0x28] sm:$0xff] %v1616
      %1631 = vset.pattern.permute.xlu0 0
      %1632 = vperm.xlu0 %1631, %v725
      %v1633 = vpop.permute.xlu0 %1632
      %1636 = vset.pattern.permute.xlu0 0
      %1637 = vperm.xlu0 %1636, %v726
      %v1638 = vpop.permute.xlu0 %1637
      %1641 = vset.pattern.permute.xlu0 0
      %1642 = vperm.xlu0 %1641, %v727
      %v1643 = vpop.permute.xlu0 %1642
      %1646 = vset.pattern.permute.xlu0 0
      %1647 = vperm.xlu0 %1646, %v728
      %v1648 = vpop.permute.xlu0 %1647
      %1651 = vset.pattern.permute.xlu0 0
      %1652 = vperm.xlu0 %1651, %v729
      %v1653 = vpop.permute.xlu0 %1652
      %v1655 = vmul.f32 %v1602, %v1633
      %v1656 = vmul.f32 %v1603, %v1633
      %v1657 = vmul.f32 %v1604, %v1633
      %v1658 = vmul.f32 %v1605, %v1638
      %v1659 = vmul.f32 %v1606, %v1638
      %v1660 = vmul.f32 %v1607, %v1638
      %v1661 = vmul.f32 %v1608, %v1643
      %v1662 = vmul.f32 %v1609, %v1643
      %v1663 = vmul.f32 %v1610, %v1643
      %v1664 = vmul.f32 %v1611, %v1648
      %v1665 = vmul.f32 %v1612, %v1648
      %v1666 = vmul.f32 %v1613, %v1648
      %v1667 = vmul.f32 %v1614, %v1653
      %v1668 = vmul.f32 %v1615, %v1653
      %v1669 = vmul.f32 %v1616, %v1653
      %v1670 = vpack.c.bf16 %v1658, %v1655
      %v1671 = vpack.c.bf16 %v1659, %v1656
      %v1672 = vpack.c.bf16 %v1660, %v1657
      %v1673 = vpack.c.bf16 %v1664, %v1661
      %v1674 = vpack.c.bf16 %v1665, %v1662
      %v1675 = vpack.c.bf16 %v1666, %v1663
      %v1676 = vpack.c.bf16 %v1667, %v1667
      %v1677 = vpack.c.bf16 %v1668, %v1668
      %v1678 = vpack.c.bf16 %v1669, %v1669
      %v1688 = vunpack.c.l.b16 %v1670
      %v1689 = vunpack.c.l.b16 %v1671
      %v1690 = vunpack.c.l.b16 %v1672
      %v1691 = vunpack.c.h.b16 %v1670
      %v1692 = vunpack.c.h.b16 %v1671
      %v1693 = vunpack.c.h.b16 %v1672
      %v1694 = vunpack.c.l.b16 %v1673
      %v1695 = vunpack.c.l.b16 %v1674
      %v1696 = vunpack.c.l.b16 %v1675
      %v1697 = vunpack.c.h.b16 %v1673
      %v1698 = vunpack.c.h.b16 %v1674
      %v1699 = vunpack.c.h.b16 %v1675
      %v1700 = vunpack.c.l.b16 %v1676
      %v1701 = vunpack.c.l.b16 %v1677
      %v1702 = vunpack.c.l.b16 %v1678
      %v1703 = vpack.c.b16 %v1689, %v1688
      %v1704 = vpack.c.b16 %v1690, %v1690
      %v1705 = vpack.c.b16 %v1692, %v1691
      %v1706 = vpack.c.b16 %v1693, %v1693
      %v1707 = vpack.c.b16 %v1695, %v1694
      %v1708 = vpack.c.b16 %v1696, %v1696
      %v1709 = vpack.c.b16 %v1698, %v1697
      %v1710 = vpack.c.b16 %v1699, %v1699
      %v1711 = vpack.c.b16 %v1701, %v1700
      %v1712 = vpack.c.b16 %v1702, %v1702
      %vm1713 = vsmask.f32 4368
      %vm1714 = vmor %vm686, %vm1713
      %v1716 = vshrl.u32 %v1703, 16
      %v1718 = vrot.slane %v1716, 7
      %v1719 = vshll.u32 %v1703, 16
      %v1721 = vor.u32 %v1718, %v1719
      %v1723 = vshrl.u32 %v1704, 16
      %v1725 = vrot.slane %v1723, 7
      %v1726 = vshll.u32 %v1704, 16
      %v1728 = vor.u32 %v1725, %v1726
      %v1729 = vrot.slane %v1718, 4
      %v1731 = vshrl.u32 %v1705, 16
      %v1733 = vrot.slane %v1731, 7
      %v1734 = vshll.u32 %v1705, 16
      %v1736 = vor.u32 %v1733, %v1734
      %v1737 = vsel %vm1714, %v1729, %v1736
      %v1738 = vrot.slane %v1725, 4
      %v1740 = vshrl.u32 %v1706, 16
      %v1742 = vrot.slane %v1740, 7
      %v1743 = vshll.u32 %v1706, 16
      %v1745 = vor.u32 %v1742, %v1743
      %v1746 = vsel %vm1714, %v1738, %v1745
      %v1747 = vrot.slane %v1733, 4
      %v1749 = vshrl.u32 %v1707, 16
      %v1751 = vrot.slane %v1749, 7
      %v1752 = vshll.u32 %v1707, 16
      %v1754 = vor.u32 %v1751, %v1752
      %v1755 = vsel %vm1714, %v1747, %v1754
      %v1756 = vrot.slane %v1742, 4
      %v1758 = vshrl.u32 %v1708, 16
      %v1760 = vrot.slane %v1758, 7
      %v1761 = vshll.u32 %v1708, 16
      %v1763 = vor.u32 %v1760, %v1761
      %v1764 = vsel %vm1714, %v1756, %v1763
      %v1765 = vrot.slane %v1751, 4
      %v1767 = vshrl.u32 %v1709, 16
      %v1769 = vrot.slane %v1767, 7
      %v1770 = vshll.u32 %v1709, 16
      %v1772 = vor.u32 %v1769, %v1770
      %v1773 = vsel %vm1714, %v1765, %v1772
      %v1774 = vrot.slane %v1760, 4
      %v1776 = vshrl.u32 %v1710, 16
      %v1778 = vrot.slane %v1776, 7
      %v1779 = vshll.u32 %v1710, 16
      %v1781 = vor.u32 %v1778, %v1779
      %v1782 = vsel %vm1714, %v1774, %v1781
      %v1783 = vrot.slane %v1769, 4
      %v1785 = vshrl.u32 %v1711, 16
      %v1787 = vrot.slane %v1785, 7
      %v1788 = vshll.u32 %v1711, 16
      %v1790 = vor.u32 %v1787, %v1788
      %v1791 = vsel %vm1714, %v1783, %v1790
      %v1792 = vrot.slane %v1778, 4
      %v1794 = vshrl.u32 %v1712, 16
      %v1796 = vrot.slane %v1794, 7
      %v1797 = vshll.u32 %v1712, 16
      %v1799 = vor.u32 %v1796, %v1797
      %v1800 = vsel %vm1714, %v1792, %v1799
      %v1801 = vrot.slane %v1787, 4
      %v1802 = vrot.slane %v1796, 4
      %vm1815 = vcmask 1043456
      %vm1816 = vmand %vm1815, %vm698
      %vm1817 = vcmask 1047556
      %vm1818 = vmand %vm1817, %vm700
      %vm1819 = vmor %vm1818, %vm1816
      %v1820 = vld [vmem:[#allocation3] sm:$0xff]
      %v1821 = vsel %vm1819, %v1721, %v1820
      %1822 = vst [vmem:[#allocation3] sm:$0xff] %v1821
      %v1823 = vld [vmem:[#allocation3 + $0x8] sm:$0xf]
      %v1824 = vsel %vm1816, %v1728, %v1823
      %1825 = vst [vmem:[#allocation3 + $0x8] sm:$0xf] %v1824
      %1826 = vst [vmem:[#allocation3 + $0xc] sm:$0xff] %v1737
      %1827 = vst [vmem:[#allocation3 + $0x14] sm:$0xf] %v1746
      %1828 = vst [vmem:[#allocation3 + $0x18] sm:$0xff] %v1755
      %1829 = vst [vmem:[#allocation3 + $0x20] sm:$0xf] %v1764
      %1830 = vst [vmem:[#allocation3 + $0x24] sm:$0xff] %v1773
      %1831 = vst [vmem:[#allocation3 + $0x2c] sm:$0xf] %v1782
      %1832 = vst [vmem:[#allocation3 + $0x30] sm:$0xff] %v1791
      %1833 = vst [vmem:[#allocation3 + $0x38] sm:$0xf] %v1800
      %v1834 = vld [vmem:[#allocation3 + $0x3c] sm:$0x11]
      %v1835 = vsel %vm691, %v1801, %v1834
      %1836 = vst [vmem:[#allocation3 + $0x3c] sm:$0x11] %v1835
      %v1837 = vld [vmem:[#allocation3 + $0x44] sm:$0x1]
      %v1838 = vsel %vm687, %v1802, %v1837
      %1839 = vst [vmem:[#allocation3 + $0x44] sm:$0x1] %v1838
      %v1840 = vld [vmem:[%s9] sm:$0x3]
      %v1841 = vld [vmem:[#allocation3] sm:$0xff]
      %v1842 = vld [vmem:[#allocation3 + $0x8] sm:$0xf]
      %v1843 = vld [vmem:[#allocation3 + $0xc] sm:$0xff]
      %v1844 = vld [vmem:[#allocation3 + $0x14] sm:$0xf]
      %v1845 = vld [vmem:[#allocation3 + $0x18] sm:$0xff]
      %v1846 = vld [vmem:[#allocation3 + $0x20] sm:$0xf]
      %v1847 = vld [vmem:[#allocation3 + $0x24] sm:$0xff]
      %v1848 = vld [vmem:[#allocation3 + $0x2c] sm:$0xf]
      %v1849 = vld [vmem:[#allocation3 + $0x30] sm:$0xff]
      %v1850 = vld [vmem:[#allocation3 + $0x38] sm:$0xf]
      %v1851 = vld [vmem:[%s3] sm:$0xff]
      %v1852 = vld [vmem:[%s3 + $0x8] sm:$0xff]
      %v1853 = vld [vmem:[%s3 + $0x10] sm:$0xff]
      %v1854 = vld [vmem:[%s3 + $0x18] sm:$0xff]
      %v1855 = vld [vmem:[%s3 + $0x20] sm:$0xff]
      %v1856 = vld [vmem:[%s3 + $0x28] sm:$0xff]
      %v1857 = vld [vmem:[%s3 + $0x30] sm:$0xff]
      %v1858 = vld [vmem:[%s3 + $0x38] sm:$0xff]
      %v1859 = vld [vmem:[%s3 + $0x40] sm:$0xff]
      %v1860 = vld [vmem:[%s3 + $0x48] sm:$0xff]
      %v1861 = vld [vmem:[%s3 + $0x50] sm:$0xff]
      %v1862 = vld [vmem:[%s3 + $0x58] sm:$0xff]
      %v1863 = vld [vmem:[%s3 + $0x60] sm:$0xff]
      %v1864 = vld [vmem:[%s3 + $0x68] sm:$0xff]
      %v1865 = vld [vmem:[%s3 + $0x70] sm:$0xff]
      %v1866 = vld [vmem:[%s3 + $0x78] sm:$0xff]
      %v1867 = vld [vmem:[%s3 + $0x80] sm:$0xff]
      %v1868 = vld [vmem:[%s3 + $0x88] sm:$0xff]
      %v1869 = vld [vmem:[%s3 + $0x90] sm:$0xff]
      %v1870 = vld [vmem:[%s3 + $0x98] sm:$0xff]
      %v1871 = vld [vmem:[%s3 + $0xa0] sm:$0xff]
      %v1872 = vld [vmem:[%s3 + $0xa8] sm:$0xff]
      %v1873 = vld [vmem:[%s3 + $0xb0] sm:$0xff]
      %v1874 = vld [vmem:[%s3 + $0xb8] sm:$0xff]
      %v1875 = vld [vmem:[%s3 + $0xc0] sm:$0xff]
      %v1876 = vld [vmem:[%s3 + $0xc8] sm:$0xff]
      %v1877 = vld [vmem:[%s3 + $0xd0] sm:$0xff]
      %v1878 = vld [vmem:[%s3 + $0xd8] sm:$0xff]
      %v1879 = vld [vmem:[%s3 + $0xe0] sm:$0xff]
      %v1880 = vld [vmem:[%s3 + $0xe8] sm:$0xff]
      %v1881 = vld [vmem:[%s3 + $0xf0] sm:$0xff]
      %v1882 = vld [vmem:[%s3 + $0xf8] sm:$0xff]
      %v1883 = vld [vmem:[%s3 + $0x100] sm:$0xff]
      %v1884 = vld [vmem:[%s3 + $0x108] sm:$0xff]
      %v1885 = vld [vmem:[%s3 + $0x110] sm:$0xff]
      %v1886 = vld [vmem:[%s3 + $0x118] sm:$0xff]
      %v1887 = vld [vmem:[%s3 + $0x120] sm:$0xff]
      %v1888 = vld [vmem:[%s3 + $0x128] sm:$0xff]
      %v1889 = vld [vmem:[%s3 + $0x130] sm:$0xff]
      %v1890 = vld [vmem:[%s3 + $0x138] sm:$0xff]
      %v1891 = vld [vmem:[%s3 + $0x140] sm:$0xff]
      %v1892 = vld [vmem:[%s3 + $0x148] sm:$0xff]
      %v1893 = vld [vmem:[%s3 + $0x150] sm:$0xff]
      %v1894 = vld [vmem:[%s3 + $0x158] sm:$0xff]
      %v1895 = vld [vmem:[%s3 + $0x160] sm:$0xff]
      %v1896 = vld [vmem:[%s3 + $0x168] sm:$0xff]
      %v1897 = vld [vmem:[%s3 + $0x170] sm:$0xff]
      %v1898 = vld [vmem:[%s3 + $0x178] sm:$0xff]
      %v1909 = vunpack.c.l.b16 %v1841
      %v1910 = vunpack.c.h.b16 %v1841
      %v1911 = vunpack.c.l.b16 %v1842
      %v1912 = vunpack.c.l.b16 %v1843
      %v1913 = vunpack.c.h.b16 %v1843
      %v1914 = vunpack.c.l.b16 %v1844
      %v1915 = vunpack.c.l.b16 %v1845
      %v1916 = vunpack.c.h.b16 %v1845
      %v1917 = vunpack.c.l.b16 %v1846
      %v1918 = vunpack.c.l.b16 %v1847
      %v1919 = vunpack.c.h.b16 %v1847
      %v1920 = vunpack.c.l.b16 %v1848
      %v1921 = vunpack.c.l.b16 %v1849
      %v1922 = vunpack.c.h.b16 %v1849
      %v1923 = vunpack.c.l.b16 %v1850
      %v1924 = vpack.c.b16 %v1912, %v1909
      %v1925 = vpack.c.b16 %v1913, %v1910
      %v1926 = vpack.c.b16 %v1914, %v1911
      %v1927 = vpack.c.b16 %v1918, %v1915
      %v1928 = vpack.c.b16 %v1919, %v1916
      %v1929 = vpack.c.b16 %v1920, %v1917
      %v1930 = vpack.c.b16 %v1921, %v1921
      %v1931 = vpack.c.b16 %v1922, %v1922
      %v1932 = vpack.c.b16 %v1923, %v1923
      %v1990 = vunpack.c.l.b16 %v1851
      %v1991 = vunpack.c.h.b16 %v1851
      %v1992 = vunpack.c.l.b16 %v1852
      %v1993 = vunpack.c.h.b16 %v1852
      %v1994 = vunpack.c.l.b16 %v1853
      %v1995 = vunpack.c.h.b16 %v1853
      %v1996 = vunpack.c.l.b16 %v1854
      %v1997 = vunpack.c.h.b16 %v1854
      %v1998 = vunpack.c.l.b16 %v1855
      %v1999 = vunpack.c.h.b16 %v1855
      %v2000 = vunpack.c.l.b16 %v1856
      %v2001 = vunpack.c.h.b16 %v1856
      %v2002 = vunpack.c.l.b16 %v1857
      %v2003 = vunpack.c.h.b16 %v1857
      %v2004 = vunpack.c.l.b16 %v1858
      %v2005 = vunpack.c.h.b16 %v1858
      %v2006 = vunpack.c.l.b16 %v1859
      %v2007 = vunpack.c.h.b16 %v1859
      %v2008 = vunpack.c.l.b16 %v1860
      %v2009 = vunpack.c.h.b16 %v1860
      %v2010 = vunpack.c.l.b16 %v1861
      %v2011 = vunpack.c.h.b16 %v1861
      %v2012 = vunpack.c.l.b16 %v1862
      %v2013 = vunpack.c.h.b16 %v1862
      %v2014 = vunpack.c.l.b16 %v1863
      %v2015 = vunpack.c.h.b16 %v1863
      %v2016 = vunpack.c.l.b16 %v1864
      %v2017 = vunpack.c.h.b16 %v1864
      %v2018 = vunpack.c.l.b16 %v1865
      %v2019 = vunpack.c.h.b16 %v1865
      %v2020 = vunpack.c.l.b16 %v1866
      %v2021 = vunpack.c.h.b16 %v1866
      %v2022 = vunpack.c.l.b16 %v1867
      %v2023 = vunpack.c.h.b16 %v1867
      %v2024 = vunpack.c.l.b16 %v1868
      %v2025 = vunpack.c.h.b16 %v1868
      %v2026 = vunpack.c.l.b16 %v1869
      %v2027 = vunpack.c.h.b16 %v1869
      %v2028 = vunpack.c.l.b16 %v1870
      %v2029 = vunpack.c.h.b16 %v1870
      %v2030 = vunpack.c.l.b16 %v1871
      %v2031 = vunpack.c.h.b16 %v1871
      %v2032 = vunpack.c.l.b16 %v1872
      %v2033 = vunpack.c.h.b16 %v1872
      %v2034 = vunpack.c.l.b16 %v1873
      %v2035 = vunpack.c.h.b16 %v1873
      %v2036 = vunpack.c.l.b16 %v1874
      %v2037 = vunpack.c.h.b16 %v1874
      %v2038 = vunpack.c.l.b16 %v1875
      %v2039 = vunpack.c.h.b16 %v1875
      %v2040 = vunpack.c.l.b16 %v1876
      %v2041 = vunpack.c.h.b16 %v1876
      %v2042 = vunpack.c.l.b16 %v1877
      %v2043 = vunpack.c.h.b16 %v1877
      %v2044 = vunpack.c.l.b16 %v1878
      %v2045 = vunpack.c.h.b16 %v1878
      %v2046 = vunpack.c.l.b16 %v1879
      %v2047 = vunpack.c.h.b16 %v1879
      %v2048 = vunpack.c.l.b16 %v1880
      %v2049 = vunpack.c.h.b16 %v1880
      %v2050 = vunpack.c.l.b16 %v1881
      %v2051 = vunpack.c.h.b16 %v1881
      %v2052 = vunpack.c.l.b16 %v1882
      %v2053 = vunpack.c.h.b16 %v1882
      %v2054 = vunpack.c.l.b16 %v1883
      %v2055 = vunpack.c.h.b16 %v1883
      %v2056 = vunpack.c.l.b16 %v1884
      %v2057 = vunpack.c.h.b16 %v1884
      %v2058 = vunpack.c.l.b16 %v1885
      %v2059 = vunpack.c.h.b16 %v1885
      %v2060 = vunpack.c.l.b16 %v1886
      %v2061 = vunpack.c.h.b16 %v1886
      %v2062 = vunpack.c.l.b16 %v1887
      %v2063 = vunpack.c.h.b16 %v1887
      %v2064 = vunpack.c.l.b16 %v1888
      %v2065 = vunpack.c.h.b16 %v1888
      %v2066 = vunpack.c.l.b16 %v1889
      %v2067 = vunpack.c.h.b16 %v1889
      %v2068 = vunpack.c.l.b16 %v1890
      %v2069 = vunpack.c.h.b16 %v1890
      %v2070 = vunpack.c.l.b16 %v1891
      %v2071 = vunpack.c.h.b16 %v1891
      %v2072 = vunpack.c.l.b16 %v1892
      %v2073 = vunpack.c.h.b16 %v1892
      %v2074 = vunpack.c.l.b16 %v1893
      %v2075 = vunpack.c.h.b16 %v1893
      %v2076 = vunpack.c.l.b16 %v1894
      %v2077 = vunpack.c.h.b16 %v1894
      %v2078 = vunpack.c.l.b16 %v1895
      %v2079 = vunpack.c.h.b16 %v1895
      %v2080 = vunpack.c.l.b16 %v1896
      %v2081 = vunpack.c.h.b16 %v1896
      %v2082 = vunpack.c.l.b16 %v1897
      %v2083 = vunpack.c.h.b16 %v1897
      %v2084 = vunpack.c.l.b16 %v1898
      %v2085 = vunpack.c.h.b16 %v1898
      %v2086 = vpack.c.b16 %v1992, %v1990
      %v2087 = vpack.c.b16 %v1993, %v1991
      %v2088 = vpack.c.b16 %v1996, %v1994
      %v2089 = vpack.c.b16 %v1997, %v1995
      %v2090 = vpack.c.b16 %v2000, %v1998
      %v2091 = vpack.c.b16 %v2001, %v1999
      %v2092 = vpack.c.b16 %v2004, %v2002
      %v2093 = vpack.c.b16 %v2005, %v2003
      %v2094 = vpack.c.b16 %v2008, %v2006
      %v2095 = vpack.c.b16 %v2009, %v2007
      %v2096 = vpack.c.b16 %v2012, %v2010
      %v2097 = vpack.c.b16 %v2013, %v2011
      %v2098 = vpack.c.b16 %v2016, %v2014
      %v2099 = vpack.c.b16 %v2017, %v2015
      %v2100 = vpack.c.b16 %v2020, %v2018
      %v2101 = vpack.c.b16 %v2021, %v2019
      %v2102 = vpack.c.b16 %v2024, %v2022
      %v2103 = vpack.c.b16 %v2025, %v2023
      %v2104 = vpack.c.b16 %v2028, %v2026
      %v2105 = vpack.c.b16 %v2029, %v2027
      %v2106 = vpack.c.b16 %v2032, %v2030
      %v2107 = vpack.c.b16 %v2033, %v2031
      %v2108 = vpack.c.b16 %v2036, %v2034
      %v2109 = vpack.c.b16 %v2037, %v2035
      %v2110 = vpack.c.b16 %v2040, %v2038
      %v2111 = vpack.c.b16 %v2041, %v2039
      %v2112 = vpack.c.b16 %v2044, %v2042
      %v2113 = vpack.c.b16 %v2045, %v2043
      %v2114 = vpack.c.b16 %v2048, %v2046
      %v2115 = vpack.c.b16 %v2049, %v2047
      %v2116 = vpack.c.b16 %v2052, %v2050
      %v2117 = vpack.c.b16 %v2053, %v2051
      %v2118 = vpack.c.b16 %v2056, %v2054
      %v2119 = vpack.c.b16 %v2057, %v2055
      %v2120 = vpack.c.b16 %v2060, %v2058
      %v2121 = vpack.c.b16 %v2061, %v2059
      %v2122 = vpack.c.b16 %v2064, %v2062
      %v2123 = vpack.c.b16 %v2065, %v2063
      %v2124 = vpack.c.b16 %v2068, %v2066
      %v2125 = vpack.c.b16 %v2069, %v2067
      %v2126 = vpack.c.b16 %v2072, %v2070
      %v2127 = vpack.c.b16 %v2073, %v2071
      %v2128 = vpack.c.b16 %v2076, %v2074
      %v2129 = vpack.c.b16 %v2077, %v2075
      %v2130 = vpack.c.b16 %v2080, %v2078
      %v2131 = vpack.c.b16 %v2081, %v2079
      %v2132 = vpack.c.b16 %v2084, %v2082
      %v2133 = vpack.c.b16 %v2085, %v2083
      %2182 = vmatprep.subr.bf16.mxu0 %v2101
      %2183 = vmatpush1.bf16.msra.mxu0 %v2100
      %2184 = vmatprep.subr.bf16.mxu0 %v2099
      %2185 = vmatpush1.bf16.msra.mxu0 %v2098
      %2186 = vmatprep.subr.bf16.mxu0 %v2097
      %2187 = vmatpush1.bf16.msra.mxu0 %v2096
      %2188 = vmatprep.subr.bf16.mxu0 %v2095
      %2189 = vmatpush1.bf16.msra.mxu0 %v2094
      %2190 = vmatprep.subr.bf16.mxu0 %v2093
      %2191 = vmatpush1.bf16.msra.mxu0 %v2092
      %2192 = vmatprep.subr.bf16.mxu0 %v2091
      %2193 = vmatpush1.bf16.msra.mxu0 %v2090
      %2194 = vmatprep.subr.bf16.mxu0 %v2089
      %2195 = vmatpush1.bf16.msra.mxu0 %v2088
      %2196 = vmatprep.subr.bf16.mxu0 %v2087
      %2197 = vmatpush1.bf16.msra.mxu0 %v2086
      %2198 = vmatprep.subr.bf16.mxu0 %v2117
      %2199 = vmatpush2.bf16.msra.mxu0 %v2116
      %2200 = vmatprep.subr.bf16.mxu0 %v2115
      %2201 = vmatpush2.bf16.msra.mxu0 %v2114
      %2202 = vmatprep.subr.bf16.mxu0 %v2113
      %2203 = vmatpush2.bf16.msra.mxu0 %v2112
      %2204 = vmatprep.subr.bf16.mxu0 %v2111
      %2205 = vmatpush2.bf16.msra.mxu0 %v2110
      %2206 = vmatprep.subr.bf16.mxu0 %v2109
      %2207 = vmatpush2.bf16.msra.mxu0 %v2108
      %2208 = vmatprep.subr.bf16.mxu0 %v2107
      %2209 = vmatpush2.bf16.msra.mxu0 %v2106
      %2210 = vmatprep.subr.bf16.mxu0 %v2105
      %2211 = vmatpush2.bf16.msra.mxu0 %v2104
      %2212 = vmatprep.subr.bf16.mxu0 %v2103
      %2213 = vmatpush2.bf16.msra.mxu0 %v2102
      %2214 = vmatprep.mubr.bf16.mxu0 %v1925
      %2215 = vmatmul.mubr.bf16.gmra.mxu0 %v1924
      %v2216 = vpop.f32.mrf.mxu0
      %v2217 = vadd.f32 0.0, %v2216
      %v2218 = vpop.f32.mrf.mxu0
      %v2219 = vadd.f32 0.0, %v2218
      %v2220 = vpop.f32.mrf.mxu0
      %v2221 = vadd.f32 0.0, %v2220
      %v2222 = vpop.f32.mrf.mxu0
      %v2223 = vadd.f32 0.0, %v2222
      %2224 = vmatprep.mubr.bf16.mxu0 %v1928
      %2225 = vmatmul.mubr.bf16.gmra.mxu0 %v1927
      %v2226 = vpop.f32.mrf.mxu0
      %v2227 = vadd.f32 0.0, %v2226
      %v2228 = vpop.f32.mrf.mxu0
      %v2229 = vadd.f32 0.0, %v2228
      %v2230 = vpop.f32.mrf.mxu0
      %v2231 = vadd.f32 0.0, %v2230
      %v2232 = vpop.f32.mrf.mxu0
      %v2233 = vadd.f32 0.0, %v2232
      %2234 = vmatprep.mubr.bf16.mxu0 %v1931
      %2235 = vmatmul.mubr.bf16.gmra.mxu0 %v1930
      %v2236 = vpop.f32.mrf.mxu0
      %v2237 = vadd.f32 0.0, %v2236
      %v2238 = vpop.f32.mrf.mxu0
      %v2239 = vadd.f32 0.0, %v2238
      %v2240 = vpop.f32.mrf.mxu0
      %v2241 = vpop.f32.mrf.mxu0
      %2242 = vdwg.mxu0
      %2243 = vmatprep.subr.bf16.mxu0 %v2133
      %2244 = vmatpush1.bf16.msra.mxu0 %v2132
      %2245 = vmatprep.subr.bf16.mxu0 %v2131
      %2246 = vmatpush1.bf16.msra.mxu0 %v2130
      %2247 = vmatprep.subr.bf16.mxu0 %v2129
      %2248 = vmatpush1.bf16.msra.mxu0 %v2128
      %2249 = vmatprep.subr.bf16.mxu0 %v2127
      %2250 = vmatpush1.bf16.msra.mxu0 %v2126
      %2251 = vmatprep.subr.bf16.mxu0 %v2125
      %2252 = vmatpush1.bf16.msra.mxu0 %v2124
      %2253 = vmatprep.subr.bf16.mxu0 %v2123
      %2254 = vmatpush1.bf16.msra.mxu0 %v2122
      %2255 = vmatprep.subr.bf16.mxu0 %v2121
      %2256 = vmatpush1.bf16.msra.mxu0 %v2120
      %2257 = vmatprep.subr.bf16.mxu0 %v2119
      %2258 = vmatpush1.bf16.msra.mxu0 %v2118
      %2259 = vmatprep.subr.bf16.mxu0 0
      %2260 = vmatpush2.bf16.msra.mxu0 0
      %2261 = vmatprep.subr.bf16.mxu0 0
      %2262 = vmatpush2.bf16.msra.mxu0 0
      %2263 = vmatprep.subr.bf16.mxu0 0
      %2264 = vmatpush2.bf16.msra.mxu0 0
      %2265 = vmatprep.subr.bf16.mxu0 0
      %2266 = vmatpush2.bf16.msra.mxu0 0
      %2267 = vmatprep.subr.bf16.mxu0 0
      %2268 = vmatpush2.bf16.msra.mxu0 0
      %2269 = vmatprep.subr.bf16.mxu0 0
      %2270 = vmatpush2.bf16.msra.mxu0 0
      %2271 = vmatprep.subr.bf16.mxu0 0
      %2272 = vmatpush2.bf16.msra.mxu0 0
      %2273 = vmatprep.subr.bf16.mxu0 0
      %2274 = vmatpush2.bf16.msra.mxu0 0
      %2275 = vmatprep.mubr.bf16.mxu0 0
      %2276 = vmatmul.mubr.bf16.gmra.mxu0 %v1926
      %v2277 = vpop.f32.mrf.mxu0
      %v2278 = vadd.f32 %v2217, %v2277
      %v2279 = vpop.f32.mrf.mxu0
      %v2280 = vadd.f32 %v2219, %v2279
      %v2281 = vpop.f32.mrf.mxu0
      %v2282 = vadd.f32 %v2221, %v2281
      %v2283 = vpop.f32.mrf.mxu0
      %v2284 = vadd.f32 %v2223, %v2283
      %2285 = vmatprep.mubr.bf16.mxu0 0
      %2286 = vmatmul.mubr.bf16.gmra.mxu0 %v1929
      %v2287 = vpop.f32.mrf.mxu0
      %v2288 = vadd.f32 %v2227, %v2287
      %v2289 = vpop.f32.mrf.mxu0
      %v2290 = vadd.f32 %v2229, %v2289
      %v2291 = vpop.f32.mrf.mxu0
      %v2292 = vadd.f32 %v2231, %v2291
      %v2293 = vpop.f32.mrf.mxu0
      %v2294 = vadd.f32 %v2233, %v2293
      %2295 = vmatprep.mubr.bf16.mxu0 0
      %2296 = vmatmul.mubr.bf16.gmra.mxu0 %v1932
      %v2297 = vpop.f32.mrf.mxu0
      %v2298 = vadd.f32 %v2237, %v2297
      %v2299 = vpop.f32.mrf.mxu0
      %v2300 = vadd.f32 %v2239, %v2299
      %v2301 = vpop.f32.mrf.mxu0
      %v2302 = vpop.f32.mrf.mxu0
      %2303 = vdwg.mxu0
      %v2305 = vlaneseq
      %v2306 = vshrl.u32 %v2305, 7
      %v2307 = vsub.s32 0, %v2306
      %v2308 = vrot.slane %v1840, %v2307
      %v2309 = vlaneseq
      %v2310 = vshrl.u32 %v2309, 7
      %v2311 = vsub.s32 1, %v2310
      %v2312 = vrot.slane %v1840, %v2311
      %v2315 = vadd.f32 %v2308, %v2278
      %v2316 = vadd.f32 %v2312, %v2280
      %v2317 = vadd.f32 %v2308, %v2282
      %v2318 = vadd.f32 %v2312, %v2284
      %v2319 = vadd.f32 %v2308, %v2288
      %v2320 = vadd.f32 %v2312, %v2290
      %v2321 = vadd.f32 %v2308, %v2292
      %v2322 = vadd.f32 %v2312, %v2294
      %v2323 = vadd.f32 %v2308, %v2298
      %v2324 = vadd.f32 %v2312, %v2300
      %2325 = vst [vmem:[#allocation2] sm:$0xff] %v2315
      %2326 = vst [vmem:[#allocation2 + $0x8] sm:$0xff] %v2316
      %2327 = vst [vmem:[#allocation2 + $0x18] sm:$0xff] %v2317
      %2328 = vst [vmem:[#allocation2 + $0x20] sm:$0xff] %v2318
      %2329 = vst [vmem:[#allocation2 + $0x30] sm:$0xff] %v2319
      %2330 = vst [vmem:[#allocation2 + $0x38] sm:$0xff] %v2320
      %2331 = vst [vmem:[#allocation2 + $0x48] sm:$0xff] %v2321
      %2332 = vst [vmem:[#allocation2 + $0x50] sm:$0xff] %v2322
      %2333 = vst [vmem:[#allocation2 + $0x60] sm:$0xff] %v2323
      %2334 = vst [vmem:[#allocation2 + $0x68] sm:$0xff] %v2324
      %v2335 = vld [vmem:[#allocation2] sm:$0xff]
      %v2336 = vld [vmem:[#allocation2 + $0x8] sm:$0xff]
      %v2337 = vld [vmem:[#allocation2 + $0x18] sm:$0xff]
      %v2338 = vld [vmem:[#allocation2 + $0x20] sm:$0xff]
      %v2339 = vld [vmem:[#allocation2 + $0x30] sm:$0xff]
      %v2340 = vld [vmem:[#allocation2 + $0x38] sm:$0xff]
      %v2341 = vld [vmem:[#allocation2 + $0x48] sm:$0xff]
      %v2342 = vld [vmem:[#allocation2 + $0x50] sm:$0xff]
      %v2343 = vld [vmem:[#allocation2 + $0x60] sm:$0xff]
      %v2344 = vld [vmem:[#allocation2 + $0x68] sm:$0xff]
      %v2345 = vld [vmem:[#allocation3] sm:$0xff]
      %v2346 = vld [vmem:[#allocation3 + $0x8] sm:$0xf]
      %v2347 = vld [vmem:[#allocation3 + $0xc] sm:$0xff]
      %v2348 = vld [vmem:[#allocation3 + $0x14] sm:$0xf]
      %v2349 = vld [vmem:[#allocation3 + $0x18] sm:$0xff]
      %v2350 = vld [vmem:[#allocation3 + $0x20] sm:$0xf]
      %v2351 = vld [vmem:[#allocation3 + $0x24] sm:$0xff]
      %v2352 = vld [vmem:[#allocation3 + $0x2c] sm:$0xf]
      %v2353 = vld [vmem:[#allocation3 + $0x30] sm:$0xff]
      %v2354 = vld [vmem:[#allocation3 + $0x38] sm:$0xf]
      %v2355 = vld [vmem:[#allocation3 + $0x3c] sm:$0x11]
      %v2356 = vld [vmem:[#allocation3 + $0x44] sm:$0x1]
      %s2357 = scalar_lea.vmem %s3, 384
      %v2358 = vld [vmem:[%s2357] sm:$0xff]
      %v2359 = vld [vmem:[%s2357 + $0x8] sm:$0xff]
      %v2360 = vld [vmem:[%s2357 + $0x10] sm:$0xff]
      %v2361 = vld [vmem:[%s2357 + $0x18] sm:$0xff]
      %v2362 = vld [vmem:[%s2357 + $0x20] sm:$0xff]
      %v2363 = vld [vmem:[%s2357 + $0x28] sm:$0xff]
      %v2364 = vld [vmem:[%s2357 + $0x30] sm:$0xff]
      %v2365 = vld [vmem:[%s2357 + $0x38] sm:$0xff]
      %v2366 = vld [vmem:[%s2357 + $0x40] sm:$0xff]
      %v2367 = vld [vmem:[%s2357 + $0x48] sm:$0xff]
      %v2368 = vld [vmem:[%s2357 + $0x50] sm:$0xff]
      %v2369 = vld [vmem:[%s2357 + $0x58] sm:$0xff]
      %v2370 = vld [vmem:[%s2357 + $0x60] sm:$0xff]
      %v2371 = vld [vmem:[%s2357 + $0x68] sm:$0xff]
      %v2372 = vld [vmem:[%s2357 + $0x70] sm:$0xff]
      %v2373 = vld [vmem:[%s2357 + $0x78] sm:$0xff]
      %v2374 = vld [vmem:[%s2357 + $0x80] sm:$0xff]
      %v2375 = vld [vmem:[%s2357 + $0x88] sm:$0xff]
      %v2376 = vld [vmem:[%s2357 + $0x90] sm:$0xff]
      %v2377 = vld [vmem:[%s2357 + $0x98] sm:$0xff]
      %v2378 = vld [vmem:[%s2357 + $0xa0] sm:$0xff]
      %v2379 = vld [vmem:[%s2357 + $0xa8] sm:$0xff]
      %v2380 = vld [vmem:[%s2357 + $0xb0] sm:$0xff]
      %v2381 = vld [vmem:[%s2357 + $0xb8] sm:$0xff]
      %v2382 = vld [vmem:[%s2357 + $0xc0] sm:$0xff]
      %v2383 = vld [vmem:[%s2357 + $0xc8] sm:$0xff]
      %v2384 = vld [vmem:[%s2357 + $0xd0] sm:$0xff]
      %v2385 = vld [vmem:[%s2357 + $0xd8] sm:$0xff]
      %v2386 = vld [vmem:[%s2357 + $0xe0] sm:$0xff]
      %v2387 = vld [vmem:[%s2357 + $0xe8] sm:$0xff]
      %v2388 = vld [vmem:[%s2357 + $0xf0] sm:$0xff]
      %v2389 = vld [vmem:[%s2357 + $0xf8] sm:$0xff]
      %v2390 = vld [vmem:[%s2357 + $0x100] sm:$0xff]
      %v2391 = vld [vmem:[%s2357 + $0x108] sm:$0xff]
      %v2392 = vld [vmem:[%s2357 + $0x110] sm:$0xff]
      %v2393 = vld [vmem:[%s2357 + $0x118] sm:$0xff]
      %v2394 = vld [vmem:[%s2357 + $0x120] sm:$0xff]
      %v2395 = vld [vmem:[%s2357 + $0x128] sm:$0xff]
      %v2396 = vld [vmem:[%s2357 + $0x130] sm:$0xff]
      %v2397 = vld [vmem:[%s2357 + $0x138] sm:$0xff]
      %v2398 = vld [vmem:[%s2357 + $0x140] sm:$0xff]
      %v2399 = vld [vmem:[%s2357 + $0x148] sm:$0xff]
      %v2400 = vld [vmem:[%s2357 + $0x150] sm:$0xff]
      %v2401 = vld [vmem:[%s2357 + $0x158] sm:$0xff]
      %v2402 = vld [vmem:[%s2357 + $0x160] sm:$0xff]
      %v2403 = vld [vmem:[%s2357 + $0x168] sm:$0xff]
      %v2404 = vld [vmem:[%s2357 + $0x170] sm:$0xff]
      %v2405 = vld [vmem:[%s2357 + $0x178] sm:$0xff]
      %v2418 = vunpack.c.l.b16 %v2345
      %v2419 = vunpack.c.h.b16 %v2345
      %v2420 = vunpack.c.l.b16 %v2346
      %v2421 = vunpack.c.l.b16 %v2347
      %v2422 = vunpack.c.h.b16 %v2347
      %v2423 = vunpack.c.l.b16 %v2348
      %v2424 = vunpack.c.l.b16 %v2349
      %v2425 = vunpack.c.h.b16 %v2349
      %v2426 = vunpack.c.l.b16 %v2350
      %v2427 = vunpack.c.l.b16 %v2351
      %v2428 = vunpack.c.h.b16 %v2351
      %v2429 = vunpack.c.l.b16 %v2352
      %v2430 = vunpack.c.l.b16 %v2353
      %v2431 = vunpack.c.h.b16 %v2353
      %v2432 = vunpack.c.l.b16 %v2354
      %v2433 = vunpack.c.l.b16 %v2355
      %v2434 = vunpack.c.h.b16 %v2355
      %v2435 = vunpack.c.l.b16 %v2356
      %v2436 = vpack.c.b16 %v2421, %v2418
      %v2437 = vpack.c.b16 %v2422, %v2419
      %v2438 = vpack.c.b16 %v2423, %v2420
      %v2439 = vpack.c.b16 %v2427, %v2424
      %v2440 = vpack.c.b16 %v2428, %v2425
      %v2441 = vpack.c.b16 %v2429, %v2426
      %v2442 = vpack.c.b16 %v2433, %v2430
      %v2443 = vpack.c.b16 %v2434, %v2431
      %v2444 = vpack.c.b16 %v2435, %v2432
      %vm2445 = vsmask.f32 7424
      %v2447 = vshrl.u32 %v2436, 16
      %v2449 = vshll.u32 %v2436, 16
      %v2451 = vrot.slane %v2449, 1
      %v2452 = vor.u32 %v2447, %v2451
      %v2454 = vshll.u32 %v2439, 16
      %v2456 = vrot.slane %v2454, 1
      %v2457 = vsel %vm2445, %v2452, %v2456
      %v2459 = vshrl.u32 %v2437, 16
      %v2461 = vshll.u32 %v2437, 16
      %v2463 = vrot.slane %v2461, 1
      %v2464 = vor.u32 %v2459, %v2463
      %v2466 = vshll.u32 %v2440, 16
      %v2468 = vrot.slane %v2466, 1
      %v2469 = vsel %vm2445, %v2464, %v2468
      %v2471 = vshrl.u32 %v2438, 16
      %v2473 = vshll.u32 %v2438, 16
      %v2475 = vrot.slane %v2473, 1
      %v2476 = vor.u32 %v2471, %v2475
      %v2478 = vshll.u32 %v2441, 16
      %v2480 = vrot.slane %v2478, 1
      %v2481 = vsel %vm2445, %v2476, %v2480
      %v2482 = vshrl.u32 %v2439, 16
      %v2484 = vor.u32 %v2482, %v2456
      %v2486 = vshll.u32 %v2442, 16
      %v2488 = vrot.slane %v2486, 1
      %v2489 = vsel %vm2445, %v2484, %v2488
      %v2490 = vshrl.u32 %v2440, 16
      %v2492 = vor.u32 %v2490, %v2468
      %v2494 = vshll.u32 %v2443, 16
      %v2496 = vrot.slane %v2494, 1
      %v2497 = vsel %vm2445, %v2492, %v2496
      %v2498 = vshrl.u32 %v2441, 16
      %v2500 = vor.u32 %v2498, %v2480
      %v2502 = vshll.u32 %v2444, 16
      %v2504 = vrot.slane %v2502, 1
      %v2505 = vsel %vm2445, %v2500, %v2504
      %v2506 = vshrl.u32 %v2442, 16
      %v2508 = vor.u32 %v2506, %v2488
      %v2509 = vshrl.u32 %v2443, 16
      %v2511 = vor.u32 %v2509, %v2496
      %v2512 = vshrl.u32 %v2444, 16
      %v2514 = vor.u32 %v2512, %v2504
      %v2572 = vunpack.c.l.b16 %v2358
      %v2573 = vunpack.c.h.b16 %v2358
      %v2574 = vunpack.c.l.b16 %v2359
      %v2575 = vunpack.c.h.b16 %v2359
      %v2576 = vunpack.c.l.b16 %v2360
      %v2577 = vunpack.c.h.b16 %v2360
      %v2578 = vunpack.c.l.b16 %v2361
      %v2579 = vunpack.c.h.b16 %v2361
      %v2580 = vunpack.c.l.b16 %v2362
      %v2581 = vunpack.c.h.b16 %v2362
      %v2582 = vunpack.c.l.b16 %v2363
      %v2583 = vunpack.c.h.b16 %v2363
      %v2584 = vunpack.c.l.b16 %v2364
      %v2585 = vunpack.c.h.b16 %v2364
      %v2586 = vunpack.c.l.b16 %v2365
      %v2587 = vunpack.c.h.b16 %v2365
      %v2588 = vunpack.c.l.b16 %v2366
      %v2589 = vunpack.c.h.b16 %v2366
      %v2590 = vunpack.c.l.b16 %v2367
      %v2591 = vunpack.c.h.b16 %v2367
      %v2592 = vunpack.c.l.b16 %v2368
      %v2593 = vunpack.c.h.b16 %v2368
      %v2594 = vunpack.c.l.b16 %v2369
      %v2595 = vunpack.c.h.b16 %v2369
      %v2596 = vunpack.c.l.b16 %v2370
      %v2597 = vunpack.c.h.b16 %v2370
      %v2598 = vunpack.c.l.b16 %v2371
      %v2599 = vunpack.c.h.b16 %v2371
      %v2600 = vunpack.c.l.b16 %v2372
      %v2601 = vunpack.c.h.b16 %v2372
      %v2602 = vunpack.c.l.b16 %v2373
      %v2603 = vunpack.c.h.b16 %v2373
      %v2604 = vunpack.c.l.b16 %v2374
      %v2605 = vunpack.c.h.b16 %v2374
      %v2606 = vunpack.c.l.b16 %v2375
      %v2607 = vunpack.c.h.b16 %v2375
      %v2608 = vunpack.c.l.b16 %v2376
      %v2609 = vunpack.c.h.b16 %v2376
      %v2610 = vunpack.c.l.b16 %v2377
      %v2611 = vunpack.c.h.b16 %v2377
      %v2612 = vunpack.c.l.b16 %v2378
      %v2613 = vunpack.c.h.b16 %v2378
      %v2614 = vunpack.c.l.b16 %v2379
      %v2615 = vunpack.c.h.b16 %v2379
      %v2616 = vunpack.c.l.b16 %v2380
      %v2617 = vunpack.c.h.b16 %v2380
      %v2618 = vunpack.c.l.b16 %v2381
      %v2619 = vunpack.c.h.b16 %v2381
      %v2620 = vunpack.c.l.b16 %v2382
      %v2621 = vunpack.c.h.b16 %v2382
      %v2622 = vunpack.c.l.b16 %v2383
      %v2623 = vunpack.c.h.b16 %v2383
      %v2624 = vunpack.c.l.b16 %v2384
      %v2625 = vunpack.c.h.b16 %v2384
      %v2626 = vunpack.c.l.b16 %v2385
      %v2627 = vunpack.c.h.b16 %v2385
      %v2628 = vunpack.c.l.b16 %v2386
      %v2629 = vunpack.c.h.b16 %v2386
      %v2630 = vunpack.c.l.b16 %v2387
      %v2631 = vunpack.c.h.b16 %v2387
      %v2632 = vunpack.c.l.b16 %v2388
      %v2633 = vunpack.c.h.b16 %v2388
      %v2634 = vunpack.c.l.b16 %v2389
      %v2635 = vunpack.c.h.b16 %v2389
      %v2636 = vunpack.c.l.b16 %v2390
      %v2637 = vunpack.c.h.b16 %v2390
      %v2638 = vunpack.c.l.b16 %v2391
      %v2639 = vunpack.c.h.b16 %v2391
      %v2640 = vunpack.c.l.b16 %v2392
      %v2641 = vunpack.c.h.b16 %v2392
      %v2642 = vunpack.c.l.b16 %v2393
      %v2643 = vunpack.c.h.b16 %v2393
      %v2644 = vunpack.c.l.b16 %v2394
      %v2645 = vunpack.c.h.b16 %v2394
      %v2646 = vunpack.c.l.b16 %v2395
      %v2647 = vunpack.c.h.b16 %v2395
      %v2648 = vunpack.c.l.b16 %v2396
      %v2649 = vunpack.c.h.b16 %v2396
      %v2650 = vunpack.c.l.b16 %v2397
      %v2651 = vunpack.c.h.b16 %v2397
      %v2652 = vunpack.c.l.b16 %v2398
      %v2653 = vunpack.c.h.b16 %v2398
      %v2654 = vunpack.c.l.b16 %v2399
      %v2655 = vunpack.c.h.b16 %v2399
      %v2656 = vunpack.c.l.b16 %v2400
      %v2657 = vunpack.c.h.b16 %v2400
      %v2658 = vunpack.c.l.b16 %v2401
      %v2659 = vunpack.c.h.b16 %v2401
      %v2660 = vunpack.c.l.b16 %v2402
      %v2661 = vunpack.c.h.b16 %v2402
      %v2662 = vunpack.c.l.b16 %v2403
      %v2663 = vunpack.c.h.b16 %v2403
      %v2664 = vunpack.c.l.b16 %v2404
      %v2665 = vunpack.c.h.b16 %v2404
      %v2666 = vunpack.c.l.b16 %v2405
      %v2667 = vunpack.c.h.b16 %v2405
      %v2668 = vpack.c.b16 %v2574, %v2572
      %v2669 = vpack.c.b16 %v2575, %v2573
      %v2670 = vpack.c.b16 %v2578, %v2576
      %v2671 = vpack.c.b16 %v2579, %v2577
      %v2672 = vpack.c.b16 %v2582, %v2580
      %v2673 = vpack.c.b16 %v2583, %v2581
      %v2674 = vpack.c.b16 %v2586, %v2584
      %v2675 = vpack.c.b16 %v2587, %v2585
      %v2676 = vpack.c.b16 %v2590, %v2588
      %v2677 = vpack.c.b16 %v2591, %v2589
      %v2678 = vpack.c.b16 %v2594, %v2592
      %v2679 = vpack.c.b16 %v2595, %v2593
      %v2680 = vpack.c.b16 %v2598, %v2596
      %v2681 = vpack.c.b16 %v2599, %v2597
      %v2682 = vpack.c.b16 %v2602, %v2600
      %v2683 = vpack.c.b16 %v2603, %v2601
      %v2684 = vpack.c.b16 %v2606, %v2604
      %v2685 = vpack.c.b16 %v2607, %v2605
      %v2686 = vpack.c.b16 %v2610, %v2608
      %v2687 = vpack.c.b16 %v2611, %v2609
      %v2688 = vpack.c.b16 %v2614, %v2612
      %v2689 = vpack.c.b16 %v2615, %v2613
      %v2690 = vpack.c.b16 %v2618, %v2616
      %v2691 = vpack.c.b16 %v2619, %v2617
      %v2692 = vpack.c.b16 %v2622, %v2620
      %v2693 = vpack.c.b16 %v2623, %v2621
      %v2694 = vpack.c.b16 %v2626, %v2624
      %v2695 = vpack.c.b16 %v2627, %v2625
      %v2696 = vpack.c.b16 %v2630, %v2628
      %v2697 = vpack.c.b16 %v2631, %v2629
      %v2698 = vpack.c.b16 %v2634, %v2632
      %v2699 = vpack.c.b16 %v2635, %v2633
      %v2700 = vpack.c.b16 %v2638, %v2636
      %v2701 = vpack.c.b16 %v2639, %v2637
      %v2702 = vpack.c.b16 %v2642, %v2640
      %v2703 = vpack.c.b16 %v2643, %v2641
      %v2704 = vpack.c.b16 %v2646, %v2644
      %v2705 = vpack.c.b16 %v2647, %v2645
      %v2706 = vpack.c.b16 %v2650, %v2648
      %v2707 = vpack.c.b16 %v2651, %v2649
      %v2708 = vpack.c.b16 %v2654, %v2652
      %v2709 = vpack.c.b16 %v2655, %v2653
      %v2710 = vpack.c.b16 %v2658, %v2656
      %v2711 = vpack.c.b16 %v2659, %v2657
      %v2712 = vpack.c.b16 %v2662, %v2660
      %v2713 = vpack.c.b16 %v2663, %v2661
      %v2714 = vpack.c.b16 %v2666, %v2664
      %v2715 = vpack.c.b16 %v2667, %v2665
      %2764 = vmatprep.subr.bf16.mxu0 %v2683
      %2765 = vmatpush1.bf16.msra.mxu0 %v2682
      %2766 = vmatprep.subr.bf16.mxu0 %v2681
      %2767 = vmatpush1.bf16.msra.mxu0 %v2680
      %2768 = vmatprep.subr.bf16.mxu0 %v2679
      %2769 = vmatpush1.bf16.msra.mxu0 %v2678
      %2770 = vmatprep.subr.bf16.mxu0 %v2677
      %2771 = vmatpush1.bf16.msra.mxu0 %v2676
      %2772 = vmatprep.subr.bf16.mxu0 %v2675
      %2773 = vmatpush1.bf16.msra.mxu0 %v2674
      %2774 = vmatprep.subr.bf16.mxu0 %v2673
      %2775 = vmatpush1.bf16.msra.mxu0 %v2672
      %2776 = vmatprep.subr.bf16.mxu0 %v2671
      %2777 = vmatpush1.bf16.msra.mxu0 %v2670
      %2778 = vmatprep.subr.bf16.mxu0 %v2669
      %2779 = vmatpush1.bf16.msra.mxu0 %v2668
      %2780 = vmatprep.subr.bf16.mxu0 %v2699
      %2781 = vmatpush2.bf16.msra.mxu0 %v2698
      %2782 = vmatprep.subr.bf16.mxu0 %v2697
      %2783 = vmatpush2.bf16.msra.mxu0 %v2696
      %2784 = vmatprep.subr.bf16.mxu0 %v2695
      %2785 = vmatpush2.bf16.msra.mxu0 %v2694
      %2786 = vmatprep.subr.bf16.mxu0 %v2693
      %2787 = vmatpush2.bf16.msra.mxu0 %v2692
      %2788 = vmatprep.subr.bf16.mxu0 %v2691
      %2789 = vmatpush2.bf16.msra.mxu0 %v2690
      %2790 = vmatprep.subr.bf16.mxu0 %v2689
      %2791 = vmatpush2.bf16.msra.mxu0 %v2688
      %2792 = vmatprep.subr.bf16.mxu0 %v2687
      %2793 = vmatpush2.bf16.msra.mxu0 %v2686
      %2794 = vmatprep.subr.bf16.mxu0 %v2685
      %2795 = vmatpush2.bf16.msra.mxu0 %v2684
      %2796 = vmatprep.mubr.bf16.mxu0 %v2469
      %2797 = vmatmul.mubr.bf16.gmra.mxu0 %v2457
      %v2798 = vpop.f32.mrf.mxu0
      %v2799 = vadd.f32 0.0, %v2798
      %v2800 = vpop.f32.mrf.mxu0
      %v2801 = vadd.f32 0.0, %v2800
      %v2802 = vpop.f32.mrf.mxu0
      %v2803 = vadd.f32 0.0, %v2802
      %v2804 = vpop.f32.mrf.mxu0
      %v2805 = vadd.f32 0.0, %v2804
      %2806 = vmatprep.mubr.bf16.mxu0 %v2497
      %2807 = vmatmul.mubr.bf16.gmra.mxu0 %v2489
      %v2808 = vpop.f32.mrf.mxu0
      %v2809 = vadd.f32 0.0, %v2808
      %v2810 = vpop.f32.mrf.mxu0
      %v2811 = vadd.f32 0.0, %v2810
      %v2812 = vpop.f32.mrf.mxu0
      %v2813 = vadd.f32 0.0, %v2812
      %v2814 = vpop.f32.mrf.mxu0
      %v2815 = vadd.f32 0.0, %v2814
      %2816 = vmatprep.mubr.bf16.mxu0 %v2511
      %2817 = vmatmul.mubr.bf16.gmra.mxu0 %v2508
      %v2818 = vpop.f32.mrf.mxu0
      %v2819 = vadd.f32 0.0, %v2818
      %v2820 = vpop.f32.mrf.mxu0
      %v2821 = vadd.f32 0.0, %v2820
      %v2822 = vpop.f32.mrf.mxu0
      %v2823 = vpop.f32.mrf.mxu0
      %2824 = vdwg.mxu0
      %2825 = vmatprep.subr.bf16.mxu0 %v2715
      %2826 = vmatpush1.bf16.msra.mxu0 %v2714
      %2827 = vmatprep.subr.bf16.mxu0 %v2713
      %2828 = vmatpush1.bf16.msra.mxu0 %v2712
      %2829 = vmatprep.subr.bf16.mxu0 %v2711
      %2830 = vmatpush1.bf16.msra.mxu0 %v2710
      %2831 = vmatprep.subr.bf16.mxu0 %v2709
      %2832 = vmatpush1.bf16.msra.mxu0 %v2708
      %2833 = vmatprep.subr.bf16.mxu0 %v2707
      %2834 = vmatpush1.bf16.msra.mxu0 %v2706
      %2835 = vmatprep.subr.bf16.mxu0 %v2705
      %2836 = vmatpush1.bf16.msra.mxu0 %v2704
      %2837 = vmatprep.subr.bf16.mxu0 %v2703
      %2838 = vmatpush1.bf16.msra.mxu0 %v2702
      %2839 = vmatprep.subr.bf16.mxu0 %v2701
      %2840 = vmatpush1.bf16.msra.mxu0 %v2700
      %2841 = vmatprep.subr.bf16.mxu0 0
      %2842 = vmatpush2.bf16.msra.mxu0 0
      %2843 = vmatprep.subr.bf16.mxu0 0
      %2844 = vmatpush2.bf16.msra.mxu0 0
      %2845 = vmatprep.subr.bf16.mxu0 0
      %2846 = vmatpush2.bf16.msra.mxu0 0
      %2847 = vmatprep.subr.bf16.mxu0 0
      %2848 = vmatpush2.bf16.msra.mxu0 0
      %2849 = vmatprep.subr.bf16.mxu0 0
      %2850 = vmatpush2.bf16.msra.mxu0 0
      %2851 = vmatprep.subr.bf16.mxu0 0
      %2852 = vmatpush2.bf16.msra.mxu0 0
      %2853 = vmatprep.subr.bf16.mxu0 0
      %2854 = vmatpush2.bf16.msra.mxu0 0
      %2855 = vmatprep.subr.bf16.mxu0 0
      %2856 = vmatpush2.bf16.msra.mxu0 0
      %2857 = vmatprep.mubr.bf16.mxu0 0
      %2858 = vmatmul.mubr.bf16.gmra.mxu0 %v2481
      %v2859 = vpop.f32.mrf.mxu0
      %v2860 = vadd.f32 %v2799, %v2859
      %v2861 = vpop.f32.mrf.mxu0
      %v2862 = vadd.f32 %v2801, %v2861
      %v2863 = vpop.f32.mrf.mxu0
      %v2864 = vadd.f32 %v2803, %v2863
      %v2865 = vpop.f32.mrf.mxu0
      %v2866 = vadd.f32 %v2805, %v2865
      %2867 = vmatprep.mubr.bf16.mxu0 0
      %2868 = vmatmul.mubr.bf16.gmra.mxu0 %v2505
      %v2869 = vpop.f32.mrf.mxu0
      %v2870 = vadd.f32 %v2809, %v2869
      %v2871 = vpop.f32.mrf.mxu0
      %v2872 = vadd.f32 %v2811, %v2871
      %v2873 = vpop.f32.mrf.mxu0
      %v2874 = vadd.f32 %v2813, %v2873
      %v2875 = vpop.f32.mrf.mxu0
      %v2876 = vadd.f32 %v2815, %v2875
      %2877 = vmatprep.mubr.bf16.mxu0 0
      %2878 = vmatmul.mubr.bf16.gmra.mxu0 %v2514
      %v2879 = vpop.f32.mrf.mxu0
      %v2880 = vadd.f32 %v2819, %v2879
      %v2881 = vpop.f32.mrf.mxu0
      %v2882 = vadd.f32 %v2821, %v2881
      %v2883 = vpop.f32.mrf.mxu0
      %v2884 = vpop.f32.mrf.mxu0
      %2885 = vdwg.mxu0
      %v2886 = vadd.f32 %v2335, %v2860
      %v2887 = vadd.f32 %v2336, %v2862
      %v2888 = vadd.f32 %v2337, %v2864
      %v2889 = vadd.f32 %v2338, %v2866
      %v2890 = vadd.f32 %v2339, %v2870
      %v2891 = vadd.f32 %v2340, %v2872
      %v2892 = vadd.f32 %v2341, %v2874
      %v2893 = vadd.f32 %v2342, %v2876
      %v2894 = vadd.f32 %v2343, %v2880
      %v2895 = vadd.f32 %v2344, %v2882
      %2896 = vst [vmem:[#allocation2] sm:$0xff] %v2886
      %2897 = vst [vmem:[#allocation2 + $0x8] sm:$0xff] %v2887
      %2898 = vst [vmem:[#allocation2 + $0x18] sm:$0xff] %v2888
      %2899 = vst [vmem:[#allocation2 + $0x20] sm:$0xff] %v2889
      %2900 = vst [vmem:[#allocation2 + $0x30] sm:$0xff] %v2890
      %2901 = vst [vmem:[#allocation2 + $0x38] sm:$0xff] %v2891
      %2902 = vst [vmem:[#allocation2 + $0x48] sm:$0xff] %v2892
      %2903 = vst [vmem:[#allocation2 + $0x50] sm:$0xff] %v2893
      %2904 = vst [vmem:[#allocation2 + $0x60] sm:$0xff] %v2894
      %2905 = vst [vmem:[#allocation2 + $0x68] sm:$0xff] %v2895
      %v2906 = vld [vmem:[#allocation2] sm:$0xff]
      %v2907 = vld [vmem:[#allocation2 + $0x8] sm:$0xff]
      %v2908 = vld [vmem:[#allocation2 + $0x18] sm:$0xff]
      %v2909 = vld [vmem:[#allocation2 + $0x20] sm:$0xff]
      %v2910 = vld [vmem:[#allocation2 + $0x30] sm:$0xff]
      %v2911 = vld [vmem:[#allocation2 + $0x38] sm:$0xff]
      %v2912 = vld [vmem:[#allocation2 + $0x48] sm:$0xff]
      %v2913 = vld [vmem:[#allocation2 + $0x50] sm:$0xff]
      %v2914 = vld [vmem:[#allocation2 + $0x60] sm:$0xff]
      %v2915 = vld [vmem:[#allocation2 + $0x68] sm:$0xff]
      %v2916 = vld [vmem:[#allocation3] sm:$0xee]
      %v2917 = vld [vmem:[#allocation3 + $0x8] sm:$0xe]
      %v2918 = vld [vmem:[#allocation3 + $0xc] sm:$0xff]
      %v2919 = vld [vmem:[#allocation3 + $0x14] sm:$0xf]
      %v2920 = vld [vmem:[#allocation3 + $0x18] sm:$0xff]
      %v2921 = vld [vmem:[#allocation3 + $0x20] sm:$0xf]
      %v2922 = vld [vmem:[#allocation3 + $0x24] sm:$0xff]
      %v2923 = vld [vmem:[#allocation3 + $0x2c] sm:$0xf]
      %v2924 = vld [vmem:[#allocation3 + $0x30] sm:$0xff]
      %v2925 = vld [vmem:[#allocation3 + $0x38] sm:$0xf]
      %v2926 = vld [vmem:[#allocation3 + $0x3c] sm:$0x11]
      %v2927 = vld [vmem:[#allocation3 + $0x44] sm:$0x1]
      %s2928 = scalar_lea.vmem %s3, 768
      %v2929 = vld [vmem:[%s2928] sm:$0xff]
      %v2930 = vld [vmem:[%s2928 + $0x8] sm:$0xff]
      %v2931 = vld [vmem:[%s2928 + $0x10] sm:$0xff]
      %v2932 = vld [vmem:[%s2928 + $0x18] sm:$0xff]
      %v2933 = vld [vmem:[%s2928 + $0x20] sm:$0xff]
      %v2934 = vld [vmem:[%s2928 + $0x28] sm:$0xff]
      %v2935 = vld [vmem:[%s2928 + $0x30] sm:$0xff]
      %v2936 = vld [vmem:[%s2928 + $0x38] sm:$0xff]
      %v2937 = vld [vmem:[%s2928 + $0x40] sm:$0xff]
      %v2938 = vld [vmem:[%s2928 + $0x48] sm:$0xff]
      %v2939 = vld [vmem:[%s2928 + $0x50] sm:$0xff]
      %v2940 = vld [vmem:[%s2928 + $0x58] sm:$0xff]
      %v2941 = vld [vmem:[%s2928 + $0x60] sm:$0xff]
      %v2942 = vld [vmem:[%s2928 + $0x68] sm:$0xff]
      %v2943 = vld [vmem:[%s2928 + $0x70] sm:$0xff]
      %v2944 = vld [vmem:[%s2928 + $0x78] sm:$0xff]
      %v2945 = vld [vmem:[%s2928 + $0x80] sm:$0xff]
      %v2946 = vld [vmem:[%s2928 + $0x88] sm:$0xff]
      %v2947 = vld [vmem:[%s2928 + $0x90] sm:$0xff]
      %v2948 = vld [vmem:[%s2928 + $0x98] sm:$0xff]
      %v2949 = vld [vmem:[%s2928 + $0xa0] sm:$0xff]
      %v2950 = vld [vmem:[%s2928 + $0xa8] sm:$0xff]
      %v2951 = vld [vmem:[%s2928 + $0xb0] sm:$0xff]
      %v2952 = vld [vmem:[%s2928 + $0xb8] sm:$0xff]
      %v2953 = vld [vmem:[%s2928 + $0xc0] sm:$0xff]
      %v2954 = vld [vmem:[%s2928 + $0xc8] sm:$0xff]
      %v2955 = vld [vmem:[%s2928 + $0xd0] sm:$0xff]
      %v2956 = vld [vmem:[%s2928 + $0xd8] sm:$0xff]
      %v2957 = vld [vmem:[%s2928 + $0xe0] sm:$0xff]
      %v2958 = vld [vmem:[%s2928 + $0xe8] sm:$0xff]
      %v2959 = vld [vmem:[%s2928 + $0xf0] sm:$0xff]
      %v2960 = vld [vmem:[%s2928 + $0xf8] sm:$0xff]
      %v2961 = vld [vmem:[%s2928 + $0x100] sm:$0xff]
      %v2962 = vld [vmem:[%s2928 + $0x108] sm:$0xff]
      %v2963 = vld [vmem:[%s2928 + $0x110] sm:$0xff]
      %v2964 = vld [vmem:[%s2928 + $0x118] sm:$0xff]
      %v2965 = vld [vmem:[%s2928 + $0x120] sm:$0xff]
      %v2966 = vld [vmem:[%s2928 + $0x128] sm:$0xff]
      %v2967 = vld [vmem:[%s2928 + $0x130] sm:$0xff]
      %v2968 = vld [vmem:[%s2928 + $0x138] sm:$0xff]
      %v2969 = vld [vmem:[%s2928 + $0x140] sm:$0xff]
      %v2970 = vld [vmem:[%s2928 + $0x148] sm:$0xff]
      %v2971 = vld [vmem:[%s2928 + $0x150] sm:$0xff]
      %v2972 = vld [vmem:[%s2928 + $0x158] sm:$0xff]
      %v2973 = vld [vmem:[%s2928 + $0x160] sm:$0xff]
      %v2974 = vld [vmem:[%s2928 + $0x168] sm:$0xff]
      %v2975 = vld [vmem:[%s2928 + $0x170] sm:$0xff]
      %v2976 = vld [vmem:[%s2928 + $0x178] sm:$0xff]
      %v2989 = vunpack.c.l.b16 %v2916
      %v2990 = vunpack.c.h.b16 %v2916
      %v2991 = vunpack.c.l.b16 %v2917
      %v2992 = vunpack.c.l.b16 %v2918
      %v2993 = vunpack.c.h.b16 %v2918
      %v2994 = vunpack.c.l.b16 %v2919
      %v2995 = vunpack.c.l.b16 %v2920
      %v2996 = vunpack.c.h.b16 %v2920
      %v2997 = vunpack.c.l.b16 %v2921
      %v2998 = vunpack.c.l.b16 %v2922
      %v2999 = vunpack.c.h.b16 %v2922
      %v3000 = vunpack.c.l.b16 %v2923
      %v3001 = vunpack.c.l.b16 %v2924
      %v3002 = vunpack.c.h.b16 %v2924
      %v3003 = vunpack.c.l.b16 %v2925
      %v3004 = vunpack.c.l.b16 %v2926
      %v3005 = vunpack.c.h.b16 %v2926
      %v3006 = vunpack.c.l.b16 %v2927
      %v3007 = vpack.c.b16 %v2992, %v2989
      %v3008 = vpack.c.b16 %v2993, %v2990
      %v3009 = vpack.c.b16 %v2994, %v2991
      %v3010 = vpack.c.b16 %v2998, %v2995
      %v3011 = vpack.c.b16 %v2999, %v2996
      %v3012 = vpack.c.b16 %v3000, %v2997
      %v3013 = vpack.c.b16 %v3004, %v3001
      %v3014 = vpack.c.b16 %v3005, %v3002
      %v3015 = vpack.c.b16 %v3006, %v3003
      %vm3016 = vcmask 1046528
      %v3017 = vrot.slane %v3007, 1
      %v3018 = vrot.slane %v3010, 1
      %v3019 = vsel %vm3016, %v3017, %v3018
      %v3020 = vrot.slane %v3008, 1
      %v3021 = vrot.slane %v3011, 1
      %v3022 = vsel %vm3016, %v3020, %v3021
      %v3023 = vrot.slane %v3009, 1
      %v3024 = vrot.slane %v3012, 1
      %v3025 = vsel %vm3016, %v3023, %v3024
      %v3026 = vrot.slane %v3013, 1
      %v3027 = vsel %vm3016, %v3018, %v3026
      %v3028 = vrot.slane %v3014, 1
      %v3029 = vsel %vm3016, %v3021, %v3028
      %v3030 = vrot.slane %v3015, 1
      %v3031 = vsel %vm3016, %v3024, %v3030
      %v3089 = vunpack.c.l.b16 %v2929
      %v3090 = vunpack.c.h.b16 %v2929
      %v3091 = vunpack.c.l.b16 %v2930
      %v3092 = vunpack.c.h.b16 %v2930
      %v3093 = vunpack.c.l.b16 %v2931
      %v3094 = vunpack.c.h.b16 %v2931
      %v3095 = vunpack.c.l.b16 %v2932
      %v3096 = vunpack.c.h.b16 %v2932
      %v3097 = vunpack.c.l.b16 %v2933
      %v3098 = vunpack.c.h.b16 %v2933
      %v3099 = vunpack.c.l.b16 %v2934
      %v3100 = vunpack.c.h.b16 %v2934
      %v3101 = vunpack.c.l.b16 %v2935
      %v3102 = vunpack.c.h.b16 %v2935
      %v3103 = vunpack.c.l.b16 %v2936
      %v3104 = vunpack.c.h.b16 %v2936
      %v3105 = vunpack.c.l.b16 %v2937
      %v3106 = vunpack.c.h.b16 %v2937
      %v3107 = vunpack.c.l.b16 %v2938
      %v3108 = vunpack.c.h.b16 %v2938
      %v3109 = vunpack.c.l.b16 %v2939
      %v3110 = vunpack.c.h.b16 %v2939
      %v3111 = vunpack.c.l.b16 %v2940
      %v3112 = vunpack.c.h.b16 %v2940
      %v3113 = vunpack.c.l.b16 %v2941
      %v3114 = vunpack.c.h.b16 %v2941
      %v3115 = vunpack.c.l.b16 %v2942
      %v3116 = vunpack.c.h.b16 %v2942
      %v3117 = vunpack.c.l.b16 %v2943
      %v3118 = vunpack.c.h.b16 %v2943
      %v3119 = vunpack.c.l.b16 %v2944
      %v3120 = vunpack.c.h.b16 %v2944
      %v3121 = vunpack.c.l.b16 %v2945
      %v3122 = vunpack.c.h.b16 %v2945
      %v3123 = vunpack.c.l.b16 %v2946
      %v3124 = vunpack.c.h.b16 %v2946
      %v3125 = vunpack.c.l.b16 %v2947
      %v3126 = vunpack.c.h.b16 %v2947
      %v3127 = vunpack.c.l.b16 %v2948
      %v3128 = vunpack.c.h.b16 %v2948
      %v3129 = vunpack.c.l.b16 %v2949
      %v3130 = vunpack.c.h.b16 %v2949
      %v3131 = vunpack.c.l.b16 %v2950
      %v3132 = vunpack.c.h.b16 %v2950
      %v3133 = vunpack.c.l.b16 %v2951
      %v3134 = vunpack.c.h.b16 %v2951
      %v3135 = vunpack.c.l.b16 %v2952
      %v3136 = vunpack.c.h.b16 %v2952
      %v3137 = vunpack.c.l.b16 %v2953
      %v3138 = vunpack.c.h.b16 %v2953
      %v3139 = vunpack.c.l.b16 %v2954
      %v3140 = vunpack.c.h.b16 %v2954
      %v3141 = vunpack.c.l.b16 %v2955
      %v3142 = vunpack.c.h.b16 %v2955
      %v3143 = vunpack.c.l.b16 %v2956
      %v3144 = vunpack.c.h.b16 %v2956
      %v3145 = vunpack.c.l.b16 %v2957
      %v3146 = vunpack.c.h.b16 %v2957
      %v3147 = vunpack.c.l.b16 %v2958
      %v3148 = vunpack.c.h.b16 %v2958
      %v3149 = vunpack.c.l.b16 %v2959
      %v3150 = vunpack.c.h.b16 %v2959
      %v3151 = vunpack.c.l.b16 %v2960
      %v3152 = vunpack.c.h.b16 %v2960
      %v3153 = vunpack.c.l.b16 %v2961
      %v3154 = vunpack.c.h.b16 %v2961
      %v3155 = vunpack.c.l.b16 %v2962
      %v3156 = vunpack.c.h.b16 %v2962
      %v3157 = vunpack.c.l.b16 %v2963
      %v3158 = vunpack.c.h.b16 %v2963
      %v3159 = vunpack.c.l.b16 %v2964
      %v3160 = vunpack.c.h.b16 %v2964
      %v3161 = vunpack.c.l.b16 %v2965
      %v3162 = vunpack.c.h.b16 %v2965
      %v3163 = vunpack.c.l.b16 %v2966
      %v3164 = vunpack.c.h.b16 %v2966
      %v3165 = vunpack.c.l.b16 %v2967
      %v3166 = vunpack.c.h.b16 %v2967
      %v3167 = vunpack.c.l.b16 %v2968
      %v3168 = vunpack.c.h.b16 %v2968
      %v3169 = vunpack.c.l.b16 %v2969
      %v3170 = vunpack.c.h.b16 %v2969
      %v3171 = vunpack.c.l.b16 %v2970
      %v3172 = vunpack.c.h.b16 %v2970
      %v3173 = vunpack.c.l.b16 %v2971
      %v3174 = vunpack.c.h.b16 %v2971
      %v3175 = vunpack.c.l.b16 %v2972
      %v3176 = vunpack.c.h.b16 %v2972
      %v3177 = vunpack.c.l.b16 %v2973
      %v3178 = vunpack.c.h.b16 %v2973
      %v3179 = vunpack.c.l.b16 %v2974
      %v3180 = vunpack.c.h.b16 %v2974
      %v3181 = vunpack.c.l.b16 %v2975
      %v3182 = vunpack.c.h.b16 %v2975
      %v3183 = vunpack.c.l.b16 %v2976
      %v3184 = vunpack.c.h.b16 %v2976
      %v3185 = vpack.c.b16 %v3091, %v3089
      %v3186 = vpack.c.b16 %v3092, %v3090
      %v3187 = vpack.c.b16 %v3095, %v3093
      %v3188 = vpack.c.b16 %v3096, %v3094
      %v3189 = vpack.c.b16 %v3099, %v3097
      %v3190 = vpack.c.b16 %v3100, %v3098
      %v3191 = vpack.c.b16 %v3103, %v3101
      %v3192 = vpack.c.b16 %v3104, %v3102
      %v3193 = vpack.c.b16 %v3107, %v3105
      %v3194 = vpack.c.b16 %v3108, %v3106
      %v3195 = vpack.c.b16 %v3111, %v3109
      %v3196 = vpack.c.b16 %v3112, %v3110
      %v3197 = vpack.c.b16 %v3115, %v3113
      %v3198 = vpack.c.b16 %v3116, %v3114
      %v3199 = vpack.c.b16 %v3119, %v3117
      %v3200 = vpack.c.b16 %v3120, %v3118
      %v3201 = vpack.c.b16 %v3123, %v3121
      %v3202 = vpack.c.b16 %v3124, %v3122
      %v3203 = vpack.c.b16 %v3127, %v3125
      %v3204 = vpack.c.b16 %v3128, %v3126
      %v3205 = vpack.c.b16 %v3131, %v3129
      %v3206 = vpack.c.b16 %v3132, %v3130
      %v3207 = vpack.c.b16 %v3135, %v3133
      %v3208 = vpack.c.b16 %v3136, %v3134
      %v3209 = vpack.c.b16 %v3139, %v3137
      %v3210 = vpack.c.b16 %v3140, %v3138
      %v3211 = vpack.c.b16 %v3143, %v3141
      %v3212 = vpack.c.b16 %v3144, %v3142
      %v3213 = vpack.c.b16 %v3147, %v3145
      %v3214 = vpack.c.b16 %v3148, %v3146
      %v3215 = vpack.c.b16 %v3151, %v3149
      %v3216 = vpack.c.b16 %v3152, %v3150
      %v3217 = vpack.c.b16 %v3155, %v3153
      %v3218 = vpack.c.b16 %v3156, %v3154
      %v3219 = vpack.c.b16 %v3159, %v3157
      %v3220 = vpack.c.b16 %v3160, %v3158
      %v3221 = vpack.c.b16 %v3163, %v3161
      %v3222 = vpack.c.b16 %v3164, %v3162
      %v3223 = vpack.c.b16 %v3167, %v3165
      %v3224 = vpack.c.b16 %v3168, %v3166
      %v3225 = vpack.c.b16 %v3171, %v3169
      %v3226 = vpack.c.b16 %v3172, %v3170
      %v3227 = vpack.c.b16 %v3175, %v3173
      %v3228 = vpack.c.b16 %v3176, %v3174
      %v3229 = vpack.c.b16 %v3179, %v3177
      %v3230 = vpack.c.b16 %v3180, %v3178
      %v3231 = vpack.c.b16 %v3183, %v3181
      %v3232 = vpack.c.b16 %v3184, %v3182
      %3281 = vmatprep.subr.bf16.mxu0 %v3200
      %3282 = vmatpush1.bf16.msra.mxu0 %v3199
      %3283 = vmatprep.subr.bf16.mxu0 %v3198
      %3284 = vmatpush1.bf16.msra.mxu0 %v3197
      %3285 = vmatprep.subr.bf16.mxu0 %v3196
      %3286 = vmatpush1.bf16.msra.mxu0 %v3195
      %3287 = vmatprep.subr.bf16.mxu0 %v3194
      %3288 = vmatpush1.bf16.msra.mxu0 %v3193
      %3289 = vmatprep.subr.bf16.mxu0 %v3192
      %3290 = vmatpush1.bf16.msra.mxu0 %v3191
      %3291 = vmatprep.subr.bf16.mxu0 %v3190
      %3292 = vmatpush1.bf16.msra.mxu0 %v3189
      %3293 = vmatprep.subr.bf16.mxu0 %v3188
      %3294 = vmatpush1.bf16.msra.mxu0 %v3187
      %3295 = vmatprep.subr.bf16.mxu0 %v3186
      %3296 = vmatpush1.bf16.msra.mxu0 %v3185
      %3297 = vmatprep.subr.bf16.mxu0 %v3216
      %3298 = vmatpush2.bf16.msra.mxu0 %v3215
      %3299 = vmatprep.subr.bf16.mxu0 %v3214
      %3300 = vmatpush2.bf16.msra.mxu0 %v3213
      %3301 = vmatprep.subr.bf16.mxu0 %v3212
      %3302 = vmatpush2.bf16.msra.mxu0 %v3211
      %3303 = vmatprep.subr.bf16.mxu0 %v3210
      %3304 = vmatpush2.bf16.msra.mxu0 %v3209
      %3305 = vmatprep.subr.bf16.mxu0 %v3208
      %3306 = vmatpush2.bf16.msra.mxu0 %v3207
      %3307 = vmatprep.subr.bf16.mxu0 %v3206
      %3308 = vmatpush2.bf16.msra.mxu0 %v3205
      %3309 = vmatprep.subr.bf16.mxu0 %v3204
      %3310 = vmatpush2.bf16.msra.mxu0 %v3203
      %3311 = vmatprep.subr.bf16.mxu0 %v3202
      %3312 = vmatpush2.bf16.msra.mxu0 %v3201
      %3313 = vmatprep.mubr.bf16.mxu0 %v3022
      %3314 = vmatmul.mubr.bf16.gmra.mxu0 %v3019
      %v3315 = vpop.f32.mrf.mxu0
      %v3316 = vadd.f32 0.0, %v3315
      %v3317 = vpop.f32.mrf.mxu0
      %v3318 = vadd.f32 0.0, %v3317
      %v3319 = vpop.f32.mrf.mxu0
      %v3320 = vadd.f32 0.0, %v3319
      %v3321 = vpop.f32.mrf.mxu0
      %v3322 = vadd.f32 0.0, %v3321
      %3323 = vmatprep.mubr.bf16.mxu0 %v3029
      %3324 = vmatmul.mubr.bf16.gmra.mxu0 %v3027
      %v3325 = vpop.f32.mrf.mxu0
      %v3326 = vadd.f32 0.0, %v3325
      %v3327 = vpop.f32.mrf.mxu0
      %v3328 = vadd.f32 0.0, %v3327
      %v3329 = vpop.f32.mrf.mxu0
      %v3330 = vadd.f32 0.0, %v3329
      %v3331 = vpop.f32.mrf.mxu0
      %v3332 = vadd.f32 0.0, %v3331
      %3333 = vmatprep.mubr.bf16.mxu0 %v3028
      %3334 = vmatmul.mubr.bf16.gmra.mxu0 %v3026
      %v3335 = vpop.f32.mrf.mxu0
      %v3336 = vadd.f32 0.0, %v3335
      %v3337 = vpop.f32.mrf.mxu0
      %v3338 = vadd.f32 0.0, %v3337
      %v3339 = vpop.f32.mrf.mxu0
      %v3340 = vpop.f32.mrf.mxu0
      %3341 = vdwg.mxu0
      %3342 = vmatprep.subr.bf16.mxu0 %v3232
      %3343 = vmatpush1.bf16.msra.mxu0 %v3231
      %3344 = vmatprep.subr.bf16.mxu0 %v3230
      %3345 = vmatpush1.bf16.msra.mxu0 %v3229
      %3346 = vmatprep.subr.bf16.mxu0 %v3228
      %3347 = vmatpush1.bf16.msra.mxu0 %v3227
      %3348 = vmatprep.subr.bf16.mxu0 %v3226
      %3349 = vmatpush1.bf16.msra.mxu0 %v3225
      %3350 = vmatprep.subr.bf16.mxu0 %v3224
      %3351 = vmatpush1.bf16.msra.mxu0 %v3223
      %3352 = vmatprep.subr.bf16.mxu0 %v3222
      %3353 = vmatpush1.bf16.msra.mxu0 %v3221
      %3354 = vmatprep.subr.bf16.mxu0 %v3220
      %3355 = vmatpush1.bf16.msra.mxu0 %v3219
      %3356 = vmatprep.subr.bf16.mxu0 %v3218
      %3357 = vmatpush1.bf16.msra.mxu0 %v3217
      %3358 = vmatprep.subr.bf16.mxu0 0
      %3359 = vmatpush2.bf16.msra.mxu0 0
      %3360 = vmatprep.subr.bf16.mxu0 0
      %3361 = vmatpush2.bf16.msra.mxu0 0
      %3362 = vmatprep.subr.bf16.mxu0 0
      %3363 = vmatpush2.bf16.msra.mxu0 0
      %3364 = vmatprep.subr.bf16.mxu0 0
      %3365 = vmatpush2.bf16.msra.mxu0 0
      %3366 = vmatprep.subr.bf16.mxu0 0
      %3367 = vmatpush2.bf16.msra.mxu0 0
      %3368 = vmatprep.subr.bf16.mxu0 0
      %3369 = vmatpush2.bf16.msra.mxu0 0
      %3370 = vmatprep.subr.bf16.mxu0 0
      %3371 = vmatpush2.bf16.msra.mxu0 0
      %3372 = vmatprep.subr.bf16.mxu0 0
      %3373 = vmatpush2.bf16.msra.mxu0 0
      %3374 = vmatprep.mubr.bf16.mxu0 0
      %3375 = vmatmul.mubr.bf16.gmra.mxu0 %v3025
      %v3376 = vpop.f32.mrf.mxu0
      %v3377 = vadd.f32 %v3316, %v3376
      %v3378 = vpop.f32.mrf.mxu0
      %v3379 = vadd.f32 %v3318, %v3378
      %v3380 = vpop.f32.mrf.mxu0
      %v3381 = vadd.f32 %v3320, %v3380
      %v3382 = vpop.f32.mrf.mxu0
      %v3383 = vadd.f32 %v3322, %v3382
      %3384 = vmatprep.mubr.bf16.mxu0 0
      %3385 = vmatmul.mubr.bf16.gmra.mxu0 %v3031
      %v3386 = vpop.f32.mrf.mxu0
      %v3387 = vadd.f32 %v3326, %v3386
      %v3388 = vpop.f32.mrf.mxu0
      %v3389 = vadd.f32 %v3328, %v3388
      %v3390 = vpop.f32.mrf.mxu0
      %v3391 = vadd.f32 %v3330, %v3390
      %v3392 = vpop.f32.mrf.mxu0
      %v3393 = vadd.f32 %v3332, %v3392
      %3394 = vmatprep.mubr.bf16.mxu0 0
      %3395 = vmatmul.mubr.bf16.gmra.mxu0 %v3030
      %v3396 = vpop.f32.mrf.mxu0
      %v3397 = vadd.f32 %v3336, %v3396
      %v3398 = vpop.f32.mrf.mxu0
      %v3399 = vadd.f32 %v3338, %v3398
      %v3400 = vpop.f32.mrf.mxu0
      %v3401 = vpop.f32.mrf.mxu0
      %3402 = vdwg.mxu0
      %v3403 = vadd.f32 %v2906, %v3377
      %v3404 = vadd.f32 %v2907, %v3379
      %v3405 = vadd.f32 %v2908, %v3381
      %v3406 = vadd.f32 %v2909, %v3383
      %v3407 = vadd.f32 %v2910, %v3387
      %v3408 = vadd.f32 %v2911, %v3389
      %v3409 = vadd.f32 %v2912, %v3391
      %v3410 = vadd.f32 %v2913, %v3393
      %v3411 = vadd.f32 %v2914, %v3397
      %v3412 = vadd.f32 %v2915, %v3399
      %3413 = vst [vmem:[#allocation2] sm:$0xff] %v3403
      %3414 = vst [vmem:[#allocation2 + $0x8] sm:$0xff] %v3404
      %3415 = vst [vmem:[#allocation2 + $0x18] sm:$0xff] %v3405
      %3416 = vst [vmem:[#allocation2 + $0x20] sm:$0xff] %v3406
      %3417 = vst [vmem:[#allocation2 + $0x30] sm:$0xff] %v3407
      %3418 = vst [vmem:[#allocation2 + $0x38] sm:$0xff] %v3408
      %3419 = vst [vmem:[#allocation2 + $0x48] sm:$0xff] %v3409
      %3420 = vst [vmem:[#allocation2 + $0x50] sm:$0xff] %v3410
      %3421 = vst [vmem:[#allocation2 + $0x60] sm:$0xff] %v3411
      %3422 = vst [vmem:[#allocation2 + $0x68] sm:$0xff] %v3412
      %v3423 = vld [vmem:[#allocation2] sm:$0xff]
      %v3424 = vld [vmem:[#allocation2 + $0x8] sm:$0xff]
      %v3425 = vld [vmem:[#allocation2 + $0x18] sm:$0xff]
      %v3426 = vld [vmem:[#allocation2 + $0x20] sm:$0xff]
      %v3427 = vld [vmem:[#allocation2 + $0x30] sm:$0xff]
      %v3428 = vld [vmem:[#allocation2 + $0x38] sm:$0xff]
      %v3429 = vld [vmem:[#allocation2 + $0x48] sm:$0xff]
      %v3430 = vld [vmem:[#allocation2 + $0x50] sm:$0xff]
      %v3431 = vld [vmem:[#allocation2 + $0x60] sm:$0xff]
      %v3432 = vld [vmem:[#allocation2 + $0x68] sm:$0xff]
      %vm3433 = vcmp.ge.f32.partialorder %v3423, 0.0
      %vm3434 = vcmp.ge.f32.partialorder %v3424, 0.0
      %vm3435 = vcmp.ge.f32.partialorder %v3425, 0.0
      %vm3436 = vcmp.ge.f32.partialorder %v3426, 0.0
      %vm3437 = vcmp.ge.f32.partialorder %v3427, 0.0
      %vm3438 = vcmp.ge.f32.partialorder %v3428, 0.0
      %vm3439 = vcmp.ge.f32.partialorder %v3429, 0.0
      %vm3440 = vcmp.ge.f32.partialorder %v3430, 0.0
      %vm3441 = vcmp.ge.f32.partialorder %v3431, 0.0
      %vm3442 = vcmp.ge.f32.partialorder %v3432, 0.0
      %v3443 = vmul.f32 %v3423, 0.2
      %v3444 = vmul.f32 %v3424, 0.2
      %v3445 = vmul.f32 %v3425, 0.2
      %v3446 = vmul.f32 %v3426, 0.2
      %v3447 = vmul.f32 %v3427, 0.2
      %v3448 = vmul.f32 %v3428, 0.2
      %v3449 = vmul.f32 %v3429, 0.2
      %v3450 = vmul.f32 %v3430, 0.2
      %v3451 = vmul.f32 %v3431, 0.2
      %v3452 = vmul.f32 %v3432, 0.2
      %v3453 = vsel %vm3433, %v3423, %v3443
      %v3454 = vsel %vm3434, %v3424, %v3444
      %v3455 = vsel %vm3435, %v3425, %v3445
      %v3456 = vsel %vm3436, %v3426, %v3446
      %v3457 = vsel %vm3437, %v3427, %v3447
      %v3458 = vsel %vm3438, %v3428, %v3448
      %v3459 = vsel %vm3439, %v3429, %v3449
      %v3460 = vsel %vm3440, %v3430, %v3450
      %v3461 = vsel %vm3441, %v3431, %v3451
      %v3462 = vsel %vm3442, %v3432, %v3452
      %3463 = vst [vmem:[%s654] sm:$0xff] %v3453
      %3464 = vst [vmem:[%s654 + $0x8] sm:$0xff] %v3454
      %3465 = vst [vmem:[%s654 + $0x10] sm:$0xff] %v3455
      %3466 = vst [vmem:[%s654 + $0x18] sm:$0xff] %v3456
      %s3467 = scalar_lea.vmem %s654, 32
      %3468 = vst [vmem:[%s3467] sm:$0xff] %v3459
      %3469 = vst [vmem:[%s3467 + $0x8] sm:$0xff] %v3460
      %3470 = vst [vmem:[%s3467 + $0x10] sm:$0xff] %v3461
      %3471 = vst [vmem:[%s3467 + $0x18] sm:$0xff] %v3462
      %v3472 = vmul.f32 %v3453, %v1633
      %v3473 = vmul.f32 %v3454, %v1633
      %v3474 = vmul.f32 %v3455, %v1638
      %v3475 = vmul.f32 %v3456, %v1638
      %v3476 = vmul.f32 %v3457, %v1643
      %v3477 = vmul.f32 %v3458, %v1643
      %v3478 = vmul.f32 %v3459, %v1648
      %v3479 = vmul.f32 %v3460, %v1648
      %v3480 = vmul.f32 %v3461, %v1653
      %v3481 = vmul.f32 %v3462, %v1653
      %v3482 = vpack.c.bf16 %v3474, %v3472
      %v3483 = vpack.c.bf16 %v3475, %v3473
      %v3484 = vpack.c.bf16 %v3478, %v3476
      %v3485 = vpack.c.bf16 %v3479, %v3477
      %v3486 = vpack.c.bf16 %v3480, %v3480
      %v3487 = vpack.c.bf16 %v3481, %v3481
      %v3494 = vunpack.c.l.b16 %v3482
      %v3495 = vunpack.c.l.b16 %v3483
      %v3496 = vunpack.c.h.b16 %v3482
      %v3497 = vunpack.c.h.b16 %v3483
      %v3498 = vunpack.c.l.b16 %v3484
      %v3499 = vunpack.c.l.b16 %v3485
      %v3500 = vunpack.c.h.b16 %v3484
      %v3501 = vunpack.c.h.b16 %v3485
      %v3502 = vunpack.c.l.b16 %v3486
      %v3503 = vunpack.c.l.b16 %v3487
      %v3504 = vpack.c.b16 %v3495, %v3494
      %v3505 = vpack.c.b16 %v3497, %v3496
      %v3506 = vpack.c.b16 %v3499, %v3498
      %v3507 = vpack.c.b16 %v3501, %v3500
      %v3508 = vpack.c.b16 %v3503, %v3502
      %vm3509 = vmor %vm685, %vm688
      %v3510 = vrot.slane %v3504, 7
      %v3511 = vrot.slane %v3510, 4
      %v3512 = vrot.slane %v3505, 7
      %v3513 = vsel %vm3509, %v3511, %v3512
      %v3514 = vrot.slane %v3512, 4
      %v3515 = vrot.slane %v3506, 7
      %v3516 = vsel %vm3509, %v3514, %v3515
      %v3517 = vrot.slane %v3515, 4
      %v3518 = vrot.slane %v3507, 7
      %v3519 = vsel %vm3509, %v3517, %v3518
      %v3520 = vrot.slane %v3518, 4
      %v3521 = vrot.slane %v3508, 7
      %v3522 = vsel %vm3509, %v3520, %v3521
      %v3523 = vrot.slane %v3521, 4
      %3530 = vst [vmem:[#allocation4] sm:$0xee] %v3510
      %3531 = vst [vmem:[#allocation4 + $0x8] sm:$0xff] %v3513
      %3532 = vst [vmem:[#allocation4 + $0x10] sm:$0xff] %v3516
      %3533 = vst [vmem:[#allocation4 + $0x18] sm:$0xff] %v3519
      %3534 = vst [vmem:[#allocation4 + $0x20] sm:$0xff] %v3522
      %3535 = vst [vmem:[#allocation4 + $0x28] sm:$0x11] %v3523
      %v3536 = vld [vmem:[%s10] sm:$0x3]
      %v3537 = vld [vmem:[#allocation4] sm:$0xff]
      %v3538 = vld [vmem:[#allocation4 + $0x8] sm:$0xff]
      %v3539 = vld [vmem:[#allocation4 + $0x10] sm:$0xff]
      %v3540 = vld [vmem:[#allocation4 + $0x18] sm:$0xff]
      %v3541 = vld [vmem:[#allocation4 + $0x20] sm:$0xff]
      %v3542 = vld [vmem:[%s4] sm:$0xff]
      %v3543 = vld [vmem:[%s4 + $0x8] sm:$0xff]
      %v3544 = vld [vmem:[%s4 + $0x10] sm:$0xff]
      %v3545 = vld [vmem:[%s4 + $0x18] sm:$0xff]
      %v3546 = vld [vmem:[%s4 + $0x20] sm:$0xff]
      %v3547 = vld [vmem:[%s4 + $0x28] sm:$0xff]
      %v3548 = vld [vmem:[%s4 + $0x30] sm:$0xff]
      %v3549 = vld [vmem:[%s4 + $0x38] sm:$0xff]
      %v3550 = vld [vmem:[%s4 + $0x40] sm:$0xff]
      %v3551 = vld [vmem:[%s4 + $0x48] sm:$0xff]
      %v3552 = vld [vmem:[%s4 + $0x50] sm:$0xff]
      %v3553 = vld [vmem:[%s4 + $0x58] sm:$0xff]
      %v3554 = vld [vmem:[%s4 + $0x60] sm:$0xff]
      %v3555 = vld [vmem:[%s4 + $0x68] sm:$0xff]
      %v3556 = vld [vmem:[%s4 + $0x70] sm:$0xff]
      %v3557 = vld [vmem:[%s4 + $0x78] sm:$0xff]
      %v3558 = vld [vmem:[%s4 + $0x80] sm:$0xff]
      %v3559 = vld [vmem:[%s4 + $0x88] sm:$0xff]
      %v3560 = vld [vmem:[%s4 + $0x90] sm:$0xff]
      %v3561 = vld [vmem:[%s4 + $0x98] sm:$0xff]
      %v3562 = vld [vmem:[%s4 + $0xa0] sm:$0xff]
      %v3563 = vld [vmem:[%s4 + $0xa8] sm:$0xff]
      %v3564 = vld [vmem:[%s4 + $0xb0] sm:$0xff]
      %v3565 = vld [vmem:[%s4 + $0xb8] sm:$0xff]
      %v3566 = vld [vmem:[%s4 + $0xc0] sm:$0xff]
      %v3567 = vld [vmem:[%s4 + $0xc8] sm:$0xff]
      %v3568 = vld [vmem:[%s4 + $0xd0] sm:$0xff]
      %v3569 = vld [vmem:[%s4 + $0xd8] sm:$0xff]
      %v3570 = vld [vmem:[%s4 + $0xe0] sm:$0xff]
      %v3571 = vld [vmem:[%s4 + $0xe8] sm:$0xff]
      %v3572 = vld [vmem:[%s4 + $0xf0] sm:$0xff]
      %v3573 = vld [vmem:[%s4 + $0xf8] sm:$0xff]
      %v3579 = vunpack.c.l.b16 %v3537
      %v3580 = vunpack.c.h.b16 %v3537
      %v3581 = vunpack.c.l.b16 %v3538
      %v3582 = vunpack.c.h.b16 %v3538
      %v3583 = vunpack.c.l.b16 %v3539
      %v3584 = vunpack.c.h.b16 %v3539
      %v3585 = vunpack.c.l.b16 %v3540
      %v3586 = vunpack.c.h.b16 %v3540
      %v3587 = vunpack.c.l.b16 %v3541
      %v3588 = vunpack.c.h.b16 %v3541
      %v3589 = vpack.c.b16 %v3581, %v3579
      %v3590 = vpack.c.b16 %v3582, %v3580
      %v3591 = vpack.c.b16 %v3585, %v3583
      %v3592 = vpack.c.b16 %v3586, %v3584
      %v3593 = vpack.c.b16 %v3587, %v3587
      %v3594 = vpack.c.b16 %v3588, %v3588
      %v3633 = vunpack.c.l.b16 %v3542
      %v3634 = vunpack.c.h.b16 %v3542
      %v3635 = vunpack.c.l.b16 %v3543
      %v3636 = vunpack.c.h.b16 %v3543
      %v3637 = vunpack.c.l.b16 %v3544
      %v3638 = vunpack.c.h.b16 %v3544
      %v3639 = vunpack.c.l.b16 %v3545
      %v3640 = vunpack.c.h.b16 %v3545
      %v3641 = vunpack.c.l.b16 %v3546
      %v3642 = vunpack.c.h.b16 %v3546
      %v3643 = vunpack.c.l.b16 %v3547
      %v3644 = vunpack.c.h.b16 %v3547
      %v3645 = vunpack.c.l.b16 %v3548
      %v3646 = vunpack.c.h.b16 %v3548
      %v3647 = vunpack.c.l.b16 %v3549
      %v3648 = vunpack.c.h.b16 %v3549
      %v3649 = vunpack.c.l.b16 %v3550
      %v3650 = vunpack.c.h.b16 %v3550
      %v3651 = vunpack.c.l.b16 %v3551
      %v3652 = vunpack.c.h.b16 %v3551
      %v3653 = vunpack.c.l.b16 %v3552
      %v3654 = vunpack.c.h.b16 %v3552
      %v3655 = vunpack.c.l.b16 %v3553
      %v3656 = vunpack.c.h.b16 %v3553
      %v3657 = vunpack.c.l.b16 %v3554
      %v3658 = vunpack.c.h.b16 %v3554
      %v3659 = vunpack.c.l.b16 %v3555
      %v3660 = vunpack.c.h.b16 %v3555
      %v3661 = vunpack.c.l.b16 %v3556
      %v3662 = vunpack.c.h.b16 %v3556
      %v3663 = vunpack.c.l.b16 %v3557
      %v3664 = vunpack.c.h.b16 %v3557
      %v3665 = vunpack.c.l.b16 %v3558
      %v3666 = vunpack.c.h.b16 %v3558
      %v3667 = vunpack.c.l.b16 %v3559
      %v3668 = vunpack.c.h.b16 %v3559
      %v3669 = vunpack.c.l.b16 %v3560
      %v3670 = vunpack.c.h.b16 %v3560
      %v3671 = vunpack.c.l.b16 %v3561
      %v3672 = vunpack.c.h.b16 %v3561
      %v3673 = vunpack.c.l.b16 %v3562
      %v3674 = vunpack.c.h.b16 %v3562
      %v3675 = vunpack.c.l.b16 %v3563
      %v3676 = vunpack.c.h.b16 %v3563
      %v3677 = vunpack.c.l.b16 %v3564
      %v3678 = vunpack.c.h.b16 %v3564
      %v3679 = vunpack.c.l.b16 %v3565
      %v3680 = vunpack.c.h.b16 %v3565
      %v3681 = vunpack.c.l.b16 %v3566
      %v3682 = vunpack.c.h.b16 %v3566
      %v3683 = vunpack.c.l.b16 %v3567
      %v3684 = vunpack.c.h.b16 %v3567
      %v3685 = vunpack.c.l.b16 %v3568
      %v3686 = vunpack.c.h.b16 %v3568
      %v3687 = vunpack.c.l.b16 %v3569
      %v3688 = vunpack.c.h.b16 %v3569
      %v3689 = vunpack.c.l.b16 %v3570
      %v3690 = vunpack.c.h.b16 %v3570
      %v3691 = vunpack.c.l.b16 %v3571
      %v3692 = vunpack.c.h.b16 %v3571
      %v3693 = vunpack.c.l.b16 %v3572
      %v3694 = vunpack.c.h.b16 %v3572
      %v3695 = vunpack.c.l.b16 %v3573
      %v3696 = vunpack.c.h.b16 %v3573
      %v3697 = vpack.c.b16 %v3635, %v3633
      %v3698 = vpack.c.b16 %v3636, %v3634
      %v3699 = vpack.c.b16 %v3639, %v3637
      %v3700 = vpack.c.b16 %v3640, %v3638
      %v3701 = vpack.c.b16 %v3643, %v3641
      %v3702 = vpack.c.b16 %v3644, %v3642
      %v3703 = vpack.c.b16 %v3647, %v3645
      %v3704 = vpack.c.b16 %v3648, %v3646
      %v3705 = vpack.c.b16 %v3651, %v3649
      %v3706 = vpack.c.b16 %v3652, %v3650
      %v3707 = vpack.c.b16 %v3655, %v3653
      %v3708 = vpack.c.b16 %v3656, %v3654
      %v3709 = vpack.c.b16 %v3659, %v3657
      %v3710 = vpack.c.b16 %v3660, %v3658
      %v3711 = vpack.c.b16 %v3663, %v3661
      %v3712 = vpack.c.b16 %v3664, %v3662
      %v3713 = vpack.c.b16 %v3667, %v3665
      %v3714 = vpack.c.b16 %v3668, %v3666
      %v3715 = vpack.c.b16 %v3671, %v3669
      %v3716 = vpack.c.b16 %v3672, %v3670
      %v3717 = vpack.c.b16 %v3675, %v3673
      %v3718 = vpack.c.b16 %v3676, %v3674
      %v3719 = vpack.c.b16 %v3679, %v3677
      %v3720 = vpack.c.b16 %v3680, %v3678
      %v3721 = vpack.c.b16 %v3683, %v3681
      %v3722 = vpack.c.b16 %v3684, %v3682
      %v3723 = vpack.c.b16 %v3687, %v3685
      %v3724 = vpack.c.b16 %v3688, %v3686
      %v3725 = vpack.c.b16 %v3691, %v3689
      %v3726 = vpack.c.b16 %v3692, %v3690
      %v3727 = vpack.c.b16 %v3695, %v3693
      %v3728 = vpack.c.b16 %v3696, %v3694
      %3761 = vmatprep.subr.bf16.mxu0 %v3712
      %3762 = vmatpush1.bf16.msra.mxu0 %v3711
      %3763 = vmatprep.subr.bf16.mxu0 %v3710
      %3764 = vmatpush1.bf16.msra.mxu0 %v3709
      %3765 = vmatprep.subr.bf16.mxu0 %v3708
      %3766 = vmatpush1.bf16.msra.mxu0 %v3707
      %3767 = vmatprep.subr.bf16.mxu0 %v3706
      %3768 = vmatpush1.bf16.msra.mxu0 %v3705
      %3769 = vmatprep.subr.bf16.mxu0 %v3704
      %3770 = vmatpush1.bf16.msra.mxu0 %v3703
      %3771 = vmatprep.subr.bf16.mxu0 %v3702
      %3772 = vmatpush1.bf16.msra.mxu0 %v3701
      %3773 = vmatprep.subr.bf16.mxu0 %v3700
      %3774 = vmatpush1.bf16.msra.mxu0 %v3699
      %3775 = vmatprep.subr.bf16.mxu0 %v3698
      %3776 = vmatpush1.bf16.msra.mxu0 %v3697
      %3777 = vmatprep.subr.bf16.mxu0 %v3728
      %3778 = vmatpush2.bf16.msra.mxu0 %v3727
      %3779 = vmatprep.subr.bf16.mxu0 %v3726
      %3780 = vmatpush2.bf16.msra.mxu0 %v3725
      %3781 = vmatprep.subr.bf16.mxu0 %v3724
      %3782 = vmatpush2.bf16.msra.mxu0 %v3723
      %3783 = vmatprep.subr.bf16.mxu0 %v3722
      %3784 = vmatpush2.bf16.msra.mxu0 %v3721
      %3785 = vmatprep.subr.bf16.mxu0 %v3720
      %3786 = vmatpush2.bf16.msra.mxu0 %v3719
      %3787 = vmatprep.subr.bf16.mxu0 %v3718
      %3788 = vmatpush2.bf16.msra.mxu0 %v3717
      %3789 = vmatprep.subr.bf16.mxu0 %v3716
      %3790 = vmatpush2.bf16.msra.mxu0 %v3715
      %3791 = vmatprep.subr.bf16.mxu0 %v3714
      %3792 = vmatpush2.bf16.msra.mxu0 %v3713
      %3793 = vmatprep.mubr.bf16.mxu0 %v3590
      %3794 = vmatmul.mubr.bf16.gmra.mxu0 %v3589
      %v3795 = vpop.f32.mrf.mxu0
      %v3796 = vadd.f32 0.0, %v3795
      %v3797 = vpop.f32.mrf.mxu0
      %v3798 = vadd.f32 0.0, %v3797
      %v3799 = vpop.f32.mrf.mxu0
      %v3800 = vadd.f32 0.0, %v3799
      %v3801 = vpop.f32.mrf.mxu0
      %v3802 = vadd.f32 0.0, %v3801
      %3803 = vmatprep.mubr.bf16.mxu0 %v3592
      %3804 = vmatmul.mubr.bf16.gmra.mxu0 %v3591
      %v3805 = vpop.f32.mrf.mxu0
      %v3806 = vadd.f32 0.0, %v3805
      %v3807 = vpop.f32.mrf.mxu0
      %v3808 = vadd.f32 0.0, %v3807
      %v3809 = vpop.f32.mrf.mxu0
      %v3810 = vadd.f32 0.0, %v3809
      %v3811 = vpop.f32.mrf.mxu0
      %v3812 = vadd.f32 0.0, %v3811
      %3813 = vmatprep.mubr.bf16.mxu0 %v3594
      %3814 = vmatmul.mubr.bf16.gmra.mxu0 %v3593
      %v3815 = vpop.f32.mrf.mxu0
      %v3816 = vadd.f32 0.0, %v3815
      %v3817 = vpop.f32.mrf.mxu0
      %v3818 = vadd.f32 0.0, %v3817
      %v3819 = vpop.f32.mrf.mxu0
      %v3820 = vpop.f32.mrf.mxu0
      %3821 = vdwg.mxu0
      %v3823 = vlaneseq
      %v3824 = vshrl.u32 %v3823, 7
      %v3825 = vsub.s32 0, %v3824
      %v3826 = vrot.slane %v3536, %v3825
      %v3827 = vlaneseq
      %v3828 = vshrl.u32 %v3827, 7
      %v3829 = vsub.s32 1, %v3828
      %v3830 = vrot.slane %v3536, %v3829
      %v3833 = vadd.f32 %v3826, %v3796
      %v3834 = vadd.f32 %v3830, %v3798
      %v3835 = vadd.f32 %v3826, %v3800
      %v3836 = vadd.f32 %v3830, %v3802
      %v3837 = vadd.f32 %v3826, %v3806
      %v3838 = vadd.f32 %v3830, %v3808
      %v3839 = vadd.f32 %v3826, %v3810
      %v3840 = vadd.f32 %v3830, %v3812
      %v3841 = vadd.f32 %v3826, %v3816
      %v3842 = vadd.f32 %v3830, %v3818
      %3843 = vst [vmem:[#allocation2] sm:$0xff] %v3833
      %3844 = vst [vmem:[#allocation2 + $0x8] sm:$0xff] %v3834
      %3845 = vst [vmem:[#allocation2 + $0x18] sm:$0xff] %v3835
      %3846 = vst [vmem:[#allocation2 + $0x20] sm:$0xff] %v3836
      %3847 = vst [vmem:[#allocation2 + $0x30] sm:$0xff] %v3837
      %3848 = vst [vmem:[#allocation2 + $0x38] sm:$0xff] %v3838
      %3849 = vst [vmem:[#allocation2 + $0x48] sm:$0xff] %v3839
      %3850 = vst [vmem:[#allocation2 + $0x50] sm:$0xff] %v3840
      %3851 = vst [vmem:[#allocation2 + $0x60] sm:$0xff] %v3841
      %3852 = vst [vmem:[#allocation2 + $0x68] sm:$0xff] %v3842
      %v3853 = vld [vmem:[#allocation2] sm:$0xff]
      %v3854 = vld [vmem:[#allocation2 + $0x8] sm:$0xff]
      %v3855 = vld [vmem:[#allocation2 + $0x18] sm:$0xff]
      %v3856 = vld [vmem:[#allocation2 + $0x20] sm:$0xff]
      %v3857 = vld [vmem:[#allocation2 + $0x30] sm:$0xff]
      %v3858 = vld [vmem:[#allocation2 + $0x38] sm:$0xff]
      %v3859 = vld [vmem:[#allocation2 + $0x48] sm:$0xff]
      %v3860 = vld [vmem:[#allocation2 + $0x50] sm:$0xff]
      %v3861 = vld [vmem:[#allocation2 + $0x60] sm:$0xff]
      %v3862 = vld [vmem:[#allocation2 + $0x68] sm:$0xff]
      %v3863 = vld [vmem:[#allocation4] sm:$0xee]
      %v3864 = vld [vmem:[#allocation4 + $0x8] sm:$0xff]
      %v3865 = vld [vmem:[#allocation4 + $0x10] sm:$0xff]
      %v3866 = vld [vmem:[#allocation4 + $0x18] sm:$0xff]
      %v3867 = vld [vmem:[#allocation4 + $0x20] sm:$0xff]
      %v3868 = vld [vmem:[#allocation4 + $0x28] sm:$0x11]
      %s3869 = scalar_lea.vmem %s4, 256
      %v3870 = vld [vmem:[%s3869] sm:$0xff]
      %v3871 = vld [vmem:[%s3869 + $0x8] sm:$0xff]
      %v3872 = vld [vmem:[%s3869 + $0x10] sm:$0xff]
      %v3873 = vld [vmem:[%s3869 + $0x18] sm:$0xff]
      %v3874 = vld [vmem:[%s3869 + $0x20] sm:$0xff]
      %v3875 = vld [vmem:[%s3869 + $0x28] sm:$0xff]
      %v3876 = vld [vmem:[%s3869 + $0x30] sm:$0xff]
      %v3877 = vld [vmem:[%s3869 + $0x38] sm:$0xff]
      %v3878 = vld [vmem:[%s3869 + $0x40] sm:$0xff]
      %v3879 = vld [vmem:[%s3869 + $0x48] sm:$0xff]
      %v3880 = vld [vmem:[%s3869 + $0x50] sm:$0xff]
      %v3881 = vld [vmem:[%s3869 + $0x58] sm:$0xff]
      %v3882 = vld [vmem:[%s3869 + $0x60] sm:$0xff]
      %v3883 = vld [vmem:[%s3869 + $0x68] sm:$0xff]
      %v3884 = vld [vmem:[%s3869 + $0x70] sm:$0xff]
      %v3885 = vld [vmem:[%s3869 + $0x78] sm:$0xff]
      %v3886 = vld [vmem:[%s3869 + $0x80] sm:$0xff]
      %v3887 = vld [vmem:[%s3869 + $0x88] sm:$0xff]
      %v3888 = vld [vmem:[%s3869 + $0x90] sm:$0xff]
      %v3889 = vld [vmem:[%s3869 + $0x98] sm:$0xff]
      %v3890 = vld [vmem:[%s3869 + $0xa0] sm:$0xff]
      %v3891 = vld [vmem:[%s3869 + $0xa8] sm:$0xff]
      %v3892 = vld [vmem:[%s3869 + $0xb0] sm:$0xff]
      %v3893 = vld [vmem:[%s3869 + $0xb8] sm:$0xff]
      %v3894 = vld [vmem:[%s3869 + $0xc0] sm:$0xff]
      %v3895 = vld [vmem:[%s3869 + $0xc8] sm:$0xff]
      %v3896 = vld [vmem:[%s3869 + $0xd0] sm:$0xff]
      %v3897 = vld [vmem:[%s3869 + $0xd8] sm:$0xff]
      %v3898 = vld [vmem:[%s3869 + $0xe0] sm:$0xff]
      %v3899 = vld [vmem:[%s3869 + $0xe8] sm:$0xff]
      %v3900 = vld [vmem:[%s3869 + $0xf0] sm:$0xff]
      %v3901 = vld [vmem:[%s3869 + $0xf8] sm:$0xff]
      %v3908 = vunpack.c.l.b16 %v3863
      %v3909 = vunpack.c.h.b16 %v3863
      %v3910 = vunpack.c.l.b16 %v3864
      %v3911 = vunpack.c.h.b16 %v3864
      %v3912 = vunpack.c.l.b16 %v3865
      %v3913 = vunpack.c.h.b16 %v3865
      %v3914 = vunpack.c.l.b16 %v3866
      %v3915 = vunpack.c.h.b16 %v3866
      %v3916 = vunpack.c.l.b16 %v3867
      %v3917 = vunpack.c.h.b16 %v3867
      %v3918 = vunpack.c.l.b16 %v3868
      %v3919 = vunpack.c.h.b16 %v3868
      %v3920 = vpack.c.b16 %v3910, %v3908
      %v3921 = vpack.c.b16 %v3911, %v3909
      %v3922 = vpack.c.b16 %v3914, %v3912
      %v3923 = vpack.c.b16 %v3915, %v3913
      %v3924 = vpack.c.b16 %v3918, %v3916
      %v3925 = vpack.c.b16 %v3919, %v3917
      %v3926 = vrot.slane %v3920, 1
      %v3927 = vrot.slane %v3922, 1
      %v3928 = vsel %vm3016, %v3926, %v3927
      %v3929 = vrot.slane %v3921, 1
      %v3930 = vrot.slane %v3923, 1
      %v3931 = vsel %vm3016, %v3929, %v3930
      %v3932 = vrot.slane %v3924, 1
      %v3933 = vsel %vm3016, %v3927, %v3932
      %v3934 = vrot.slane %v3925, 1
      %v3935 = vsel %vm3016, %v3930, %v3934
      %v3974 = vunpack.c.l.b16 %v3870
      %v3975 = vunpack.c.h.b16 %v3870
      %v3976 = vunpack.c.l.b16 %v3871
      %v3977 = vunpack.c.h.b16 %v3871
      %v3978 = vunpack.c.l.b16 %v3872
      %v3979 = vunpack.c.h.b16 %v3872
      %v3980 = vunpack.c.l.b16 %v3873
      %v3981 = vunpack.c.h.b16 %v3873
      %v3982 = vunpack.c.l.b16 %v3874
      %v3983 = vunpack.c.h.b16 %v3874
      %v3984 = vunpack.c.l.b16 %v3875
      %v3985 = vunpack.c.h.b16 %v3875
      %v3986 = vunpack.c.l.b16 %v3876
      %v3987 = vunpack.c.h.b16 %v3876
      %v3988 = vunpack.c.l.b16 %v3877
      %v3989 = vunpack.c.h.b16 %v3877
      %v3990 = vunpack.c.l.b16 %v3878
      %v3991 = vunpack.c.h.b16 %v3878
      %v3992 = vunpack.c.l.b16 %v3879
      %v3993 = vunpack.c.h.b16 %v3879
      %v3994 = vunpack.c.l.b16 %v3880
      %v3995 = vunpack.c.h.b16 %v3880
      %v3996 = vunpack.c.l.b16 %v3881
      %v3997 = vunpack.c.h.b16 %v3881
      %v3998 = vunpack.c.l.b16 %v3882
      %v3999 = vunpack.c.h.b16 %v3882
      %v4000 = vunpack.c.l.b16 %v3883
      %v4001 = vunpack.c.h.b16 %v3883
      %v4002 = vunpack.c.l.b16 %v3884
      %v4003 = vunpack.c.h.b16 %v3884
      %v4004 = vunpack.c.l.b16 %v3885
      %v4005 = vunpack.c.h.b16 %v3885
      %v4006 = vunpack.c.l.b16 %v3886
      %v4007 = vunpack.c.h.b16 %v3886
      %v4008 = vunpack.c.l.b16 %v3887
      %v4009 = vunpack.c.h.b16 %v3887
      %v4010 = vunpack.c.l.b16 %v3888
      %v4011 = vunpack.c.h.b16 %v3888
      %v4012 = vunpack.c.l.b16 %v3889
      %v4013 = vunpack.c.h.b16 %v3889
      %v4014 = vunpack.c.l.b16 %v3890
      %v4015 = vunpack.c.h.b16 %v3890
      %v4016 = vunpack.c.l.b16 %v3891
      %v4017 = vunpack.c.h.b16 %v3891
      %v4018 = vunpack.c.l.b16 %v3892
      %v4019 = vunpack.c.h.b16 %v3892
      %v4020 = vunpack.c.l.b16 %v3893
      %v4021 = vunpack.c.h.b16 %v3893
      %v4022 = vunpack.c.l.b16 %v3894
      %v4023 = vunpack.c.h.b16 %v3894
      %v4024 = vunpack.c.l.b16 %v3895
      %v4025 = vunpack.c.h.b16 %v3895
      %v4026 = vunpack.c.l.b16 %v3896
      %v4027 = vunpack.c.h.b16 %v3896
      %v4028 = vunpack.c.l.b16 %v3897
      %v4029 = vunpack.c.h.b16 %v3897
      %v4030 = vunpack.c.l.b16 %v3898
      %v4031 = vunpack.c.h.b16 %v3898
      %v4032 = vunpack.c.l.b16 %v3899
      %v4033 = vunpack.c.h.b16 %v3899
      %v4034 = vunpack.c.l.b16 %v3900
      %v4035 = vunpack.c.h.b16 %v3900
      %v4036 = vunpack.c.l.b16 %v3901
      %v4037 = vunpack.c.h.b16 %v3901
      %v4038 = vpack.c.b16 %v3976, %v3974
      %v4039 = vpack.c.b16 %v3977, %v3975
      %v4040 = vpack.c.b16 %v3980, %v3978
      %v4041 = vpack.c.b16 %v3981, %v3979
      %v4042 = vpack.c.b16 %v3984, %v3982
      %v4043 = vpack.c.b16 %v3985, %v3983
      %v4044 = vpack.c.b16 %v3988, %v3986
      %v4045 = vpack.c.b16 %v3989, %v3987
      %v4046 = vpack.c.b16 %v3992, %v3990
      %v4047 = vpack.c.b16 %v3993, %v3991
      %v4048 = vpack.c.b16 %v3996, %v3994
      %v4049 = vpack.c.b16 %v3997, %v3995
      %v4050 = vpack.c.b16 %v4000, %v3998
      %v4051 = vpack.c.b16 %v4001, %v3999
      %v4052 = vpack.c.b16 %v4004, %v4002
      %v4053 = vpack.c.b16 %v4005, %v4003
      %v4054 = vpack.c.b16 %v4008, %v4006
      %v4055 = vpack.c.b16 %v4009, %v4007
      %v4056 = vpack.c.b16 %v4012, %v4010
      %v4057 = vpack.c.b16 %v4013, %v4011
      %v4058 = vpack.c.b16 %v4016, %v4014
      %v4059 = vpack.c.b16 %v4017, %v4015
      %v4060 = vpack.c.b16 %v4020, %v4018
      %v4061 = vpack.c.b16 %v4021, %v4019
      %v4062 = vpack.c.b16 %v4024, %v4022
      %v4063 = vpack.c.b16 %v4025, %v4023
      %v4064 = vpack.c.b16 %v4028, %v4026
      %v4065 = vpack.c.b16 %v4029, %v4027
      %v4066 = vpack.c.b16 %v4032, %v4030
      %v4067 = vpack.c.b16 %v4033, %v4031
      %v4068 = vpack.c.b16 %v4036, %v4034
      %v4069 = vpack.c.b16 %v4037, %v4035
      %4102 = vmatprep.subr.bf16.mxu0 %v4053
      %4103 = vmatpush1.bf16.msra.mxu0 %v4052
      %4104 = vmatprep.subr.bf16.mxu0 %v4051
      %4105 = vmatpush1.bf16.msra.mxu0 %v4050
      %4106 = vmatprep.subr.bf16.mxu0 %v4049
      %4107 = vmatpush1.bf16.msra.mxu0 %v4048
      %4108 = vmatprep.subr.bf16.mxu0 %v4047
      %4109 = vmatpush1.bf16.msra.mxu0 %v4046
      %4110 = vmatprep.subr.bf16.mxu0 %v4045
      %4111 = vmatpush1.bf16.msra.mxu0 %v4044
      %4112 = vmatprep.subr.bf16.mxu0 %v4043
      %4113 = vmatpush1.bf16.msra.mxu0 %v4042
      %4114 = vmatprep.subr.bf16.mxu0 %v4041
      %4115 = vmatpush1.bf16.msra.mxu0 %v4040
      %4116 = vmatprep.subr.bf16.mxu0 %v4039
      %4117 = vmatpush1.bf16.msra.mxu0 %v4038
      %4118 = vmatprep.subr.bf16.mxu0 %v4069
      %4119 = vmatpush2.bf16.msra.mxu0 %v4068
      %4120 = vmatprep.subr.bf16.mxu0 %v4067
      %4121 = vmatpush2.bf16.msra.mxu0 %v4066
      %4122 = vmatprep.subr.bf16.mxu0 %v4065
      %4123 = vmatpush2.bf16.msra.mxu0 %v4064
      %4124 = vmatprep.subr.bf16.mxu0 %v4063
      %4125 = vmatpush2.bf16.msra.mxu0 %v4062
      %4126 = vmatprep.subr.bf16.mxu0 %v4061
      %4127 = vmatpush2.bf16.msra.mxu0 %v4060
      %4128 = vmatprep.subr.bf16.mxu0 %v4059
      %4129 = vmatpush2.bf16.msra.mxu0 %v4058
      %4130 = vmatprep.subr.bf16.mxu0 %v4057
      %4131 = vmatpush2.bf16.msra.mxu0 %v4056
      %4132 = vmatprep.subr.bf16.mxu0 %v4055
      %4133 = vmatpush2.bf16.msra.mxu0 %v4054
      %4134 = vmatprep.mubr.bf16.mxu0 %v3931
      %4135 = vmatmul.mubr.bf16.gmra.mxu0 %v3928
      %v4136 = vpop.f32.mrf.mxu0
      %v4137 = vadd.f32 0.0, %v4136
      %v4138 = vpop.f32.mrf.mxu0
      %v4139 = vadd.f32 0.0, %v4138
      %v4140 = vpop.f32.mrf.mxu0
      %v4141 = vadd.f32 0.0, %v4140
      %v4142 = vpop.f32.mrf.mxu0
      %v4143 = vadd.f32 0.0, %v4142
      %4144 = vmatprep.mubr.bf16.mxu0 %v3935
      %4145 = vmatmul.mubr.bf16.gmra.mxu0 %v3933
      %v4146 = vpop.f32.mrf.mxu0
      %v4147 = vadd.f32 0.0, %v4146
      %v4148 = vpop.f32.mrf.mxu0
      %v4149 = vadd.f32 0.0, %v4148
      %v4150 = vpop.f32.mrf.mxu0
      %v4151 = vadd.f32 0.0, %v4150
      %v4152 = vpop.f32.mrf.mxu0
      %v4153 = vadd.f32 0.0, %v4152
      %4154 = vmatprep.mubr.bf16.mxu0 %v3934
      %4155 = vmatmul.mubr.bf16.gmra.mxu0 %v3932
      %v4156 = vpop.f32.mrf.mxu0
      %v4157 = vadd.f32 0.0, %v4156
      %v4158 = vpop.f32.mrf.mxu0
      %v4159 = vadd.f32 0.0, %v4158
      %v4160 = vpop.f32.mrf.mxu0
      %v4161 = vpop.f32.mrf.mxu0
      %4162 = vdwg.mxu0
      %v4163 = vadd.f32 %v3853, %v4137
      %v4164 = vadd.f32 %v3854, %v4139
      %v4165 = vadd.f32 %v3855, %v4141
      %v4166 = vadd.f32 %v3856, %v4143
      %v4167 = vadd.f32 %v3857, %v4147
      %v4168 = vadd.f32 %v3858, %v4149
      %v4169 = vadd.f32 %v3859, %v4151
      %v4170 = vadd.f32 %v3860, %v4153
      %v4171 = vadd.f32 %v3861, %v4157
      %v4172 = vadd.f32 %v3862, %v4159
      %4173 = vst [vmem:[#allocation2] sm:$0xff] %v4163
      %4174 = vst [vmem:[#allocation2 + $0x8] sm:$0xff] %v4164
      %4175 = vst [vmem:[#allocation2 + $0x18] sm:$0xff] %v4165
      %4176 = vst [vmem:[#allocation2 + $0x20] sm:$0xff] %v4166
      %4177 = vst [vmem:[#allocation2 + $0x30] sm:$0xff] %v4167
      %4178 = vst [vmem:[#allocation2 + $0x38] sm:$0xff] %v4168
      %4179 = vst [vmem:[#allocation2 + $0x48] sm:$0xff] %v4169
      %4180 = vst [vmem:[#allocation2 + $0x50] sm:$0xff] %v4170
      %4181 = vst [vmem:[#allocation2 + $0x60] sm:$0xff] %v4171
      %4182 = vst [vmem:[#allocation2 + $0x68] sm:$0xff] %v4172
      %v4183 = vld [vmem:[#allocation2] sm:$0xff]
      %v4184 = vld [vmem:[#allocation2 + $0x8] sm:$0xff]
      %v4185 = vld [vmem:[#allocation2 + $0x18] sm:$0xff]
      %v4186 = vld [vmem:[#allocation2 + $0x20] sm:$0xff]
      %v4187 = vld [vmem:[#allocation2 + $0x30] sm:$0xff]
      %v4188 = vld [vmem:[#allocation2 + $0x38] sm:$0xff]
      %v4189 = vld [vmem:[#allocation2 + $0x48] sm:$0xff]
      %v4190 = vld [vmem:[#allocation2 + $0x50] sm:$0xff]
      %v4191 = vld [vmem:[#allocation2 + $0x60] sm:$0xff]
      %v4192 = vld [vmem:[#allocation2 + $0x68] sm:$0xff]
      %v4193 = vld [vmem:[#allocation4] sm:$0xcc]
      %v4194 = vld [vmem:[#allocation4 + $0x8] sm:$0xff]
      %v4195 = vld [vmem:[#allocation4 + $0x10] sm:$0xff]
      %v4196 = vld [vmem:[#allocation4 + $0x18] sm:$0xff]
      %v4197 = vld [vmem:[#allocation4 + $0x20] sm:$0xff]
      %v4198 = vld [vmem:[#allocation4 + $0x28] sm:$0x33]
      %s4199 = scalar_lea.vmem %s4, 512
      %v4200 = vld [vmem:[%s4199] sm:$0xff]
      %v4201 = vld [vmem:[%s4199 + $0x8] sm:$0xff]
      %v4202 = vld [vmem:[%s4199 + $0x10] sm:$0xff]
      %v4203 = vld [vmem:[%s4199 + $0x18] sm:$0xff]
      %v4204 = vld [vmem:[%s4199 + $0x20] sm:$0xff]
      %v4205 = vld [vmem:[%s4199 + $0x28] sm:$0xff]
      %v4206 = vld [vmem:[%s4199 + $0x30] sm:$0xff]
      %v4207 = vld [vmem:[%s4199 + $0x38] sm:$0xff]
      %v4208 = vld [vmem:[%s4199 + $0x40] sm:$0xff]
      %v4209 = vld [vmem:[%s4199 + $0x48] sm:$0xff]
      %v4210 = vld [vmem:[%s4199 + $0x50] sm:$0xff]
      %v4211 = vld [vmem:[%s4199 + $0x58] sm:$0xff]
      %v4212 = vld [vmem:[%s4199 + $0x60] sm:$0xff]
      %v4213 = vld [vmem:[%s4199 + $0x68] sm:$0xff]
      %v4214 = vld [vmem:[%s4199 + $0x70] sm:$0xff]
      %v4215 = vld [vmem:[%s4199 + $0x78] sm:$0xff]
      %v4216 = vld [vmem:[%s4199 + $0x80] sm:$0xff]
      %v4217 = vld [vmem:[%s4199 + $0x88] sm:$0xff]
      %v4218 = vld [vmem:[%s4199 + $0x90] sm:$0xff]
      %v4219 = vld [vmem:[%s4199 + $0x98] sm:$0xff]
      %v4220 = vld [vmem:[%s4199 + $0xa0] sm:$0xff]
      %v4221 = vld [vmem:[%s4199 + $0xa8] sm:$0xff]
      %v4222 = vld [vmem:[%s4199 + $0xb0] sm:$0xff]
      %v4223 = vld [vmem:[%s4199 + $0xb8] sm:$0xff]
      %v4224 = vld [vmem:[%s4199 + $0xc0] sm:$0xff]
      %v4225 = vld [vmem:[%s4199 + $0xc8] sm:$0xff]
      %v4226 = vld [vmem:[%s4199 + $0xd0] sm:$0xff]
      %v4227 = vld [vmem:[%s4199 + $0xd8] sm:$0xff]
      %v4228 = vld [vmem:[%s4199 + $0xe0] sm:$0xff]
      %v4229 = vld [vmem:[%s4199 + $0xe8] sm:$0xff]
      %v4230 = vld [vmem:[%s4199 + $0xf0] sm:$0xff]
      %v4231 = vld [vmem:[%s4199 + $0xf8] sm:$0xff]
      %v4238 = vunpack.c.l.b16 %v4193
      %v4239 = vunpack.c.h.b16 %v4193
      %v4240 = vunpack.c.l.b16 %v4194
      %v4241 = vunpack.c.h.b16 %v4194
      %v4242 = vunpack.c.l.b16 %v4195
      %v4243 = vunpack.c.h.b16 %v4195
      %v4244 = vunpack.c.l.b16 %v4196
      %v4245 = vunpack.c.h.b16 %v4196
      %v4246 = vunpack.c.l.b16 %v4197
      %v4247 = vunpack.c.h.b16 %v4197
      %v4248 = vunpack.c.l.b16 %v4198
      %v4249 = vunpack.c.h.b16 %v4198
      %v4250 = vpack.c.b16 %v4240, %v4238
      %v4251 = vpack.c.b16 %v4241, %v4239
      %v4252 = vpack.c.b16 %v4244, %v4242
      %v4253 = vpack.c.b16 %v4245, %v4243
      %v4254 = vpack.c.b16 %v4248, %v4246
      %v4255 = vpack.c.b16 %v4249, %v4247
      %vm4256 = vcmask 1045504
      %v4257 = vrot.slane %v4250, 2
      %v4258 = vrot.slane %v4252, 2
      %v4259 = vsel %vm4256, %v4257, %v4258
      %v4260 = vrot.slane %v4251, 2
      %v4261 = vrot.slane %v4253, 2
      %v4262 = vsel %vm4256, %v4260, %v4261
      %v4263 = vrot.slane %v4254, 2
      %v4264 = vsel %vm4256, %v4258, %v4263
      %v4265 = vrot.slane %v4255, 2
      %v4266 = vsel %vm4256, %v4261, %v4265
      %v4305 = vunpack.c.l.b16 %v4200
      %v4306 = vunpack.c.h.b16 %v4200
      %v4307 = vunpack.c.l.b16 %v4201
      %v4308 = vunpack.c.h.b16 %v4201
      %v4309 = vunpack.c.l.b16 %v4202
      %v4310 = vunpack.c.h.b16 %v4202
      %v4311 = vunpack.c.l.b16 %v4203
      %v4312 = vunpack.c.h.b16 %v4203
      %v4313 = vunpack.c.l.b16 %v4204
      %v4314 = vunpack.c.h.b16 %v4204
      %v4315 = vunpack.c.l.b16 %v4205
      %v4316 = vunpack.c.h.b16 %v4205
      %v4317 = vunpack.c.l.b16 %v4206
      %v4318 = vunpack.c.h.b16 %v4206
      %v4319 = vunpack.c.l.b16 %v4207
      %v4320 = vunpack.c.h.b16 %v4207
      %v4321 = vunpack.c.l.b16 %v4208
      %v4322 = vunpack.c.h.b16 %v4208
      %v4323 = vunpack.c.l.b16 %v4209
      %v4324 = vunpack.c.h.b16 %v4209
      %v4325 = vunpack.c.l.b16 %v4210
      %v4326 = vunpack.c.h.b16 %v4210
      %v4327 = vunpack.c.l.b16 %v4211
      %v4328 = vunpack.c.h.b16 %v4211
      %v4329 = vunpack.c.l.b16 %v4212
      %v4330 = vunpack.c.h.b16 %v4212
      %v4331 = vunpack.c.l.b16 %v4213
      %v4332 = vunpack.c.h.b16 %v4213
      %v4333 = vunpack.c.l.b16 %v4214
      %v4334 = vunpack.c.h.b16 %v4214
      %v4335 = vunpack.c.l.b16 %v4215
      %v4336 = vunpack.c.h.b16 %v4215
      %v4337 = vunpack.c.l.b16 %v4216
      %v4338 = vunpack.c.h.b16 %v4216
      %v4339 = vunpack.c.l.b16 %v4217
      %v4340 = vunpack.c.h.b16 %v4217
      %v4341 = vunpack.c.l.b16 %v4218
      %v4342 = vunpack.c.h.b16 %v4218
      %v4343 = vunpack.c.l.b16 %v4219
      %v4344 = vunpack.c.h.b16 %v4219
      %v4345 = vunpack.c.l.b16 %v4220
      %v4346 = vunpack.c.h.b16 %v4220
      %v4347 = vunpack.c.l.b16 %v4221
      %v4348 = vunpack.c.h.b16 %v4221
      %v4349 = vunpack.c.l.b16 %v4222
      %v4350 = vunpack.c.h.b16 %v4222
      %v4351 = vunpack.c.l.b16 %v4223
      %v4352 = vunpack.c.h.b16 %v4223
      %v4353 = vunpack.c.l.b16 %v4224
      %v4354 = vunpack.c.h.b16 %v4224
      %v4355 = vunpack.c.l.b16 %v4225
      %v4356 = vunpack.c.h.b16 %v4225
      %v4357 = vunpack.c.l.b16 %v4226
      %v4358 = vunpack.c.h.b16 %v4226
      %v4359 = vunpack.c.l.b16 %v4227
      %v4360 = vunpack.c.h.b16 %v4227
      %v4361 = vunpack.c.l.b16 %v4228
      %v4362 = vunpack.c.h.b16 %v4228
      %v4363 = vunpack.c.l.b16 %v4229
      %v4364 = vunpack.c.h.b16 %v4229
      %v4365 = vunpack.c.l.b16 %v4230
      %v4366 = vunpack.c.h.b16 %v4230
      %v4367 = vunpack.c.l.b16 %v4231
      %v4368 = vunpack.c.h.b16 %v4231
      %v4369 = vpack.c.b16 %v4307, %v4305
      %v4370 = vpack.c.b16 %v4308, %v4306
      %v4371 = vpack.c.b16 %v4311, %v4309
      %v4372 = vpack.c.b16 %v4312, %v4310
      %v4373 = vpack.c.b16 %v4315, %v4313
      %v4374 = vpack.c.b16 %v4316, %v4314
      %v4375 = vpack.c.b16 %v4319, %v4317
      %v4376 = vpack.c.b16 %v4320, %v4318
      %v4377 = vpack.c.b16 %v4323, %v4321
      %v4378 = vpack.c.b16 %v4324, %v4322
      %v4379 = vpack.c.b16 %v4327, %v4325
      %v4380 = vpack.c.b16 %v4328, %v4326
      %v4381 = vpack.c.b16 %v4331, %v4329
      %v4382 = vpack.c.b16 %v4332, %v4330
      %v4383 = vpack.c.b16 %v4335, %v4333
      %v4384 = vpack.c.b16 %v4336, %v4334
      %v4385 = vpack.c.b16 %v4339, %v4337
      %v4386 = vpack.c.b16 %v4340, %v4338
      %v4387 = vpack.c.b16 %v4343, %v4341
      %v4388 = vpack.c.b16 %v4344, %v4342
      %v4389 = vpack.c.b16 %v4347, %v4345
      %v4390 = vpack.c.b16 %v4348, %v4346
      %v4391 = vpack.c.b16 %v4351, %v4349
      %v4392 = vpack.c.b16 %v4352, %v4350
      %v4393 = vpack.c.b16 %v4355, %v4353
      %v4394 = vpack.c.b16 %v4356, %v4354
      %v4395 = vpack.c.b16 %v4359, %v4357
      %v4396 = vpack.c.b16 %v4360, %v4358
      %v4397 = vpack.c.b16 %v4363, %v4361
      %v4398 = vpack.c.b16 %v4364, %v4362
      %v4399 = vpack.c.b16 %v4367, %v4365
      %v4400 = vpack.c.b16 %v4368, %v4366
      %4433 = vmatprep.subr.bf16.mxu0 %v4384
      %4434 = vmatpush1.bf16.msra.mxu0 %v4383
      %4435 = vmatprep.subr.bf16.mxu0 %v4382
      %4436 = vmatpush1.bf16.msra.mxu0 %v4381
      %4437 = vmatprep.subr.bf16.mxu0 %v4380
      %4438 = vmatpush1.bf16.msra.mxu0 %v4379
      %4439 = vmatprep.subr.bf16.mxu0 %v4378
      %4440 = vmatpush1.bf16.msra.mxu0 %v4377
      %4441 = vmatprep.subr.bf16.mxu0 %v4376
      %4442 = vmatpush1.bf16.msra.mxu0 %v4375
      %4443 = vmatprep.subr.bf16.mxu0 %v4374
      %4444 = vmatpush1.bf16.msra.mxu0 %v4373
      %4445 = vmatprep.subr.bf16.mxu0 %v4372
      %4446 = vmatpush1.bf16.msra.mxu0 %v4371
      %4447 = vmatprep.subr.bf16.mxu0 %v4370
      %4448 = vmatpush1.bf16.msra.mxu0 %v4369
      %4449 = vmatprep.subr.bf16.mxu0 %v4400
      %4450 = vmatpush2.bf16.msra.mxu0 %v4399
      %4451 = vmatprep.subr.bf16.mxu0 %v4398
      %4452 = vmatpush2.bf16.msra.mxu0 %v4397
      %4453 = vmatprep.subr.bf16.mxu0 %v4396
      %4454 = vmatpush2.bf16.msra.mxu0 %v4395
      %4455 = vmatprep.subr.bf16.mxu0 %v4394
      %4456 = vmatpush2.bf16.msra.mxu0 %v4393
      %4457 = vmatprep.subr.bf16.mxu0 %v4392
      %4458 = vmatpush2.bf16.msra.mxu0 %v4391
      %4459 = vmatprep.subr.bf16.mxu0 %v4390
      %4460 = vmatpush2.bf16.msra.mxu0 %v4389
      %4461 = vmatprep.subr.bf16.mxu0 %v4388
      %4462 = vmatpush2.bf16.msra.mxu0 %v4387
      %4463 = vmatprep.subr.bf16.mxu0 %v4386
      %4464 = vmatpush2.bf16.msra.mxu0 %v4385
      %4465 = vmatprep.mubr.bf16.mxu0 %v4262
      %4466 = vmatmul.mubr.bf16.gmra.mxu0 %v4259
      %v4467 = vpop.f32.mrf.mxu0
      %v4468 = vadd.f32 0.0, %v4467
      %v4469 = vpop.f32.mrf.mxu0
      %v4470 = vadd.f32 0.0, %v4469
      %v4471 = vpop.f32.mrf.mxu0
      %v4472 = vadd.f32 0.0, %v4471
      %v4473 = vpop.f32.mrf.mxu0
      %v4474 = vadd.f32 0.0, %v4473
      %4475 = vmatprep.mubr.bf16.mxu0 %v4266
      %4476 = vmatmul.mubr.bf16.gmra.mxu0 %v4264
      %v4477 = vpop.f32.mrf.mxu0
      %v4478 = vadd.f32 0.0, %v4477
      %v4479 = vpop.f32.mrf.mxu0
      %v4480 = vadd.f32 0.0, %v4479
      %v4481 = vpop.f32.mrf.mxu0
      %v4482 = vadd.f32 0.0, %v4481
      %v4483 = vpop.f32.mrf.mxu0
      %v4484 = vadd.f32 0.0, %v4483
      %4485 = vmatprep.mubr.bf16.mxu0 %v4265
      %4486 = vmatmul.mubr.bf16.gmra.mxu0 %v4263
      %v4487 = vpop.f32.mrf.mxu0
      %v4488 = vadd.f32 0.0, %v4487
      %v4489 = vpop.f32.mrf.mxu0
      %v4490 = vadd.f32 0.0, %v4489
      %v4491 = vpop.f32.mrf.mxu0
      %v4492 = vpop.f32.mrf.mxu0
      %4493 = vdwg.mxu0
      %v4494 = vadd.f32 %v4183, %v4468
      %v4495 = vadd.f32 %v4184, %v4470
      %v4496 = vadd.f32 %v4185, %v4472
      %v4497 = vadd.f32 %v4186, %v4474
      %v4498 = vadd.f32 %v4187, %v4478
      %v4499 = vadd.f32 %v4188, %v4480
      %v4500 = vadd.f32 %v4189, %v4482
      %v4501 = vadd.f32 %v4190, %v4484
      %v4502 = vadd.f32 %v4191, %v4488
      %v4503 = vadd.f32 %v4192, %v4490
      %4504 = vst [vmem:[#allocation2] sm:$0xff] %v4494
      %4505 = vst [vmem:[#allocation2 + $0x8] sm:$0xff] %v4495
      %4506 = vst [vmem:[#allocation2 + $0x18] sm:$0xff] %v4496
      %4507 = vst [vmem:[#allocation2 + $0x20] sm:$0xff] %v4497
      %4508 = vst [vmem:[#allocation2 + $0x30] sm:$0xff] %v4498
      %4509 = vst [vmem:[#allocation2 + $0x38] sm:$0xff] %v4499
      %4510 = vst [vmem:[#allocation2 + $0x48] sm:$0xff] %v4500
      %4511 = vst [vmem:[#allocation2 + $0x50] sm:$0xff] %v4501
      %4512 = vst [vmem:[#allocation2 + $0x60] sm:$0xff] %v4502
      %4513 = vst [vmem:[#allocation2 + $0x68] sm:$0xff] %v4503
      %v4514 = vld [vmem:[#allocation2] sm:$0xff]
      %v4515 = vld [vmem:[#allocation2 + $0x8] sm:$0xff]
      %v4516 = vld [vmem:[#allocation2 + $0x18] sm:$0xff]
      %v4517 = vld [vmem:[#allocation2 + $0x20] sm:$0xff]
      %v4518 = vld [vmem:[#allocation2 + $0x30] sm:$0xff]
      %v4519 = vld [vmem:[#allocation2 + $0x38] sm:$0xff]
      %v4520 = vld [vmem:[#allocation2 + $0x48] sm:$0xff]
      %v4521 = vld [vmem:[#allocation2 + $0x50] sm:$0xff]
      %v4522 = vld [vmem:[#allocation2 + $0x60] sm:$0xff]
      %v4523 = vld [vmem:[#allocation2 + $0x68] sm:$0xff]
      %vm4524 = vcmp.ge.f32.partialorder %v4514, 0.0
      %vm4525 = vcmp.ge.f32.partialorder %v4515, 0.0
      %vm4526 = vcmp.ge.f32.partialorder %v4516, 0.0
      %vm4527 = vcmp.ge.f32.partialorder %v4517, 0.0
      %vm4528 = vcmp.ge.f32.partialorder %v4518, 0.0
      %vm4529 = vcmp.ge.f32.partialorder %v4519, 0.0
      %vm4530 = vcmp.ge.f32.partialorder %v4520, 0.0
      %vm4531 = vcmp.ge.f32.partialorder %v4521, 0.0
      %vm4532 = vcmp.ge.f32.partialorder %v4522, 0.0
      %vm4533 = vcmp.ge.f32.partialorder %v4523, 0.0
      %v4534 = vmul.f32 %v4514, 0.2
      %v4535 = vmul.f32 %v4515, 0.2
      %v4536 = vmul.f32 %v4516, 0.2
      %v4537 = vmul.f32 %v4517, 0.2
      %v4538 = vmul.f32 %v4518, 0.2
      %v4539 = vmul.f32 %v4519, 0.2
      %v4540 = vmul.f32 %v4520, 0.2
      %v4541 = vmul.f32 %v4521, 0.2
      %v4542 = vmul.f32 %v4522, 0.2
      %v4543 = vmul.f32 %v4523, 0.2
      %v4544 = vsel %vm4524, %v4514, %v4534
      %v4545 = vsel %vm4525, %v4515, %v4535
      %v4546 = vsel %vm4526, %v4516, %v4536
      %v4547 = vsel %vm4527, %v4517, %v4537
      %v4548 = vsel %vm4528, %v4518, %v4538
      %v4549 = vsel %vm4529, %v4519, %v4539
      %v4550 = vsel %vm4530, %v4520, %v4540
      %v4551 = vsel %vm4531, %v4521, %v4541
      %v4552 = vsel %vm4532, %v4522, %v4542
      %v4553 = vsel %vm4533, %v4523, %v4543
      %4554 = vst [vmem:[%s661] sm:$0xff] %v4544
      %4555 = vst [vmem:[%s661 + $0x8] sm:$0xff] %v4545
      %4556 = vst [vmem:[%s661 + $0x10] sm:$0xff] %v4546
      %4557 = vst [vmem:[%s661 + $0x18] sm:$0xff] %v4547
      %s4558 = scalar_lea.vmem %s661, 32
      %4559 = vst [vmem:[%s4558] sm:$0xff] %v4550
      %4560 = vst [vmem:[%s4558 + $0x8] sm:$0xff] %v4551
      %4561 = vst [vmem:[%s4558 + $0x10] sm:$0xff] %v4552
      %4562 = vst [vmem:[%s4558 + $0x18] sm:$0xff] %v4553
      %v4563 = vmul.f32 %v4544, %v1633
      %v4564 = vmul.f32 %v4545, %v1633
      %v4565 = vmul.f32 %v4546, %v1638
      %v4566 = vmul.f32 %v4547, %v1638
      %v4567 = vmul.f32 %v4548, %v1643
      %v4568 = vmul.f32 %v4549, %v1643
      %v4569 = vmul.f32 %v4550, %v1648
      %v4570 = vmul.f32 %v4551, %v1648
      %v4571 = vmul.f32 %v4552, %v1653
      %v4572 = vmul.f32 %v4553, %v1653
      %v4573 = vpack.c.bf16 %v4565, %v4563
      %v4574 = vpack.c.bf16 %v4566, %v4564
      %v4575 = vpack.c.bf16 %v4569, %v4567
      %v4576 = vpack.c.bf16 %v4570, %v4568
      %v4577 = vpack.c.bf16 %v4571, %v4571
      %v4578 = vpack.c.bf16 %v4572, %v4572
      %v4585 = vunpack.c.l.b16 %v4573
      %v4586 = vunpack.c.l.b16 %v4574
      %v4587 = vunpack.c.h.b16 %v4573
      %v4588 = vunpack.c.h.b16 %v4574
      %v4589 = vunpack.c.l.b16 %v4575
      %v4590 = vunpack.c.l.b16 %v4576
      %v4591 = vunpack.c.h.b16 %v4575
      %v4592 = vunpack.c.h.b16 %v4576
      %v4593 = vunpack.c.l.b16 %v4577
      %v4594 = vunpack.c.l.b16 %v4578
      %v4595 = vpack.c.b16 %v4586, %v4585
      %v4596 = vpack.c.b16 %v4588, %v4587
      %v4597 = vpack.c.b16 %v4590, %v4589
      %v4598 = vpack.c.b16 %v4592, %v4591
      %v4599 = vpack.c.b16 %v4594, %v4593
      %vm4600 = vcmask 1041408
      %vm4601 = vcmask 1045508
      %vm4602 = vmor %vm4600, %vm4601
      %v4603 = vrot.slane %v4595, 6
      %v4604 = vrot.slane %v4603, 4
      %v4605 = vrot.slane %v4596, 6
      %v4606 = vsel %vm4602, %v4604, %v4605
      %v4607 = vrot.slane %v4605, 4
      %v4608 = vrot.slane %v4597, 6
      %v4609 = vsel %vm4602, %v4607, %v4608
      %v4610 = vrot.slane %v4608, 4
      %v4611 = vrot.slane %v4598, 6
      %v4612 = vsel %vm4602, %v4610, %v4611
      %v4613 = vrot.slane %v4611, 4
      %v4614 = vrot.slane %v4599, 6
      %v4615 = vsel %vm4602, %v4613, %v4614
      %v4616 = vrot.slane %v4614, 4
      %4623 = vst [vmem:[#allocation5] sm:$0xcc] %v4603
      %4624 = vst [vmem:[#allocation5 + $0x8] sm:$0xff] %v4606
      %4625 = vst [vmem:[#allocation5 + $0x10] sm:$0xff] %v4609
      %4626 = vst [vmem:[#allocation5 + $0x18] sm:$0xff] %v4612
      %4627 = vst [vmem:[#allocation5 + $0x20] sm:$0xff] %v4615
      %4628 = vst [vmem:[#allocation5 + $0x28] sm:$0x33] %v4616
      %v4629 = vld [vmem:[%s11] sm:$0x1]
      %v4630 = vld [vmem:[#allocation5] sm:$0xff]
      %v4631 = vld [vmem:[#allocation5 + $0x8] sm:$0xff]
      %v4632 = vld [vmem:[#allocation5 + $0x10] sm:$0xff]
      %v4633 = vld [vmem:[#allocation5 + $0x18] sm:$0xff]
      %v4634 = vld [vmem:[#allocation5 + $0x20] sm:$0xff]
      %v4635 = vld [vmem:[%s5] sm:$0xf]
      %v4636 = vld [vmem:[%s5 + $0x4] sm:$0xf]
      %v4637 = vld [vmem:[%s5 + $0x8] sm:$0xf]
      %v4638 = vld [vmem:[%s5 + $0xc] sm:$0xf]
      %v4639 = vld [vmem:[%s5 + $0x10] sm:$0xf]
      %v4640 = vld [vmem:[%s5 + $0x14] sm:$0xf]
      %v4641 = vld [vmem:[%s5 + $0x18] sm:$0xf]
      %v4642 = vld [vmem:[%s5 + $0x1c] sm:$0xf]
      %v4643 = vld [vmem:[%s5 + $0x20] sm:$0xf]
      %v4644 = vld [vmem:[%s5 + $0x24] sm:$0xf]
      %v4645 = vld [vmem:[%s5 + $0x28] sm:$0xf]
      %v4646 = vld [vmem:[%s5 + $0x2c] sm:$0xf]
      %v4647 = vld [vmem:[%s5 + $0x30] sm:$0xf]
      %v4648 = vld [vmem:[%s5 + $0x34] sm:$0xf]
      %v4649 = vld [vmem:[%s5 + $0x38] sm:$0xf]
      %v4650 = vld [vmem:[%s5 + $0x3c] sm:$0xf]
      %v4651 = vld [vmem:[%s5 + $0x40] sm:$0xf]
      %v4652 = vld [vmem:[%s5 + $0x44] sm:$0xf]
      %v4653 = vld [vmem:[%s5 + $0x48] sm:$0xf]
      %v4654 = vld [vmem:[%s5 + $0x4c] sm:$0xf]
      %v4655 = vld [vmem:[%s5 + $0x50] sm:$0xf]
      %v4656 = vld [vmem:[%s5 + $0x54] sm:$0xf]
      %v4657 = vld [vmem:[%s5 + $0x58] sm:$0xf]
      %v4658 = vld [vmem:[%s5 + $0x5c] sm:$0xf]
      %v4659 = vld [vmem:[%s5 + $0x60] sm:$0xf]
      %v4660 = vld [vmem:[%s5 + $0x64] sm:$0xf]
      %v4661 = vld [vmem:[%s5 + $0x68] sm:$0xf]
      %v4662 = vld [vmem:[%s5 + $0x6c] sm:$0xf]
      %v4663 = vld [vmem:[%s5 + $0x70] sm:$0xf]
      %v4664 = vld [vmem:[%s5 + $0x74] sm:$0xf]
      %v4665 = vld [vmem:[%s5 + $0x78] sm:$0xf]
      %v4666 = vld [vmem:[%s5 + $0x7c] sm:$0xf]
      %v4672 = vunpack.c.l.b16 %v4630
      %v4673 = vunpack.c.h.b16 %v4630
      %v4674 = vunpack.c.l.b16 %v4631
      %v4675 = vunpack.c.h.b16 %v4631
      %v4676 = vunpack.c.l.b16 %v4632
      %v4677 = vunpack.c.h.b16 %v4632
      %v4678 = vunpack.c.l.b16 %v4633
      %v4679 = vunpack.c.h.b16 %v4633
      %v4680 = vunpack.c.l.b16 %v4634
      %v4681 = vunpack.c.h.b16 %v4634
      %v4682 = vpack.c.b16 %v4674, %v4672
      %v4683 = vpack.c.b16 %v4675, %v4673
      %v4684 = vpack.c.b16 %v4678, %v4676
      %v4685 = vpack.c.b16 %v4679, %v4677
      %v4686 = vpack.c.b16 %v4680, %v4680
      %v4687 = vpack.c.b16 %v4681, %v4681
      %v4726 = vunpack.c.l.b16 %v4635
      %v4727 = vunpack.c.l.b16 %v4636
      %v4728 = vunpack.c.l.b16 %v4637
      %v4729 = vunpack.c.l.b16 %v4638
      %v4730 = vunpack.c.l.b16 %v4639
      %v4731 = vunpack.c.l.b16 %v4640
      %v4732 = vunpack.c.l.b16 %v4641
      %v4733 = vunpack.c.l.b16 %v4642
      %v4734 = vunpack.c.l.b16 %v4643
      %v4735 = vunpack.c.l.b16 %v4644
      %v4736 = vunpack.c.l.b16 %v4645
      %v4737 = vunpack.c.l.b16 %v4646
      %v4738 = vunpack.c.l.b16 %v4647
      %v4739 = vunpack.c.l.b16 %v4648
      %v4740 = vunpack.c.l.b16 %v4649
      %v4741 = vunpack.c.l.b16 %v4650
      %v4742 = vunpack.c.l.b16 %v4651
      %v4743 = vunpack.c.l.b16 %v4652
      %v4744 = vunpack.c.l.b16 %v4653
      %v4745 = vunpack.c.l.b16 %v4654
      %v4746 = vunpack.c.l.b16 %v4655
      %v4747 = vunpack.c.l.b16 %v4656
      %v4748 = vunpack.c.l.b16 %v4657
      %v4749 = vunpack.c.l.b16 %v4658
      %v4750 = vunpack.c.l.b16 %v4659
      %v4751 = vunpack.c.l.b16 %v4660
      %v4752 = vunpack.c.l.b16 %v4661
      %v4753 = vunpack.c.l.b16 %v4662
      %v4754 = vunpack.c.l.b16 %v4663
      %v4755 = vunpack.c.l.b16 %v4664
      %v4756 = vunpack.c.l.b16 %v4665
      %v4757 = vunpack.c.l.b16 %v4666
      %v4758 = vpack.c.b16 %v4727, %v4726
      %v4759 = vpack.c.b16 %v4729, %v4728
      %v4760 = vpack.c.b16 %v4731, %v4730
      %v4761 = vpack.c.b16 %v4733, %v4732
      %v4762 = vpack.c.b16 %v4735, %v4734
      %v4763 = vpack.c.b16 %v4737, %v4736
      %v4764 = vpack.c.b16 %v4739, %v4738
      %v4765 = vpack.c.b16 %v4741, %v4740
      %v4766 = vpack.c.b16 %v4743, %v4742
      %v4767 = vpack.c.b16 %v4745, %v4744
      %v4768 = vpack.c.b16 %v4747, %v4746
      %v4769 = vpack.c.b16 %v4749, %v4748
      %v4770 = vpack.c.b16 %v4751, %v4750
      %v4771 = vpack.c.b16 %v4753, %v4752
      %v4772 = vpack.c.b16 %v4755, %v4754
      %v4773 = vpack.c.b16 %v4757, %v4756
      %4790 = vmatprep.subr.bf16.mxu0 0
      %4791 = vmatpush1.bf16.msra.mxu0 %v4765
      %4792 = vmatprep.subr.bf16.mxu0 0
      %4793 = vmatpush1.bf16.msra.mxu0 %v4764
      %4794 = vmatprep.subr.bf16.mxu0 0
      %4795 = vmatpush1.bf16.msra.mxu0 %v4763
      %4796 = vmatprep.subr.bf16.mxu0 0
      %4797 = vmatpush1.bf16.msra.mxu0 %v4762
      %4798 = vmatprep.subr.bf16.mxu0 0
      %4799 = vmatpush1.bf16.msra.mxu0 %v4761
      %4800 = vmatprep.subr.bf16.mxu0 0
      %4801 = vmatpush1.bf16.msra.mxu0 %v4760
      %4802 = vmatprep.subr.bf16.mxu0 0
      %4803 = vmatpush1.bf16.msra.mxu0 %v4759
      %4804 = vmatprep.subr.bf16.mxu0 0
      %4805 = vmatpush1.bf16.msra.mxu0 %v4758
      %4806 = vmatprep.subr.bf16.mxu0 0
      %4807 = vmatpush2.bf16.msra.mxu0 %v4773
      %4808 = vmatprep.subr.bf16.mxu0 0
      %4809 = vmatpush2.bf16.msra.mxu0 %v4772
      %4810 = vmatprep.subr.bf16.mxu0 0
      %4811 = vmatpush2.bf16.msra.mxu0 %v4771
      %4812 = vmatprep.subr.bf16.mxu0 0
      %4813 = vmatpush2.bf16.msra.mxu0 %v4770
      %4814 = vmatprep.subr.bf16.mxu0 0
      %4815 = vmatpush2.bf16.msra.mxu0 %v4769
      %4816 = vmatprep.subr.bf16.mxu0 0
      %4817 = vmatpush2.bf16.msra.mxu0 %v4768
      %4818 = vmatprep.subr.bf16.mxu0 0
      %4819 = vmatpush2.bf16.msra.mxu0 %v4767
      %4820 = vmatprep.subr.bf16.mxu0 0
      %4821 = vmatpush2.bf16.msra.mxu0 %v4766
      %4822 = vmatprep.mubr.bf16.mxu0 %v4683
      %4823 = vmatmul.mubr.bf16.gmra.mxu0 %v4682
      %v4824 = vpop.f32.mrf.mxu0
      %v4825 = vadd.f32 0.0, %v4824
      %v4826 = vpop.f32.mrf.mxu0
      %v4827 = vpop.f32.mrf.mxu0
      %v4828 = vadd.f32 0.0, %v4827
      %v4829 = vpop.f32.mrf.mxu0
      %4830 = vmatprep.mubr.bf16.mxu0 %v4685
      %4831 = vmatmul.mubr.bf16.gmra.mxu0 %v4684
      %v4832 = vpop.f32.mrf.mxu0
      %v4833 = vadd.f32 0.0, %v4832
      %v4834 = vpop.f32.mrf.mxu0
      %v4835 = vpop.f32.mrf.mxu0
      %v4836 = vadd.f32 0.0, %v4835
      %v4837 = vpop.f32.mrf.mxu0
      %4838 = vmatprep.mubr.bf16.mxu0 %v4687
      %4839 = vmatmul.mubr.bf16.gmra.mxu0 %v4686
      %v4840 = vpop.f32.mrf.mxu0
      %v4841 = vadd.f32 0.0, %v4840
      %v4842 = vpop.f32.mrf.mxu0
      %v4843 = vpop.f32.mrf.mxu0
      %v4844 = vpop.f32.mrf.mxu0
      %4845 = vdwg.mxu0
      %v4847 = vlaneseq
      %v4848 = vshrl.u32 %v4847, 7
      %v4849 = vsub.s32 0, %v4848
      %v4850 = vrot.slane %v4629, %v4849
      %v4852 = vadd.f32 %v4850, %v4825
      %v4853 = vadd.f32 %v4850, %v4828
      %v4854 = vadd.f32 %v4850, %v4833
      %v4855 = vadd.f32 %v4850, %v4836
      %v4856 = vadd.f32 %v4850, %v4841
      %4857 = vst [vmem:[#allocation2] sm:$0xff] %v4852
      %4858 = vst [vmem:[#allocation2 + $0x18] sm:$0xff] %v4853
      %4859 = vst [vmem:[#allocation2 + $0x30] sm:$0xff] %v4854
      %4860 = vst [vmem:[#allocation2 + $0x48] sm:$0xff] %v4855
      %4861 = vst [vmem:[#allocation2 + $0x60] sm:$0xff] %v4856
      %v4862 = vld [vmem:[#allocation2] sm:$0xff]
      %v4863 = vld [vmem:[#allocation2 + $0x18] sm:$0xff]
      %v4864 = vld [vmem:[#allocation2 + $0x30] sm:$0xff]
      %v4865 = vld [vmem:[#allocation2 + $0x48] sm:$0xff]
      %v4866 = vld [vmem:[#allocation2 + $0x60] sm:$0xff]
      %v4867 = vld [vmem:[#allocation5] sm:$0xcc]
      %v4868 = vld [vmem:[#allocation5 + $0x8] sm:$0xff]
      %v4869 = vld [vmem:[#allocation5 + $0x10] sm:$0xff]
      %v4870 = vld [vmem:[#allocation5 + $0x18] sm:$0xff]
      %v4871 = vld [vmem:[#allocation5 + $0x20] sm:$0xff]
      %v4872 = vld [vmem:[#allocation5 + $0x28] sm:$0x33]
      %s4873 = scalar_lea.vmem %s5, 128
      %v4874 = vld [vmem:[%s4873] sm:$0xf]
      %v4875 = vld [vmem:[%s4873 + $0x4] sm:$0xf]
      %v4876 = vld [vmem:[%s4873 + $0x8] sm:$0xf]
      %v4877 = vld [vmem:[%s4873 + $0xc] sm:$0xf]
      %v4878 = vld [vmem:[%s4873 + $0x10] sm:$0xf]
      %v4879 = vld [vmem:[%s4873 + $0x14] sm:$0xf]
      %v4880 = vld [vmem:[%s4873 + $0x18] sm:$0xf]
      %v4881 = vld [vmem:[%s4873 + $0x1c] sm:$0xf]
      %v4882 = vld [vmem:[%s4873 + $0x20] sm:$0xf]
      %v4883 = vld [vmem:[%s4873 + $0x24] sm:$0xf]
      %v4884 = vld [vmem:[%s4873 + $0x28] sm:$0xf]
      %v4885 = vld [vmem:[%s4873 + $0x2c] sm:$0xf]
      %v4886 = vld [vmem:[%s4873 + $0x30] sm:$0xf]
      %v4887 = vld [vmem:[%s4873 + $0x34] sm:$0xf]
      %v4888 = vld [vmem:[%s4873 + $0x38] sm:$0xf]
      %v4889 = vld [vmem:[%s4873 + $0x3c] sm:$0xf]
      %v4890 = vld [vmem:[%s4873 + $0x40] sm:$0xf]
      %v4891 = vld [vmem:[%s4873 + $0x44] sm:$0xf]
      %v4892 = vld [vmem:[%s4873 + $0x48] sm:$0xf]
      %v4893 = vld [vmem:[%s4873 + $0x4c] sm:$0xf]
      %v4894 = vld [vmem:[%s4873 + $0x50] sm:$0xf]
      %v4895 = vld [vmem:[%s4873 + $0x54] sm:$0xf]
      %v4896 = vld [vmem:[%s4873 + $0x58] sm:$0xf]
      %v4897 = vld [vmem:[%s4873 + $0x5c] sm:$0xf]
      %v4898 = vld [vmem:[%s4873 + $0x60] sm:$0xf]
      %v4899 = vld [vmem:[%s4873 + $0x64] sm:$0xf]
      %v4900 = vld [vmem:[%s4873 + $0x68] sm:$0xf]
      %v4901 = vld [vmem:[%s4873 + $0x6c] sm:$0xf]
      %v4902 = vld [vmem:[%s4873 + $0x70] sm:$0xf]
      %v4903 = vld [vmem:[%s4873 + $0x74] sm:$0xf]
      %v4904 = vld [vmem:[%s4873 + $0x78] sm:$0xf]
      %v4905 = vld [vmem:[%s4873 + $0x7c] sm:$0xf]
      %v4912 = vunpack.c.l.b16 %v4867
      %v4913 = vunpack.c.h.b16 %v4867
      %v4914 = vunpack.c.l.b16 %v4868
      %v4915 = vunpack.c.h.b16 %v4868
      %v4916 = vunpack.c.l.b16 %v4869
      %v4917 = vunpack.c.h.b16 %v4869
      %v4918 = vunpack.c.l.b16 %v4870
      %v4919 = vunpack.c.h.b16 %v4870
      %v4920 = vunpack.c.l.b16 %v4871
      %v4921 = vunpack.c.h.b16 %v4871
      %v4922 = vunpack.c.l.b16 %v4872
      %v4923 = vunpack.c.h.b16 %v4872
      %v4924 = vpack.c.b16 %v4914, %v4912
      %v4925 = vpack.c.b16 %v4915, %v4913
      %v4926 = vpack.c.b16 %v4918, %v4916
      %v4927 = vpack.c.b16 %v4919, %v4917
      %v4928 = vpack.c.b16 %v4922, %v4920
      %v4929 = vpack.c.b16 %v4923, %v4921
      %v4930 = vrot.slane %v4924, 2
      %v4931 = vrot.slane %v4926, 2
      %v4932 = vsel %vm4256, %v4930, %v4931
      %v4933 = vrot.slane %v4925, 2
      %v4934 = vrot.slane %v4927, 2
      %v4935 = vsel %vm4256, %v4933, %v4934
      %v4936 = vrot.slane %v4928, 2
      %v4937 = vsel %vm4256, %v4931, %v4936
      %v4938 = vrot.slane %v4929, 2
      %v4939 = vsel %vm4256, %v4934, %v4938
      %v4978 = vunpack.c.l.b16 %v4874
      %v4979 = vunpack.c.l.b16 %v4875
      %v4980 = vunpack.c.l.b16 %v4876
      %v4981 = vunpack.c.l.b16 %v4877
      %v4982 = vunpack.c.l.b16 %v4878
      %v4983 = vunpack.c.l.b16 %v4879
      %v4984 = vunpack.c.l.b16 %v4880
      %v4985 = vunpack.c.l.b16 %v4881
      %v4986 = vunpack.c.l.b16 %v4882
      %v4987 = vunpack.c.l.b16 %v4883
      %v4988 = vunpack.c.l.b16 %v4884
      %v4989 = vunpack.c.l.b16 %v4885
      %v4990 = vunpack.c.l.b16 %v4886
      %v4991 = vunpack.c.l.b16 %v4887
      %v4992 = vunpack.c.l.b16 %v4888
      %v4993 = vunpack.c.l.b16 %v4889
      %v4994 = vunpack.c.l.b16 %v4890
      %v4995 = vunpack.c.l.b16 %v4891
      %v4996 = vunpack.c.l.b16 %v4892
      %v4997 = vunpack.c.l.b16 %v4893
      %v4998 = vunpack.c.l.b16 %v4894
      %v4999 = vunpack.c.l.b16 %v4895
      %v5000 = vunpack.c.l.b16 %v4896
      %v5001 = vunpack.c.l.b16 %v4897
      %v5002 = vunpack.c.l.b16 %v4898
      %v5003 = vunpack.c.l.b16 %v4899
      %v5004 = vunpack.c.l.b16 %v4900
      %v5005 = vunpack.c.l.b16 %v4901
      %v5006 = vunpack.c.l.b16 %v4902
      %v5007 = vunpack.c.l.b16 %v4903
      %v5008 = vunpack.c.l.b16 %v4904
      %v5009 = vunpack.c.l.b16 %v4905
      %v5010 = vpack.c.b16 %v4979, %v4978
      %v5011 = vpack.c.b16 %v4981, %v4980
      %v5012 = vpack.c.b16 %v4983, %v4982
      %v5013 = vpack.c.b16 %v4985, %v4984
      %v5014 = vpack.c.b16 %v4987, %v4986
      %v5015 = vpack.c.b16 %v4989, %v4988
      %v5016 = vpack.c.b16 %v4991, %v4990
      %v5017 = vpack.c.b16 %v4993, %v4992
      %v5018 = vpack.c.b16 %v4995, %v4994
      %v5019 = vpack.c.b16 %v4997, %v4996
      %v5020 = vpack.c.b16 %v4999, %v4998
      %v5021 = vpack.c.b16 %v5001, %v5000
      %v5022 = vpack.c.b16 %v5003, %v5002
      %v5023 = vpack.c.b16 %v5005, %v5004
      %v5024 = vpack.c.b16 %v5007, %v5006
      %v5025 = vpack.c.b16 %v5009, %v5008
      %5042 = vmatprep.subr.bf16.mxu0 0
      %5043 = vmatpush1.bf16.msra.mxu0 %v5017
      %5044 = vmatprep.subr.bf16.mxu0 0
      %5045 = vmatpush1.bf16.msra.mxu0 %v5016
      %5046 = vmatprep.subr.bf16.mxu0 0
      %5047 = vmatpush1.bf16.msra.mxu0 %v5015
      %5048 = vmatprep.subr.bf16.mxu0 0
      %5049 = vmatpush1.bf16.msra.mxu0 %v5014
      %5050 = vmatprep.subr.bf16.mxu0 0
      %5051 = vmatpush1.bf16.msra.mxu0 %v5013
      %5052 = vmatprep.subr.bf16.mxu0 0
      %5053 = vmatpush1.bf16.msra.mxu0 %v5012
      %5054 = vmatprep.subr.bf16.mxu0 0
      %5055 = vmatpush1.bf16.msra.mxu0 %v5011
      %5056 = vmatprep.subr.bf16.mxu0 0
      %5057 = vmatpush1.bf16.msra.mxu0 %v5010
      %5058 = vmatprep.subr.bf16.mxu0 0
      %5059 = vmatpush2.bf16.msra.mxu0 %v5025
      %5060 = vmatprep.subr.bf16.mxu0 0
      %5061 = vmatpush2.bf16.msra.mxu0 %v5024
      %5062 = vmatprep.subr.bf16.mxu0 0
      %5063 = vmatpush2.bf16.msra.mxu0 %v5023
      %5064 = vmatprep.subr.bf16.mxu0 0
      %5065 = vmatpush2.bf16.msra.mxu0 %v5022
      %5066 = vmatprep.subr.bf16.mxu0 0
      %5067 = vmatpush2.bf16.msra.mxu0 %v5021
      %5068 = vmatprep.subr.bf16.mxu0 0
      %5069 = vmatpush2.bf16.msra.mxu0 %v5020
      %5070 = vmatprep.subr.bf16.mxu0 0
      %5071 = vmatpush2.bf16.msra.mxu0 %v5019
      %5072 = vmatprep.subr.bf16.mxu0 0
      %5073 = vmatpush2.bf16.msra.mxu0 %v5018
      %5074 = vmatprep.mubr.bf16.mxu0 %v4935
      %5075 = vmatmul.mubr.bf16.gmra.mxu0 %v4932
      %v5076 = vpop.f32.mrf.mxu0
      %v5077 = vadd.f32 0.0, %v5076
      %v5078 = vpop.f32.mrf.mxu0
      %v5079 = vpop.f32.mrf.mxu0
      %v5080 = vadd.f32 0.0, %v5079
      %v5081 = vpop.f32.mrf.mxu0
      %5082 = vmatprep.mubr.bf16.mxu0 %v4939
      %5083 = vmatmul.mubr.bf16.gmra.mxu0 %v4937
      %v5084 = vpop.f32.mrf.mxu0
      %v5085 = vadd.f32 0.0, %v5084
      %v5086 = vpop.f32.mrf.mxu0
      %v5087 = vpop.f32.mrf.mxu0
      %v5088 = vadd.f32 0.0, %v5087
      %v5089 = vpop.f32.mrf.mxu0
      %5090 = vmatprep.mubr.bf16.mxu0 %v4938
      %5091 = vmatmul.mubr.bf16.gmra.mxu0 %v4936
      %v5092 = vpop.f32.mrf.mxu0
      %v5093 = vadd.f32 0.0, %v5092
      %v5094 = vpop.f32.mrf.mxu0
      %v5095 = vpop.f32.mrf.mxu0
      %v5096 = vpop.f32.mrf.mxu0
      %5097 = vdwg.mxu0
      %v5098 = vadd.f32 %v4862, %v5077
      %v5099 = vadd.f32 %v4863, %v5080
      %v5100 = vadd.f32 %v4864, %v5085
      %v5101 = vadd.f32 %v4865, %v5088
      %v5102 = vadd.f32 %v4866, %v5093
      %5103 = vst [vmem:[#allocation2] sm:$0xff] %v5098
      %5104 = vst [vmem:[#allocation2 + $0x18] sm:$0xff] %v5099
      %5105 = vst [vmem:[#allocation2 + $0x30] sm:$0xff] %v5100
      %5106 = vst [vmem:[#allocation2 + $0x48] sm:$0xff] %v5101
      %5107 = vst [vmem:[#allocation2 + $0x60] sm:$0xff] %v5102
      %v5108 = vld [vmem:[#allocation2] sm:$0xff]
      %v5109 = vld [vmem:[#allocation2 + $0x18] sm:$0xff]
      %v5110 = vld [vmem:[#allocation2 + $0x30] sm:$0xff]
      %v5111 = vld [vmem:[#allocation2 + $0x48] sm:$0xff]
      %v5112 = vld [vmem:[#allocation2 + $0x60] sm:$0xff]
      %v5113 = vld [vmem:[#allocation5 + $0x8] sm:$0xff]
      %v5114 = vld [vmem:[#allocation5 + $0x10] sm:$0xff]
      %v5115 = vld [vmem:[#allocation5 + $0x18] sm:$0xff]
      %v5116 = vld [vmem:[#allocation5 + $0x20] sm:$0xff]
      %v5117 = vld [vmem:[#allocation5 + $0x28] sm:$0xff]
      %s5118 = scalar_lea.vmem %s5, 256
      %v5119 = vld [vmem:[%s5118] sm:$0xf]
      %v5120 = vld [vmem:[%s5118 + $0x4] sm:$0xf]
      %v5121 = vld [vmem:[%s5118 + $0x8] sm:$0xf]
      %v5122 = vld [vmem:[%s5118 + $0xc] sm:$0xf]
      %v5123 = vld [vmem:[%s5118 + $0x10] sm:$0xf]
      %v5124 = vld [vmem:[%s5118 + $0x14] sm:$0xf]
      %v5125 = vld [vmem:[%s5118 + $0x18] sm:$0xf]
      %v5126 = vld [vmem:[%s5118 + $0x1c] sm:$0xf]
      %v5127 = vld [vmem:[%s5118 + $0x20] sm:$0xf]
      %v5128 = vld [vmem:[%s5118 + $0x24] sm:$0xf]
      %v5129 = vld [vmem:[%s5118 + $0x28] sm:$0xf]
      %v5130 = vld [vmem:[%s5118 + $0x2c] sm:$0xf]
      %v5131 = vld [vmem:[%s5118 + $0x30] sm:$0xf]
      %v5132 = vld [vmem:[%s5118 + $0x34] sm:$0xf]
      %v5133 = vld [vmem:[%s5118 + $0x38] sm:$0xf]
      %v5134 = vld [vmem:[%s5118 + $0x3c] sm:$0xf]
      %v5135 = vld [vmem:[%s5118 + $0x40] sm:$0xf]
      %v5136 = vld [vmem:[%s5118 + $0x44] sm:$0xf]
      %v5137 = vld [vmem:[%s5118 + $0x48] sm:$0xf]
      %v5138 = vld [vmem:[%s5118 + $0x4c] sm:$0xf]
      %v5139 = vld [vmem:[%s5118 + $0x50] sm:$0xf]
      %v5140 = vld [vmem:[%s5118 + $0x54] sm:$0xf]
      %v5141 = vld [vmem:[%s5118 + $0x58] sm:$0xf]
      %v5142 = vld [vmem:[%s5118 + $0x5c] sm:$0xf]
      %v5143 = vld [vmem:[%s5118 + $0x60] sm:$0xf]
      %v5144 = vld [vmem:[%s5118 + $0x64] sm:$0xf]
      %v5145 = vld [vmem:[%s5118 + $0x68] sm:$0xf]
      %v5146 = vld [vmem:[%s5118 + $0x6c] sm:$0xf]
      %v5147 = vld [vmem:[%s5118 + $0x70] sm:$0xf]
      %v5148 = vld [vmem:[%s5118 + $0x74] sm:$0xf]
      %v5149 = vld [vmem:[%s5118 + $0x78] sm:$0xf]
      %v5150 = vld [vmem:[%s5118 + $0x7c] sm:$0xf]
      %v5156 = vunpack.c.l.b16 %v5113
      %v5157 = vunpack.c.h.b16 %v5113
      %v5158 = vunpack.c.l.b16 %v5114
      %v5159 = vunpack.c.h.b16 %v5114
      %v5160 = vunpack.c.l.b16 %v5115
      %v5161 = vunpack.c.h.b16 %v5115
      %v5162 = vunpack.c.l.b16 %v5116
      %v5163 = vunpack.c.h.b16 %v5116
      %v5164 = vunpack.c.l.b16 %v5117
      %v5165 = vunpack.c.h.b16 %v5117
      %v5166 = vpack.c.b16 %v5158, %v5156
      %v5167 = vpack.c.b16 %v5159, %v5157
      %v5168 = vpack.c.b16 %v5162, %v5160
      %v5169 = vpack.c.b16 %v5163, %v5161
      %v5170 = vpack.c.b16 %v5164, %v5164
      %v5171 = vpack.c.b16 %v5165, %v5165
      %v5210 = vunpack.c.l.b16 %v5119
      %v5211 = vunpack.c.l.b16 %v5120
      %v5212 = vunpack.c.l.b16 %v5121
      %v5213 = vunpack.c.l.b16 %v5122
      %v5214 = vunpack.c.l.b16 %v5123
      %v5215 = vunpack.c.l.b16 %v5124
      %v5216 = vunpack.c.l.b16 %v5125
      %v5217 = vunpack.c.l.b16 %v5126
      %v5218 = vunpack.c.l.b16 %v5127
      %v5219 = vunpack.c.l.b16 %v5128
      %v5220 = vunpack.c.l.b16 %v5129
      %v5221 = vunpack.c.l.b16 %v5130
      %v5222 = vunpack.c.l.b16 %v5131
      %v5223 = vunpack.c.l.b16 %v5132
      %v5224 = vunpack.c.l.b16 %v5133
      %v5225 = vunpack.c.l.b16 %v5134
      %v5226 = vunpack.c.l.b16 %v5135
      %v5227 = vunpack.c.l.b16 %v5136
      %v5228 = vunpack.c.l.b16 %v5137
      %v5229 = vunpack.c.l.b16 %v5138
      %v5230 = vunpack.c.l.b16 %v5139
      %v5231 = vunpack.c.l.b16 %v5140
      %v5232 = vunpack.c.l.b16 %v5141
      %v5233 = vunpack.c.l.b16 %v5142
      %v5234 = vunpack.c.l.b16 %v5143
      %v5235 = vunpack.c.l.b16 %v5144
      %v5236 = vunpack.c.l.b16 %v5145
      %v5237 = vunpack.c.l.b16 %v5146
      %v5238 = vunpack.c.l.b16 %v5147
      %v5239 = vunpack.c.l.b16 %v5148
      %v5240 = vunpack.c.l.b16 %v5149
      %v5241 = vunpack.c.l.b16 %v5150
      %v5242 = vpack.c.b16 %v5211, %v5210
      %v5243 = vpack.c.b16 %v5213, %v5212
      %v5244 = vpack.c.b16 %v5215, %v5214
      %v5245 = vpack.c.b16 %v5217, %v5216
      %v5246 = vpack.c.b16 %v5219, %v5218
      %v5247 = vpack.c.b16 %v5221, %v5220
      %v5248 = vpack.c.b16 %v5223, %v5222
      %v5249 = vpack.c.b16 %v5225, %v5224
      %v5250 = vpack.c.b16 %v5227, %v5226
      %v5251 = vpack.c.b16 %v5229, %v5228
      %v5252 = vpack.c.b16 %v5231, %v5230
      %v5253 = vpack.c.b16 %v5233, %v5232
      %v5254 = vpack.c.b16 %v5235, %v5234
      %v5255 = vpack.c.b16 %v5237, %v5236
      %v5256 = vpack.c.b16 %v5239, %v5238
      %v5257 = vpack.c.b16 %v5241, %v5240
      %5274 = vmatprep.subr.bf16.mxu0 0
      %5275 = vmatpush1.bf16.msra.mxu0 %v5249
      %5276 = vmatprep.subr.bf16.mxu0 0
      %5277 = vmatpush1.bf16.msra.mxu0 %v5248
      %5278 = vmatprep.subr.bf16.mxu0 0
      %5279 = vmatpush1.bf16.msra.mxu0 %v5247
      %5280 = vmatprep.subr.bf16.mxu0 0
      %5281 = vmatpush1.bf16.msra.mxu0 %v5246
      %5282 = vmatprep.subr.bf16.mxu0 0
      %5283 = vmatpush1.bf16.msra.mxu0 %v5245
      %5284 = vmatprep.subr.bf16.mxu0 0
      %5285 = vmatpush1.bf16.msra.mxu0 %v5244
      %5286 = vmatprep.subr.bf16.mxu0 0
      %5287 = vmatpush1.bf16.msra.mxu0 %v5243
      %5288 = vmatprep.subr.bf16.mxu0 0
      %5289 = vmatpush1.bf16.msra.mxu0 %v5242
      %5290 = vmatprep.subr.bf16.mxu0 0
      %5291 = vmatpush2.bf16.msra.mxu0 %v5257
      %5292 = vmatprep.subr.bf16.mxu0 0
      %5293 = vmatpush2.bf16.msra.mxu0 %v5256
      %5294 = vmatprep.subr.bf16.mxu0 0
      %5295 = vmatpush2.bf16.msra.mxu0 %v5255
      %5296 = vmatprep.subr.bf16.mxu0 0
      %5297 = vmatpush2.bf16.msra.mxu0 %v5254
      %5298 = vmatprep.subr.bf16.mxu0 0
      %5299 = vmatpush2.bf16.msra.mxu0 %v5253
      %5300 = vmatprep.subr.bf16.mxu0 0
      %5301 = vmatpush2.bf16.msra.mxu0 %v5252
      %5302 = vmatprep.subr.bf16.mxu0 0
      %5303 = vmatpush2.bf16.msra.mxu0 %v5251
      %5304 = vmatprep.subr.bf16.mxu0 0
      %5305 = vmatpush2.bf16.msra.mxu0 %v5250
      %5306 = vmatprep.mubr.bf16.mxu0 %v5167
      %5307 = vmatmul.mubr.bf16.gmra.mxu0 %v5166
      %v5308 = vpop.f32.mrf.mxu0
      %v5309 = vadd.f32 0.0, %v5308
      %v5310 = vpop.f32.mrf.mxu0
      %v5311 = vpop.f32.mrf.mxu0
      %v5312 = vadd.f32 0.0, %v5311
      %v5313 = vpop.f32.mrf.mxu0
      %5314 = vmatprep.mubr.bf16.mxu0 %v5169
      %5315 = vmatmul.mubr.bf16.gmra.mxu0 %v5168
      %v5316 = vpop.f32.mrf.mxu0
      %v5317 = vadd.f32 0.0, %v5316
      %v5318 = vpop.f32.mrf.mxu0
      %v5319 = vpop.f32.mrf.mxu0
      %v5320 = vadd.f32 0.0, %v5319
      %v5321 = vpop.f32.mrf.mxu0
      %5322 = vmatprep.mubr.bf16.mxu0 %v5171
      %5323 = vmatmul.mubr.bf16.gmra.mxu0 %v5170
      %v5324 = vpop.f32.mrf.mxu0
      %v5325 = vadd.f32 0.0, %v5324
      %v5326 = vpop.f32.mrf.mxu0
      %v5327 = vpop.f32.mrf.mxu0
      %v5328 = vpop.f32.mrf.mxu0
      %5329 = vdwg.mxu0
      %v5330 = vadd.f32 %v5108, %v5309
      %v5331 = vadd.f32 %v5109, %v5312
      %v5332 = vadd.f32 %v5110, %v5317
      %v5333 = vadd.f32 %v5111, %v5320
      %v5334 = vadd.f32 %v5112, %v5325
      %5335 = vst [vmem:[#allocation2] sm:$0xff] %v5330
      %5336 = vst [vmem:[#allocation2 + $0x18] sm:$0xff] %v5331
      %5337 = vst [vmem:[#allocation2 + $0x30] sm:$0xff] %v5332
      %5338 = vst [vmem:[#allocation2 + $0x48] sm:$0xff] %v5333
      %5339 = vst [vmem:[#allocation2 + $0x60] sm:$0xff] %v5334
      %v5340 = vld [vmem:[#allocation2] sm:$0xff]
      %v5341 = vld [vmem:[#allocation2 + $0x18] sm:$0xff]
      %v5342 = vld [vmem:[#allocation2 + $0x30] sm:$0xff]
      %v5343 = vld [vmem:[#allocation2 + $0x48] sm:$0xff]
      %v5344 = vld [vmem:[#allocation2 + $0x60] sm:$0xff]
      %vm5345 = vcmp.ge.f32.partialorder %v5340, 0.0
      %vm5346 = vcmp.ge.f32.partialorder %v5341, 0.0
      %vm5347 = vcmp.ge.f32.partialorder %v5342, 0.0
      %vm5348 = vcmp.ge.f32.partialorder %v5343, 0.0
      %vm5349 = vcmp.ge.f32.partialorder %v5344, 0.0
      %v5350 = vmul.f32 %v5340, 0.2
      %v5351 = vmul.f32 %v5341, 0.2
      %v5352 = vmul.f32 %v5342, 0.2
      %v5353 = vmul.f32 %v5343, 0.2
      %v5354 = vmul.f32 %v5344, 0.2
      %v5355 = vsel %vm5345, %v5340, %v5350
      %v5356 = vsel %vm5346, %v5341, %v5351
      %v5357 = vsel %vm5347, %v5342, %v5352
      %v5358 = vsel %vm5348, %v5343, %v5353
      %v5359 = vsel %vm5349, %v5344, %v5354
      %5360 = vst [vmem:[%s668] sm:$0xff] %v5355
      %5361 = vst [vmem:[%s668 + $0x8] sm:$0xff] %v5356
      %s5362 = scalar_lea.vmem %s668, 16
      %5363 = vst [vmem:[%s5362] sm:$0xff] %v5358
      %5364 = vst [vmem:[%s5362 + $0x8] sm:$0xff] %v5359
      %v5365 = vmul.f32 %v5355, %v1633
      %v5366 = vmul.f32 %v5356, %v1638
      %v5367 = vmul.f32 %v5357, %v1643
      %v5368 = vmul.f32 %v5358, %v1648
      %v5369 = vmul.f32 %v5359, %v1653
      %v5370 = vpack.c.bf16 %v5366, %v5365
      %v5371 = vpack.c.bf16 %v5368, %v5367
      %v5372 = vpack.c.bf16 %v5369, %v5369
      %v5376 = vunpack.c.l.b16 %v5370
      %v5377 = vunpack.c.h.b16 %v5370
      %v5378 = vunpack.c.l.b16 %v5371
      %v5379 = vunpack.c.h.b16 %v5371
      %v5380 = vunpack.c.l.b16 %v5372
      %v5381 = vpack.c.b16 %v5376, %v5376
      %v5382 = vpack.c.b16 %v5377, %v5377
      %v5383 = vpack.c.b16 %v5378, %v5378
      %v5384 = vpack.c.b16 %v5379, %v5379
      %v5385 = vpack.c.b16 %v5380, %v5380
      %v5387 = vshrl.u32 %v5381, 16
      %v5389 = vrot.slane %v5387, 7
      %v5390 = vshll.u32 %v5381, 16
      %v5392 = vor.u32 %v5389, %v5390
      %v5393 = vrot.slane %v5389, 4
      %v5395 = vshrl.u32 %v5382, 16
      %v5397 = vrot.slane %v5395, 7
      %v5398 = vshll.u32 %v5382, 16
      %v5400 = vor.u32 %v5397, %v5398
      %v5401 = vsel %vm1714, %v5393, %v5400
      %v5402 = vrot.slane %v5397, 4
      %v5404 = vshrl.u32 %v5383, 16
      %v5406 = vrot.slane %v5404, 7
      %v5407 = vshll.u32 %v5383, 16
      %v5409 = vor.u32 %v5406, %v5407
      %v5410 = vsel %vm1714, %v5402, %v5409
      %v5411 = vrot.slane %v5406, 4
      %v5413 = vshrl.u32 %v5384, 16
      %v5415 = vrot.slane %v5413, 7
      %v5416 = vshll.u32 %v5384, 16
      %v5418 = vor.u32 %v5415, %v5416
      %v5419 = vsel %vm1714, %v5411, %v5418
      %v5420 = vrot.slane %v5415, 4
      %v5422 = vshrl.u32 %v5385, 16
      %v5424 = vrot.slane %v5422, 7
      %v5425 = vshll.u32 %v5385, 16
      %v5427 = vor.u32 %v5424, %v5425
      %v5428 = vsel %vm1714, %v5420, %v5427
      %v5429 = vrot.slane %v5424, 4
      %v5436 = vld [vmem:[#allocation6] sm:$0xf]
      %v5437 = vsel %vm1816, %v5392, %v5436
      %5438 = vst [vmem:[#allocation6] sm:$0xf] %v5437
      %5439 = vst [vmem:[#allocation6 + $0x4] sm:$0xf] %v5401
      %5440 = vst [vmem:[#allocation6 + $0x8] sm:$0xf] %v5410
      %5441 = vst [vmem:[#allocation6 + $0xc] sm:$0xf] %v5419
      %5442 = vst [vmem:[#allocation6 + $0x10] sm:$0xf] %v5428
      %v5443 = vld [vmem:[#allocation6 + $0x14] sm:$0x1]
      %v5444 = vsel %vm687, %v5429, %v5443
      %5445 = vst [vmem:[#allocation6 + $0x14] sm:$0x1] %v5444
      %v5446 = vld [vmem:[%s12] sm:$0x1]
      %v5447 = vld [vmem:[#allocation6] sm:$0xf]
      %v5448 = vld [vmem:[#allocation6 + $0x4] sm:$0xf]
      %v5449 = vld [vmem:[#allocation6 + $0x8] sm:$0xf]
      %v5450 = vld [vmem:[#allocation6 + $0xc] sm:$0xf]
      %v5451 = vld [vmem:[#allocation6 + $0x10] sm:$0xf]
      %v5452 = vld [vmem:[%s6] sm:$0xf]
      %v5453 = vld [vmem:[%s6 + $0x4] sm:$0xf]
      %v5454 = vld [vmem:[%s6 + $0x8] sm:$0xf]
      %v5455 = vld [vmem:[%s6 + $0xc] sm:$0xf]
      %v5456 = vld [vmem:[%s6 + $0x10] sm:$0xf]
      %v5457 = vld [vmem:[%s6 + $0x14] sm:$0xf]
      %v5458 = vld [vmem:[%s6 + $0x18] sm:$0xf]
      %v5459 = vld [vmem:[%s6 + $0x1c] sm:$0xf]
      %v5460 = vld [vmem:[%s6 + $0x20] sm:$0xf]
      %v5461 = vld [vmem:[%s6 + $0x24] sm:$0xf]
      %v5462 = vld [vmem:[%s6 + $0x28] sm:$0xf]
      %v5463 = vld [vmem:[%s6 + $0x2c] sm:$0xf]
      %v5464 = vld [vmem:[%s6 + $0x30] sm:$0xf]
      %v5465 = vld [vmem:[%s6 + $0x34] sm:$0xf]
      %v5466 = vld [vmem:[%s6 + $0x38] sm:$0xf]
      %v5467 = vld [vmem:[%s6 + $0x3c] sm:$0xf]
      %v5473 = vunpack.c.l.b16 %v5447
      %v5474 = vunpack.c.l.b16 %v5448
      %v5475 = vunpack.c.l.b16 %v5449
      %v5476 = vunpack.c.l.b16 %v5450
      %v5477 = vunpack.c.l.b16 %v5451
      %v5478 = vpack.c.b16 %v5474, %v5473
      %v5479 = vpack.c.b16 %v5476, %v5475
      %v5480 = vpack.c.b16 %v5477, %v5477
      %v5500 = vunpack.c.l.b16 %v5452
      %v5501 = vunpack.c.l.b16 %v5453
      %v5502 = vunpack.c.l.b16 %v5454
      %v5503 = vunpack.c.l.b16 %v5455
      %v5504 = vunpack.c.l.b16 %v5456
      %v5505 = vunpack.c.l.b16 %v5457
      %v5506 = vunpack.c.l.b16 %v5458
      %v5507 = vunpack.c.l.b16 %v5459
      %v5508 = vunpack.c.l.b16 %v5460
      %v5509 = vunpack.c.l.b16 %v5461
      %v5510 = vunpack.c.l.b16 %v5462
      %v5511 = vunpack.c.l.b16 %v5463
      %v5512 = vunpack.c.l.b16 %v5464
      %v5513 = vunpack.c.l.b16 %v5465
      %v5514 = vunpack.c.l.b16 %v5466
      %v5515 = vunpack.c.l.b16 %v5467
      %v5516 = vpack.c.b16 %v5501, %v5500
      %v5517 = vpack.c.b16 %v5503, %v5502
      %v5518 = vpack.c.b16 %v5505, %v5504
      %v5519 = vpack.c.b16 %v5507, %v5506
      %v5520 = vpack.c.b16 %v5509, %v5508
      %v5521 = vpack.c.b16 %v5511, %v5510
      %v5522 = vpack.c.b16 %v5513, %v5512
      %v5523 = vpack.c.b16 %v5515, %v5514
      %5532 = vmatprep.subr.bf16.mxu0 0
      %5533 = vmatpush1.bf16.msra.mxu0 %v5523
      %5534 = vmatprep.subr.bf16.mxu0 0
      %5535 = vmatpush1.bf16.msra.mxu0 %v5522
      %5536 = vmatprep.subr.bf16.mxu0 0
      %5537 = vmatpush1.bf16.msra.mxu0 %v5521
      %5538 = vmatprep.subr.bf16.mxu0 0
      %5539 = vmatpush1.bf16.msra.mxu0 %v5520
      %5540 = vmatprep.subr.bf16.mxu0 0
      %5541 = vmatpush1.bf16.msra.mxu0 %v5519
      %5542 = vmatprep.subr.bf16.mxu0 0
      %5543 = vmatpush1.bf16.msra.mxu0 %v5518
      %5544 = vmatprep.subr.bf16.mxu0 0
      %5545 = vmatpush1.bf16.msra.mxu0 %v5517
      %5546 = vmatprep.subr.bf16.mxu0 0
      %5547 = vmatpush1.bf16.msra.mxu0 %v5516
      %5548 = vmatprep.subr.bf16.mxu0 0
      %5549 = vmatpush2.bf16.msra.mxu0 0
      %5550 = vmatprep.subr.bf16.mxu0 0
      %5551 = vmatpush2.bf16.msra.mxu0 0
      %5552 = vmatprep.subr.bf16.mxu0 0
      %5553 = vmatpush2.bf16.msra.mxu0 0
      %5554 = vmatprep.subr.bf16.mxu0 0
      %5555 = vmatpush2.bf16.msra.mxu0 0
      %5556 = vmatprep.subr.bf16.mxu0 0
      %5557 = vmatpush2.bf16.msra.mxu0 0
      %5558 = vmatprep.subr.bf16.mxu0 0
      %5559 = vmatpush2.bf16.msra.mxu0 0
      %5560 = vmatprep.subr.bf16.mxu0 0
      %5561 = vmatpush2.bf16.msra.mxu0 0
      %5562 = vmatprep.subr.bf16.mxu0 0
      %5563 = vmatpush2.bf16.msra.mxu0 0
      %5564 = vmatprep.mubr.bf16.mxu0 0
      %5565 = vmatmul.mubr.bf16.gmra.mxu0 %v5478
      %v5566 = vpop.f32.mrf.mxu0
      %v5567 = vadd.f32 0.0, %v5566
      %v5568 = vpop.f32.mrf.mxu0
      %v5569 = vpop.f32.mrf.mxu0
      %v5570 = vadd.f32 0.0, %v5569
      %v5571 = vpop.f32.mrf.mxu0
      %5572 = vmatprep.mubr.bf16.mxu0 0
      %5573 = vmatmul.mubr.bf16.gmra.mxu0 %v5479
      %v5574 = vpop.f32.mrf.mxu0
      %v5575 = vadd.f32 0.0, %v5574
      %v5576 = vpop.f32.mrf.mxu0
      %v5577 = vpop.f32.mrf.mxu0
      %v5578 = vadd.f32 0.0, %v5577
      %v5579 = vpop.f32.mrf.mxu0
      %5580 = vmatprep.mubr.bf16.mxu0 0
      %5581 = vmatmul.mubr.bf16.gmra.mxu0 %v5480
      %v5582 = vpop.f32.mrf.mxu0
      %v5583 = vadd.f32 0.0, %v5582
      %v5584 = vpop.f32.mrf.mxu0
      %v5585 = vpop.f32.mrf.mxu0
      %v5586 = vpop.f32.mrf.mxu0
      %5587 = vdwg.mxu0
      %v5589 = vlaneseq
      %v5590 = vshrl.u32 %v5589, 7
      %v5591 = vsub.s32 0, %v5590
      %v5592 = vrot.slane %v5446, %v5591
      %v5594 = vadd.f32 %v5592, %v5567
      %v5595 = vadd.f32 %v5592, %v5570
      %v5596 = vadd.f32 %v5592, %v5575
      %v5597 = vadd.f32 %v5592, %v5578
      %v5598 = vadd.f32 %v5592, %v5583
      %5599 = vst [vmem:[#allocation2] sm:$0xff] %v5594
      %5600 = vst [vmem:[#allocation2 + $0x18] sm:$0xff] %v5595
      %5601 = vst [vmem:[#allocation2 + $0x30] sm:$0xff] %v5596
      %5602 = vst [vmem:[#allocation2 + $0x48] sm:$0xff] %v5597
      %5603 = vst [vmem:[#allocation2 + $0x60] sm:$0xff] %v5598
      %v5604 = vld [vmem:[#allocation2] sm:$0xff]
      %v5605 = vld [vmem:[#allocation2 + $0x18] sm:$0xff]
      %v5606 = vld [vmem:[#allocation2 + $0x30] sm:$0xff]
      %v5607 = vld [vmem:[#allocation2 + $0x48] sm:$0xff]
      %v5608 = vld [vmem:[#allocation2 + $0x60] sm:$0xff]
      %v5609 = vld [vmem:[#allocation6] sm:$0xf]
      %v5610 = vld [vmem:[#allocation6 + $0x4] sm:$0xf]
      %v5611 = vld [vmem:[#allocation6 + $0x8] sm:$0xf]
      %v5612 = vld [vmem:[#allocation6 + $0xc] sm:$0xf]
      %v5613 = vld [vmem:[#allocation6 + $0x10] sm:$0xf]
      %v5614 = vld [vmem:[#allocation6 + $0x14] sm:$0x1]
      %s5615 = scalar_lea.vmem %s6, 64
      %v5616 = vld [vmem:[%s5615] sm:$0xf]
      %v5617 = vld [vmem:[%s5615 + $0x4] sm:$0xf]
      %v5618 = vld [vmem:[%s5615 + $0x8] sm:$0xf]
      %v5619 = vld [vmem:[%s5615 + $0xc] sm:$0xf]
      %v5620 = vld [vmem:[%s5615 + $0x10] sm:$0xf]
      %v5621 = vld [vmem:[%s5615 + $0x14] sm:$0xf]
      %v5622 = vld [vmem:[%s5615 + $0x18] sm:$0xf]
      %v5623 = vld [vmem:[%s5615 + $0x1c] sm:$0xf]
      %v5624 = vld [vmem:[%s5615 + $0x20] sm:$0xf]
      %v5625 = vld [vmem:[%s5615 + $0x24] sm:$0xf]
      %v5626 = vld [vmem:[%s5615 + $0x28] sm:$0xf]
      %v5627 = vld [vmem:[%s5615 + $0x2c] sm:$0xf]
      %v5628 = vld [vmem:[%s5615 + $0x30] sm:$0xf]
      %v5629 = vld [vmem:[%s5615 + $0x34] sm:$0xf]
      %v5630 = vld [vmem:[%s5615 + $0x38] sm:$0xf]
      %v5631 = vld [vmem:[%s5615 + $0x3c] sm:$0xf]
      %v5638 = vunpack.c.l.b16 %v5609
      %v5639 = vunpack.c.l.b16 %v5610
      %v5640 = vunpack.c.l.b16 %v5611
      %v5641 = vunpack.c.l.b16 %v5612
      %v5642 = vunpack.c.l.b16 %v5613
      %v5643 = vunpack.c.l.b16 %v5614
      %v5644 = vpack.c.b16 %v5639, %v5638
      %v5645 = vpack.c.b16 %v5641, %v5640
      %v5646 = vpack.c.b16 %v5643, %v5642
      %v5648 = vshrl.u32 %v5644, 16
      %v5650 = vshll.u32 %v5644, 16
      %v5652 = vrot.slane %v5650, 1
      %v5653 = vor.u32 %v5648, %v5652
      %v5655 = vshll.u32 %v5645, 16
      %v5657 = vrot.slane %v5655, 1
      %v5658 = vsel %vm2445, %v5653, %v5657
      %v5659 = vshrl.u32 %v5645, 16
      %v5661 = vor.u32 %v5659, %v5657
      %v5663 = vshll.u32 %v5646, 16
      %v5665 = vrot.slane %v5663, 1
      %v5666 = vsel %vm2445, %v5661, %v5665
      %v5667 = vshrl.u32 %v5646, 16
      %v5669 = vor.u32 %v5667, %v5665
      %v5689 = vunpack.c.l.b16 %v5616
      %v5690 = vunpack.c.l.b16 %v5617
      %v5691 = vunpack.c.l.b16 %v5618
      %v5692 = vunpack.c.l.b16 %v5619
      %v5693 = vunpack.c.l.b16 %v5620
      %v5694 = vunpack.c.l.b16 %v5621
      %v5695 = vunpack.c.l.b16 %v5622
      %v5696 = vunpack.c.l.b16 %v5623
      %v5697 = vunpack.c.l.b16 %v5624
      %v5698 = vunpack.c.l.b16 %v5625
      %v5699 = vunpack.c.l.b16 %v5626
      %v5700 = vunpack.c.l.b16 %v5627
      %v5701 = vunpack.c.l.b16 %v5628
      %v5702 = vunpack.c.l.b16 %v5629
      %v5703 = vunpack.c.l.b16 %v5630
      %v5704 = vunpack.c.l.b16 %v5631
      %v5705 = vpack.c.b16 %v5690, %v5689
      %v5706 = vpack.c.b16 %v5692, %v5691
      %v5707 = vpack.c.b16 %v5694, %v5693
      %v5708 = vpack.c.b16 %v5696, %v5695
      %v5709 = vpack.c.b16 %v5698, %v5697
      %v5710 = vpack.c.b16 %v5700, %v5699
      %v5711 = vpack.c.b16 %v5702, %v5701
      %v5712 = vpack.c.b16 %v5704, %v5703
      %5721 = vmatprep.subr.bf16.mxu0 0
      %5722 = vmatpush1.bf16.msra.mxu0 %v5712
      %5723 = vmatprep.subr.bf16.mxu0 0
      %5724 = vmatpush1.bf16.msra.mxu0 %v5711
      %5725 = vmatprep.subr.bf16.mxu0 0
      %5726 = vmatpush1.bf16.msra.mxu0 %v5710
      %5727 = vmatprep.subr.bf16.mxu0 0
      %5728 = vmatpush1.bf16.msra.mxu0 %v5709
      %5729 = vmatprep.subr.bf16.mxu0 0
      %5730 = vmatpush1.bf16.msra.mxu0 %v5708
      %5731 = vmatprep.subr.bf16.mxu0 0
      %5732 = vmatpush1.bf16.msra.mxu0 %v5707
      %5733 = vmatprep.subr.bf16.mxu0 0
      %5734 = vmatpush1.bf16.msra.mxu0 %v5706
      %5735 = vmatprep.subr.bf16.mxu0 0
      %5736 = vmatpush1.bf16.msra.mxu0 %v5705
      %5737 = vmatprep.subr.bf16.mxu0 0
      %5738 = vmatpush2.bf16.msra.mxu0 0
      %5739 = vmatprep.subr.bf16.mxu0 0
      %5740 = vmatpush2.bf16.msra.mxu0 0
      %5741 = vmatprep.subr.bf16.mxu0 0
      %5742 = vmatpush2.bf16.msra.mxu0 0
      %5743 = vmatprep.subr.bf16.mxu0 0
      %5744 = vmatpush2.bf16.msra.mxu0 0
      %5745 = vmatprep.subr.bf16.mxu0 0
      %5746 = vmatpush2.bf16.msra.mxu0 0
      %5747 = vmatprep.subr.bf16.mxu0 0
      %5748 = vmatpush2.bf16.msra.mxu0 0
      %5749 = vmatprep.subr.bf16.mxu0 0
      %5750 = vmatpush2.bf16.msra.mxu0 0
      %5751 = vmatprep.subr.bf16.mxu0 0
      %5752 = vmatpush2.bf16.msra.mxu0 0
      %5753 = vmatprep.mubr.bf16.mxu0 0
      %5754 = vmatmul.mubr.bf16.gmra.mxu0 %v5658
      %v5755 = vpop.f32.mrf.mxu0
      %v5756 = vadd.f32 0.0, %v5755
      %v5757 = vpop.f32.mrf.mxu0
      %v5758 = vpop.f32.mrf.mxu0
      %v5759 = vadd.f32 0.0, %v5758
      %v5760 = vpop.f32.mrf.mxu0
      %5761 = vmatprep.mubr.bf16.mxu0 0
      %5762 = vmatmul.mubr.bf16.gmra.mxu0 %v5666
      %v5763 = vpop.f32.mrf.mxu0
      %v5764 = vadd.f32 0.0, %v5763
      %v5765 = vpop.f32.mrf.mxu0
      %v5766 = vpop.f32.mrf.mxu0
      %v5767 = vadd.f32 0.0, %v5766
      %v5768 = vpop.f32.mrf.mxu0
      %5769 = vmatprep.mubr.bf16.mxu0 0
      %5770 = vmatmul.mubr.bf16.gmra.mxu0 %v5669
      %v5771 = vpop.f32.mrf.mxu0
      %v5772 = vadd.f32 0.0, %v5771
      %v5773 = vpop.f32.mrf.mxu0
      %v5774 = vpop.f32.mrf.mxu0
      %v5775 = vpop.f32.mrf.mxu0
      %5776 = vdwg.mxu0
      %v5777 = vadd.f32 %v5604, %v5756
      %v5778 = vadd.f32 %v5605, %v5759
      %v5779 = vadd.f32 %v5606, %v5764
      %v5780 = vadd.f32 %v5607, %v5767
      %v5781 = vadd.f32 %v5608, %v5772
      %5782 = vst [vmem:[#allocation2] sm:$0xff] %v5777
      %5783 = vst [vmem:[#allocation2 + $0x18] sm:$0xff] %v5778
      %5784 = vst [vmem:[#allocation2 + $0x30] sm:$0xff] %v5779
      %5785 = vst [vmem:[#allocation2 + $0x48] sm:$0xff] %v5780
      %5786 = vst [vmem:[#allocation2 + $0x60] sm:$0xff] %v5781
      %v5787 = vld [vmem:[#allocation2] sm:$0xff]
      %v5788 = vld [vmem:[#allocation2 + $0x18] sm:$0xff]
      %v5789 = vld [vmem:[#allocation2 + $0x30] sm:$0xff]
      %v5790 = vld [vmem:[#allocation2 + $0x48] sm:$0xff]
      %v5791 = vld [vmem:[#allocation2 + $0x60] sm:$0xff]
      %v5792 = vld [vmem:[#allocation6] sm:$0xe]
      %v5793 = vld [vmem:[#allocation6 + $0x4] sm:$0xf]
      %v5794 = vld [vmem:[#allocation6 + $0x8] sm:$0xf]
      %v5795 = vld [vmem:[#allocation6 + $0xc] sm:$0xf]
      %v5796 = vld [vmem:[#allocation6 + $0x10] sm:$0xf]
      %v5797 = vld [vmem:[#allocation6 + $0x14] sm:$0x1]
      %s5798 = scalar_lea.vmem %s6, 128
      %v5799 = vld [vmem:[%s5798] sm:$0xf]
      %v5800 = vld [vmem:[%s5798 + $0x4] sm:$0xf]
      %v5801 = vld [vmem:[%s5798 + $0x8] sm:$0xf]
      %v5802 = vld [vmem:[%s5798 + $0xc] sm:$0xf]
      %v5803 = vld [vmem:[%s5798 + $0x10] sm:$0xf]
      %v5804 = vld [vmem:[%s5798 + $0x14] sm:$0xf]
      %v5805 = vld [vmem:[%s5798 + $0x18] sm:$0xf]
      %v5806 = vld [vmem:[%s5798 + $0x1c] sm:$0xf]
      %v5807 = vld [vmem:[%s5798 + $0x20] sm:$0xf]
      %v5808 = vld [vmem:[%s5798 + $0x24] sm:$0xf]
      %v5809 = vld [vmem:[%s5798 + $0x28] sm:$0xf]
      %v5810 = vld [vmem:[%s5798 + $0x2c] sm:$0xf]
      %v5811 = vld [vmem:[%s5798 + $0x30] sm:$0xf]
      %v5812 = vld [vmem:[%s5798 + $0x34] sm:$0xf]
      %v5813 = vld [vmem:[%s5798 + $0x38] sm:$0xf]
      %v5814 = vld [vmem:[%s5798 + $0x3c] sm:$0xf]
      %v5821 = vunpack.c.l.b16 %v5792
      %v5822 = vunpack.c.l.b16 %v5793
      %v5823 = vunpack.c.l.b16 %v5794
      %v5824 = vunpack.c.l.b16 %v5795
      %v5825 = vunpack.c.l.b16 %v5796
      %v5826 = vunpack.c.l.b16 %v5797
      %v5827 = vpack.c.b16 %v5822, %v5821
      %v5828 = vpack.c.b16 %v5824, %v5823
      %v5829 = vpack.c.b16 %v5826, %v5825
      %v5830 = vrot.slane %v5827, 1
      %v5831 = vrot.slane %v5828, 1
      %v5832 = vsel %vm3016, %v5830, %v5831
      %v5833 = vrot.slane %v5829, 1
      %v5834 = vsel %vm3016, %v5831, %v5833
      %v5854 = vunpack.c.l.b16 %v5799
      %v5855 = vunpack.c.l.b16 %v5800
      %v5856 = vunpack.c.l.b16 %v5801
      %v5857 = vunpack.c.l.b16 %v5802
      %v5858 = vunpack.c.l.b16 %v5803
      %v5859 = vunpack.c.l.b16 %v5804
      %v5860 = vunpack.c.l.b16 %v5805
      %v5861 = vunpack.c.l.b16 %v5806
      %v5862 = vunpack.c.l.b16 %v5807
      %v5863 = vunpack.c.l.b16 %v5808
      %v5864 = vunpack.c.l.b16 %v5809
      %v5865 = vunpack.c.l.b16 %v5810
      %v5866 = vunpack.c.l.b16 %v5811
      %v5867 = vunpack.c.l.b16 %v5812
      %v5868 = vunpack.c.l.b16 %v5813
      %v5869 = vunpack.c.l.b16 %v5814
      %v5870 = vpack.c.b16 %v5855, %v5854
      %v5871 = vpack.c.b16 %v5857, %v5856
      %v5872 = vpack.c.b16 %v5859, %v5858
      %v5873 = vpack.c.b16 %v5861, %v5860
      %v5874 = vpack.c.b16 %v5863, %v5862
      %v5875 = vpack.c.b16 %v5865, %v5864
      %v5876 = vpack.c.b16 %v5867, %v5866
      %v5877 = vpack.c.b16 %v5869, %v5868
      %5886 = vmatprep.subr.bf16.mxu0 0
      %5887 = vmatpush1.bf16.msra.mxu0 %v5877
      %5888 = vmatprep.subr.bf16.mxu0 0
      %5889 = vmatpush1.bf16.msra.mxu0 %v5876
      %5890 = vmatprep.subr.bf16.mxu0 0
      %5891 = vmatpush1.bf16.msra.mxu0 %v5875
      %5892 = vmatprep.subr.bf16.mxu0 0
      %5893 = vmatpush1.bf16.msra.mxu0 %v5874
      %5894 = vmatprep.subr.bf16.mxu0 0
      %5895 = vmatpush1.bf16.msra.mxu0 %v5873
      %5896 = vmatprep.subr.bf16.mxu0 0
      %5897 = vmatpush1.bf16.msra.mxu0 %v5872
      %5898 = vmatprep.subr.bf16.mxu0 0
      %5899 = vmatpush1.bf16.msra.mxu0 %v5871
      %5900 = vmatprep.subr.bf16.mxu0 0
      %5901 = vmatpush1.bf16.msra.mxu0 %v5870
      %5902 = vmatprep.subr.bf16.mxu0 0
      %5903 = vmatpush2.bf16.msra.mxu0 0
      %5904 = vmatprep.subr.bf16.mxu0 0
      %5905 = vmatpush2.bf16.msra.mxu0 0
      %5906 = vmatprep.subr.bf16.mxu0 0
      %5907 = vmatpush2.bf16.msra.mxu0 0
      %5908 = vmatprep.subr.bf16.mxu0 0
      %5909 = vmatpush2.bf16.msra.mxu0 0
      %5910 = vmatprep.subr.bf16.mxu0 0
      %5911 = vmatpush2.bf16.msra.mxu0 0
      %5912 = vmatprep.subr.bf16.mxu0 0
      %5913 = vmatpush2.bf16.msra.mxu0 0
      %5914 = vmatprep.subr.bf16.mxu0 0
      %5915 = vmatpush2.bf16.msra.mxu0 0
      %5916 = vmatprep.subr.bf16.mxu0 0
      %5917 = vmatpush2.bf16.msra.mxu0 0
      %5918 = vmatprep.mubr.bf16.mxu0 0
      %5919 = vmatmul.mubr.bf16.gmra.mxu0 %v5832
      %v5920 = vpop.f32.mrf.mxu0
      %v5921 = vadd.f32 0.0, %v5920
      %v5922 = vpop.f32.mrf.mxu0
      %v5923 = vpop.f32.mrf.mxu0
      %v5924 = vadd.f32 0.0, %v5923
      %v5925 = vpop.f32.mrf.mxu0
      %5926 = vmatprep.mubr.bf16.mxu0 0
      %5927 = vmatmul.mubr.bf16.gmra.mxu0 %v5834
      %v5928 = vpop.f32.mrf.mxu0
      %v5929 = vadd.f32 0.0, %v5928
      %v5930 = vpop.f32.mrf.mxu0
      %v5931 = vpop.f32.mrf.mxu0
      %v5932 = vadd.f32 0.0, %v5931
      %v5933 = vpop.f32.mrf.mxu0
      %5934 = vmatprep.mubr.bf16.mxu0 0
      %5935 = vmatmul.mubr.bf16.gmra.mxu0 %v5833
      %v5936 = vpop.f32.mrf.mxu0
      %v5937 = vadd.f32 0.0, %v5936
      %v5938 = vpop.f32.mrf.mxu0
      %v5939 = vpop.f32.mrf.mxu0
      %v5940 = vpop.f32.mrf.mxu0
      %5941 = vdwg.mxu0
      %v5942 = vadd.f32 %v5787, %v5921
      %v5943 = vadd.f32 %v5788, %v5924
      %v5944 = vadd.f32 %v5789, %v5929
      %v5945 = vadd.f32 %v5790, %v5932
      %v5946 = vadd.f32 %v5791, %v5937
      %5947 = vst [vmem:[#allocation2] sm:$0xff] %v5942
      %5948 = vst [vmem:[#allocation2 + $0x18] sm:$0xff] %v5943
      %5949 = vst [vmem:[#allocation2 + $0x30] sm:$0xff] %v5944
      %5950 = vst [vmem:[#allocation2 + $0x48] sm:$0xff] %v5945
      %5951 = vst [vmem:[#allocation2 + $0x60] sm:$0xff] %v5946
      %v5952 = vld [vmem:[#allocation2] sm:$0xff]
      %v5953 = vld [vmem:[#allocation2 + $0x18] sm:$0xff]
      %v5954 = vld [vmem:[#allocation2 + $0x30] sm:$0xff]
      %v5955 = vld [vmem:[#allocation2 + $0x48] sm:$0xff]
      %v5956 = vld [vmem:[#allocation2 + $0x60] sm:$0xff]
      %vm5957 = vcmp.ge.f32.partialorder %v5952, 0.0
      %vm5958 = vcmp.ge.f32.partialorder %v5953, 0.0
      %vm5959 = vcmp.ge.f32.partialorder %v5954, 0.0
      %vm5960 = vcmp.ge.f32.partialorder %v5955, 0.0
      %vm5961 = vcmp.ge.f32.partialorder %v5956, 0.0
      %v5962 = vmul.f32 %v5952, 0.2
      %v5963 = vmul.f32 %v5953, 0.2
      %v5964 = vmul.f32 %v5954, 0.2
      %v5965 = vmul.f32 %v5955, 0.2
      %v5966 = vmul.f32 %v5956, 0.2
      %v5967 = vsel %vm5957, %v5952, %v5962
      %v5968 = vsel %vm5958, %v5953, %v5963
      %v5969 = vsel %vm5959, %v5954, %v5964
      %v5970 = vsel %vm5960, %v5955, %v5965
      %v5971 = vsel %vm5961, %v5956, %v5966
      %5972 = vst [vmem:[%s675] sm:$0xff] %v5967
      %5973 = vst [vmem:[%s675 + $0x8] sm:$0xff] %v5968
      %s5974 = scalar_lea.vmem %s675, 16
      %5975 = vst [vmem:[%s5974] sm:$0xff] %v5970
      %5976 = vst [vmem:[%s5974 + $0x8] sm:$0xff] %v5971
      %v5977 = vmul.f32 %v5967, %v1633
      %v5978 = vmul.f32 %v5968, %v1638
      %v5979 = vmul.f32 %v5969, %v1643
      %v5980 = vmul.f32 %v5970, %v1648
      %v5981 = vmul.f32 %v5971, %v1653
      %v5982 = vpack.c.bf16 %v5978, %v5977
      %v5983 = vpack.c.bf16 %v5980, %v5979
      %v5984 = vpack.c.bf16 %v5981, %v5981
      %v5988 = vunpack.c.l.b16 %v5982
      %v5989 = vunpack.c.h.b16 %v5982
      %v5990 = vunpack.c.l.b16 %v5983
      %v5991 = vunpack.c.h.b16 %v5983
      %v5992 = vunpack.c.l.b16 %v5984
      %v5993 = vpack.c.b16 %v5988, %v5988
      %v5994 = vpack.c.b16 %v5989, %v5989
      %v5995 = vpack.c.b16 %v5990, %v5990
      %v5996 = vpack.c.b16 %v5991, %v5991
      %v5997 = vpack.c.b16 %v5992, %v5992
      %v5999 = vshrl.u32 %v5993, 16
      %v6001 = vrot.slane %v5999, 7
      %v6002 = vshll.u32 %v5993, 16
      %v6004 = vor.u32 %v6001, %v6002
      %v6005 = vrot.slane %v6001, 4
      %v6007 = vshrl.u32 %v5994, 16
      %v6009 = vrot.slane %v6007, 7
      %v6010 = vshll.u32 %v5994, 16
      %v6012 = vor.u32 %v6009, %v6010
      %v6013 = vsel %vm1714, %v6005, %v6012
      %v6014 = vrot.slane %v6009, 4
      %v6016 = vshrl.u32 %v5995, 16
      %v6018 = vrot.slane %v6016, 7
      %v6019 = vshll.u32 %v5995, 16
      %v6021 = vor.u32 %v6018, %v6019
      %v6022 = vsel %vm1714, %v6014, %v6021
      %v6023 = vrot.slane %v6018, 4
      %v6025 = vshrl.u32 %v5996, 16
      %v6027 = vrot.slane %v6025, 7
      %v6028 = vshll.u32 %v5996, 16
      %v6030 = vor.u32 %v6027, %v6028
      %v6031 = vsel %vm1714, %v6023, %v6030
      %v6032 = vrot.slane %v6027, 4
      %v6034 = vshrl.u32 %v5997, 16
      %v6036 = vrot.slane %v6034, 7
      %v6037 = vshll.u32 %v5997, 16
      %v6039 = vor.u32 %v6036, %v6037
      %v6040 = vsel %vm1714, %v6032, %v6039
      %v6041 = vrot.slane %v6036, 4
      %v6048 = vld [vmem:[#allocation7] sm:$0xf]
      %v6049 = vsel %vm1816, %v6004, %v6048
      %6050 = vst [vmem:[#allocation7] sm:$0xf] %v6049
      %6051 = vst [vmem:[#allocation7 + $0x4] sm:$0xf] %v6013
      %6052 = vst [vmem:[#allocation7 + $0x8] sm:$0xf] %v6022
      %6053 = vst [vmem:[#allocation7 + $0xc] sm:$0xf] %v6031
      %6054 = vst [vmem:[#allocation7 + $0x10] sm:$0xf] %v6040
      %v6055 = vld [vmem:[#allocation7 + $0x14] sm:$0x1]
      %v6056 = vsel %vm687, %v6041, %v6055
      %6057 = vst [vmem:[#allocation7 + $0x14] sm:$0x1] %v6056
      %v6058 = vld [vmem:[%s13] sm:$0x1]
      %v6059 = vld [vmem:[#allocation7] sm:$0xf]
      %v6060 = vld [vmem:[#allocation7 + $0x4] sm:$0xf]
      %v6061 = vld [vmem:[#allocation7 + $0x8] sm:$0xf]
      %v6062 = vld [vmem:[#allocation7 + $0xc] sm:$0xf]
      %v6063 = vld [vmem:[#allocation7 + $0x10] sm:$0xf]
      %v6064 = vld [vmem:[%s7] sm:$0xf]
      %v6065 = vld [vmem:[%s7 + $0x4] sm:$0xf]
      %v6066 = vld [vmem:[%s7 + $0x8] sm:$0xf]
      %v6067 = vld [vmem:[%s7 + $0xc] sm:$0xf]
      %v6068 = vld [vmem:[%s7 + $0x10] sm:$0xf]
      %v6069 = vld [vmem:[%s7 + $0x14] sm:$0xf]
      %v6070 = vld [vmem:[%s7 + $0x18] sm:$0xf]
      %v6071 = vld [vmem:[%s7 + $0x1c] sm:$0xf]
      %v6072 = vld [vmem:[%s7 + $0x20] sm:$0xf]
      %v6073 = vld [vmem:[%s7 + $0x24] sm:$0xf]
      %v6074 = vld [vmem:[%s7 + $0x28] sm:$0xf]
      %v6075 = vld [vmem:[%s7 + $0x2c] sm:$0xf]
      %v6076 = vld [vmem:[%s7 + $0x30] sm:$0xf]
      %v6077 = vld [vmem:[%s7 + $0x34] sm:$0xf]
      %v6078 = vld [vmem:[%s7 + $0x38] sm:$0xf]
      %v6079 = vld [vmem:[%s7 + $0x3c] sm:$0xf]
      %v6085 = vunpack.c.l.b16 %v6059
      %v6086 = vunpack.c.l.b16 %v6060
      %v6087 = vunpack.c.l.b16 %v6061
      %v6088 = vunpack.c.l.b16 %v6062
      %v6089 = vunpack.c.l.b16 %v6063
      %v6090 = vpack.c.b16 %v6086, %v6085
      %v6091 = vpack.c.b16 %v6088, %v6087
      %v6092 = vpack.c.b16 %v6089, %v6089
      %v6112 = vunpack.c.l.b16 %v6064
      %v6113 = vunpack.c.l.b16 %v6065
      %v6114 = vunpack.c.l.b16 %v6066
      %v6115 = vunpack.c.l.b16 %v6067
      %v6116 = vunpack.c.l.b16 %v6068
      %v6117 = vunpack.c.l.b16 %v6069
      %v6118 = vunpack.c.l.b16 %v6070
      %v6119 = vunpack.c.l.b16 %v6071
      %v6120 = vunpack.c.l.b16 %v6072
      %v6121 = vunpack.c.l.b16 %v6073
      %v6122 = vunpack.c.l.b16 %v6074
      %v6123 = vunpack.c.l.b16 %v6075
      %v6124 = vunpack.c.l.b16 %v6076
      %v6125 = vunpack.c.l.b16 %v6077
      %v6126 = vunpack.c.l.b16 %v6078
      %v6127 = vunpack.c.l.b16 %v6079
      %v6128 = vpack.c.b16 %v6113, %v6112
      %v6129 = vpack.c.b16 %v6115, %v6114
      %v6130 = vpack.c.b16 %v6117, %v6116
      %v6131 = vpack.c.b16 %v6119, %v6118
      %v6132 = vpack.c.b16 %v6121, %v6120
      %v6133 = vpack.c.b16 %v6123, %v6122
      %v6134 = vpack.c.b16 %v6125, %v6124
      %v6135 = vpack.c.b16 %v6127, %v6126
      %6144 = vmatprep.subr.bf16.mxu0 0
      %6145 = vmatpush1.bf16.msra.mxu0 %v6135
      %6146 = vmatprep.subr.bf16.mxu0 0
      %6147 = vmatpush1.bf16.msra.mxu0 %v6134
      %6148 = vmatprep.subr.bf16.mxu0 0
      %6149 = vmatpush1.bf16.msra.mxu0 %v6133
      %6150 = vmatprep.subr.bf16.mxu0 0
      %6151 = vmatpush1.bf16.msra.mxu0 %v6132
      %6152 = vmatprep.subr.bf16.mxu0 0
      %6153 = vmatpush1.bf16.msra.mxu0 %v6131
      %6154 = vmatprep.subr.bf16.mxu0 0
      %6155 = vmatpush1.bf16.msra.mxu0 %v6130
      %6156 = vmatprep.subr.bf16.mxu0 0
      %6157 = vmatpush1.bf16.msra.mxu0 %v6129
      %6158 = vmatprep.subr.bf16.mxu0 0
      %6159 = vmatpush1.bf16.msra.mxu0 %v6128
      %6160 = vmatprep.subr.bf16.mxu0 0
      %6161 = vmatpush2.bf16.msra.mxu0 0
      %6162 = vmatprep.subr.bf16.mxu0 0
      %6163 = vmatpush2.bf16.msra.mxu0 0
      %6164 = vmatprep.subr.bf16.mxu0 0
      %6165 = vmatpush2.bf16.msra.mxu0 0
      %6166 = vmatprep.subr.bf16.mxu0 0
      %6167 = vmatpush2.bf16.msra.mxu0 0
      %6168 = vmatprep.subr.bf16.mxu0 0
      %6169 = vmatpush2.bf16.msra.mxu0 0
      %6170 = vmatprep.subr.bf16.mxu0 0
      %6171 = vmatpush2.bf16.msra.mxu0 0
      %6172 = vmatprep.subr.bf16.mxu0 0
      %6173 = vmatpush2.bf16.msra.mxu0 0
      %6174 = vmatprep.subr.bf16.mxu0 0
      %6175 = vmatpush2.bf16.msra.mxu0 0
      %6176 = vmatprep.mubr.bf16.mxu0 0
      %6177 = vmatmul.mubr.bf16.gmra.mxu0 %v6090
      %v6178 = vpop.f32.mrf.mxu0
      %v6179 = vadd.f32 0.0, %v6178
      %v6180 = vpop.f32.mrf.mxu0
      %v6181 = vpop.f32.mrf.mxu0
      %v6182 = vadd.f32 0.0, %v6181
      %v6183 = vpop.f32.mrf.mxu0
      %6184 = vmatprep.mubr.bf16.mxu0 0
      %6185 = vmatmul.mubr.bf16.gmra.mxu0 %v6091
      %v6186 = vpop.f32.mrf.mxu0
      %v6187 = vadd.f32 0.0, %v6186
      %v6188 = vpop.f32.mrf.mxu0
      %v6189 = vpop.f32.mrf.mxu0
      %v6190 = vadd.f32 0.0, %v6189
      %v6191 = vpop.f32.mrf.mxu0
      %6192 = vmatprep.mubr.bf16.mxu0 0
      %6193 = vmatmul.mubr.bf16.gmra.mxu0 %v6092
      %v6194 = vpop.f32.mrf.mxu0
      %v6195 = vadd.f32 0.0, %v6194
      %v6196 = vpop.f32.mrf.mxu0
      %v6197 = vpop.f32.mrf.mxu0
      %v6198 = vpop.f32.mrf.mxu0
      %6199 = vdwg.mxu0
      %v6201 = vlaneseq
      %v6202 = vshrl.u32 %v6201, 7
      %v6203 = vsub.s32 0, %v6202
      %v6204 = vrot.slane %v6058, %v6203
      %v6206 = vadd.f32 %v6204, %v6179
      %v6207 = vadd.f32 %v6204, %v6182
      %v6208 = vadd.f32 %v6204, %v6187
      %v6209 = vadd.f32 %v6204, %v6190
      %v6210 = vadd.f32 %v6204, %v6195
      %6211 = vst [vmem:[#allocation2] sm:$0xff] %v6206
      %6212 = vst [vmem:[#allocation2 + $0x18] sm:$0xff] %v6207
      %6213 = vst [vmem:[#allocation2 + $0x30] sm:$0xff] %v6208
      %6214 = vst [vmem:[#allocation2 + $0x48] sm:$0xff] %v6209
      %6215 = vst [vmem:[#allocation2 + $0x60] sm:$0xff] %v6210
      %v6216 = vld [vmem:[#allocation2] sm:$0xff]
      %v6217 = vld [vmem:[#allocation2 + $0x18] sm:$0xff]
      %v6218 = vld [vmem:[#allocation2 + $0x30] sm:$0xff]
      %v6219 = vld [vmem:[#allocation2 + $0x48] sm:$0xff]
      %v6220 = vld [vmem:[#allocation2 + $0x60] sm:$0xff]
      %v6221 = vld [vmem:[#allocation7] sm:$0xf]
      %v6222 = vld [vmem:[#allocation7 + $0x4] sm:$0xf]
      %v6223 = vld [vmem:[#allocation7 + $0x8] sm:$0xf]
      %v6224 = vld [vmem:[#allocation7 + $0xc] sm:$0xf]
      %v6225 = vld [vmem:[#allocation7 + $0x10] sm:$0xf]
      %v6226 = vld [vmem:[#allocation7 + $0x14] sm:$0x1]
      %s6227 = scalar_lea.vmem %s7, 64
      %v6228 = vld [vmem:[%s6227] sm:$0xf]
      %v6229 = vld [vmem:[%s6227 + $0x4] sm:$0xf]
      %v6230 = vld [vmem:[%s6227 + $0x8] sm:$0xf]
      %v6231 = vld [vmem:[%s6227 + $0xc] sm:$0xf]
      %v6232 = vld [vmem:[%s6227 + $0x10] sm:$0xf]
      %v6233 = vld [vmem:[%s6227 + $0x14] sm:$0xf]
      %v6234 = vld [vmem:[%s6227 + $0x18] sm:$0xf]
      %v6235 = vld [vmem:[%s6227 + $0x1c] sm:$0xf]
      %v6236 = vld [vmem:[%s6227 + $0x20] sm:$0xf]
      %v6237 = vld [vmem:[%s6227 + $0x24] sm:$0xf]
      %v6238 = vld [vmem:[%s6227 + $0x28] sm:$0xf]
      %v6239 = vld [vmem:[%s6227 + $0x2c] sm:$0xf]
      %v6240 = vld [vmem:[%s6227 + $0x30] sm:$0xf]
      %v6241 = vld [vmem:[%s6227 + $0x34] sm:$0xf]
      %v6242 = vld [vmem:[%s6227 + $0x38] sm:$0xf]
      %v6243 = vld [vmem:[%s6227 + $0x3c] sm:$0xf]
      %v6250 = vunpack.c.l.b16 %v6221
      %v6251 = vunpack.c.l.b16 %v6222
      %v6252 = vunpack.c.l.b16 %v6223
      %v6253 = vunpack.c.l.b16 %v6224
      %v6254 = vunpack.c.l.b16 %v6225
      %v6255 = vunpack.c.l.b16 %v6226
      %v6256 = vpack.c.b16 %v6251, %v6250
      %v6257 = vpack.c.b16 %v6253, %v6252
      %v6258 = vpack.c.b16 %v6255, %v6254
      %v6260 = vshrl.u32 %v6256, 16
      %v6262 = vshll.u32 %v6256, 16
      %v6264 = vrot.slane %v6262, 1
      %v6265 = vor.u32 %v6260, %v6264
      %v6267 = vshll.u32 %v6257, 16
      %v6269 = vrot.slane %v6267, 1
      %v6270 = vsel %vm2445, %v6265, %v6269
      %v6271 = vshrl.u32 %v6257, 16
      %v6273 = vor.u32 %v6271, %v6269
      %v6275 = vshll.u32 %v6258, 16
      %v6277 = vrot.slane %v6275, 1
      %v6278 = vsel %vm2445, %v6273, %v6277
      %v6279 = vshrl.u32 %v6258, 16
      %v6281 = vor.u32 %v6279, %v6277
      %v6301 = vunpack.c.l.b16 %v6228
      %v6302 = vunpack.c.l.b16 %v6229
      %v6303 = vunpack.c.l.b16 %v6230
      %v6304 = vunpack.c.l.b16 %v6231
      %v6305 = vunpack.c.l.b16 %v6232
      %v6306 = vunpack.c.l.b16 %v6233
      %v6307 = vunpack.c.l.b16 %v6234
      %v6308 = vunpack.c.l.b16 %v6235
      %v6309 = vunpack.c.l.b16 %v6236
      %v6310 = vunpack.c.l.b16 %v6237
      %v6311 = vunpack.c.l.b16 %v6238
      %v6312 = vunpack.c.l.b16 %v6239
      %v6313 = vunpack.c.l.b16 %v6240
      %v6314 = vunpack.c.l.b16 %v6241
      %v6315 = vunpack.c.l.b16 %v6242
      %v6316 = vunpack.c.l.b16 %v6243
      %v6317 = vpack.c.b16 %v6302, %v6301
      %v6318 = vpack.c.b16 %v6304, %v6303
      %v6319 = vpack.c.b16 %v6306, %v6305
      %v6320 = vpack.c.b16 %v6308, %v6307
      %v6321 = vpack.c.b16 %v6310, %v6309
      %v6322 = vpack.c.b16 %v6312, %v6311
      %v6323 = vpack.c.b16 %v6314, %v6313
      %v6324 = vpack.c.b16 %v6316, %v6315
      %6333 = vmatprep.subr.bf16.mxu0 0
      %6334 = vmatpush1.bf16.msra.mxu0 %v6324
      %6335 = vmatprep.subr.bf16.mxu0 0
      %6336 = vmatpush1.bf16.msra.mxu0 %v6323
      %6337 = vmatprep.subr.bf16.mxu0 0
      %6338 = vmatpush1.bf16.msra.mxu0 %v6322
      %6339 = vmatprep.subr.bf16.mxu0 0
      %6340 = vmatpush1.bf16.msra.mxu0 %v6321
      %6341 = vmatprep.subr.bf16.mxu0 0
      %6342 = vmatpush1.bf16.msra.mxu0 %v6320
      %6343 = vmatprep.subr.bf16.mxu0 0
      %6344 = vmatpush1.bf16.msra.mxu0 %v6319
      %6345 = vmatprep.subr.bf16.mxu0 0
      %6346 = vmatpush1.bf16.msra.mxu0 %v6318
      %6347 = vmatprep.subr.bf16.mxu0 0
      %6348 = vmatpush1.bf16.msra.mxu0 %v6317
      %6349 = vmatprep.subr.bf16.mxu0 0
      %6350 = vmatpush2.bf16.msra.mxu0 0
      %6351 = vmatprep.subr.bf16.mxu0 0
      %6352 = vmatpush2.bf16.msra.mxu0 0
      %6353 = vmatprep.subr.bf16.mxu0 0
      %6354 = vmatpush2.bf16.msra.mxu0 0
      %6355 = vmatprep.subr.bf16.mxu0 0
      %6356 = vmatpush2.bf16.msra.mxu0 0
      %6357 = vmatprep.subr.bf16.mxu0 0
      %6358 = vmatpush2.bf16.msra.mxu0 0
      %6359 = vmatprep.subr.bf16.mxu0 0
      %6360 = vmatpush2.bf16.msra.mxu0 0
      %6361 = vmatprep.subr.bf16.mxu0 0
      %6362 = vmatpush2.bf16.msra.mxu0 0
      %6363 = vmatprep.subr.bf16.mxu0 0
      %6364 = vmatpush2.bf16.msra.mxu0 0
      %6365 = vmatprep.mubr.bf16.mxu0 0
      %6366 = vmatmul.mubr.bf16.gmra.mxu0 %v6270
      %v6367 = vpop.f32.mrf.mxu0
      %v6368 = vadd.f32 0.0, %v6367
      %v6369 = vpop.f32.mrf.mxu0
      %v6370 = vpop.f32.mrf.mxu0
      %v6371 = vadd.f32 0.0, %v6370
      %v6372 = vpop.f32.mrf.mxu0
      %6373 = vmatprep.mubr.bf16.mxu0 0
      %6374 = vmatmul.mubr.bf16.gmra.mxu0 %v6278
      %v6375 = vpop.f32.mrf.mxu0
      %v6376 = vadd.f32 0.0, %v6375
      %v6377 = vpop.f32.mrf.mxu0
      %v6378 = vpop.f32.mrf.mxu0
      %v6379 = vadd.f32 0.0, %v6378
      %v6380 = vpop.f32.mrf.mxu0
      %6381 = vmatprep.mubr.bf16.mxu0 0
      %6382 = vmatmul.mubr.bf16.gmra.mxu0 %v6281
      %v6383 = vpop.f32.mrf.mxu0
      %v6384 = vadd.f32 0.0, %v6383
      %v6385 = vpop.f32.mrf.mxu0
      %v6386 = vpop.f32.mrf.mxu0
      %v6387 = vpop.f32.mrf.mxu0
      %6388 = vdwg.mxu0
      %v6389 = vadd.f32 %v6216, %v6368
      %v6390 = vadd.f32 %v6217, %v6371
      %v6391 = vadd.f32 %v6218, %v6376
      %v6392 = vadd.f32 %v6219, %v6379
      %v6393 = vadd.f32 %v6220, %v6384
      %6394 = vst [vmem:[#allocation2] sm:$0xff] %v6389
      %6395 = vst [vmem:[#allocation2 + $0x18] sm:$0xff] %v6390
      %6396 = vst [vmem:[#allocation2 + $0x30] sm:$0xff] %v6391
      %6397 = vst [vmem:[#allocation2 + $0x48] sm:$0xff] %v6392
      %6398 = vst [vmem:[#allocation2 + $0x60] sm:$0xff] %v6393
      %v6399 = vld [vmem:[#allocation2] sm:$0xff]
      %v6400 = vld [vmem:[#allocation2 + $0x18] sm:$0xff]
      %v6401 = vld [vmem:[#allocation2 + $0x30] sm:$0xff]
      %v6402 = vld [vmem:[#allocation2 + $0x48] sm:$0xff]
      %v6403 = vld [vmem:[#allocation2 + $0x60] sm:$0xff]
      %v6404 = vld [vmem:[#allocation7] sm:$0xe]
      %v6405 = vld [vmem:[#allocation7 + $0x4] sm:$0xf]
      %v6406 = vld [vmem:[#allocation7 + $0x8] sm:$0xf]
      %v6407 = vld [vmem:[#allocation7 + $0xc] sm:$0xf]
      %v6408 = vld [vmem:[#allocation7 + $0x10] sm:$0xf]
      %v6409 = vld [vmem:[#allocation7 + $0x14] sm:$0x1]
      %s6410 = scalar_lea.vmem %s7, 128
      %v6411 = vld [vmem:[%s6410] sm:$0xf]
      %v6412 = vld [vmem:[%s6410 + $0x4] sm:$0xf]
      %v6413 = vld [vmem:[%s6410 + $0x8] sm:$0xf]
      %v6414 = vld [vmem:[%s6410 + $0xc] sm:$0xf]
      %v6415 = vld [vmem:[%s6410 + $0x10] sm:$0xf]
      %v6416 = vld [vmem:[%s6410 + $0x14] sm:$0xf]
      %v6417 = vld [vmem:[%s6410 + $0x18] sm:$0xf]
      %v6418 = vld [vmem:[%s6410 + $0x1c] sm:$0xf]
      %v6419 = vld [vmem:[%s6410 + $0x20] sm:$0xf]
      %v6420 = vld [vmem:[%s6410 + $0x24] sm:$0xf]
      %v6421 = vld [vmem:[%s6410 + $0x28] sm:$0xf]
      %v6422 = vld [vmem:[%s6410 + $0x2c] sm:$0xf]
      %v6423 = vld [vmem:[%s6410 + $0x30] sm:$0xf]
      %v6424 = vld [vmem:[%s6410 + $0x34] sm:$0xf]
      %v6425 = vld [vmem:[%s6410 + $0x38] sm:$0xf]
      %v6426 = vld [vmem:[%s6410 + $0x3c] sm:$0xf]
      %v6433 = vunpack.c.l.b16 %v6404
      %v6434 = vunpack.c.l.b16 %v6405
      %v6435 = vunpack.c.l.b16 %v6406
      %v6436 = vunpack.c.l.b16 %v6407
      %v6437 = vunpack.c.l.b16 %v6408
      %v6438 = vunpack.c.l.b16 %v6409
      %v6439 = vpack.c.b16 %v6434, %v6433
      %v6440 = vpack.c.b16 %v6436, %v6435
      %v6441 = vpack.c.b16 %v6438, %v6437
      %v6442 = vrot.slane %v6439, 1
      %v6443 = vrot.slane %v6440, 1
      %v6444 = vsel %vm3016, %v6442, %v6443
      %v6445 = vrot.slane %v6441, 1
      %v6446 = vsel %vm3016, %v6443, %v6445
      %v6466 = vunpack.c.l.b16 %v6411
      %v6467 = vunpack.c.l.b16 %v6412
      %v6468 = vunpack.c.l.b16 %v6413
      %v6469 = vunpack.c.l.b16 %v6414
      %v6470 = vunpack.c.l.b16 %v6415
      %v6471 = vunpack.c.l.b16 %v6416
      %v6472 = vunpack.c.l.b16 %v6417
      %v6473 = vunpack.c.l.b16 %v6418
      %v6474 = vunpack.c.l.b16 %v6419
      %v6475 = vunpack.c.l.b16 %v6420
      %v6476 = vunpack.c.l.b16 %v6421
      %v6477 = vunpack.c.l.b16 %v6422
      %v6478 = vunpack.c.l.b16 %v6423
      %v6479 = vunpack.c.l.b16 %v6424
      %v6480 = vunpack.c.l.b16 %v6425
      %v6481 = vunpack.c.l.b16 %v6426
      %v6482 = vpack.c.b16 %v6467, %v6466
      %v6483 = vpack.c.b16 %v6469, %v6468
      %v6484 = vpack.c.b16 %v6471, %v6470
      %v6485 = vpack.c.b16 %v6473, %v6472
      %v6486 = vpack.c.b16 %v6475, %v6474
      %v6487 = vpack.c.b16 %v6477, %v6476
      %v6488 = vpack.c.b16 %v6479, %v6478
      %v6489 = vpack.c.b16 %v6481, %v6480
      %6498 = vmatprep.subr.bf16.mxu0 0
      %6499 = vmatpush1.bf16.msra.mxu0 %v6489
      %6500 = vmatprep.subr.bf16.mxu0 0
      %6501 = vmatpush1.bf16.msra.mxu0 %v6488
      %6502 = vmatprep.subr.bf16.mxu0 0
      %6503 = vmatpush1.bf16.msra.mxu0 %v6487
      %6504 = vmatprep.subr.bf16.mxu0 0
      %6505 = vmatpush1.bf16.msra.mxu0 %v6486
      %6506 = vmatprep.subr.bf16.mxu0 0
      %6507 = vmatpush1.bf16.msra.mxu0 %v6485
      %6508 = vmatprep.subr.bf16.mxu0 0
      %6509 = vmatpush1.bf16.msra.mxu0 %v6484
      %6510 = vmatprep.subr.bf16.mxu0 0
      %6511 = vmatpush1.bf16.msra.mxu0 %v6483
      %6512 = vmatprep.subr.bf16.mxu0 0
      %6513 = vmatpush1.bf16.msra.mxu0 %v6482
      %6514 = vmatprep.subr.bf16.mxu0 0
      %6515 = vmatpush2.bf16.msra.mxu0 0
      %6516 = vmatprep.subr.bf16.mxu0 0
      %6517 = vmatpush2.bf16.msra.mxu0 0
      %6518 = vmatprep.subr.bf16.mxu0 0
      %6519 = vmatpush2.bf16.msra.mxu0 0
      %6520 = vmatprep.subr.bf16.mxu0 0
      %6521 = vmatpush2.bf16.msra.mxu0 0
      %6522 = vmatprep.subr.bf16.mxu0 0
      %6523 = vmatpush2.bf16.msra.mxu0 0
      %6524 = vmatprep.subr.bf16.mxu0 0
      %6525 = vmatpush2.bf16.msra.mxu0 0
      %6526 = vmatprep.subr.bf16.mxu0 0
      %6527 = vmatpush2.bf16.msra.mxu0 0
      %6528 = vmatprep.subr.bf16.mxu0 0
      %6529 = vmatpush2.bf16.msra.mxu0 0
      %6530 = vmatprep.mubr.bf16.mxu0 0
      %6531 = vmatmul.mubr.bf16.gmra.mxu0 %v6444
      %v6532 = vpop.f32.mrf.mxu0
      %v6533 = vadd.f32 0.0, %v6532
      %v6534 = vpop.f32.mrf.mxu0
      %v6535 = vpop.f32.mrf.mxu0
      %v6536 = vadd.f32 0.0, %v6535
      %v6537 = vpop.f32.mrf.mxu0
      %6538 = vmatprep.mubr.bf16.mxu0 0
      %6539 = vmatmul.mubr.bf16.gmra.mxu0 %v6446
      %v6540 = vpop.f32.mrf.mxu0
      %v6541 = vadd.f32 0.0, %v6540
      %v6542 = vpop.f32.mrf.mxu0
      %v6543 = vpop.f32.mrf.mxu0
      %v6544 = vadd.f32 0.0, %v6543
      %v6545 = vpop.f32.mrf.mxu0
      %6546 = vmatprep.mubr.bf16.mxu0 0
      %6547 = vmatmul.mubr.bf16.gmra.mxu0 %v6445
      %v6548 = vpop.f32.mrf.mxu0
      %v6549 = vadd.f32 0.0, %v6548
      %v6550 = vpop.f32.mrf.mxu0
      %v6551 = vpop.f32.mrf.mxu0
      %v6552 = vpop.f32.mrf.mxu0
      %6553 = vdwg.mxu0
      %v6554 = vadd.f32 %v6399, %v6533
      %v6555 = vadd.f32 %v6400, %v6536
      %v6556 = vadd.f32 %v6401, %v6541
      %v6557 = vadd.f32 %v6402, %v6544
      %v6558 = vadd.f32 %v6403, %v6549
      %6559 = vst [vmem:[#allocation2] sm:$0xff] %v6554
      %6560 = vst [vmem:[#allocation2 + $0x18] sm:$0xff] %v6555
      %6561 = vst [vmem:[#allocation2 + $0x30] sm:$0xff] %v6556
      %6562 = vst [vmem:[#allocation2 + $0x48] sm:$0xff] %v6557
      %6563 = vst [vmem:[#allocation2 + $0x60] sm:$0xff] %v6558
      %v6564 = vld [vmem:[#allocation2] sm:$0xff]
      %v6565 = vld [vmem:[#allocation2 + $0x18] sm:$0xff]
      %v6566 = vld [vmem:[#allocation2 + $0x48] sm:$0xff]
      %v6567 = vld [vmem:[#allocation2 + $0x60] sm:$0xff]
      %6568 = vst [vmem:[%s682] sm:$0xff] %v6564
      %6569 = vst [vmem:[%s682 + $0x8] sm:$0xff] %v6565
      %s6570 = scalar_lea.vmem %s682, 16
      %6571 = vst [vmem:[%s6570] sm:$0xff] %v6566
      %6572 = vst [vmem:[%s6570 + $0x8] sm:$0xff] %v6567
      %s6573 = smul.u32 2, %s31
      %p6574 = scmp.lt.s32.totalorder %s6573, 3
      %s6575 = scalar_select %p6574, %s6573, 3
      %s6576 = smul.addr %s6575, 6
      %s6577 = smul.addr %s6576, 8
      %s6578 = scalar_lea.vmem %s14, %s6577
      %s6579 = smul.u32 2, %s31
      %p6580 = scmp.lt.s32.totalorder %s6579, 3
      %s6581 = scalar_select %p6580, %s6579, 3
      %s6582 = smul.addr %s6581, 4
      %s6583 = smul.addr %s6582, 8
      %s6584 = scalar_lea.vmem %s15, %s6583
      %s6585 = smul.u32 2, %s31
      %p6586 = scmp.lt.s32.totalorder %s6585, 3
      %s6587 = scalar_select %p6586, %s6585, 3
      %s6588 = smul.addr %s6587, 4
      %s6589 = smul.addr %s6588, 8
      %s6590 = scalar_lea.vmem %s16, %s6589
      %s6591 = smul.u32 2, %s31
      %p6592 = scmp.lt.s32.totalorder %s6591, 3
      %s6593 = scalar_select %p6592, %s6591, 3
      %s6594 = smul.addr %s6593, 2
      %s6595 = smul.addr %s6594, 8
      %s6596 = scalar_lea.vmem %s17, %s6595
      %s6597 = smul.u32 2, %s31
      %p6598 = scmp.lt.s32.totalorder %s6597, 3
      %s6599 = scalar_select %p6598, %s6597, 3
      %s6600 = smul.addr %s6599, 2
      %s6601 = smul.addr %s6600, 8
      %s6602 = scalar_lea.vmem %s18, %s6601
      %s6603 = smul.u32 2, %s31
      %p6604 = scmp.lt.s32.totalorder %s6603, 3
      %s6605 = scalar_select %p6604, %s6603, 3
      %s6606 = smul.addr %s6605, 2
      %s6607 = smul.addr %s6606, 8
      %s6608 = scalar_lea.vmem %s19, %s6607
      // Predicated region
      $region77: #{discriminator_stft_forward.1} parent=75 // pred_check
        %p6609 = pneg %p348
      $region78: #{discriminator_stft_forward.1} parent=75 // pred_check_branch
        %6611 = sbr.rel (%p6609) target = $region80
      $region79: #{discriminator_stft_forward.1} parent=75 // pred_region
        %s6612 = smul.u32 2, %s31
      $region80: #{discriminator_stft_forward.1} parent=75 // pred_fallthru
        _
      // Predicated region
      $region81: #{discriminator_stft_forward.1} parent=75 // pred_check
        %p6613 = pneg %p374
      $region82: #{discriminator_stft_forward.1} parent=75 // pred_check_branch
        %6615 = sbr.rel (%p6613) target = $region84
      $region83: #{discriminator_stft_forward.1} parent=75 // pred_region
        %s6616 = smul.u32 2, %s31
      $region84: #{discriminator_stft_forward.1} parent=75 // pred_fallthru
        _
      // Predicated region
      $region85: #{discriminator_stft_forward.1} parent=75 // pred_check
        %p6617 = pneg %p400
      $region86: #{discriminator_stft_forward.1} parent=75 // pred_check_branch
        %6619 = sbr.rel (%p6617) target = $region88
      $region87: #{discriminator_stft_forward.1} parent=75 // pred_region
        %s6620 = smul.u32 2, %s31
      $region88: #{discriminator_stft_forward.1} parent=75 // pred_fallthru
        _
      // Predicated region
      $region89: #{discriminator_stft_forward.1} parent=75 // pred_check
        %p6621 = pneg %p426
      $region90: #{discriminator_stft_forward.1} parent=75 // pred_check_branch
        %6623 = sbr.rel (%p6621) target = $region92
      $region91: #{discriminator_stft_forward.1} parent=75 // pred_region
        %s6624 = smul.u32 2, %s31
      $region92: #{discriminator_stft_forward.1} parent=75 // pred_fallthru
        _
      // Predicated region
      $region93: #{discriminator_stft_forward.1} parent=75 // pred_check
        %p6625 = pneg %p452
      $region94: #{discriminator_stft_forward.1} parent=75 // pred_check_branch
        %6627 = sbr.rel (%p6625) target = $region96
      $region95: #{discriminator_stft_forward.1} parent=75 // pred_region
        %s6628 = smul.u32 2, %s31
      $region96: #{discriminator_stft_forward.1} parent=75 // pred_fallthru
        _
      // Predicated region
      $region97: #{discriminator_stft_forward.1} parent=75 // pred_check
        %p6629 = pneg %p478
      $region98: #{discriminator_stft_forward.1} parent=75 // pred_check_branch
        %6631 = sbr.rel (%p6629) target = $region100
      $region99: #{discriminator_stft_forward.1} parent=75 // pred_region
        %s6632 = smul.u32 2, %s31
      $region100: #{discriminator_stft_forward.1} parent=75 // pred_fallthru
        _
    $region76: #{discriminator_stft_forward.1} parent=5 // pred_fallthru
      _
    %p6633 = scmp.le.s32.totalorder 2, %s26
    // Predicated region
    $region101: #{discriminator_stft_forward.1} parent=5 // pred_check
      %p6634 = pneg %p6633
    $region102: #{discriminator_stft_forward.1} parent=5 // pred_check_branch
      %6636 = sbr.rel (%p6634) target = $region104
    $region103: #{discriminator_stft_forward.1} parent=5 // pred_region
      %s6637 = ssub.s32 %s26, 2
      // Predicated region
      $region105: #{discriminator_stft_forward.1} parent=103 // pred_check
        %p6638 = pneg %p354
      $region106: #{discriminator_stft_forward.1} parent=103 // pred_check_branch
        %6640 = sbr.rel (%p6638) target = $region108
      $region107: #{discriminator_stft_forward.1} parent=103 // pred_region
        %s6641 = smul.u32 2, %s32
        %p6642 = scmp.lt.s32.totalorder %s6641, 3
        %s6643 = scalar_select %p6642, %s6641, 3
        %s6644 = smul.addr %s6643, 6
        %s6645 = smul.addr %s6644, 8
        %s6646 = scalar_lea.vmem %s14, %s6645
      $region108: #{discriminator_stft_forward.1} parent=103 // pred_fallthru
        _
      // Predicated region
      $region109: #{discriminator_stft_forward.1} parent=103 // pred_check
        %p6647 = pneg %p380
      $region110: #{discriminator_stft_forward.1} parent=103 // pred_check_branch
        %6649 = sbr.rel (%p6647) target = $region112
      $region111: #{discriminator_stft_forward.1} parent=103 // pred_region
        %s6650 = smul.u32 2, %s32
        %p6651 = scmp.lt.s32.totalorder %s6650, 3
        %s6652 = scalar_select %p6651, %s6650, 3
        %s6653 = smul.addr %s6652, 4
        %s6654 = smul.addr %s6653, 8
        %s6655 = scalar_lea.vmem %s15, %s6654
      $region112: #{discriminator_stft_forward.1} parent=103 // pred_fallthru
        _
      // Predicated region
      $region113: #{discriminator_stft_forward.1} parent=103 // pred_check
        %p6656 = pneg %p406
      $region114: #{discriminator_stft_forward.1} parent=103 // pred_check_branch
        %6658 = sbr.rel (%p6656) target = $region116
      $region115: #{discriminator_stft_forward.1} parent=103 // pred_region
        %s6659 = smul.u32 2, %s32
        %p6660 = scmp.lt.s32.totalorder %s6659, 3
        %s6661 = scalar_select %p6660, %s6659, 3
        %s6662 = smul.addr %s6661, 4
        %s6663 = smul.addr %s6662, 8
        %s6664 = scalar_lea.vmem %s16, %s6663
      $region116: #{discriminator_stft_forward.1} parent=103 // pred_fallthru
        _
      // Predicated region
      $region117: #{discriminator_stft_forward.1} parent=103 // pred_check
        %p6665 = pneg %p432
      $region118: #{discriminator_stft_forward.1} parent=103 // pred_check_branch
        %6667 = sbr.rel (%p6665) target = $region120
      $region119: #{discriminator_stft_forward.1} parent=103 // pred_region
        %s6668 = smul.u32 2, %s32
        %p6669 = scmp.lt.s32.totalorder %s6668, 3
        %s6670 = scalar_select %p6669, %s6668, 3
        %s6671 = smul.addr %s6670, 2
        %s6672 = smul.addr %s6671, 8
        %s6673 = scalar_lea.vmem %s17, %s6672
      $region120: #{discriminator_stft_forward.1} parent=103 // pred_fallthru
        _
      // Predicated region
      $region121: #{discriminator_stft_forward.1} parent=103 // pred_check
        %p6674 = pneg %p458
      $region122: #{discriminator_stft_forward.1} parent=103 // pred_check_branch
        %6676 = sbr.rel (%p6674) target = $region124
      $region123: #{discriminator_stft_forward.1} parent=103 // pred_region
        %s6677 = smul.u32 2, %s32
        %p6678 = scmp.lt.s32.totalorder %s6677, 3
        %s6679 = scalar_select %p6678, %s6677, 3
        %s6680 = smul.addr %s6679, 2
        %s6681 = smul.addr %s6680, 8
        %s6682 = scalar_lea.vmem %s18, %s6681
      $region124: #{discriminator_stft_forward.1} parent=103 // pred_fallthru
        _
      // Predicated region
      $region125: #{discriminator_stft_forward.1} parent=103 // pred_check
        %p6683 = pneg %p484
      $region126: #{discriminator_stft_forward.1} parent=103 // pred_check_branch
        %6685 = sbr.rel (%p6683) target = $region128
      $region127: #{discriminator_stft_forward.1} parent=103 // pred_region
        %s6686 = smul.u32 2, %s32
        %p6687 = scmp.lt.s32.totalorder %s6686, 3
        %s6688 = scalar_select %p6687, %s6686, 3
        %s6689 = smul.addr %s6688, 2
        %s6690 = smul.addr %s6689, 8
        %s6691 = scalar_lea.vmem %s19, %s6690
      $region128: #{discriminator_stft_forward.1} parent=103 // pred_fallthru
        _
    $region104: #{discriminator_stft_forward.1} parent=5 // pred_fallthru
      _
  $region6: #{discriminator_stft_forward.1} parent=0 // loop_footer
    %s30 = sadd.s32 1, %s26
  $region7: #{discriminator_stft_forward.1} parent=0 // loop_footer_branch
    %25 = sbr.rel target = $region3
  $region8: #{discriminator_stft_forward.1} parent=0 // loop_exit
    _

</llo_original>
